<compile_context>
chip_gen: v7x
topology: tpu7x:2x2x1
jax: 0.10.0
libtpu: 0.0.40
codegen_flags: <defaults>
</compile_context>

<pallas_src>
import numpy as np

import jax
import jax.numpy as jnp
from jax.experimental import pallas as pl
from jax.experimental.pallas import tpu as pltpu

# Geometry (88x88x1 input is forced by fc1.in_features == 5776 == 16*19*19):
#   conv1: 1->6, 5x5: 88x88 -> 84x84, pool -> 42x42
#   conv2: 6->16, 5x5: 42x42 -> 38x38, pool -> 19x19
_Q = 22              # 88 / 4: side of a 4x4-deinterleaved input plane
_XROW = 512          # padded flattened input-plane length (22*22 = 484 -> 512)
_NP1 = 464           # conv1 GEMM width: 21x21 parity grid, row stride 22 (+pad)
_NP2 = 19 * 22       # = 418, conv2 GEMM width: 19x19 grid, row stride 22

_PARITIES = ((0, 0), (0, 1), (1, 0), (1, 1))


# ----------------------------------------------------------------------------
# Pallas kernels
# ----------------------------------------------------------------------------
def _conv_stack_kernel(x_ref, w1_ref, b1_ref, w2_ref, b2_ref, o_ref,
                       px_s, y1_s, py_s):
    """Fused conv1+ReLU+pool -> conv2+ReLU+pool for ONE sample.

    x_ref : (1, 4, 4, 512)  4x4-deinterleaved, row-flattened 88x88 image:
                            x_ref[0, i, j, r*22 + s] = x[4r+i, 4s+j]
    w1_ref: (96, 64)        conv1 weights, expanded per (out-parity, pool-tap)
    b1_ref: (6, 1)
    w2_ref: (64, 216)       conv2 weights, expanded per pool-tap
    b2_ref: (16, 1)
    o_ref : (1, 16, 418)    pooled conv2 output, column index = e*22 + f (e,f<19)
    px_s  : (64, 464)  f32  conv1 master patch matrix (VMEM scratch)
    y1_s  : (2,2,6,464)f32  pooled conv1 output, 2x2-deinterleaved
    py_s  : (216, 418) f32  conv2 master patch matrix
    """
    # ---- conv1 master patches: row (a, b) holds x[4r+a, 4s+b] over the 21x21
    #      parity grid (r, s), flattened with row stride 22.  Every row is a
    #      contiguous slice of one deinterleaved input plane.
    for a in range(8):
        for b in range(8):
            start = _Q * (a // 4) + (b // 4)
            px_s[a * 8 + b, :] = x_ref[0, a % 4, b % 4, start:start + _NP1]

    # One GEMM covers all 4 output parities x 4 pool taps x 6 channels.
    r1 = jnp.dot(w1_ref[...], px_s[...], preferred_element_type=jnp.float32)

    # 2x2 max-pool == max over the 4 pool-tap row blocks, then bias + ReLU.
    for g, (p, q) in enumerate(_PARITIES):
        base = g * 24
        acc = r1[base:base + 6, :]
        for t in range(1, 4):
            acc = jnp.maximum(acc, r1[base + 6 * t:base + 6 * t + 6, :])
        y1_s[p, q, :, :] = jnp.maximum(acc + b1_ref[...], 0.0)

    # ---- conv2 master patches: row ((m*6+n)*6 + c) holds y1[c, 2e+m, 2f+n]
    #      over the 19x19 output grid (e, f), flattened with row stride 22.
    #      Again only contiguous slices of the deinterleaved y1 planes.
    for m in range(6):
        for n in range(6):
            off = _Q * (m // 2) + (n // 2)
            row0 = (m * 6 + n) * 6
            py_s[row0:row0 + 6, :] = y1_s[m % 2, n % 2, :, off:off + _NP2]

    r2 = jnp.dot(w2_ref[...], py_s[...], preferred_element_type=jnp.float32)

    acc2 = r2[0:16, :]
    for t in range(1, 4):
        acc2 = jnp.maximum(acc2, r2[16 * t:16 * t + 16, :])
    o_ref[0, :, :] = jnp.maximum(acc2 + b2_ref[...], 0.0)


def _fc_softmax_kernel(x_ref, w1_ref, b1_ref, w2_ref, b2_ref, w3_ref, b3_ref,
                       o_ref):
    """Fused fc1+ReLU -> fc2+ReLU -> fc3 -> softmax (all weights VMEM-resident).

    Weights/activations are bf16, accumulation and softmax are f32.
    """
    h = jnp.dot(x_ref[...], w1_ref[...],
                preferred_element_type=jnp.float32) + b1_ref[...]
    h = jnp.maximum(h, 0.0)
    h = jnp.dot(h.astype(w2_ref.dtype), w2_ref[...],
                preferred_element_type=jnp.float32) + b2_ref[...]
    h = jnp.maximum(h, 0.0)
    z = jnp.dot(h.astype(w3_ref.dtype), w3_ref[...],
                preferred_element_type=jnp.float32) + b3_ref[...]
    z = z - jnp.max(z, axis=-1, keepdims=True)
    e = jnp.exp(z)
    o_ref[...] = (e / jnp.sum(e, axis=-1, keepdims=True)).astype(o_ref.dtype)


# ----------------------------------------------------------------------------
# pallas_call wrappers
# ----------------------------------------------------------------------------
def conv_stack_pallas(x4, w1all, b1, w2all, b2):
    """x4: (B,4,4,512), w1all: (96,64), w2all: (64,216) -> (B, 16, 418)."""
    B = x4.shape[0]
    return pl.pallas_call(
        _conv_stack_kernel,
        grid=(B,),
        out_shape=jax.ShapeDtypeStruct((B, 16, _NP2), jnp.float32),
        in_specs=[
            pl.BlockSpec((1, 4, 4, _XROW), lambda b: (b, 0, 0, 0)),
            pl.BlockSpec((96, 64), lambda b: (0, 0)),
            pl.BlockSpec((6, 1), lambda b: (0, 0)),
            pl.BlockSpec((64, 216), lambda b: (0, 0)),
            pl.BlockSpec((16, 1), lambda b: (0, 0)),
        ],
        out_specs=pl.BlockSpec((1, 16, _NP2), lambda b: (b, 0, 0)),
        scratch_shapes=[
            pltpu.VMEM((64, _NP1), jnp.float32),
            pltpu.VMEM((2, 2, 6, _NP1), jnp.float32),
            pltpu.VMEM((216, _NP2), jnp.float32),
        ],
        compiler_params=pltpu.CompilerParams(
            dimension_semantics=("parallel",),   # batch across TCs on v7x
        ),
    )(x4, w1all, b1.reshape(6, 1), w2all, b2.reshape(16, 1))


def fc_softmax_pallas(x, w1, b1, w2, b2, w3, b3):
    """x: (B, 5776) bf16 -> softmax(relu(relu(x@w1+b1)@w2+b2)@w3+b3)."""
    B = x.shape[0]
    C = w3.shape[1]
    # Single invocation, no grid: every operand is a full-array VMEM block,
    # so there is no pointless double-buffering of the fc1 weight.
    return pl.pallas_call(
        _fc_softmax_kernel,
        out_shape=jax.ShapeDtypeStruct((B, C), jnp.float32),
    )(x, w1, b1.reshape(1, -1), w2, b2.reshape(1, -1), w3, b3.reshape(1, -1))


# ----------------------------------------------------------------------------
# Tiny plain-JAX glue (no data blowup): deinterleave input, expand conv weights
# ----------------------------------------------------------------------------
def _deinterleave_input(x):
    """x: (B,1,88,88) -> (B,4,4,512) with out[b,i,j, r*22+s] = x[b,0,4r+i,4s+j]."""
    B = x.shape[0]
    x = x.reshape(B, _Q, 4, _Q, 4)                 # [b, r, i, s, j]
    x = jnp.transpose(x, (0, 2, 4, 1, 3))          # [b, i, j, r, s]
    x = x.reshape(B, 4, 4, _Q * _Q)                # flat index = r*22 + s
    return jnp.pad(x, ((0, 0), (0, 0), (0, 0), (0, _XROW - _Q * _Q)))


def _expand_conv1_weights(w1):
    """(6,1,5,5) -> (96,64): row ((p*2+q)*4 + (i*2+j))*6 + c, col a*8+b holds
    w1[c,0, a-2p-i, b-2q-j] (0 if out of the 5x5 window)."""
    w1mat = w1.reshape(6, 25)
    w1pad = jnp.concatenate([w1mat, jnp.zeros((6, 1), w1mat.dtype)], axis=1)
    src = np.full((16, 64), 25, dtype=np.int32)    # 25 -> zero column
    for g, (p, q) in enumerate(_PARITIES):
        for t, (i, j) in enumerate(_PARITIES):
            gi = g * 4 + t
            for a in range(8):
                for b in range(8):
                    kh, kw = a - 2 * p - i, b - 2 * q - j
                    if 0 <= kh < 5 and 0 <= kw < 5:
                        src[gi, a * 8 + b] = kh * 5 + kw
    w1e = w1pad[:, src]                            # (6, 16, 64)
    return jnp.transpose(w1e, (1, 0, 2)).reshape(96, 64)


def _expand_conv2_weights(w2):
    """(16,6,5,5) -> (64,216): row t*16+o (t = i2*2+j2), col (m*6+n)*6+c holds
    w2[o, c, m-i2, n-j2] (0 if out of the 5x5 window)."""
    w2mat = w2.reshape(16, 150)
    w2pad = jnp.concatenate([w2mat, jnp.zeros((16, 1), w2mat.dtype)], axis=1)
    src = np.full((4, 216), 150, dtype=np.int32)   # 150 -> zero column
    for t, (i2, j2) in enumerate(_PARITIES):
        for m in range(6):
            for n in range(6):
                kh, kw = m - i2, n - j2
                if 0 <= kh < 5 and 0 <= kw < 5:
                    for c in range(6):
                        src[t, (m * 6 + n) * 6 + c] = c * 25 + kh * 5 + kw
    w2e = w2pad[:, src]                            # (16, 4, 216)
    return jnp.transpose(w2e, (1, 0, 2)).reshape(64, 216)


# ----------------------------------------------------------------------------
# Net forward (matches the PyTorch module semantics)
# ----------------------------------------------------------------------------
def net_forward(x_nchw, params):
    x = x_nchw.astype(jnp.float32)                 # (B, 1, 88, 88)
    B = x.shape[0]

    x4 = _deinterleave_input(x)                          # (B, 4, 4, 512)
    w1all = _expand_conv1_weights(params["conv1_w"])     # (96, 64)
    w2all = _expand_conv2_weights(params["conv2_w"])     # (64, 216)

    # conv1+ReLU+pool -> conv2+ReLU+pool, one kernel, one grid step per sample.
    y2 = conv_stack_pallas(x4, w1all, params["conv1_b"],
                           w2all, params["conv2_b"])     # (B, 16, 418)

    # Drop the stride-22 padding columns -> torch.flatten(x, 1) order.
    # (Tiny XLA reshape on ~27 KB/sample; padding never feeds valid outputs.)
    h = y2.reshape(B, 16, 19, 22)[:, :, :, :19].reshape(B, 16 * 19 * 19)

    # fc1+ReLU -> fc2+ReLU -> fc3 -> softmax (bf16 operands, f32 accumulation).
    return fc_softmax_pallas(
        h.astype(jnp.bfloat16),
        params["fc1_w"].astype(jnp.bfloat16), params["fc1_b"],
        params["fc2_w"].astype(jnp.bfloat16), params["fc2_b"],
        params["fc3_w"].astype(jnp.bfloat16), params["fc3_b"],
    )


# Pure-JAX reference (same bf16 rounding of the fc operands) for self-checking.
def net_forward_reference(x_nchw, params):
    x = x_nchw.astype(jnp.float32)
    B = x.shape[0]
    dn = ("NCHW", "OIHW", "NCHW")
    hi = jax.lax.Precision.HIGHEST

    y = jax.lax.conv_general_dilated(x, params["conv1_w"], (1, 1), "VALID",
                                     dimension_numbers=dn, precision=hi)
    y = jnp.maximum(y + params["conv1_b"][None, :, None, None], 0.0)
    y = jax.lax.reduce_window(y, -jnp.inf, jax.lax.max,
                              (1, 1, 2, 2), (1, 1, 2, 2), "VALID")
    y = jax.lax.conv_general_dilated(y, params["conv2_w"], (1, 1), "VALID",
                                     dimension_numbers=dn, precision=hi)
    y = jnp.maximum(y + params["conv2_b"][None, :, None, None], 0.0)
    y = jax.lax.reduce_window(y, -jnp.inf, jax.lax.max,
                              (1, 1, 2, 2), (1, 1, 2, 2), "VALID")
    h = y.reshape(B, -1)

    def dotf(v, w):
        return jnp.dot(v.astype(jnp.bfloat16).astype(jnp.float32),
                       w.astype(jnp.bfloat16).astype(jnp.float32), precision=hi)

    h = jnp.maximum(dotf(h, params["fc1_w"]) + params["fc1_b"], 0.0)
    h = jnp.maximum(dotf(h, params["fc2_w"]) + params["fc2_b"], 0.0)
    z = dotf(h, params["fc3_w"]) + params["fc3_b"]
    z = z - jnp.max(z, axis=-1, keepdims=True)
    e = jnp.exp(z)
    return e / jnp.sum(e, axis=-1, keepdims=True)


def init_params(key, nb_classes):
    ks = jax.random.split(key, 10)

    def init(k, shape, fan_in):
        return jax.random.normal(k, shape, jnp.float32) / jnp.sqrt(fan_in)

    return dict(
        conv1_w=init(ks[0], (6, 1, 5, 5), 25.0),     # torch layout (Cout,Cin,KH,KW)
        conv1_b=init(ks[1], (6,), 25.0),
        conv2_w=init(ks[2], (16, 6, 5, 5), 150.0),
        conv2_b=init(ks[3], (16,), 150.0),
        fc1_w=init(ks[4], (5776, 120), 5776.0),      # (in, out)
        fc1_b=init(ks[5], (120,), 5776.0),
        fc2_w=init(ks[6], (120, 84), 120.0),
        fc2_b=init(ks[7], (84,), 120.0),
        fc3_w=init(ks[8], (84, 10), 84.0),
        fc3_b=init(ks[9], (10,), 84.0),
    )


if __name__ == "__main__":
    nb_classes = 10
    key = jax.random.PRNGKey(0)
    k_param, k_x = jax.random.split(key)
    params = init_params(k_param, nb_classes)

    # fc1.in_features == 5776 == 16*19*19 forces an 88x88 single-channel input.
    x = jax.random.normal(k_x, (2, 1, 88, 88), jnp.float32)

    out = jax.jit(net_forward)(x, params)
    out = jax.block_until_ready(out)

    assert out.shape == (2, nb_classes)
    assert bool(jnp.all(jnp.isfinite(out)))
    assert bool(jnp.allclose(jnp.sum(out, axis=1), 1.0, atol=1e-3))

    ref = jax.block_until_ready(jax.jit(net_forward_reference)(x, params))
    assert bool(jnp.max(jnp.abs(out - ref)) < 5e-2)

    print("KERNEL_OK")
</pallas_src>

<mosaic_0001>
module attributes {stable_mosaic.version = 11 : i64} {
  func.func @_conv_stack_kernel(%arg0: i32, %arg1: memref<1x4x4x512xf32, #tpu.memory_space<vmem>>, %arg2: memref<96x64xf32, #tpu.memory_space<vmem>>, %arg3: memref<6x1xf32, #tpu.memory_space<vmem>>, %arg4: memref<64x216xf32, #tpu.memory_space<vmem>>, %arg5: memref<16x1xf32, #tpu.memory_space<vmem>>, %arg6: memref<1x16x418xf32, #tpu.memory_space<vmem>>, %arg7: memref<64x464xf32, #tpu.memory_space<vmem>>, %arg8: memref<2x2x6x464xf32, #tpu.memory_space<vmem>>, %arg9: memref<216x418xf32, #tpu.memory_space<vmem>>) attributes {dimension_semantics = [#tpu.dimension_semantics<parallel>], iteration_bounds = array<i64: 2>, scalar_prefetch = 0 : i64, scratch_operands = 3 : i64, tpu.core_type = #tpu.core_type<tc>, window_params = [{transform_indices = @transform_0, window_bounds = array<i64: 1, 4, 4, 512>}, {pipeline_mode = #tpu.pipeline_mode<synchronous>, transform_indices = @transform_1, window_bounds = array<i64: 96, 64>}, {pipeline_mode = #tpu.pipeline_mode<synchronous>, transform_indices = @transform_2, window_bounds = array<i64: 6, 1>}, {pipeline_mode = #tpu.pipeline_mode<synchronous>, transform_indices = @transform_3, window_bounds = array<i64: 64, 216>}, {pipeline_mode = #tpu.pipeline_mode<synchronous>, transform_indices = @transform_4, window_bounds = array<i64: 16, 1>}, {transform_indices = @transform_5, window_bounds = array<i64: 1, 16, 418>}]} {
    %c0 = arith.constant 0 : index
    %c0_0 = arith.constant 0 : index
    %c0_1 = arith.constant 0 : index
    %c0_2 = arith.constant 0 : index
    %0 = vector.load %arg1[%c0, %c0_0, %c0_1, %c0_2] : memref<1x4x4x512xf32, #tpu.memory_space<vmem>>, vector<1x1x1x464xf32>
    %1 = vector.shape_cast %0 : vector<1x1x1x464xf32> to vector<464xf32>
    %c0_3 = arith.constant 0 : index
    %c0_4 = arith.constant 0 : index
    %2 = vector.load %arg7[%c0_3, %c0_4] : memref<64x464xf32, #tpu.memory_space<vmem>>, vector<1x464xf32>
    %3 = vector.shape_cast %2 : vector<1x464xf32> to vector<464xf32>
    %4 = vector.shape_cast %1 : vector<464xf32> to vector<1x464xf32>
    tpu.vector_store %arg7[%c0_3, %c0_4], %4 {strides = array<i32>} : memref<64x464xf32, #tpu.memory_space<vmem>>, vector<1x464xf32>,
    %c0_5 = arith.constant 0 : index
    %c0_6 = arith.constant 0 : index
    %c1 = arith.constant 1 : index
    %c0_7 = arith.constant 0 : index
    %5 = vector.load %arg1[%c0_5, %c0_6, %c1, %c0_7] : memref<1x4x4x512xf32, #tpu.memory_space<vmem>>, vector<1x1x1x464xf32>
    %6 = vector.shape_cast %5 : vector<1x1x1x464xf32> to vector<464xf32>
    %c1_8 = arith.constant 1 : index
    %c0_9 = arith.constant 0 : index
    %7 = vector.load %arg7[%c1_8, %c0_9] : memref<64x464xf32, #tpu.memory_space<vmem>>, vector<1x464xf32>
    %8 = vector.shape_cast %7 : vector<1x464xf32> to vector<464xf32>
    %9 = vector.shape_cast %6 : vector<464xf32> to vector<1x464xf32>
    tpu.vector_store %arg7[%c1_8, %c0_9], %9 {strides = array<i32>} : memref<64x464xf32, #tpu.memory_space<vmem>>, vector<1x464xf32>,
    %c0_10 = arith.constant 0 : index
    %c0_11 = arith.constant 0 : index
    %c2 = arith.constant 2 : index
    %c0_12 = arith.constant 0 : index
    %10 = vector.load %arg1[%c0_10, %c0_11, %c2, %c0_12] : memref<1x4x4x512xf32, #tpu.memory_space<vmem>>, vector<1x1x1x464xf32>
    %11 = vector.shape_cast %10 : vector<1x1x1x464xf32> to vector<464xf32>
    %c2_13 = arith.constant 2 : index
    %c0_14 = arith.constant 0 : index
    %12 = vector.load %arg7[%c2_13, %c0_14] : memref<64x464xf32, #tpu.memory_space<vmem>>, vector<1x464xf32>
    %13 = vector.shape_cast %12 : vector<1x464xf32> to vector<464xf32>
    %14 = vector.shape_cast %11 : vector<464xf32> to vector<1x464xf32>
    tpu.vector_store %arg7[%c2_13, %c0_14], %14 {strides = array<i32>} : memref<64x464xf32, #tpu.memory_space<vmem>>, vector<1x464xf32>,
    %c0_15 = arith.constant 0 : index
    %c0_16 = arith.constant 0 : index
    %c3 = arith.constant 3 : index
    %c0_17 = arith.constant 0 : index
    %15 = vector.load %arg1[%c0_15, %c0_16, %c3, %c0_17] : memref<1x4x4x512xf32, #tpu.memory_space<vmem>>, vector<1x1x1x464xf32>
    %16 = vector.shape_cast %15 : vector<1x1x1x464xf32> to vector<464xf32>
    %c3_18 = arith.constant 3 : index
    %c0_19 = arith.constant 0 : index
    %17 = vector.load %arg7[%c3_18, %c0_19] : memref<64x464xf32, #tpu.memory_space<vmem>>, vector<1x464xf32>
    %18 = vector.shape_cast %17 : vector<1x464xf32> to vector<464xf32>
    %19 = vector.shape_cast %16 : vector<464xf32> to vector<1x464xf32>
    tpu.vector_store %arg7[%c3_18, %c0_19], %19 {strides = array<i32>} : memref<64x464xf32, #tpu.memory_space<vmem>>, vector<1x464xf32>,
    %c0_20 = arith.constant 0 : index
    %c0_21 = arith.constant 0 : index
    %c0_22 = arith.constant 0 : index
    %c1_23 = arith.constant 1 : index
    %20 = vector.load %arg1[%c0_20, %c0_21, %c0_22, %c1_23] : memref<1x4x4x512xf32, #tpu.memory_space<vmem>>, vector<1x1x1x464xf32>
    %21 = vector.shape_cast %20 : vector<1x1x1x464xf32> to vector<464xf32>
    %c4 = arith.constant 4 : index
    %c0_24 = arith.constant 0 : index
    %22 = vector.load %arg7[%c4, %c0_24] : memref<64x464xf32, #tpu.memory_space<vmem>>, vector<1x464xf32>
    %23 = vector.shape_cast %22 : vector<1x464xf32> to vector<464xf32>
    %24 = vector.shape_cast %21 : vector<464xf32> to vector<1x464xf32>
    tpu.vector_store %arg7[%c4, %c0_24], %24 {strides = array<i32>} : memref<64x464xf32, #tpu.memory_space<vmem>>, vector<1x464xf32>,
    %c0_25 = arith.constant 0 : index
    %c0_26 = arith.constant 0 : index
    %c1_27 = arith.constant 1 : index
    %c1_28 = arith.constant 1 : index
    %25 = vector.load %arg1[%c0_25, %c0_26, %c1_27, %c1_28] : memref<1x4x4x512xf32, #tpu.memory_space<vmem>>, vector<1x1x1x464xf32>
    %26 = vector.shape_cast %25 : vector<1x1x1x464xf32> to vector<464xf32>
    %c5 = arith.constant 5 : index
    %c0_29 = arith.constant 0 : index
    %27 = vector.load %arg7[%c5, %c0_29] : memref<64x464xf32, #tpu.memory_space<vmem>>, vector<1x464xf32>
    %28 = vector.shape_cast %27 : vector<1x464xf32> to vector<464xf32>
    %29 = vector.shape_cast %26 : vector<464xf32> to vector<1x464xf32>
    tpu.vector_store %arg7[%c5, %c0_29], %29 {strides = array<i32>} : memref<64x464xf32, #tpu.memory_space<vmem>>, vector<1x464xf32>,
    %c0_30 = arith.constant 0 : index
    %c0_31 = arith.constant 0 : index
    %c2_32 = arith.constant 2 : index
    %c1_33 = arith.constant 1 : index
    %30 = vector.load %arg1[%c0_30, %c0_31, %c2_32, %c1_33] : memref<1x4x4x512xf32, #tpu.memory_space<vmem>>, vector<1x1x1x464xf32>
    %31 = vector.shape_cast %30 : vector<1x1x1x464xf32> to vector<464xf32>
    %c6 = arith.constant 6 : index
    %c0_34 = arith.constant 0 : index
    %32 = vector.load %arg7[%c6, %c0_34] : memref<64x464xf32, #tpu.memory_space<vmem>>, vector<1x464xf32>
    %33 = vector.shape_cast %32 : vector<1x464xf32> to vector<464xf32>
    %34 = vector.shape_cast %31 : vector<464xf32> to vector<1x464xf32>
    tpu.vector_store %arg7[%c6, %c0_34], %34 {strides = array<i32>} : memref<64x464xf32, #tpu.memory_space<vmem>>, vector<1x464xf32>,
    %c0_35 = arith.constant 0 : index
    %c0_36 = arith.constant 0 : index
    %c3_37 = arith.constant 3 : index
    %c1_38 = arith.constant 1 : index
    %35 = vector.load %arg1[%c0_35, %c0_36, %c3_37, %c1_38] : memref<1x4x4x512xf32, #tpu.memory_space<vmem>>, vector<1x1x1x464xf32>
    %36 = vector.shape_cast %35 : vector<1x1x1x464xf32> to vector<464xf32>
    %c7 = arith.constant 7 : index
    %c0_39 = arith.constant 0 : index
    %37 = vector.load %arg7[%c7, %c0_39] : memref<64x464xf32, #tpu.memory_space<vmem>>, vector<1x464xf32>
    %38 = vector.shape_cast %37 : vector<1x464xf32> to vector<464xf32>
    %39 = vector.shape_cast %36 : vector<464xf32> to vector<1x464xf32>
    tpu.vector_store %arg7[%c7, %c0_39], %39 {strides = array<i32>} : memref<64x464xf32, #tpu.memory_space<vmem>>, vector<1x464xf32>,
    %c0_40 = arith.constant 0 : index
    %c1_41 = arith.constant 1 : index
    %c0_42 = arith.constant 0 : index
    %c0_43 = arith.constant 0 : index
    %40 = vector.load %arg1[%c0_40, %c1_41, %c0_42, %c0_43] : memref<1x4x4x512xf32, #tpu.memory_space<vmem>>, vector<1x1x1x464xf32>
    %41 = vector.shape_cast %40 : vector<1x1x1x464xf32> to vector<464xf32>
    %c8 = arith.constant 8 : index
    %c0_44 = arith.constant 0 : index
    %42 = vector.load %arg7[%c8, %c0_44] : memref<64x464xf32, #tpu.memory_space<vmem>>, vector<1x464xf32>
    %43 = vector.shape_cast %42 : vector<1x464xf32> to vector<464xf32>
    %44 = vector.shape_cast %41 : vector<464xf32> to vector<1x464xf32>
    tpu.vector_store %arg7[%c8, %c0_44], %44 {strides = array<i32>} : memref<64x464xf32, #tpu.memory_space<vmem>>, vector<1x464xf32>,
    %c0_45 = arith.constant 0 : index
    %c1_46 = arith.constant 1 : index
    %c1_47 = arith.constant 1 : index
    %c0_48 = arith.constant 0 : index
    %45 = vector.load %arg1[%c0_45, %c1_46, %c1_47, %c0_48] : memref<1x4x4x512xf32, #tpu.memory_space<vmem>>, vector<1x1x1x464xf32>
    %46 = vector.shape_cast %45 : vector<1x1x1x464xf32> to vector<464xf32>
    %c9 = arith.constant 9 : index
    %c0_49 = arith.constant 0 : index
    %47 = vector.load %arg7[%c9, %c0_49] : memref<64x464xf32, #tpu.memory_space<vmem>>, vector<1x464xf32>
    %48 = vector.shape_cast %47 : vector<1x464xf32> to vector<464xf32>
    %49 = vector.shape_cast %46 : vector<464xf32> to vector<1x464xf32>
    tpu.vector_store %arg7[%c9, %c0_49], %49 {strides = array<i32>} : memref<64x464xf32, #tpu.memory_space<vmem>>, vector<1x464xf32>,
    %c0_50 = arith.constant 0 : index
    %c1_51 = arith.constant 1 : index
    %c2_52 = arith.constant 2 : index
    %c0_53 = arith.constant 0 : index
    %50 = vector.load %arg1[%c0_50, %c1_51, %c2_52, %c0_53] : memref<1x4x4x512xf32, #tpu.memory_space<vmem>>, vector<1x1x1x464xf32>
    %51 = vector.shape_cast %50 : vector<1x1x1x464xf32> to vector<464xf32>
    %c10 = arith.constant 10 : index
    %c0_54 = arith.constant 0 : index
    %52 = vector.load %arg7[%c10, %c0_54] : memref<64x464xf32, #tpu.memory_space<vmem>>, vector<1x464xf32>
    %53 = vector.shape_cast %52 : vector<1x464xf32> to vector<464xf32>
    %54 = vector.shape_cast %51 : vector<464xf32> to vector<1x464xf32>
    tpu.vector_store %arg7[%c10, %c0_54], %54 {strides = array<i32>} : memref<64x464xf32, #tpu.memory_space<vmem>>, vector<1x464xf32>,
    %c0_55 = arith.constant 0 : index
    %c1_56 = arith.constant 1 : index
    %c3_57 = arith.constant 3 : index
    %c0_58 = arith.constant 0 : index
    %55 = vector.load %arg1[%c0_55, %c1_56, %c3_57, %c0_58] : memref<1x4x4x512xf32, #tpu.memory_space<vmem>>, vector<1x1x1x464xf32>
    %56 = vector.shape_cast %55 : vector<1x1x1x464xf32> to vector<464xf32>
    %c11 = arith.constant 11 : index
    %c0_59 = arith.constant 0 : index
    %57 = vector.load %arg7[%c11, %c0_59] : memref<64x464xf32, #tpu.memory_space<vmem>>, vector<1x464xf32>
    %58 = vector.shape_cast %57 : vector<1x464xf32> to vector<464xf32>
    %59 = vector.shape_cast %56 : vector<464xf32> to vector<1x464xf32>
    tpu.vector_store %arg7[%c11, %c0_59], %59 {strides = array<i32>} : memref<64x464xf32, #tpu.memory_space<vmem>>, vector<1x464xf32>,
    %c0_60 = arith.constant 0 : index
    %c1_61 = arith.constant 1 : index
    %c0_62 = arith.constant 0 : index
    %c1_63 = arith.constant 1 : index
    %60 = vector.load %arg1[%c0_60, %c1_61, %c0_62, %c1_63] : memref<1x4x4x512xf32, #tpu.memory_space<vmem>>, vector<1x1x1x464xf32>
    %61 = vector.shape_cast %60 : vector<1x1x1x464xf32> to vector<464xf32>
    %c12 = arith.constant 12 : index
    %c0_64 = arith.constant 0 : index
    %62 = vector.load %arg7[%c12, %c0_64] : memref<64x464xf32, #tpu.memory_space<vmem>>, vector<1x464xf32>
    %63 = vector.shape_cast %62 : vector<1x464xf32> to vector<464xf32>
    %64 = vector.shape_cast %61 : vector<464xf32> to vector<1x464xf32>
    tpu.vector_store %arg7[%c12, %c0_64], %64 {strides = array<i32>} : memref<64x464xf32, #tpu.memory_space<vmem>>, vector<1x464xf32>,
    %c0_65 = arith.constant 0 : index
    %c1_66 = arith.constant 1 : index
    %c1_67 = arith.constant 1 : index
    %c1_68 = arith.constant 1 : index
    %65 = vector.load %arg1[%c0_65, %c1_66, %c1_67, %c1_68] : memref<1x4x4x512xf32, #tpu.memory_space<vmem>>, vector<1x1x1x464xf32>
    %66 = vector.shape_cast %65 : vector<1x1x1x464xf32> to vector<464xf32>
    %c13 = arith.constant 13 : index
    %c0_69 = arith.constant 0 : index
    %67 = vector.load %arg7[%c13, %c0_69] : memref<64x464xf32, #tpu.memory_space<vmem>>, vector<1x464xf32>
    %68 = vector.shape_cast %67 : vector<1x464xf32> to vector<464xf32>
    %69 = vector.shape_cast %66 : vector<464xf32> to vector<1x464xf32>
    tpu.vector_store %arg7[%c13, %c0_69], %69 {strides = array<i32>} : memref<64x464xf32, #tpu.memory_space<vmem>>, vector<1x464xf32>,
    %c0_70 = arith.constant 0 : index
    %c1_71 = arith.constant 1 : index
    %c2_72 = arith.constant 2 : index
    %c1_73 = arith.constant 1 : index
    %70 = vector.load %arg1[%c0_70, %c1_71, %c2_72, %c1_73] : memref<1x4x4x512xf32, #tpu.memory_space<vmem>>, vector<1x1x1x464xf32>
    %71 = vector.shape_cast %70 : vector<1x1x1x464xf32> to vector<464xf32>
    %c14 = arith.constant 14 : index
    %c0_74 = arith.constant 0 : index
    %72 = vector.load %arg7[%c14, %c0_74] : memref<64x464xf32, #tpu.memory_space<vmem>>, vector<1x464xf32>
    %73 = vector.shape_cast %72 : vector<1x464xf32> to vector<464xf32>
    %74 = vector.shape_cast %71 : vector<464xf32> to vector<1x464xf32>
    tpu.vector_store %arg7[%c14, %c0_74], %74 {strides = array<i32>} : memref<64x464xf32, #tpu.memory_space<vmem>>, vector<1x464xf32>,
    %c0_75 = arith.constant 0 : index
    %c1_76 = arith.constant 1 : index
    %c3_77 = arith.constant 3 : index
    %c1_78 = arith.constant 1 : index
    %75 = vector.load %arg1[%c0_75, %c1_76, %c3_77, %c1_78] : memref<1x4x4x512xf32, #tpu.memory_space<vmem>>, vector<1x1x1x464xf32>
    %76 = vector.shape_cast %75 : vector<1x1x1x464xf32> to vector<464xf32>
    %c15 = arith.constant 15 : index
    %c0_79 = arith.constant 0 : index
    %77 = vector.load %arg7[%c15, %c0_79] : memref<64x464xf32, #tpu.memory_space<vmem>>, vector<1x464xf32>
    %78 = vector.shape_cast %77 : vector<1x464xf32> to vector<464xf32>
    %79 = vector.shape_cast %76 : vector<464xf32> to vector<1x464xf32>
    tpu.vector_store %arg7[%c15, %c0_79], %79 {strides = array<i32>} : memref<64x464xf32, #tpu.memory_space<vmem>>, vector<1x464xf32>,
    %c0_80 = arith.constant 0 : index
    %c2_81 = arith.constant 2 : index
    %c0_82 = arith.constant 0 : index
    %c0_83 = arith.constant 0 : index
    %80 = vector.load %arg1[%c0_80, %c2_81, %c0_82, %c0_83] : memref<1x4x4x512xf32, #tpu.memory_space<vmem>>, vector<1x1x1x464xf32>
    %81 = vector.shape_cast %80 : vector<1x1x1x464xf32> to vector<464xf32>
    %c16 = arith.constant 16 : index
    %c0_84 = arith.constant 0 : index
    %82 = vector.load %arg7[%c16, %c0_84] : memref<64x464xf32, #tpu.memory_space<vmem>>, vector<1x464xf32>
    %83 = vector.shape_cast %82 : vector<1x464xf32> to vector<464xf32>
    %84 = vector.shape_cast %81 : vector<464xf32> to vector<1x464xf32>
    tpu.vector_store %arg7[%c16, %c0_84], %84 {strides = array<i32>} : memref<64x464xf32, #tpu.memory_space<vmem>>, vector<1x464xf32>,
    %c0_85 = arith.constant 0 : index
    %c2_86 = arith.constant 2 : index
    %c1_87 = arith.constant 1 : index
    %c0_88 = arith.constant 0 : index
    %85 = vector.load %arg1[%c0_85, %c2_86, %c1_87, %c0_88] : memref<1x4x4x512xf32, #tpu.memory_space<vmem>>, vector<1x1x1x464xf32>
    %86 = vector.shape_cast %85 : vector<1x1x1x464xf32> to vector<464xf32>
    %c17 = arith.constant 17 : index
    %c0_89 = arith.constant 0 : index
    %87 = vector.load %arg7[%c17, %c0_89] : memref<64x464xf32, #tpu.memory_space<vmem>>, vector<1x464xf32>
    %88 = vector.shape_cast %87 : vector<1x464xf32> to vector<464xf32>
    %89 = vector.shape_cast %86 : vector<464xf32> to vector<1x464xf32>
    tpu.vector_store %arg7[%c17, %c0_89], %89 {strides = array<i32>} : memref<64x464xf32, #tpu.memory_space<vmem>>, vector<1x464xf32>,
    %c0_90 = arith.constant 0 : index
    %c2_91 = arith.constant 2 : index
    %c2_92 = arith.constant 2 : index
    %c0_93 = arith.constant 0 : index
    %90 = vector.load %arg1[%c0_90, %c2_91, %c2_92, %c0_93] : memref<1x4x4x512xf32, #tpu.memory_space<vmem>>, vector<1x1x1x464xf32>
    %91 = vector.shape_cast %90 : vector<1x1x1x464xf32> to vector<464xf32>
    %c18 = arith.constant 18 : index
    %c0_94 = arith.constant 0 : index
    %92 = vector.load %arg7[%c18, %c0_94] : memref<64x464xf32, #tpu.memory_space<vmem>>, vector<1x464xf32>
    %93 = vector.shape_cast %92 : vector<1x464xf32> to vector<464xf32>
    %94 = vector.shape_cast %91 : vector<464xf32> to vector<1x464xf32>
    tpu.vector_store %arg7[%c18, %c0_94], %94 {strides = array<i32>} : memref<64x464xf32, #tpu.memory_space<vmem>>, vector<1x464xf32>,
    %c0_95 = arith.constant 0 : index
    %c2_96 = arith.constant 2 : index
    %c3_97 = arith.constant 3 : index
    %c0_98 = arith.constant 0 : index
    %95 = vector.load %arg1[%c0_95, %c2_96, %c3_97, %c0_98] : memref<1x4x4x512xf32, #tpu.memory_space<vmem>>, vector<1x1x1x464xf32>
    %96 = vector.shape_cast %95 : vector<1x1x1x464xf32> to vector<464xf32>
    %c19 = arith.constant 19 : index
    %c0_99 = arith.constant 0 : index
    %97 = vector.load %arg7[%c19, %c0_99] : memref<64x464xf32, #tpu.memory_space<vmem>>, vector<1x464xf32>
    %98 = vector.shape_cast %97 : vector<1x464xf32> to vector<464xf32>
    %99 = vector.shape_cast %96 : vector<464xf32> to vector<1x464xf32>
    tpu.vector_store %arg7[%c19, %c0_99], %99 {strides = array<i32>} : memref<64x464xf32, #tpu.memory_space<vmem>>, vector<1x464xf32>,
    %c0_100 = arith.constant 0 : index
    %c2_101 = arith.constant 2 : index
    %c0_102 = arith.constant 0 : index
    %c1_103 = arith.constant 1 : index
    %100 = vector.load %arg1[%c0_100, %c2_101, %c0_102, %c1_103] : memref<1x4x4x512xf32, #tpu.memory_space<vmem>>, vector<1x1x1x464xf32>
    %101 = vector.shape_cast %100 : vector<1x1x1x464xf32> to vector<464xf32>
    %c20 = arith.constant 20 : index
    %c0_104 = arith.constant 0 : index
    %102 = vector.load %arg7[%c20, %c0_104] : memref<64x464xf32, #tpu.memory_space<vmem>>, vector<1x464xf32>
    %103 = vector.shape_cast %102 : vector<1x464xf32> to vector<464xf32>
    %104 = vector.shape_cast %101 : vector<464xf32> to vector<1x464xf32>
    tpu.vector_store %arg7[%c20, %c0_104], %104 {strides = array<i32>} : memref<64x464xf32, #tpu.memory_space<vmem>>, vector<1x464xf32>,
    %c0_105 = arith.constant 0 : index
    %c2_106 = arith.constant 2 : index
    %c1_107 = arith.constant 1 : index
    %c1_108 = arith.constant 1 : index
    %105 = vector.load %arg1[%c0_105, %c2_106, %c1_107, %c1_108] : memref<1x4x4x512xf32, #tpu.memory_space<vmem>>, vector<1x1x1x464xf32>
    %106 = vector.shape_cast %105 : vector<1x1x1x464xf32> to vector<464xf32>
    %c21 = arith.constant 21 : index
    %c0_109 = arith.constant 0 : index
    %107 = vector.load %arg7[%c21, %c0_109] : memref<64x464xf32, #tpu.memory_space<vmem>>, vector<1x464xf32>
    %108 = vector.shape_cast %107 : vector<1x464xf32> to vector<464xf32>
    %109 = vector.shape_cast %106 : vector<464xf32> to vector<1x464xf32>
    tpu.vector_store %arg7[%c21, %c0_109], %109 {strides = array<i32>} : memref<64x464xf32, #tpu.memory_space<vmem>>, vector<1x464xf32>,
    %c0_110 = arith.constant 0 : index
    %c2_111 = arith.constant 2 : index
    %c2_112 = arith.constant 2 : index
    %c1_113 = arith.constant 1 : index
    %110 = vector.load %arg1[%c0_110, %c2_111, %c2_112, %c1_113] : memref<1x4x4x512xf32, #tpu.memory_space<vmem>>, vector<1x1x1x464xf32>
    %111 = vector.shape_cast %110 : vector<1x1x1x464xf32> to vector<464xf32>
    %c22 = arith.constant 22 : index
    %c0_114 = arith.constant 0 : index
    %112 = vector.load %arg7[%c22, %c0_114] : memref<64x464xf32, #tpu.memory_space<vmem>>, vector<1x464xf32>
    %113 = vector.shape_cast %112 : vector<1x464xf32> to vector<464xf32>
    %114 = vector.shape_cast %111 : vector<464xf32> to vector<1x464xf32>
    tpu.vector_store %arg7[%c22, %c0_114], %114 {strides = array<i32>} : memref<64x464xf32, #tpu.memory_space<vmem>>, vector<1x464xf32>,
    %c0_115 = arith.constant 0 : index
    %c2_116 = arith.constant 2 : index
    %c3_117 = arith.constant 3 : index
    %c1_118 = arith.constant 1 : index
    %115 = vector.load %arg1[%c0_115, %c2_116, %c3_117, %c1_118] : memref<1x4x4x512xf32, #tpu.memory_space<vmem>>, vector<1x1x1x464xf32>
    %116 = vector.shape_cast %115 : vector<1x1x1x464xf32> to vector<464xf32>
    %c23 = arith.constant 23 : index
    %c0_119 = arith.constant 0 : index
    %117 = vector.load %arg7[%c23, %c0_119] : memref<64x464xf32, #tpu.memory_space<vmem>>, vector<1x464xf32>
    %118 = vector.shape_cast %117 : vector<1x464xf32> to vector<464xf32>
    %119 = vector.shape_cast %116 : vector<464xf32> to vector<1x464xf32>
    tpu.vector_store %arg7[%c23, %c0_119], %119 {strides = array<i32>} : memref<64x464xf32, #tpu.memory_space<vmem>>, vector<1x464xf32>,
    %c0_120 = arith.constant 0 : index
    %c3_121 = arith.constant 3 : index
    %c0_122 = arith.constant 0 : index
    %c0_123 = arith.constant 0 : index
    %120 = vector.load %arg1[%c0_120, %c3_121, %c0_122, %c0_123] : memref<1x4x4x512xf32, #tpu.memory_space<vmem>>, vector<1x1x1x464xf32>
    %121 = vector.shape_cast %120 : vector<1x1x1x464xf32> to vector<464xf32>
    %c24 = arith.constant 24 : index
    %c0_124 = arith.constant 0 : index
    %122 = vector.load %arg7[%c24, %c0_124] : memref<64x464xf32, #tpu.memory_space<vmem>>, vector<1x464xf32>
    %123 = vector.shape_cast %122 : vector<1x464xf32> to vector<464xf32>
    %124 = vector.shape_cast %121 : vector<464xf32> to vector<1x464xf32>
    tpu.vector_store %arg7[%c24, %c0_124], %124 {strides = array<i32>} : memref<64x464xf32, #tpu.memory_space<vmem>>, vector<1x464xf32>,
    %c0_125 = arith.constant 0 : index
    %c3_126 = arith.constant 3 : index
    %c1_127 = arith.constant 1 : index
    %c0_128 = arith.constant 0 : index
    %125 = vector.load %arg1[%c0_125, %c3_126, %c1_127, %c0_128] : memref<1x4x4x512xf32, #tpu.memory_space<vmem>>, vector<1x1x1x464xf32>
    %126 = vector.shape_cast %125 : vector<1x1x1x464xf32> to vector<464xf32>
    %c25 = arith.constant 25 : index
    %c0_129 = arith.constant 0 : index
    %127 = vector.load %arg7[%c25, %c0_129] : memref<64x464xf32, #tpu.memory_space<vmem>>, vector<1x464xf32>
    %128 = vector.shape_cast %127 : vector<1x464xf32> to vector<464xf32>
    %129 = vector.shape_cast %126 : vector<464xf32> to vector<1x464xf32>
    tpu.vector_store %arg7[%c25, %c0_129], %129 {strides = array<i32>} : memref<64x464xf32, #tpu.memory_space<vmem>>, vector<1x464xf32>,
    %c0_130 = arith.constant 0 : index
    %c3_131 = arith.constant 3 : index
    %c2_132 = arith.constant 2 : index
    %c0_133 = arith.constant 0 : index
    %130 = vector.load %arg1[%c0_130, %c3_131, %c2_132, %c0_133] : memref<1x4x4x512xf32, #tpu.memory_space<vmem>>, vector<1x1x1x464xf32>
    %131 = vector.shape_cast %130 : vector<1x1x1x464xf32> to vector<464xf32>
    %c26 = arith.constant 26 : index
    %c0_134 = arith.constant 0 : index
    %132 = vector.load %arg7[%c26, %c0_134] : memref<64x464xf32, #tpu.memory_space<vmem>>, vector<1x464xf32>
    %133 = vector.shape_cast %132 : vector<1x464xf32> to vector<464xf32>
    %134 = vector.shape_cast %131 : vector<464xf32> to vector<1x464xf32>
    tpu.vector_store %arg7[%c26, %c0_134], %134 {strides = array<i32>} : memref<64x464xf32, #tpu.memory_space<vmem>>, vector<1x464xf32>,
    %c0_135 = arith.constant 0 : index
    %c3_136 = arith.constant 3 : index
    %c3_137 = arith.constant 3 : index
    %c0_138 = arith.constant 0 : index
    %135 = vector.load %arg1[%c0_135, %c3_136, %c3_137, %c0_138] : memref<1x4x4x512xf32, #tpu.memory_space<vmem>>, vector<1x1x1x464xf32>
    %136 = vector.shape_cast %135 : vector<1x1x1x464xf32> to vector<464xf32>
    %c27 = arith.constant 27 : index
    %c0_139 = arith.constant 0 : index
    %137 = vector.load %arg7[%c27, %c0_139] : memref<64x464xf32, #tpu.memory_space<vmem>>, vector<1x464xf32>
    %138 = vector.shape_cast %137 : vector<1x464xf32> to vector<464xf32>
    %139 = vector.shape_cast %136 : vector<464xf32> to vector<1x464xf32>
    tpu.vector_store %arg7[%c27, %c0_139], %139 {strides = array<i32>} : memref<64x464xf32, #tpu.memory_space<vmem>>, vector<1x464xf32>,
    %c0_140 = arith.constant 0 : index
    %c3_141 = arith.constant 3 : index
    %c0_142 = arith.constant 0 : index
    %c1_143 = arith.constant 1 : index
    %140 = vector.load %arg1[%c0_140, %c3_141, %c0_142, %c1_143] : memref<1x4x4x512xf32, #tpu.memory_space<vmem>>, vector<1x1x1x464xf32>
    %141 = vector.shape_cast %140 : vector<1x1x1x464xf32> to vector<464xf32>
    %c28 = arith.constant 28 : index
    %c0_144 = arith.constant 0 : index
    %142 = vector.load %arg7[%c28, %c0_144] : memref<64x464xf32, #tpu.memory_space<vmem>>, vector<1x464xf32>
    %143 = vector.shape_cast %142 : vector<1x464xf32> to vector<464xf32>
    %144 = vector.shape_cast %141 : vector<464xf32> to vector<1x464xf32>
    tpu.vector_store %arg7[%c28, %c0_144], %144 {strides = array<i32>} : memref<64x464xf32, #tpu.memory_space<vmem>>, vector<1x464xf32>,
    %c0_145 = arith.constant 0 : index
    %c3_146 = arith.constant 3 : index
    %c1_147 = arith.constant 1 : index
    %c1_148 = arith.constant 1 : index
    %145 = vector.load %arg1[%c0_145, %c3_146, %c1_147, %c1_148] : memref<1x4x4x512xf32, #tpu.memory_space<vmem>>, vector<1x1x1x464xf32>
    %146 = vector.shape_cast %145 : vector<1x1x1x464xf32> to vector<464xf32>
    %c29 = arith.constant 29 : index
    %c0_149 = arith.constant 0 : index
    %147 = vector.load %arg7[%c29, %c0_149] : memref<64x464xf32, #tpu.memory_space<vmem>>, vector<1x464xf32>
    %148 = vector.shape_cast %147 : vector<1x464xf32> to vector<464xf32>
    %149 = vector.shape_cast %146 : vector<464xf32> to vector<1x464xf32>
    tpu.vector_store %arg7[%c29, %c0_149], %149 {strides = array<i32>} : memref<64x464xf32, #tpu.memory_space<vmem>>, vector<1x464xf32>,
    %c0_150 = arith.constant 0 : index
    %c3_151 = arith.constant 3 : index
    %c2_152 = arith.constant 2 : index
    %c1_153 = arith.constant 1 : index
    %150 = vector.load %arg1[%c0_150, %c3_151, %c2_152, %c1_153] : memref<1x4x4x512xf32, #tpu.memory_space<vmem>>, vector<1x1x1x464xf32>
    %151 = vector.shape_cast %150 : vector<1x1x1x464xf32> to vector<464xf32>
    %c30 = arith.constant 30 : index
    %c0_154 = arith.constant 0 : index
    %152 = vector.load %arg7[%c30, %c0_154] : memref<64x464xf32, #tpu.memory_space<vmem>>, vector<1x464xf32>
    %153 = vector.shape_cast %152 : vector<1x464xf32> to vector<464xf32>
    %154 = vector.shape_cast %151 : vector<464xf32> to vector<1x464xf32>
    tpu.vector_store %arg7[%c30, %c0_154], %154 {strides = array<i32>} : memref<64x464xf32, #tpu.memory_space<vmem>>, vector<1x464xf32>,
    %c0_155 = arith.constant 0 : index
    %c3_156 = arith.constant 3 : index
    %c3_157 = arith.constant 3 : index
    %c1_158 = arith.constant 1 : index
    %155 = vector.load %arg1[%c0_155, %c3_156, %c3_157, %c1_158] : memref<1x4x4x512xf32, #tpu.memory_space<vmem>>, vector<1x1x1x464xf32>
    %156 = vector.shape_cast %155 : vector<1x1x1x464xf32> to vector<464xf32>
    %c31 = arith.constant 31 : index
    %c0_159 = arith.constant 0 : index
    %157 = vector.load %arg7[%c31, %c0_159] : memref<64x464xf32, #tpu.memory_space<vmem>>, vector<1x464xf32>
    %158 = vector.shape_cast %157 : vector<1x464xf32> to vector<464xf32>
    %159 = vector.shape_cast %156 : vector<464xf32> to vector<1x464xf32>
    tpu.vector_store %arg7[%c31, %c0_159], %159 {strides = array<i32>} : memref<64x464xf32, #tpu.memory_space<vmem>>, vector<1x464xf32>,
    %c0_160 = arith.constant 0 : index
    %c0_161 = arith.constant 0 : index
    %c0_162 = arith.constant 0 : index
    %c22_163 = arith.constant 22 : index
    %160 = vector.load %arg1[%c0_160, %c0_161, %c0_162, %c22_163] : memref<1x4x4x512xf32, #tpu.memory_space<vmem>>, vector<1x1x1x464xf32>
    %161 = vector.shape_cast %160 : vector<1x1x1x464xf32> to vector<464xf32>
    %c32 = arith.constant 32 : index
    %c0_164 = arith.constant 0 : index
    %162 = vector.load %arg7[%c32, %c0_164] : memref<64x464xf32, #tpu.memory_space<vmem>>, vector<1x464xf32>
    %163 = vector.shape_cast %162 : vector<1x464xf32> to vector<464xf32>
    %164 = vector.shape_cast %161 : vector<464xf32> to vector<1x464xf32>
    tpu.vector_store %arg7[%c32, %c0_164], %164 {strides = array<i32>} : memref<64x464xf32, #tpu.memory_space<vmem>>, vector<1x464xf32>,
    %c0_165 = arith.constant 0 : index
    %c0_166 = arith.constant 0 : index
    %c1_167 = arith.constant 1 : index
    %c22_168 = arith.constant 22 : index
    %165 = vector.load %arg1[%c0_165, %c0_166, %c1_167, %c22_168] : memref<1x4x4x512xf32, #tpu.memory_space<vmem>>, vector<1x1x1x464xf32>
    %166 = vector.shape_cast %165 : vector<1x1x1x464xf32> to vector<464xf32>
    %c33 = arith.constant 33 : index
    %c0_169 = arith.constant 0 : index
    %167 = vector.load %arg7[%c33, %c0_169] : memref<64x464xf32, #tpu.memory_space<vmem>>, vector<1x464xf32>
    %168 = vector.shape_cast %167 : vector<1x464xf32> to vector<464xf32>
    %169 = vector.shape_cast %166 : vector<464xf32> to vector<1x464xf32>
    tpu.vector_store %arg7[%c33, %c0_169], %169 {strides = array<i32>} : memref<64x464xf32, #tpu.memory_space<vmem>>, vector<1x464xf32>,
    %c0_170 = arith.constant 0 : index
    %c0_171 = arith.constant 0 : index
    %c2_172 = arith.constant 2 : index
    %c22_173 = arith.constant 22 : index
    %170 = vector.load %arg1[%c0_170, %c0_171, %c2_172, %c22_173] : memref<1x4x4x512xf32, #tpu.memory_space<vmem>>, vector<1x1x1x464xf32>
    %171 = vector.shape_cast %170 : vector<1x1x1x464xf32> to vector<464xf32>
    %c34 = arith.constant 34 : index
    %c0_174 = arith.constant 0 : index
    %172 = vector.load %arg7[%c34, %c0_174] : memref<64x464xf32, #tpu.memory_space<vmem>>, vector<1x464xf32>
    %173 = vector.shape_cast %172 : vector<1x464xf32> to vector<464xf32>
    %174 = vector.shape_cast %171 : vector<464xf32> to vector<1x464xf32>
    tpu.vector_store %arg7[%c34, %c0_174], %174 {strides = array<i32>} : memref<64x464xf32, #tpu.memory_space<vmem>>, vector<1x464xf32>,
    %c0_175 = arith.constant 0 : index
    %c0_176 = arith.constant 0 : index
    %c3_177 = arith.constant 3 : index
    %c22_178 = arith.constant 22 : index
    %175 = vector.load %arg1[%c0_175, %c0_176, %c3_177, %c22_178] : memref<1x4x4x512xf32, #tpu.memory_space<vmem>>, vector<1x1x1x464xf32>
    %176 = vector.shape_cast %175 : vector<1x1x1x464xf32> to vector<464xf32>
    %c35 = arith.constant 35 : index
    %c0_179 = arith.constant 0 : index
    %177 = vector.load %arg7[%c35, %c0_179] : memref<64x464xf32, #tpu.memory_space<vmem>>, vector<1x464xf32>
    %178 = vector.shape_cast %177 : vector<1x464xf32> to vector<464xf32>
    %179 = vector.shape_cast %176 : vector<464xf32> to vector<1x464xf32>
    tpu.vector_store %arg7[%c35, %c0_179], %179 {strides = array<i32>} : memref<64x464xf32, #tpu.memory_space<vmem>>, vector<1x464xf32>,
    %c0_180 = arith.constant 0 : index
    %c0_181 = arith.constant 0 : index
    %c0_182 = arith.constant 0 : index
    %c23_183 = arith.constant 23 : index
    %180 = vector.load %arg1[%c0_180, %c0_181, %c0_182, %c23_183] : memref<1x4x4x512xf32, #tpu.memory_space<vmem>>, vector<1x1x1x464xf32>
    %181 = vector.shape_cast %180 : vector<1x1x1x464xf32> to vector<464xf32>
    %c36 = arith.constant 36 : index
    %c0_184 = arith.constant 0 : index
    %182 = vector.load %arg7[%c36, %c0_184] : memref<64x464xf32, #tpu.memory_space<vmem>>, vector<1x464xf32>
    %183 = vector.shape_cast %182 : vector<1x464xf32> to vector<464xf32>
    %184 = vector.shape_cast %181 : vector<464xf32> to vector<1x464xf32>
    tpu.vector_store %arg7[%c36, %c0_184], %184 {strides = array<i32>} : memref<64x464xf32, #tpu.memory_space<vmem>>, vector<1x464xf32>,
    %c0_185 = arith.constant 0 : index
    %c0_186 = arith.constant 0 : index
    %c1_187 = arith.constant 1 : index
    %c23_188 = arith.constant 23 : index
    %185 = vector.load %arg1[%c0_185, %c0_186, %c1_187, %c23_188] : memref<1x4x4x512xf32, #tpu.memory_space<vmem>>, vector<1x1x1x464xf32>
    %186 = vector.shape_cast %185 : vector<1x1x1x464xf32> to vector<464xf32>
    %c37 = arith.constant 37 : index
    %c0_189 = arith.constant 0 : index
    %187 = vector.load %arg7[%c37, %c0_189] : memref<64x464xf32, #tpu.memory_space<vmem>>, vector<1x464xf32>
    %188 = vector.shape_cast %187 : vector<1x464xf32> to vector<464xf32>
    %189 = vector.shape_cast %186 : vector<464xf32> to vector<1x464xf32>
    tpu.vector_store %arg7[%c37, %c0_189], %189 {strides = array<i32>} : memref<64x464xf32, #tpu.memory_space<vmem>>, vector<1x464xf32>,
    %c0_190 = arith.constant 0 : index
    %c0_191 = arith.constant 0 : index
    %c2_192 = arith.constant 2 : index
    %c23_193 = arith.constant 23 : index
    %190 = vector.load %arg1[%c0_190, %c0_191, %c2_192, %c23_193] : memref<1x4x4x512xf32, #tpu.memory_space<vmem>>, vector<1x1x1x464xf32>
    %191 = vector.shape_cast %190 : vector<1x1x1x464xf32> to vector<464xf32>
    %c38 = arith.constant 38 : index
    %c0_194 = arith.constant 0 : index
    %192 = vector.load %arg7[%c38, %c0_194] : memref<64x464xf32, #tpu.memory_space<vmem>>, vector<1x464xf32>
    %193 = vector.shape_cast %192 : vector<1x464xf32> to vector<464xf32>
    %194 = vector.shape_cast %191 : vector<464xf32> to vector<1x464xf32>
    tpu.vector_store %arg7[%c38, %c0_194], %194 {strides = array<i32>} : memref<64x464xf32, #tpu.memory_space<vmem>>, vector<1x464xf32>,
    %c0_195 = arith.constant 0 : index
    %c0_196 = arith.constant 0 : index
    %c3_197 = arith.constant 3 : index
    %c23_198 = arith.constant 23 : index
    %195 = vector.load %arg1[%c0_195, %c0_196, %c3_197, %c23_198] : memref<1x4x4x512xf32, #tpu.memory_space<vmem>>, vector<1x1x1x464xf32>
    %196 = vector.shape_cast %195 : vector<1x1x1x464xf32> to vector<464xf32>
    %c39 = arith.constant 39 : index
    %c0_199 = arith.constant 0 : index
    %197 = vector.load %arg7[%c39, %c0_199] : memref<64x464xf32, #tpu.memory_space<vmem>>, vector<1x464xf32>
    %198 = vector.shape_cast %197 : vector<1x464xf32> to vector<464xf32>
    %199 = vector.shape_cast %196 : vector<464xf32> to vector<1x464xf32>
    tpu.vector_store %arg7[%c39, %c0_199], %199 {strides = array<i32>} : memref<64x464xf32, #tpu.memory_space<vmem>>, vector<1x464xf32>,
    %c0_200 = arith.constant 0 : index
    %c1_201 = arith.constant 1 : index
    %c0_202 = arith.constant 0 : index
    %c22_203 = arith.constant 22 : index
    %200 = vector.load %arg1[%c0_200, %c1_201, %c0_202, %c22_203] : memref<1x4x4x512xf32, #tpu.memory_space<vmem>>, vector<1x1x1x464xf32>
    %201 = vector.shape_cast %200 : vector<1x1x1x464xf32> to vector<464xf32>
    %c40 = arith.constant 40 : index
    %c0_204 = arith.constant 0 : index
    %202 = vector.load %arg7[%c40, %c0_204] : memref<64x464xf32, #tpu.memory_space<vmem>>, vector<1x464xf32>
    %203 = vector.shape_cast %202 : vector<1x464xf32> to vector<464xf32>
    %204 = vector.shape_cast %201 : vector<464xf32> to vector<1x464xf32>
    tpu.vector_store %arg7[%c40, %c0_204], %204 {strides = array<i32>} : memref<64x464xf32, #tpu.memory_space<vmem>>, vector<1x464xf32>,
    %c0_205 = arith.constant 0 : index
    %c1_206 = arith.constant 1 : index
    %c1_207 = arith.constant 1 : index
    %c22_208 = arith.constant 22 : index
    %205 = vector.load %arg1[%c0_205, %c1_206, %c1_207, %c22_208] : memref<1x4x4x512xf32, #tpu.memory_space<vmem>>, vector<1x1x1x464xf32>
    %206 = vector.shape_cast %205 : vector<1x1x1x464xf32> to vector<464xf32>
    %c41 = arith.constant 41 : index
    %c0_209 = arith.constant 0 : index
    %207 = vector.load %arg7[%c41, %c0_209] : memref<64x464xf32, #tpu.memory_space<vmem>>, vector<1x464xf32>
    %208 = vector.shape_cast %207 : vector<1x464xf32> to vector<464xf32>
    %209 = vector.shape_cast %206 : vector<464xf32> to vector<1x464xf32>
    tpu.vector_store %arg7[%c41, %c0_209], %209 {strides = array<i32>} : memref<64x464xf32, #tpu.memory_space<vmem>>, vector<1x464xf32>,
    %c0_210 = arith.constant 0 : index
    %c1_211 = arith.constant 1 : index
    %c2_212 = arith.constant 2 : index
    %c22_213 = arith.constant 22 : index
    %210 = vector.load %arg1[%c0_210, %c1_211, %c2_212, %c22_213] : memref<1x4x4x512xf32, #tpu.memory_space<vmem>>, vector<1x1x1x464xf32>
    %211 = vector.shape_cast %210 : vector<1x1x1x464xf32> to vector<464xf32>
    %c42 = arith.constant 42 : index
    %c0_214 = arith.constant 0 : index
    %212 = vector.load %arg7[%c42, %c0_214] : memref<64x464xf32, #tpu.memory_space<vmem>>, vector<1x464xf32>
    %213 = vector.shape_cast %212 : vector<1x464xf32> to vector<464xf32>
    %214 = vector.shape_cast %211 : vector<464xf32> to vector<1x464xf32>
    tpu.vector_store %arg7[%c42, %c0_214], %214 {strides = array<i32>} : memref<64x464xf32, #tpu.memory_space<vmem>>, vector<1x464xf32>,
    %c0_215 = arith.constant 0 : index
    %c1_216 = arith.constant 1 : index
    %c3_217 = arith.constant 3 : index
    %c22_218 = arith.constant 22 : index
    %215 = vector.load %arg1[%c0_215, %c1_216, %c3_217, %c22_218] : memref<1x4x4x512xf32, #tpu.memory_space<vmem>>, vector<1x1x1x464xf32>
    %216 = vector.shape_cast %215 : vector<1x1x1x464xf32> to vector<464xf32>
    %c43 = arith.constant 43 : index
    %c0_219 = arith.constant 0 : index
    %217 = vector.load %arg7[%c43, %c0_219] : memref<64x464xf32, #tpu.memory_space<vmem>>, vector<1x464xf32>
    %218 = vector.shape_cast %217 : vector<1x464xf32> to vector<464xf32>
    %219 = vector.shape_cast %216 : vector<464xf32> to vector<1x464xf32>
    tpu.vector_store %arg7[%c43, %c0_219], %219 {strides = array<i32>} : memref<64x464xf32, #tpu.memory_space<vmem>>, vector<1x464xf32>,
    %c0_220 = arith.constant 0 : index
    %c1_221 = arith.constant 1 : index
    %c0_222 = arith.constant 0 : index
    %c23_223 = arith.constant 23 : index
    %220 = vector.load %arg1[%c0_220, %c1_221, %c0_222, %c23_223] : memref<1x4x4x512xf32, #tpu.memory_space<vmem>>, vector<1x1x1x464xf32>
    %221 = vector.shape_cast %220 : vector<1x1x1x464xf32> to vector<464xf32>
    %c44 = arith.constant 44 : index
    %c0_224 = arith.constant 0 : index
    %222 = vector.load %arg7[%c44, %c0_224] : memref<64x464xf32, #tpu.memory_space<vmem>>, vector<1x464xf32>
    %223 = vector.shape_cast %222 : vector<1x464xf32> to vector<464xf32>
    %224 = vector.shape_cast %221 : vector<464xf32> to vector<1x464xf32>
    tpu.vector_store %arg7[%c44, %c0_224], %224 {strides = array<i32>} : memref<64x464xf32, #tpu.memory_space<vmem>>, vector<1x464xf32>,
    %c0_225 = arith.constant 0 : index
    %c1_226 = arith.constant 1 : index
    %c1_227 = arith.constant 1 : index
    %c23_228 = arith.constant 23 : index
    %225 = vector.load %arg1[%c0_225, %c1_226, %c1_227, %c23_228] : memref<1x4x4x512xf32, #tpu.memory_space<vmem>>, vector<1x1x1x464xf32>
    %226 = vector.shape_cast %225 : vector<1x1x1x464xf32> to vector<464xf32>
    %c45 = arith.constant 45 : index
    %c0_229 = arith.constant 0 : index
    %227 = vector.load %arg7[%c45, %c0_229] : memref<64x464xf32, #tpu.memory_space<vmem>>, vector<1x464xf32>
    %228 = vector.shape_cast %227 : vector<1x464xf32> to vector<464xf32>
    %229 = vector.shape_cast %226 : vector<464xf32> to vector<1x464xf32>
    tpu.vector_store %arg7[%c45, %c0_229], %229 {strides = array<i32>} : memref<64x464xf32, #tpu.memory_space<vmem>>, vector<1x464xf32>,
    %c0_230 = arith.constant 0 : index
    %c1_231 = arith.constant 1 : index
    %c2_232 = arith.constant 2 : index
    %c23_233 = arith.constant 23 : index
    %230 = vector.load %arg1[%c0_230, %c1_231, %c2_232, %c23_233] : memref<1x4x4x512xf32, #tpu.memory_space<vmem>>, vector<1x1x1x464xf32>
    %231 = vector.shape_cast %230 : vector<1x1x1x464xf32> to vector<464xf32>
    %c46 = arith.constant 46 : index
    %c0_234 = arith.constant 0 : index
    %232 = vector.load %arg7[%c46, %c0_234] : memref<64x464xf32, #tpu.memory_space<vmem>>, vector<1x464xf32>
    %233 = vector.shape_cast %232 : vector<1x464xf32> to vector<464xf32>
    %234 = vector.shape_cast %231 : vector<464xf32> to vector<1x464xf32>
    tpu.vector_store %arg7[%c46, %c0_234], %234 {strides = array<i32>} : memref<64x464xf32, #tpu.memory_space<vmem>>, vector<1x464xf32>,
    %c0_235 = arith.constant 0 : index
    %c1_236 = arith.constant 1 : index
    %c3_237 = arith.constant 3 : index
    %c23_238 = arith.constant 23 : index
    %235 = vector.load %arg1[%c0_235, %c1_236, %c3_237, %c23_238] : memref<1x4x4x512xf32, #tpu.memory_space<vmem>>, vector<1x1x1x464xf32>
    %236 = vector.shape_cast %235 : vector<1x1x1x464xf32> to vector<464xf32>
    %c47 = arith.constant 47 : index
    %c0_239 = arith.constant 0 : index
    %237 = vector.load %arg7[%c47, %c0_239] : memref<64x464xf32, #tpu.memory_space<vmem>>, vector<1x464xf32>
    %238 = vector.shape_cast %237 : vector<1x464xf32> to vector<464xf32>
    %239 = vector.shape_cast %236 : vector<464xf32> to vector<1x464xf32>
    tpu.vector_store %arg7[%c47, %c0_239], %239 {strides = array<i32>} : memref<64x464xf32, #tpu.memory_space<vmem>>, vector<1x464xf32>,
    %c0_240 = arith.constant 0 : index
    %c2_241 = arith.constant 2 : index
    %c0_242 = arith.constant 0 : index
    %c22_243 = arith.constant 22 : index
    %240 = vector.load %arg1[%c0_240, %c2_241, %c0_242, %c22_243] : memref<1x4x4x512xf32, #tpu.memory_space<vmem>>, vector<1x1x1x464xf32>
    %241 = vector.shape_cast %240 : vector<1x1x1x464xf32> to vector<464xf32>
    %c48 = arith.constant 48 : index
    %c0_244 = arith.constant 0 : index
    %242 = vector.load %arg7[%c48, %c0_244] : memref<64x464xf32, #tpu.memory_space<vmem>>, vector<1x464xf32>
    %243 = vector.shape_cast %242 : vector<1x464xf32> to vector<464xf32>
    %244 = vector.shape_cast %241 : vector<464xf32> to vector<1x464xf32>
    tpu.vector_store %arg7[%c48, %c0_244], %244 {strides = array<i32>} : memref<64x464xf32, #tpu.memory_space<vmem>>, vector<1x464xf32>,
    %c0_245 = arith.constant 0 : index
    %c2_246 = arith.constant 2 : index
    %c1_247 = arith.constant 1 : index
    %c22_248 = arith.constant 22 : index
    %245 = vector.load %arg1[%c0_245, %c2_246, %c1_247, %c22_248] : memref<1x4x4x512xf32, #tpu.memory_space<vmem>>, vector<1x1x1x464xf32>
    %246 = vector.shape_cast %245 : vector<1x1x1x464xf32> to vector<464xf32>
    %c49 = arith.constant 49 : index
    %c0_249 = arith.constant 0 : index
    %247 = vector.load %arg7[%c49, %c0_249] : memref<64x464xf32, #tpu.memory_space<vmem>>, vector<1x464xf32>
    %248 = vector.shape_cast %247 : vector<1x464xf32> to vector<464xf32>
    %249 = vector.shape_cast %246 : vector<464xf32> to vector<1x464xf32>
    tpu.vector_store %arg7[%c49, %c0_249], %249 {strides = array<i32>} : memref<64x464xf32, #tpu.memory_space<vmem>>, vector<1x464xf32>,
    %c0_250 = arith.constant 0 : index
    %c2_251 = arith.constant 2 : index
    %c2_252 = arith.constant 2 : index
    %c22_253 = arith.constant 22 : index
    %250 = vector.load %arg1[%c0_250, %c2_251, %c2_252, %c22_253] : memref<1x4x4x512xf32, #tpu.memory_space<vmem>>, vector<1x1x1x464xf32>
    %251 = vector.shape_cast %250 : vector<1x1x1x464xf32> to vector<464xf32>
    %c50 = arith.constant 50 : index
    %c0_254 = arith.constant 0 : index
    %252 = vector.load %arg7[%c50, %c0_254] : memref<64x464xf32, #tpu.memory_space<vmem>>, vector<1x464xf32>
    %253 = vector.shape_cast %252 : vector<1x464xf32> to vector<464xf32>
    %254 = vector.shape_cast %251 : vector<464xf32> to vector<1x464xf32>
    tpu.vector_store %arg7[%c50, %c0_254], %254 {strides = array<i32>} : memref<64x464xf32, #tpu.memory_space<vmem>>, vector<1x464xf32>,
    %c0_255 = arith.constant 0 : index
    %c2_256 = arith.constant 2 : index
    %c3_257 = arith.constant 3 : index
    %c22_258 = arith.constant 22 : index
    %255 = vector.load %arg1[%c0_255, %c2_256, %c3_257, %c22_258] : memref<1x4x4x512xf32, #tpu.memory_space<vmem>>, vector<1x1x1x464xf32>
    %256 = vector.shape_cast %255 : vector<1x1x1x464xf32> to vector<464xf32>
    %c51 = arith.constant 51 : index
    %c0_259 = arith.constant 0 : index
    %257 = vector.load %arg7[%c51, %c0_259] : memref<64x464xf32, #tpu.memory_space<vmem>>, vector<1x464xf32>
    %258 = vector.shape_cast %257 : vector<1x464xf32> to vector<464xf32>
    %259 = vector.shape_cast %256 : vector<464xf32> to vector<1x464xf32>
    tpu.vector_store %arg7[%c51, %c0_259], %259 {strides = array<i32>} : memref<64x464xf32, #tpu.memory_space<vmem>>, vector<1x464xf32>,
    %c0_260 = arith.constant 0 : index
    %c2_261 = arith.constant 2 : index
    %c0_262 = arith.constant 0 : index
    %c23_263 = arith.constant 23 : index
    %260 = vector.load %arg1[%c0_260, %c2_261, %c0_262, %c23_263] : memref<1x4x4x512xf32, #tpu.memory_space<vmem>>, vector<1x1x1x464xf32>
    %261 = vector.shape_cast %260 : vector<1x1x1x464xf32> to vector<464xf32>
    %c52 = arith.constant 52 : index
    %c0_264 = arith.constant 0 : index
    %262 = vector.load %arg7[%c52, %c0_264] : memref<64x464xf32, #tpu.memory_space<vmem>>, vector<1x464xf32>
    %263 = vector.shape_cast %262 : vector<1x464xf32> to vector<464xf32>
    %264 = vector.shape_cast %261 : vector<464xf32> to vector<1x464xf32>
    tpu.vector_store %arg7[%c52, %c0_264], %264 {strides = array<i32>} : memref<64x464xf32, #tpu.memory_space<vmem>>, vector<1x464xf32>,
    %c0_265 = arith.constant 0 : index
    %c2_266 = arith.constant 2 : index
    %c1_267 = arith.constant 1 : index
    %c23_268 = arith.constant 23 : index
    %265 = vector.load %arg1[%c0_265, %c2_266, %c1_267, %c23_268] : memref<1x4x4x512xf32, #tpu.memory_space<vmem>>, vector<1x1x1x464xf32>
    %266 = vector.shape_cast %265 : vector<1x1x1x464xf32> to vector<464xf32>
    %c53 = arith.constant 53 : index
    %c0_269 = arith.constant 0 : index
    %267 = vector.load %arg7[%c53, %c0_269] : memref<64x464xf32, #tpu.memory_space<vmem>>, vector<1x464xf32>
    %268 = vector.shape_cast %267 : vector<1x464xf32> to vector<464xf32>
    %269 = vector.shape_cast %266 : vector<464xf32> to vector<1x464xf32>
    tpu.vector_store %arg7[%c53, %c0_269], %269 {strides = array<i32>} : memref<64x464xf32, #tpu.memory_space<vmem>>, vector<1x464xf32>,
    %c0_270 = arith.constant 0 : index
    %c2_271 = arith.constant 2 : index
    %c2_272 = arith.constant 2 : index
    %c23_273 = arith.constant 23 : index
    %270 = vector.load %arg1[%c0_270, %c2_271, %c2_272, %c23_273] : memref<1x4x4x512xf32, #tpu.memory_space<vmem>>, vector<1x1x1x464xf32>
    %271 = vector.shape_cast %270 : vector<1x1x1x464xf32> to vector<464xf32>
    %c54 = arith.constant 54 : index
    %c0_274 = arith.constant 0 : index
    %272 = vector.load %arg7[%c54, %c0_274] : memref<64x464xf32, #tpu.memory_space<vmem>>, vector<1x464xf32>
    %273 = vector.shape_cast %272 : vector<1x464xf32> to vector<464xf32>
    %274 = vector.shape_cast %271 : vector<464xf32> to vector<1x464xf32>
    tpu.vector_store %arg7[%c54, %c0_274], %274 {strides = array<i32>} : memref<64x464xf32, #tpu.memory_space<vmem>>, vector<1x464xf32>,
    %c0_275 = arith.constant 0 : index
    %c2_276 = arith.constant 2 : index
    %c3_277 = arith.constant 3 : index
    %c23_278 = arith.constant 23 : index
    %275 = vector.load %arg1[%c0_275, %c2_276, %c3_277, %c23_278] : memref<1x4x4x512xf32, #tpu.memory_space<vmem>>, vector<1x1x1x464xf32>
    %276 = vector.shape_cast %275 : vector<1x1x1x464xf32> to vector<464xf32>
    %c55 = arith.constant 55 : index
    %c0_279 = arith.constant 0 : index
    %277 = vector.load %arg7[%c55, %c0_279] : memref<64x464xf32, #tpu.memory_space<vmem>>, vector<1x464xf32>
    %278 = vector.shape_cast %277 : vector<1x464xf32> to vector<464xf32>
    %279 = vector.shape_cast %276 : vector<464xf32> to vector<1x464xf32>
    tpu.vector_store %arg7[%c55, %c0_279], %279 {strides = array<i32>} : memref<64x464xf32, #tpu.memory_space<vmem>>, vector<1x464xf32>,
    %c0_280 = arith.constant 0 : index
    %c3_281 = arith.constant 3 : index
    %c0_282 = arith.constant 0 : index
    %c22_283 = arith.constant 22 : index
    %280 = vector.load %arg1[%c0_280, %c3_281, %c0_282, %c22_283] : memref<1x4x4x512xf32, #tpu.memory_space<vmem>>, vector<1x1x1x464xf32>
    %281 = vector.shape_cast %280 : vector<1x1x1x464xf32> to vector<464xf32>
    %c56 = arith.constant 56 : index
    %c0_284 = arith.constant 0 : index
    %282 = vector.load %arg7[%c56, %c0_284] : memref<64x464xf32, #tpu.memory_space<vmem>>, vector<1x464xf32>
    %283 = vector.shape_cast %282 : vector<1x464xf32> to vector<464xf32>
    %284 = vector.shape_cast %281 : vector<464xf32> to vector<1x464xf32>
    tpu.vector_store %arg7[%c56, %c0_284], %284 {strides = array<i32>} : memref<64x464xf32, #tpu.memory_space<vmem>>, vector<1x464xf32>,
    %c0_285 = arith.constant 0 : index
    %c3_286 = arith.constant 3 : index
    %c1_287 = arith.constant 1 : index
    %c22_288 = arith.constant 22 : index
    %285 = vector.load %arg1[%c0_285, %c3_286, %c1_287, %c22_288] : memref<1x4x4x512xf32, #tpu.memory_space<vmem>>, vector<1x1x1x464xf32>
    %286 = vector.shape_cast %285 : vector<1x1x1x464xf32> to vector<464xf32>
    %c57 = arith.constant 57 : index
    %c0_289 = arith.constant 0 : index
    %287 = vector.load %arg7[%c57, %c0_289] : memref<64x464xf32, #tpu.memory_space<vmem>>, vector<1x464xf32>
    %288 = vector.shape_cast %287 : vector<1x464xf32> to vector<464xf32>
    %289 = vector.shape_cast %286 : vector<464xf32> to vector<1x464xf32>
    tpu.vector_store %arg7[%c57, %c0_289], %289 {strides = array<i32>} : memref<64x464xf32, #tpu.memory_space<vmem>>, vector<1x464xf32>,
    %c0_290 = arith.constant 0 : index
    %c3_291 = arith.constant 3 : index
    %c2_292 = arith.constant 2 : index
    %c22_293 = arith.constant 22 : index
    %290 = vector.load %arg1[%c0_290, %c3_291, %c2_292, %c22_293] : memref<1x4x4x512xf32, #tpu.memory_space<vmem>>, vector<1x1x1x464xf32>
    %291 = vector.shape_cast %290 : vector<1x1x1x464xf32> to vector<464xf32>
    %c58 = arith.constant 58 : index
    %c0_294 = arith.constant 0 : index
    %292 = vector.load %arg7[%c58, %c0_294] : memref<64x464xf32, #tpu.memory_space<vmem>>, vector<1x464xf32>
    %293 = vector.shape_cast %292 : vector<1x464xf32> to vector<464xf32>
    %294 = vector.shape_cast %291 : vector<464xf32> to vector<1x464xf32>
    tpu.vector_store %arg7[%c58, %c0_294], %294 {strides = array<i32>} : memref<64x464xf32, #tpu.memory_space<vmem>>, vector<1x464xf32>,
    %c0_295 = arith.constant 0 : index
    %c3_296 = arith.constant 3 : index
    %c3_297 = arith.constant 3 : index
    %c22_298 = arith.constant 22 : index
    %295 = vector.load %arg1[%c0_295, %c3_296, %c3_297, %c22_298] : memref<1x4x4x512xf32, #tpu.memory_space<vmem>>, vector<1x1x1x464xf32>
    %296 = vector.shape_cast %295 : vector<1x1x1x464xf32> to vector<464xf32>
    %c59 = arith.constant 59 : index
    %c0_299 = arith.constant 0 : index
    %297 = vector.load %arg7[%c59, %c0_299] : memref<64x464xf32, #tpu.memory_space<vmem>>, vector<1x464xf32>
    %298 = vector.shape_cast %297 : vector<1x464xf32> to vector<464xf32>
    %299 = vector.shape_cast %296 : vector<464xf32> to vector<1x464xf32>
    tpu.vector_store %arg7[%c59, %c0_299], %299 {strides = array<i32>} : memref<64x464xf32, #tpu.memory_space<vmem>>, vector<1x464xf32>,
    %c0_300 = arith.constant 0 : index
    %c3_301 = arith.constant 3 : index
    %c0_302 = arith.constant 0 : index
    %c23_303 = arith.constant 23 : index
    %300 = vector.load %arg1[%c0_300, %c3_301, %c0_302, %c23_303] : memref<1x4x4x512xf32, #tpu.memory_space<vmem>>, vector<1x1x1x464xf32>
    %301 = vector.shape_cast %300 : vector<1x1x1x464xf32> to vector<464xf32>
    %c60 = arith.constant 60 : index
    %c0_304 = arith.constant 0 : index
    %302 = vector.load %arg7[%c60, %c0_304] : memref<64x464xf32, #tpu.memory_space<vmem>>, vector<1x464xf32>
    %303 = vector.shape_cast %302 : vector<1x464xf32> to vector<464xf32>
    %304 = vector.shape_cast %301 : vector<464xf32> to vector<1x464xf32>
    tpu.vector_store %arg7[%c60, %c0_304], %304 {strides = array<i32>} : memref<64x464xf32, #tpu.memory_space<vmem>>, vector<1x464xf32>,
    %c0_305 = arith.constant 0 : index
    %c3_306 = arith.constant 3 : index
    %c1_307 = arith.constant 1 : index
    %c23_308 = arith.constant 23 : index
    %305 = vector.load %arg1[%c0_305, %c3_306, %c1_307, %c23_308] : memref<1x4x4x512xf32, #tpu.memory_space<vmem>>, vector<1x1x1x464xf32>
    %306 = vector.shape_cast %305 : vector<1x1x1x464xf32> to vector<464xf32>
    %c61 = arith.constant 61 : index
    %c0_309 = arith.constant 0 : index
    %307 = vector.load %arg7[%c61, %c0_309] : memref<64x464xf32, #tpu.memory_space<vmem>>, vector<1x464xf32>
    %308 = vector.shape_cast %307 : vector<1x464xf32> to vector<464xf32>
    %309 = vector.shape_cast %306 : vector<464xf32> to vector<1x464xf32>
    tpu.vector_store %arg7[%c61, %c0_309], %309 {strides = array<i32>} : memref<64x464xf32, #tpu.memory_space<vmem>>, vector<1x464xf32>,
    %c0_310 = arith.constant 0 : index
    %c3_311 = arith.constant 3 : index
    %c2_312 = arith.constant 2 : index
    %c23_313 = arith.constant 23 : index
    %310 = vector.load %arg1[%c0_310, %c3_311, %c2_312, %c23_313] : memref<1x4x4x512xf32, #tpu.memory_space<vmem>>, vector<1x1x1x464xf32>
    %311 = vector.shape_cast %310 : vector<1x1x1x464xf32> to vector<464xf32>
    %c62 = arith.constant 62 : index
    %c0_314 = arith.constant 0 : index
    %312 = vector.load %arg7[%c62, %c0_314] : memref<64x464xf32, #tpu.memory_space<vmem>>, vector<1x464xf32>
    %313 = vector.shape_cast %312 : vector<1x464xf32> to vector<464xf32>
    %314 = vector.shape_cast %311 : vector<464xf32> to vector<1x464xf32>
    tpu.vector_store %arg7[%c62, %c0_314], %314 {strides = array<i32>} : memref<64x464xf32, #tpu.memory_space<vmem>>, vector<1x464xf32>,
    %c0_315 = arith.constant 0 : index
    %c3_316 = arith.constant 3 : index
    %c3_317 = arith.constant 3 : index
    %c23_318 = arith.constant 23 : index
    %315 = vector.load %arg1[%c0_315, %c3_316, %c3_317, %c23_318] : memref<1x4x4x512xf32, #tpu.memory_space<vmem>>, vector<1x1x1x464xf32>
    %316 = vector.shape_cast %315 : vector<1x1x1x464xf32> to vector<464xf32>
    %c63 = arith.constant 63 : index
    %c0_319 = arith.constant 0 : index
    %317 = vector.load %arg7[%c63, %c0_319] : memref<64x464xf32, #tpu.memory_space<vmem>>, vector<1x464xf32>
    %318 = vector.shape_cast %317 : vector<1x464xf32> to vector<464xf32>
    %319 = vector.shape_cast %316 : vector<464xf32> to vector<1x464xf32>
    tpu.vector_store %arg7[%c63, %c0_319], %319 {strides = array<i32>} : memref<64x464xf32, #tpu.memory_space<vmem>>, vector<1x464xf32>,
    %c0_320 = arith.constant 0 : index
    %c0_321 = arith.constant 0 : index
    %320 = vector.load %arg2[%c0_320, %c0_321] : memref<96x64xf32, #tpu.memory_space<vmem>>, vector<96x64xf32>
    %c0_322 = arith.constant 0 : index
    %c0_323 = arith.constant 0 : index
    %321 = vector.load %arg7[%c0_322, %c0_323] : memref<64x464xf32, #tpu.memory_space<vmem>>, vector<64x464xf32>
    %cst = arith.constant dense<0.000000e+00> : vector<96x464xf32>
    %322 = tpu.matmul %320, %321, %cst {dimension_numbers = #tpu.dot_dimension_numbers<[1], [0], [0], [1], [0, 0, 1, 1], [], []>} : vector<96x64xf32>, vector<64x464xf32>, vector<96x464xf32> -> vector<96x464xf32>
    %323 = vector.extract_strided_slice %322 {offsets = [0, 0], sizes = [6, 464], strides = [1, 1]} : vector<96x464xf32> to vector<6x464xf32>
    %324 = vector.extract_strided_slice %322 {offsets = [6, 0], sizes = [6, 464], strides = [1, 1]} : vector<96x464xf32> to vector<6x464xf32>
    %325 = arith.maximumf %323, %324 : vector<6x464xf32>
    %326 = vector.extract_strided_slice %322 {offsets = [12, 0], sizes = [6, 464], strides = [1, 1]} : vector<96x464xf32> to vector<6x464xf32>
    %327 = arith.maximumf %325, %326 : vector<6x464xf32>
    %328 = vector.extract_strided_slice %322 {offsets = [18, 0], sizes = [6, 464], strides = [1, 1]} : vector<96x464xf32> to vector<6x464xf32>
    %329 = arith.maximumf %327, %328 : vector<6x464xf32>
    %c0_324 = arith.constant 0 : index
    %c0_325 = arith.constant 0 : index
    %330 = vector.load %arg3[%c0_324, %c0_325] : memref<6x1xf32, #tpu.memory_space<vmem>>, vector<6x1xf32>
    %331 = vector.broadcast %330 : vector<6x1xf32> to vector<6x464xf32>
    %332 = arith.addf %329, %331 : vector<6x464xf32>
    %cst_326 = arith.constant 0.000000e+00 : f32
    %333 = vector.broadcast %cst_326 : f32 to vector<6x464xf32>
    %334 = arith.maximumf %332, %333 : vector<6x464xf32>
    %c0_327 = arith.constant 0 : index
    %c0_328 = arith.constant 0 : index
    %c0_329 = arith.constant 0 : index
    %c0_330 = arith.constant 0 : index
    %335 = vector.load %arg8[%c0_327, %c0_328, %c0_329, %c0_330] : memref<2x2x6x464xf32, #tpu.memory_space<vmem>>, vector<1x1x6x464xf32>
    %336 = vector.shape_cast %335 : vector<1x1x6x464xf32> to vector<6x464xf32>
    %337 = vector.shape_cast %334 : vector<6x464xf32> to vector<1x1x6x464xf32>
    tpu.vector_store %arg8[%c0_327, %c0_328, %c0_329, %c0_330], %337 {strides = array<i32>} : memref<2x2x6x464xf32, #tpu.memory_space<vmem>>, vector<1x1x6x464xf32>,
    %338 = vector.extract_strided_slice %322 {offsets = [24, 0], sizes = [6, 464], strides = [1, 1]} : vector<96x464xf32> to vector<6x464xf32>
    %339 = vector.extract_strided_slice %322 {offsets = [30, 0], sizes = [6, 464], strides = [1, 1]} : vector<96x464xf32> to vector<6x464xf32>
    %340 = arith.maximumf %338, %339 : vector<6x464xf32>
    %341 = vector.extract_strided_slice %322 {offsets = [36, 0], sizes = [6, 464], strides = [1, 1]} : vector<96x464xf32> to vector<6x464xf32>
    %342 = arith.maximumf %340, %341 : vector<6x464xf32>
    %343 = vector.extract_strided_slice %322 {offsets = [42, 0], sizes = [6, 464], strides = [1, 1]} : vector<96x464xf32> to vector<6x464xf32>
    %344 = arith.maximumf %342, %343 : vector<6x464xf32>
    %c0_331 = arith.constant 0 : index
    %c0_332 = arith.constant 0 : index
    %345 = vector.load %arg3[%c0_331, %c0_332] : memref<6x1xf32, #tpu.memory_space<vmem>>, vector<6x1xf32>
    %346 = vector.broadcast %345 : vector<6x1xf32> to vector<6x464xf32>
    %347 = arith.addf %344, %346 : vector<6x464xf32>
    %cst_333 = arith.constant 0.000000e+00 : f32
    %348 = vector.broadcast %cst_333 : f32 to vector<6x464xf32>
    %349 = arith.maximumf %347, %348 : vector<6x464xf32>
    %c0_334 = arith.constant 0 : index
    %c1_335 = arith.constant 1 : index
    %c0_336 = arith.constant 0 : index
    %c0_337 = arith.constant 0 : index
    %350 = vector.load %arg8[%c0_334, %c1_335, %c0_336, %c0_337] : memref<2x2x6x464xf32, #tpu.memory_space<vmem>>, vector<1x1x6x464xf32>
    %351 = vector.shape_cast %350 : vector<1x1x6x464xf32> to vector<6x464xf32>
    %352 = vector.shape_cast %349 : vector<6x464xf32> to vector<1x1x6x464xf32>
    tpu.vector_store %arg8[%c0_334, %c1_335, %c0_336, %c0_337], %352 {strides = array<i32>} : memref<2x2x6x464xf32, #tpu.memory_space<vmem>>, vector<1x1x6x464xf32>,
    %353 = vector.extract_strided_slice %322 {offsets = [48, 0], sizes = [6, 464], strides = [1, 1]} : vector<96x464xf32> to vector<6x464xf32>
    %354 = vector.extract_strided_slice %322 {offsets = [54, 0], sizes = [6, 464], strides = [1, 1]} : vector<96x464xf32> to vector<6x464xf32>
    %355 = arith.maximumf %353, %354 : vector<6x464xf32>
    %356 = vector.extract_strided_slice %322 {offsets = [60, 0], sizes = [6, 464], strides = [1, 1]} : vector<96x464xf32> to vector<6x464xf32>
    %357 = arith.maximumf %355, %356 : vector<6x464xf32>
    %358 = vector.extract_strided_slice %322 {offsets = [66, 0], sizes = [6, 464], strides = [1, 1]} : vector<96x464xf32> to vector<6x464xf32>
    %359 = arith.maximumf %357, %358 : vector<6x464xf32>
    %c0_338 = arith.constant 0 : index
    %c0_339 = arith.constant 0 : index
    %360 = vector.load %arg3[%c0_338, %c0_339] : memref<6x1xf32, #tpu.memory_space<vmem>>, vector<6x1xf32>
    %361 = vector.broadcast %360 : vector<6x1xf32> to vector<6x464xf32>
    %362 = arith.addf %359, %361 : vector<6x464xf32>
    %cst_340 = arith.constant 0.000000e+00 : f32
    %363 = vector.broadcast %cst_340 : f32 to vector<6x464xf32>
    %364 = arith.maximumf %362, %363 : vector<6x464xf32>
    %c1_341 = arith.constant 1 : index
    %c0_342 = arith.constant 0 : index
    %c0_343 = arith.constant 0 : index
    %c0_344 = arith.constant 0 : index
    %365 = vector.load %arg8[%c1_341, %c0_342, %c0_343, %c0_344] : memref<2x2x6x464xf32, #tpu.memory_space<vmem>>, vector<1x1x6x464xf32>
    %366 = vector.shape_cast %365 : vector<1x1x6x464xf32> to vector<6x464xf32>
    %367 = vector.shape_cast %364 : vector<6x464xf32> to vector<1x1x6x464xf32>
    tpu.vector_store %arg8[%c1_341, %c0_342, %c0_343, %c0_344], %367 {strides = array<i32>} : memref<2x2x6x464xf32, #tpu.memory_space<vmem>>, vector<1x1x6x464xf32>,
    %368 = vector.extract_strided_slice %322 {offsets = [72, 0], sizes = [6, 464], strides = [1, 1]} : vector<96x464xf32> to vector<6x464xf32>
    %369 = vector.extract_strided_slice %322 {offsets = [78, 0], sizes = [6, 464], strides = [1, 1]} : vector<96x464xf32> to vector<6x464xf32>
    %370 = arith.maximumf %368, %369 : vector<6x464xf32>
    %371 = vector.extract_strided_slice %322 {offsets = [84, 0], sizes = [6, 464], strides = [1, 1]} : vector<96x464xf32> to vector<6x464xf32>
    %372 = arith.maximumf %370, %371 : vector<6x464xf32>
    %373 = vector.extract_strided_slice %322 {offsets = [90, 0], sizes = [6, 464], strides = [1, 1]} : vector<96x464xf32> to vector<6x464xf32>
    %374 = arith.maximumf %372, %373 : vector<6x464xf32>
    %c0_345 = arith.constant 0 : index
    %c0_346 = arith.constant 0 : index
    %375 = vector.load %arg3[%c0_345, %c0_346] : memref<6x1xf32, #tpu.memory_space<vmem>>, vector<6x1xf32>
    %376 = vector.broadcast %375 : vector<6x1xf32> to vector<6x464xf32>
    %377 = arith.addf %374, %376 : vector<6x464xf32>
    %cst_347 = arith.constant 0.000000e+00 : f32
    %378 = vector.broadcast %cst_347 : f32 to vector<6x464xf32>
    %379 = arith.maximumf %377, %378 : vector<6x464xf32>
    %c1_348 = arith.constant 1 : index
    %c1_349 = arith.constant 1 : index
    %c0_350 = arith.constant 0 : index
    %c0_351 = arith.constant 0 : index
    %380 = vector.load %arg8[%c1_348, %c1_349, %c0_350, %c0_351] : memref<2x2x6x464xf32, #tpu.memory_space<vmem>>, vector<1x1x6x464xf32>
    %381 = vector.shape_cast %380 : vector<1x1x6x464xf32> to vector<6x464xf32>
    %382 = vector.shape_cast %379 : vector<6x464xf32> to vector<1x1x6x464xf32>
    tpu.vector_store %arg8[%c1_348, %c1_349, %c0_350, %c0_351], %382 {strides = array<i32>} : memref<2x2x6x464xf32, #tpu.memory_space<vmem>>, vector<1x1x6x464xf32>,
    %c0_352 = arith.constant 0 : index
    %c0_353 = arith.constant 0 : index
    %c0_354 = arith.constant 0 : index
    %c0_355 = arith.constant 0 : index
    %383 = vector.load %arg8[%c0_352, %c0_353, %c0_354, %c0_355] : memref<2x2x6x464xf32, #tpu.memory_space<vmem>>, vector<1x1x6x418xf32>
    %384 = vector.shape_cast %383 : vector<1x1x6x418xf32> to vector<6x418xf32>
    %c0_356 = arith.constant 0 : index
    %c0_357 = arith.constant 0 : index
    %385 = vector.load %arg9[%c0_356, %c0_357] : memref<216x418xf32, #tpu.memory_space<vmem>>, vector<6x418xf32>
    tpu.vector_store %arg9[%c0_356, %c0_357], %384 {strides = array<i32>} : memref<216x418xf32, #tpu.memory_space<vmem>>, vector<6x418xf32>,
    %c0_358 = arith.constant 0 : index
    %c1_359 = arith.constant 1 : index
    %c0_360 = arith.constant 0 : index
    %c0_361 = arith.constant 0 : index
    %386 = vector.load %arg8[%c0_358, %c1_359, %c0_360, %c0_361] : memref<2x2x6x464xf32, #tpu.memory_space<vmem>>, vector<1x1x6x418xf32>
    %387 = vector.shape_cast %386 : vector<1x1x6x418xf32> to vector<6x418xf32>
    %c6_362 = arith.constant 6 : index
    %c0_363 = arith.constant 0 : index
    %388 = vector.load %arg9[%c6_362, %c0_363] : memref<216x418xf32, #tpu.memory_space<vmem>>, vector<6x418xf32>
    tpu.vector_store %arg9[%c6_362, %c0_363], %387 {strides = array<i32>} : memref<216x418xf32, #tpu.memory_space<vmem>>, vector<6x418xf32>,
    %c0_364 = arith.constant 0 : index
    %c0_365 = arith.constant 0 : index
    %c0_366 = arith.constant 0 : index
    %c1_367 = arith.constant 1 : index
    %389 = vector.load %arg8[%c0_364, %c0_365, %c0_366, %c1_367] : memref<2x2x6x464xf32, #tpu.memory_space<vmem>>, vector<1x1x6x418xf32>
    %390 = vector.shape_cast %389 : vector<1x1x6x418xf32> to vector<6x418xf32>
    %c12_368 = arith.constant 12 : index
    %c0_369 = arith.constant 0 : index
    %391 = vector.load %arg9[%c12_368, %c0_369] : memref<216x418xf32, #tpu.memory_space<vmem>>, vector<6x418xf32>
    tpu.vector_store %arg9[%c12_368, %c0_369], %390 {strides = array<i32>} : memref<216x418xf32, #tpu.memory_space<vmem>>, vector<6x418xf32>,
    %c0_370 = arith.constant 0 : index
    %c1_371 = arith.constant 1 : index
    %c0_372 = arith.constant 0 : index
    %c1_373 = arith.constant 1 : index
    %392 = vector.load %arg8[%c0_370, %c1_371, %c0_372, %c1_373] : memref<2x2x6x464xf32, #tpu.memory_space<vmem>>, vector<1x1x6x418xf32>
    %393 = vector.shape_cast %392 : vector<1x1x6x418xf32> to vector<6x418xf32>
    %c18_374 = arith.constant 18 : index
    %c0_375 = arith.constant 0 : index
    %394 = vector.load %arg9[%c18_374, %c0_375] : memref<216x418xf32, #tpu.memory_space<vmem>>, vector<6x418xf32>
    tpu.vector_store %arg9[%c18_374, %c0_375], %393 {strides = array<i32>} : memref<216x418xf32, #tpu.memory_space<vmem>>, vector<6x418xf32>,
    %c0_376 = arith.constant 0 : index
    %c0_377 = arith.constant 0 : index
    %c0_378 = arith.constant 0 : index
    %c2_379 = arith.constant 2 : index
    %395 = vector.load %arg8[%c0_376, %c0_377, %c0_378, %c2_379] : memref<2x2x6x464xf32, #tpu.memory_space<vmem>>, vector<1x1x6x418xf32>
    %396 = vector.shape_cast %395 : vector<1x1x6x418xf32> to vector<6x418xf32>
    %c24_380 = arith.constant 24 : index
    %c0_381 = arith.constant 0 : index
    %397 = vector.load %arg9[%c24_380, %c0_381] : memref<216x418xf32, #tpu.memory_space<vmem>>, vector<6x418xf32>
    tpu.vector_store %arg9[%c24_380, %c0_381], %396 {strides = array<i32>} : memref<216x418xf32, #tpu.memory_space<vmem>>, vector<6x418xf32>,
    %c0_382 = arith.constant 0 : index
    %c1_383 = arith.constant 1 : index
    %c0_384 = arith.constant 0 : index
    %c2_385 = arith.constant 2 : index
    %398 = vector.load %arg8[%c0_382, %c1_383, %c0_384, %c2_385] : memref<2x2x6x464xf32, #tpu.memory_space<vmem>>, vector<1x1x6x418xf32>
    %399 = vector.shape_cast %398 : vector<1x1x6x418xf32> to vector<6x418xf32>
    %c30_386 = arith.constant 30 : index
    %c0_387 = arith.constant 0 : index
    %400 = vector.load %arg9[%c30_386, %c0_387] : memref<216x418xf32, #tpu.memory_space<vmem>>, vector<6x418xf32>
    tpu.vector_store %arg9[%c30_386, %c0_387], %399 {strides = array<i32>} : memref<216x418xf32, #tpu.memory_space<vmem>>, vector<6x418xf32>,
    %c1_388 = arith.constant 1 : index
    %c0_389 = arith.constant 0 : index
    %c0_390 = arith.constant 0 : index
    %c0_391 = arith.constant 0 : index
    %401 = vector.load %arg8[%c1_388, %c0_389, %c0_390, %c0_391] : memref<2x2x6x464xf32, #tpu.memory_space<vmem>>, vector<1x1x6x418xf32>
    %402 = vector.shape_cast %401 : vector<1x1x6x418xf32> to vector<6x418xf32>
    %c36_392 = arith.constant 36 : index
    %c0_393 = arith.constant 0 : index
    %403 = vector.load %arg9[%c36_392, %c0_393] : memref<216x418xf32, #tpu.memory_space<vmem>>, vector<6x418xf32>
    tpu.vector_store %arg9[%c36_392, %c0_393], %402 {strides = array<i32>} : memref<216x418xf32, #tpu.memory_space<vmem>>, vector<6x418xf32>,
    %c1_394 = arith.constant 1 : index
    %c1_395 = arith.constant 1 : index
    %c0_396 = arith.constant 0 : index
    %c0_397 = arith.constant 0 : index
    %404 = vector.load %arg8[%c1_394, %c1_395, %c0_396, %c0_397] : memref<2x2x6x464xf32, #tpu.memory_space<vmem>>, vector<1x1x6x418xf32>
    %405 = vector.shape_cast %404 : vector<1x1x6x418xf32> to vector<6x418xf32>
    %c42_398 = arith.constant 42 : index
    %c0_399 = arith.constant 0 : index
    %406 = vector.load %arg9[%c42_398, %c0_399] : memref<216x418xf32, #tpu.memory_space<vmem>>, vector<6x418xf32>
    tpu.vector_store %arg9[%c42_398, %c0_399], %405 {strides = array<i32>} : memref<216x418xf32, #tpu.memory_space<vmem>>, vector<6x418xf32>,
    %c1_400 = arith.constant 1 : index
    %c0_401 = arith.constant 0 : index
    %c0_402 = arith.constant 0 : index
    %c1_403 = arith.constant 1 : index
    %407 = vector.load %arg8[%c1_400, %c0_401, %c0_402, %c1_403] : memref<2x2x6x464xf32, #tpu.memory_space<vmem>>, vector<1x1x6x418xf32>
    %408 = vector.shape_cast %407 : vector<1x1x6x418xf32> to vector<6x418xf32>
    %c48_404 = arith.constant 48 : index
    %c0_405 = arith.constant 0 : index
    %409 = vector.load %arg9[%c48_404, %c0_405] : memref<216x418xf32, #tpu.memory_space<vmem>>, vector<6x418xf32>
    tpu.vector_store %arg9[%c48_404, %c0_405], %408 {strides = array<i32>} : memref<216x418xf32, #tpu.memory_space<vmem>>, vector<6x418xf32>,
    %c1_406 = arith.constant 1 : index
    %c1_407 = arith.constant 1 : index
    %c0_408 = arith.constant 0 : index
    %c1_409 = arith.constant 1 : index
    %410 = vector.load %arg8[%c1_406, %c1_407, %c0_408, %c1_409] : memref<2x2x6x464xf32, #tpu.memory_space<vmem>>, vector<1x1x6x418xf32>
    %411 = vector.shape_cast %410 : vector<1x1x6x418xf32> to vector<6x418xf32>
    %c54_410 = arith.constant 54 : index
    %c0_411 = arith.constant 0 : index
    %412 = vector.load %arg9[%c54_410, %c0_411] : memref<216x418xf32, #tpu.memory_space<vmem>>, vector<6x418xf32>
    tpu.vector_store %arg9[%c54_410, %c0_411], %411 {strides = array<i32>} : memref<216x418xf32, #tpu.memory_space<vmem>>, vector<6x418xf32>,
    %c1_412 = arith.constant 1 : index
    %c0_413 = arith.constant 0 : index
    %c0_414 = arith.constant 0 : index
    %c2_415 = arith.constant 2 : index
    %413 = vector.load %arg8[%c1_412, %c0_413, %c0_414, %c2_415] : memref<2x2x6x464xf32, #tpu.memory_space<vmem>>, vector<1x1x6x418xf32>
    %414 = vector.shape_cast %413 : vector<1x1x6x418xf32> to vector<6x418xf32>
    %c60_416 = arith.constant 60 : index
    %c0_417 = arith.constant 0 : index
    %415 = vector.load %arg9[%c60_416, %c0_417] : memref<216x418xf32, #tpu.memory_space<vmem>>, vector<6x418xf32>
    tpu.vector_store %arg9[%c60_416, %c0_417], %414 {strides = array<i32>} : memref<216x418xf32, #tpu.memory_space<vmem>>, vector<6x418xf32>,
    %c1_418 = arith.constant 1 : index
    %c1_419 = arith.constant 1 : index
    %c0_420 = arith.constant 0 : index
    %c2_421 = arith.constant 2 : index
    %416 = vector.load %arg8[%c1_418, %c1_419, %c0_420, %c2_421] : memref<2x2x6x464xf32, #tpu.memory_space<vmem>>, vector<1x1x6x418xf32>
    %417 = vector.shape_cast %416 : vector<1x1x6x418xf32> to vector<6x418xf32>
    %c66 = arith.constant 66 : index
    %c0_422 = arith.constant 0 : index
    %418 = vector.load %arg9[%c66, %c0_422] : memref<216x418xf32, #tpu.memory_space<vmem>>, vector<6x418xf32>
    tpu.vector_store %arg9[%c66, %c0_422], %417 {strides = array<i32>} : memref<216x418xf32, #tpu.memory_space<vmem>>, vector<6x418xf32>,
    %c0_423 = arith.constant 0 : index
    %c0_424 = arith.constant 0 : index
    %c0_425 = arith.constant 0 : index
    %c22_426 = arith.constant 22 : index
    %419 = vector.load %arg8[%c0_423, %c0_424, %c0_425, %c22_426] : memref<2x2x6x464xf32, #tpu.memory_space<vmem>>, vector<1x1x6x418xf32>
    %420 = vector.shape_cast %419 : vector<1x1x6x418xf32> to vector<6x418xf32>
    %c72 = arith.constant 72 : index
    %c0_427 = arith.constant 0 : index
    %421 = vector.load %arg9[%c72, %c0_427] : memref<216x418xf32, #tpu.memory_space<vmem>>, vector<6x418xf32>
    tpu.vector_store %arg9[%c72, %c0_427], %420 {strides = array<i32>} : memref<216x418xf32, #tpu.memory_space<vmem>>, vector<6x418xf32>,
    %c0_428 = arith.constant 0 : index
    %c1_429 = arith.constant 1 : index
    %c0_430 = arith.constant 0 : index
    %c22_431 = arith.constant 22 : index
    %422 = vector.load %arg8[%c0_428, %c1_429, %c0_430, %c22_431] : memref<2x2x6x464xf32, #tpu.memory_space<vmem>>, vector<1x1x6x418xf32>
    %423 = vector.shape_cast %422 : vector<1x1x6x418xf32> to vector<6x418xf32>
    %c78 = arith.constant 78 : index
    %c0_432 = arith.constant 0 : index
    %424 = vector.load %arg9[%c78, %c0_432] : memref<216x418xf32, #tpu.memory_space<vmem>>, vector<6x418xf32>
    tpu.vector_store %arg9[%c78, %c0_432], %423 {strides = array<i32>} : memref<216x418xf32, #tpu.memory_space<vmem>>, vector<6x418xf32>,
    %c0_433 = arith.constant 0 : index
    %c0_434 = arith.constant 0 : index
    %c0_435 = arith.constant 0 : index
    %c23_436 = arith.constant 23 : index
    %425 = vector.load %arg8[%c0_433, %c0_434, %c0_435, %c23_436] : memref<2x2x6x464xf32, #tpu.memory_space<vmem>>, vector<1x1x6x418xf32>
    %426 = vector.shape_cast %425 : vector<1x1x6x418xf32> to vector<6x418xf32>
    %c84 = arith.constant 84 : index
    %c0_437 = arith.constant 0 : index
    %427 = vector.load %arg9[%c84, %c0_437] : memref<216x418xf32, #tpu.memory_space<vmem>>, vector<6x418xf32>
    tpu.vector_store %arg9[%c84, %c0_437], %426 {strides = array<i32>} : memref<216x418xf32, #tpu.memory_space<vmem>>, vector<6x418xf32>,
    %c0_438 = arith.constant 0 : index
    %c1_439 = arith.constant 1 : index
    %c0_440 = arith.constant 0 : index
    %c23_441 = arith.constant 23 : index
    %428 = vector.load %arg8[%c0_438, %c1_439, %c0_440, %c23_441] : memref<2x2x6x464xf32, #tpu.memory_space<vmem>>, vector<1x1x6x418xf32>
    %429 = vector.shape_cast %428 : vector<1x1x6x418xf32> to vector<6x418xf32>
    %c90 = arith.constant 90 : index
    %c0_442 = arith.constant 0 : index
    %430 = vector.load %arg9[%c90, %c0_442] : memref<216x418xf32, #tpu.memory_space<vmem>>, vector<6x418xf32>
    tpu.vector_store %arg9[%c90, %c0_442], %429 {strides = array<i32>} : memref<216x418xf32, #tpu.memory_space<vmem>>, vector<6x418xf32>,
    %c0_443 = arith.constant 0 : index
    %c0_444 = arith.constant 0 : index
    %c0_445 = arith.constant 0 : index
    %c24_446 = arith.constant 24 : index
    %431 = vector.load %arg8[%c0_443, %c0_444, %c0_445, %c24_446] : memref<2x2x6x464xf32, #tpu.memory_space<vmem>>, vector<1x1x6x418xf32>
    %432 = vector.shape_cast %431 : vector<1x1x6x418xf32> to vector<6x418xf32>
    %c96 = arith.constant 96 : index
    %c0_447 = arith.constant 0 : index
    %433 = vector.load %arg9[%c96, %c0_447] : memref<216x418xf32, #tpu.memory_space<vmem>>, vector<6x418xf32>
    tpu.vector_store %arg9[%c96, %c0_447], %432 {strides = array<i32>} : memref<216x418xf32, #tpu.memory_space<vmem>>, vector<6x418xf32>,
    %c0_448 = arith.constant 0 : index
    %c1_449 = arith.constant 1 : index
    %c0_450 = arith.constant 0 : index
    %c24_451 = arith.constant 24 : index
    %434 = vector.load %arg8[%c0_448, %c1_449, %c0_450, %c24_451] : memref<2x2x6x464xf32, #tpu.memory_space<vmem>>, vector<1x1x6x418xf32>
    %435 = vector.shape_cast %434 : vector<1x1x6x418xf32> to vector<6x418xf32>
    %c102 = arith.constant 102 : index
    %c0_452 = arith.constant 0 : index
    %436 = vector.load %arg9[%c102, %c0_452] : memref<216x418xf32, #tpu.memory_space<vmem>>, vector<6x418xf32>
    tpu.vector_store %arg9[%c102, %c0_452], %435 {strides = array<i32>} : memref<216x418xf32, #tpu.memory_space<vmem>>, vector<6x418xf32>,
    %c1_453 = arith.constant 1 : index
    %c0_454 = arith.constant 0 : index
    %c0_455 = arith.constant 0 : index
    %c22_456 = arith.constant 22 : index
    %437 = vector.load %arg8[%c1_453, %c0_454, %c0_455, %c22_456] : memref<2x2x6x464xf32, #tpu.memory_space<vmem>>, vector<1x1x6x418xf32>
    %438 = vector.shape_cast %437 : vector<1x1x6x418xf32> to vector<6x418xf32>
    %c108 = arith.constant 108 : index
    %c0_457 = arith.constant 0 : index
    %439 = vector.load %arg9[%c108, %c0_457] : memref<216x418xf32, #tpu.memory_space<vmem>>, vector<6x418xf32>
    tpu.vector_store %arg9[%c108, %c0_457], %438 {strides = array<i32>} : memref<216x418xf32, #tpu.memory_space<vmem>>, vector<6x418xf32>,
    %c1_458 = arith.constant 1 : index
    %c1_459 = arith.constant 1 : index
    %c0_460 = arith.constant 0 : index
    %c22_461 = arith.constant 22 : index
    %440 = vector.load %arg8[%c1_458, %c1_459, %c0_460, %c22_461] : memref<2x2x6x464xf32, #tpu.memory_space<vmem>>, vector<1x1x6x418xf32>
    %441 = vector.shape_cast %440 : vector<1x1x6x418xf32> to vector<6x418xf32>
    %c114 = arith.constant 114 : index
    %c0_462 = arith.constant 0 : index
    %442 = vector.load %arg9[%c114, %c0_462] : memref<216x418xf32, #tpu.memory_space<vmem>>, vector<6x418xf32>
    tpu.vector_store %arg9[%c114, %c0_462], %441 {strides = array<i32>} : memref<216x418xf32, #tpu.memory_space<vmem>>, vector<6x418xf32>,
    %c1_463 = arith.constant 1 : index
    %c0_464 = arith.constant 0 : index
    %c0_465 = arith.constant 0 : index
    %c23_466 = arith.constant 23 : index
    %443 = vector.load %arg8[%c1_463, %c0_464, %c0_465, %c23_466] : memref<2x2x6x464xf32, #tpu.memory_space<vmem>>, vector<1x1x6x418xf32>
    %444 = vector.shape_cast %443 : vector<1x1x6x418xf32> to vector<6x418xf32>
    %c120 = arith.constant 120 : index
    %c0_467 = arith.constant 0 : index
    %445 = vector.load %arg9[%c120, %c0_467] : memref<216x418xf32, #tpu.memory_space<vmem>>, vector<6x418xf32>
    tpu.vector_store %arg9[%c120, %c0_467], %444 {strides = array<i32>} : memref<216x418xf32, #tpu.memory_space<vmem>>, vector<6x418xf32>,
    %c1_468 = arith.constant 1 : index
    %c1_469 = arith.constant 1 : index
    %c0_470 = arith.constant 0 : index
    %c23_471 = arith.constant 23 : index
    %446 = vector.load %arg8[%c1_468, %c1_469, %c0_470, %c23_471] : memref<2x2x6x464xf32, #tpu.memory_space<vmem>>, vector<1x1x6x418xf32>
    %447 = vector.shape_cast %446 : vector<1x1x6x418xf32> to vector<6x418xf32>
    %c126 = arith.constant 126 : index
    %c0_472 = arith.constant 0 : index
    %448 = vector.load %arg9[%c126, %c0_472] : memref<216x418xf32, #tpu.memory_space<vmem>>, vector<6x418xf32>
    tpu.vector_store %arg9[%c126, %c0_472], %447 {strides = array<i32>} : memref<216x418xf32, #tpu.memory_space<vmem>>, vector<6x418xf32>,
    %c1_473 = arith.constant 1 : index
    %c0_474 = arith.constant 0 : index
    %c0_475 = arith.constant 0 : index
    %c24_476 = arith.constant 24 : index
    %449 = vector.load %arg8[%c1_473, %c0_474, %c0_475, %c24_476] : memref<2x2x6x464xf32, #tpu.memory_space<vmem>>, vector<1x1x6x418xf32>
    %450 = vector.shape_cast %449 : vector<1x1x6x418xf32> to vector<6x418xf32>
    %c132 = arith.constant 132 : index
    %c0_477 = arith.constant 0 : index
    %451 = vector.load %arg9[%c132, %c0_477] : memref<216x418xf32, #tpu.memory_space<vmem>>, vector<6x418xf32>
    tpu.vector_store %arg9[%c132, %c0_477], %450 {strides = array<i32>} : memref<216x418xf32, #tpu.memory_space<vmem>>, vector<6x418xf32>,
    %c1_478 = arith.constant 1 : index
    %c1_479 = arith.constant 1 : index
    %c0_480 = arith.constant 0 : index
    %c24_481 = arith.constant 24 : index
    %452 = vector.load %arg8[%c1_478, %c1_479, %c0_480, %c24_481] : memref<2x2x6x464xf32, #tpu.memory_space<vmem>>, vector<1x1x6x418xf32>
    %453 = vector.shape_cast %452 : vector<1x1x6x418xf32> to vector<6x418xf32>
    %c138 = arith.constant 138 : index
    %c0_482 = arith.constant 0 : index
    %454 = vector.load %arg9[%c138, %c0_482] : memref<216x418xf32, #tpu.memory_space<vmem>>, vector<6x418xf32>
    tpu.vector_store %arg9[%c138, %c0_482], %453 {strides = array<i32>} : memref<216x418xf32, #tpu.memory_space<vmem>>, vector<6x418xf32>,
    %c0_483 = arith.constant 0 : index
    %c0_484 = arith.constant 0 : index
    %c0_485 = arith.constant 0 : index
    %c44_486 = arith.constant 44 : index
    %455 = vector.load %arg8[%c0_483, %c0_484, %c0_485, %c44_486] : memref<2x2x6x464xf32, #tpu.memory_space<vmem>>, vector<1x1x6x418xf32>
    %456 = vector.shape_cast %455 : vector<1x1x6x418xf32> to vector<6x418xf32>
    %c144 = arith.constant 144 : index
    %c0_487 = arith.constant 0 : index
    %457 = vector.load %arg9[%c144, %c0_487] : memref<216x418xf32, #tpu.memory_space<vmem>>, vector<6x418xf32>
    tpu.vector_store %arg9[%c144, %c0_487], %456 {strides = array<i32>} : memref<216x418xf32, #tpu.memory_space<vmem>>, vector<6x418xf32>,
    %c0_488 = arith.constant 0 : index
    %c1_489 = arith.constant 1 : index
    %c0_490 = arith.constant 0 : index
    %c44_491 = arith.constant 44 : index
    %458 = vector.load %arg8[%c0_488, %c1_489, %c0_490, %c44_491] : memref<2x2x6x464xf32, #tpu.memory_space<vmem>>, vector<1x1x6x418xf32>
    %459 = vector.shape_cast %458 : vector<1x1x6x418xf32> to vector<6x418xf32>
    %c150 = arith.constant 150 : index
    %c0_492 = arith.constant 0 : index
    %460 = vector.load %arg9[%c150, %c0_492] : memref<216x418xf32, #tpu.memory_space<vmem>>, vector<6x418xf32>
    tpu.vector_store %arg9[%c150, %c0_492], %459 {strides = array<i32>} : memref<216x418xf32, #tpu.memory_space<vmem>>, vector<6x418xf32>,
    %c0_493 = arith.constant 0 : index
    %c0_494 = arith.constant 0 : index
    %c0_495 = arith.constant 0 : index
    %c45_496 = arith.constant 45 : index
    %461 = vector.load %arg8[%c0_493, %c0_494, %c0_495, %c45_496] : memref<2x2x6x464xf32, #tpu.memory_space<vmem>>, vector<1x1x6x418xf32>
    %462 = vector.shape_cast %461 : vector<1x1x6x418xf32> to vector<6x418xf32>
    %c156 = arith.constant 156 : index
    %c0_497 = arith.constant 0 : index
    %463 = vector.load %arg9[%c156, %c0_497] : memref<216x418xf32, #tpu.memory_space<vmem>>, vector<6x418xf32>
    tpu.vector_store %arg9[%c156, %c0_497], %462 {strides = array<i32>} : memref<216x418xf32, #tpu.memory_space<vmem>>, vector<6x418xf32>,
    %c0_498 = arith.constant 0 : index
    %c1_499 = arith.constant 1 : index
    %c0_500 = arith.constant 0 : index
    %c45_501 = arith.constant 45 : index
    %464 = vector.load %arg8[%c0_498, %c1_499, %c0_500, %c45_501] : memref<2x2x6x464xf32, #tpu.memory_space<vmem>>, vector<1x1x6x418xf32>
    %465 = vector.shape_cast %464 : vector<1x1x6x418xf32> to vector<6x418xf32>
    %c162 = arith.constant 162 : index
    %c0_502 = arith.constant 0 : index
    %466 = vector.load %arg9[%c162, %c0_502] : memref<216x418xf32, #tpu.memory_space<vmem>>, vector<6x418xf32>
    tpu.vector_store %arg9[%c162, %c0_502], %465 {strides = array<i32>} : memref<216x418xf32, #tpu.memory_space<vmem>>, vector<6x418xf32>,
    %c0_503 = arith.constant 0 : index
    %c0_504 = arith.constant 0 : index
    %c0_505 = arith.constant 0 : index
    %c46_506 = arith.constant 46 : index
    %467 = vector.load %arg8[%c0_503, %c0_504, %c0_505, %c46_506] : memref<2x2x6x464xf32, #tpu.memory_space<vmem>>, vector<1x1x6x418xf32>
    %468 = vector.shape_cast %467 : vector<1x1x6x418xf32> to vector<6x418xf32>
    %c168 = arith.constant 168 : index
    %c0_507 = arith.constant 0 : index
    %469 = vector.load %arg9[%c168, %c0_507] : memref<216x418xf32, #tpu.memory_space<vmem>>, vector<6x418xf32>
    tpu.vector_store %arg9[%c168, %c0_507], %468 {strides = array<i32>} : memref<216x418xf32, #tpu.memory_space<vmem>>, vector<6x418xf32>,
    %c0_508 = arith.constant 0 : index
    %c1_509 = arith.constant 1 : index
    %c0_510 = arith.constant 0 : index
    %c46_511 = arith.constant 46 : index
    %470 = vector.load %arg8[%c0_508, %c1_509, %c0_510, %c46_511] : memref<2x2x6x464xf32, #tpu.memory_space<vmem>>, vector<1x1x6x418xf32>
    %471 = vector.shape_cast %470 : vector<1x1x6x418xf32> to vector<6x418xf32>
    %c174 = arith.constant 174 : index
    %c0_512 = arith.constant 0 : index
    %472 = vector.load %arg9[%c174, %c0_512] : memref<216x418xf32, #tpu.memory_space<vmem>>, vector<6x418xf32>
    tpu.vector_store %arg9[%c174, %c0_512], %471 {strides = array<i32>} : memref<216x418xf32, #tpu.memory_space<vmem>>, vector<6x418xf32>,
    %c1_513 = arith.constant 1 : index
    %c0_514 = arith.constant 0 : index
    %c0_515 = arith.constant 0 : index
    %c44_516 = arith.constant 44 : index
    %473 = vector.load %arg8[%c1_513, %c0_514, %c0_515, %c44_516] : memref<2x2x6x464xf32, #tpu.memory_space<vmem>>, vector<1x1x6x418xf32>
    %474 = vector.shape_cast %473 : vector<1x1x6x418xf32> to vector<6x418xf32>
    %c180 = arith.constant 180 : index
    %c0_517 = arith.constant 0 : index
    %475 = vector.load %arg9[%c180, %c0_517] : memref<216x418xf32, #tpu.memory_space<vmem>>, vector<6x418xf32>
    tpu.vector_store %arg9[%c180, %c0_517], %474 {strides = array<i32>} : memref<216x418xf32, #tpu.memory_space<vmem>>, vector<6x418xf32>,
    %c1_518 = arith.constant 1 : index
    %c1_519 = arith.constant 1 : index
    %c0_520 = arith.constant 0 : index
    %c44_521 = arith.constant 44 : index
    %476 = vector.load %arg8[%c1_518, %c1_519, %c0_520, %c44_521] : memref<2x2x6x464xf32, #tpu.memory_space<vmem>>, vector<1x1x6x418xf32>
    %477 = vector.shape_cast %476 : vector<1x1x6x418xf32> to vector<6x418xf32>
    %c186 = arith.constant 186 : index
    %c0_522 = arith.constant 0 : index
    %478 = vector.load %arg9[%c186, %c0_522] : memref<216x418xf32, #tpu.memory_space<vmem>>, vector<6x418xf32>
    tpu.vector_store %arg9[%c186, %c0_522], %477 {strides = array<i32>} : memref<216x418xf32, #tpu.memory_space<vmem>>, vector<6x418xf32>,
    %c1_523 = arith.constant 1 : index
    %c0_524 = arith.constant 0 : index
    %c0_525 = arith.constant 0 : index
    %c45_526 = arith.constant 45 : index
    %479 = vector.load %arg8[%c1_523, %c0_524, %c0_525, %c45_526] : memref<2x2x6x464xf32, #tpu.memory_space<vmem>>, vector<1x1x6x418xf32>
    %480 = vector.shape_cast %479 : vector<1x1x6x418xf32> to vector<6x418xf32>
    %c192 = arith.constant 192 : index
    %c0_527 = arith.constant 0 : index
    %481 = vector.load %arg9[%c192, %c0_527] : memref<216x418xf32, #tpu.memory_space<vmem>>, vector<6x418xf32>
    tpu.vector_store %arg9[%c192, %c0_527], %480 {strides = array<i32>} : memref<216x418xf32, #tpu.memory_space<vmem>>, vector<6x418xf32>,
    %c1_528 = arith.constant 1 : index
    %c1_529 = arith.constant 1 : index
    %c0_530 = arith.constant 0 : index
    %c45_531 = arith.constant 45 : index
    %482 = vector.load %arg8[%c1_528, %c1_529, %c0_530, %c45_531] : memref<2x2x6x464xf32, #tpu.memory_space<vmem>>, vector<1x1x6x418xf32>
    %483 = vector.shape_cast %482 : vector<1x1x6x418xf32> to vector<6x418xf32>
    %c198 = arith.constant 198 : index
    %c0_532 = arith.constant 0 : index
    %484 = vector.load %arg9[%c198, %c0_532] : memref<216x418xf32, #tpu.memory_space<vmem>>, vector<6x418xf32>
    tpu.vector_store %arg9[%c198, %c0_532], %483 {strides = array<i32>} : memref<216x418xf32, #tpu.memory_space<vmem>>, vector<6x418xf32>,
    %c1_533 = arith.constant 1 : index
    %c0_534 = arith.constant 0 : index
    %c0_535 = arith.constant 0 : index
    %c46_536 = arith.constant 46 : index
    %485 = vector.load %arg8[%c1_533, %c0_534, %c0_535, %c46_536] : memref<2x2x6x464xf32, #tpu.memory_space<vmem>>, vector<1x1x6x418xf32>
    %486 = vector.shape_cast %485 : vector<1x1x6x418xf32> to vector<6x418xf32>
    %c204 = arith.constant 204 : index
    %c0_537 = arith.constant 0 : index
    %487 = vector.load %arg9[%c204, %c0_537] : memref<216x418xf32, #tpu.memory_space<vmem>>, vector<6x418xf32>
    tpu.vector_store %arg9[%c204, %c0_537], %486 {strides = array<i32>} : memref<216x418xf32, #tpu.memory_space<vmem>>, vector<6x418xf32>,
    %c1_538 = arith.constant 1 : index
    %c1_539 = arith.constant 1 : index
    %c0_540 = arith.constant 0 : index
    %c46_541 = arith.constant 46 : index
    %488 = vector.load %arg8[%c1_538, %c1_539, %c0_540, %c46_541] : memref<2x2x6x464xf32, #tpu.memory_space<vmem>>, vector<1x1x6x418xf32>
    %489 = vector.shape_cast %488 : vector<1x1x6x418xf32> to vector<6x418xf32>
    %c210 = arith.constant 210 : index
    %c0_542 = arith.constant 0 : index
    %490 = vector.load %arg9[%c210, %c0_542] : memref<216x418xf32, #tpu.memory_space<vmem>>, vector<6x418xf32>
    tpu.vector_store %arg9[%c210, %c0_542], %489 {strides = array<i32>} : memref<216x418xf32, #tpu.memory_space<vmem>>, vector<6x418xf32>,
    %c0_543 = arith.constant 0 : index
    %c0_544 = arith.constant 0 : index
    %491 = vector.load %arg4[%c0_543, %c0_544] : memref<64x216xf32, #tpu.memory_space<vmem>>, vector<64x216xf32>
    %c0_545 = arith.constant 0 : index
    %c0_546 = arith.constant 0 : index
    %492 = vector.load %arg9[%c0_545, %c0_546] : memref<216x418xf32, #tpu.memory_space<vmem>>, vector<216x418xf32>
    %cst_547 = arith.constant dense<0.000000e+00> : vector<64x418xf32>
    %493 = tpu.matmul %491, %492, %cst_547 {dimension_numbers = #tpu.dot_dimension_numbers<[1], [0], [0], [1], [0, 0, 1, 1], [], []>} : vector<64x216xf32>, vector<216x418xf32>, vector<64x418xf32> -> vector<64x418xf32>
    %494 = vector.extract_strided_slice %493 {offsets = [0, 0], sizes = [16, 418], strides = [1, 1]} : vector<64x418xf32> to vector<16x418xf32>
    %495 = vector.extract_strided_slice %493 {offsets = [16, 0], sizes = [16, 418], strides = [1, 1]} : vector<64x418xf32> to vector<16x418xf32>
    %496 = arith.maximumf %494, %495 : vector<16x418xf32>
    %497 = vector.extract_strided_slice %493 {offsets = [32, 0], sizes = [16, 418], strides = [1, 1]} : vector<64x418xf32> to vector<16x418xf32>
    %498 = arith.maximumf %496, %497 : vector<16x418xf32>
    %499 = vector.extract_strided_slice %493 {offsets = [48, 0], sizes = [16, 418], strides = [1, 1]} : vector<64x418xf32> to vector<16x418xf32>
    %500 = arith.maximumf %498, %499 : vector<16x418xf32>
    %c0_548 = arith.constant 0 : index
    %c0_549 = arith.constant 0 : index
    %501 = vector.load %arg5[%c0_548, %c0_549] : memref<16x1xf32, #tpu.memory_space<vmem>>, vector<16x1xf32>
    %502 = vector.broadcast %501 : vector<16x1xf32> to vector<16x418xf32>
    %503 = arith.addf %500, %502 : vector<16x418xf32>
    %cst_550 = arith.constant 0.000000e+00 : f32
    %504 = vector.broadcast %cst_550 : f32 to vector<16x418xf32>
    %505 = arith.maximumf %503, %504 : vector<16x418xf32>
    %c0_551 = arith.constant 0 : index
    %c0_552 = arith.constant 0 : index
    %c0_553 = arith.constant 0 : index
    %506 = vector.load %arg6[%c0_551, %c0_552, %c0_553] : memref<1x16x418xf32, #tpu.memory_space<vmem>>, vector<1x16x418xf32>
    %507 = vector.shape_cast %506 : vector<1x16x418xf32> to vector<16x418xf32>
    %508 = vector.shape_cast %505 : vector<16x418xf32> to vector<1x16x418xf32>
    tpu.vector_store %arg6[%c0_551, %c0_552, %c0_553], %508 {strides = array<i32>} : memref<1x16x418xf32, #tpu.memory_space<vmem>>, vector<1x16x418xf32>,
    return
  }
  func.func @transform_0(%arg0: i32) -> (i32, i32, i32, i32) {
    %c0_i32 = arith.constant 0 : i32
    %c0_i32_0 = arith.constant 0 : i32
    %c0_i32_1 = arith.constant 0 : i32
    %c0_i32_2 = arith.constant 0 : i32
    return %arg0, %c0_i32, %c0_i32_0, %c0_i32_1 : i32, i32, i32, i32
  }
  func.func @transform_1(%arg0: i32) -> (i32, i32) {
    %c0_i32 = arith.constant 0 : i32
    %c0_i32_0 = arith.constant 0 : i32
    %c0_i32_1 = arith.constant 0 : i32
    return %c0_i32, %c0_i32_0 : i32, i32
  }
  func.func @transform_2(%arg0: i32) -> (i32, i32) {
    %c0_i32 = arith.constant 0 : i32
    %c0_i32_0 = arith.constant 0 : i32
    %c0_i32_1 = arith.constant 0 : i32
    return %c0_i32, %c0_i32_0 : i32, i32
  }
  func.func @transform_3(%arg0: i32) -> (i32, i32) {
    %c0_i32 = arith.constant 0 : i32
    %c0_i32_0 = arith.constant 0 : i32
    %c0_i32_1 = arith.constant 0 : i32
    return %c0_i32, %c0_i32_0 : i32, i32
  }
  func.func @transform_4(%arg0: i32) -> (i32, i32) {
    %c0_i32 = arith.constant 0 : i32
    %c0_i32_0 = arith.constant 0 : i32
    %c0_i32_1 = arith.constant 0 : i32
    return %c0_i32, %c0_i32_0 : i32, i32
  }
  func.func @transform_5(%arg0: i32) -> (i32, i32, i32) {
    %c0_i32 = arith.constant 0 : i32
    %c0_i32_0 = arith.constant 0 : i32
    %c0_i32_1 = arith.constant 0 : i32
    return %arg0, %c0_i32, %c0_i32_0 : i32, i32, i32
  }
}

module attributes {stable_mosaic.version = 11 : i64} {
  func.func @_fc_softmax_kernel(%arg0: memref<2x5776xbf16, #tpu.memory_space<vmem>>, %arg1: memref<5776x120xbf16, #tpu.memory_space<vmem>>, %arg2: memref<1x120xf32, #tpu.memory_space<vmem>>, %arg3: memref<120x84xbf16, #tpu.memory_space<vmem>>, %arg4: memref<1x84xf32, #tpu.memory_space<vmem>>, %arg5: memref<84x10xbf16, #tpu.memory_space<vmem>>, %arg6: memref<1x10xf32, #tpu.memory_space<vmem>>, %arg7: memref<2x10xf32, #tpu.memory_space<vmem>>) attributes {dimension_semantics = [], scalar_prefetch = 0 : i64, scratch_operands = 0 : i64, tpu.core_type = #tpu.core_type<tc>} {
    %c0 = arith.constant 0 : index
    %c0_0 = arith.constant 0 : index
    %0 = vector.load %arg0[%c0, %c0_0] : memref<2x5776xbf16, #tpu.memory_space<vmem>>, vector<2x5776xbf16>
    %c0_1 = arith.constant 0 : index
    %c0_2 = arith.constant 0 : index
    %1 = vector.load %arg1[%c0_1, %c0_2] : memref<5776x120xbf16, #tpu.memory_space<vmem>>, vector<5776x120xbf16>
    %cst = arith.constant dense<0.000000e+00> : vector<2x120xf32>
    %2 = tpu.matmul %0, %1, %cst {dimension_numbers = #tpu.dot_dimension_numbers<[1], [0], [0], [1], [0, 0, 1, 1], [], []>} : vector<2x5776xbf16>, vector<5776x120xbf16>, vector<2x120xf32> -> vector<2x120xf32>
    %c0_3 = arith.constant 0 : index
    %c0_4 = arith.constant 0 : index
    %3 = vector.load %arg2[%c0_3, %c0_4] : memref<1x120xf32, #tpu.memory_space<vmem>>, vector<1x120xf32>
    %4 = vector.broadcast %3 : vector<1x120xf32> to vector<2x120xf32>
    %5 = arith.addf %2, %4 : vector<2x120xf32>
    %cst_5 = arith.constant 0.000000e+00 : f32
    %6 = vector.broadcast %cst_5 : f32 to vector<2x120xf32>
    %7 = arith.maximumf %5, %6 : vector<2x120xf32>
    %8 = arith.truncf %7 : vector<2x120xf32> to vector<2x120xbf16>
    %c0_6 = arith.constant 0 : index
    %c0_7 = arith.constant 0 : index
    %9 = vector.load %arg3[%c0_6, %c0_7] : memref<120x84xbf16, #tpu.memory_space<vmem>>, vector<120x84xbf16>
    %cst_8 = arith.constant dense<0.000000e+00> : vector<2x84xf32>
    %10 = tpu.matmul %8, %9, %cst_8 {dimension_numbers = #tpu.dot_dimension_numbers<[1], [0], [0], [1], [0, 0, 1, 1], [], []>} : vector<2x120xbf16>, vector<120x84xbf16>, vector<2x84xf32> -> vector<2x84xf32>
    %c0_9 = arith.constant 0 : index
    %c0_10 = arith.constant 0 : index
    %11 = vector.load %arg4[%c0_9, %c0_10] : memref<1x84xf32, #tpu.memory_space<vmem>>, vector<1x84xf32>
    %12 = vector.broadcast %11 : vector<1x84xf32> to vector<2x84xf32>
    %13 = arith.addf %10, %12 : vector<2x84xf32>
    %cst_11 = arith.constant 0.000000e+00 : f32
    %14 = vector.broadcast %cst_11 : f32 to vector<2x84xf32>
    %15 = arith.maximumf %13, %14 : vector<2x84xf32>
    %16 = arith.truncf %15 : vector<2x84xf32> to vector<2x84xbf16>
    %c0_12 = arith.constant 0 : index
    %c0_13 = arith.constant 0 : index
    %17 = vector.load %arg5[%c0_12, %c0_13] : memref<84x10xbf16, #tpu.memory_space<vmem>>, vector<84x10xbf16>
    %cst_14 = arith.constant dense<0.000000e+00> : vector<2x10xf32>
    %18 = tpu.matmul %16, %17, %cst_14 {dimension_numbers = #tpu.dot_dimension_numbers<[1], [0], [0], [1], [0, 0, 1, 1], [], []>} : vector<2x84xbf16>, vector<84x10xbf16>, vector<2x10xf32> -> vector<2x10xf32>
    %c0_15 = arith.constant 0 : index
    %c0_16 = arith.constant 0 : index
    %19 = vector.load %arg6[%c0_15, %c0_16] : memref<1x10xf32, #tpu.memory_space<vmem>>, vector<1x10xf32>
    %20 = vector.broadcast %19 : vector<1x10xf32> to vector<2x10xf32>
    %21 = arith.addf %18, %20 : vector<2x10xf32>
    %cst_17 = arith.constant dense<0xFF800000> : vector<2xf32>
    %22 = vector.multi_reduction <maximumf>, %21, %cst_17 [1] : vector<2x10xf32> to vector<2xf32>
    %23 = vector.shape_cast %22 : vector<2xf32> to vector<2x1xf32>
    %24 = vector.broadcast %23 : vector<2x1xf32> to vector<2x10xf32>
    %25 = arith.subf %21, %24 : vector<2x10xf32>
    %26 = math.exp %25 : vector<2x10xf32>
    %cst_18 = arith.constant dense<0.000000e+00> : vector<2xf32>
    %27 = vector.multi_reduction <add>, %26, %cst_18 [1] : vector<2x10xf32> to vector<2xf32>
    %28 = vector.shape_cast %27 : vector<2xf32> to vector<2x1xf32>
    %29 = vector.broadcast %28 : vector<2x1xf32> to vector<2x10xf32>
    %30 = arith.divf %26, %29 : vector<2x10xf32>
    %c0_19 = arith.constant 0 : index
    %c0_20 = arith.constant 0 : index
    %31 = vector.load %arg7[%c0_19, %c0_20] : memref<2x10xf32, #tpu.memory_space<vmem>>, vector<2x10xf32>
    tpu.vector_store %arg7[%c0_19, %c0_20], %30 {strides = array<i32>} : memref<2x10xf32, #tpu.memory_space<vmem>>, vector<2x10xf32>,
    return
  }
}

</mosaic_0001>

<llo_original>
// kernel: net_forward.2
$region0: #{net_forward.2}
  #allocation0 [shape = 'u32[]', space=smem, size = 0x4, offset = 0x4, fixed_abs, tag = 'smem constant byte address 0x4 - core index']
  #allocation1 [shape = 'u32[144,128]{1,0:T(1,128)}', space=vmem, size = 0x12000, scoped, tag = 'internal scratch']
  #allocation2 [shape = 'f32[64,464]{1,0:T(8,128)}', space=vmem, size = 0x20000, scoped, tag = 'scratch operand']
  #allocation3 [shape = 'f32[2,2,6,464]{3,2,1,0:T(8,128)}', space=vmem, size = 0x10000, scoped, tag = 'scratch operand']
  #allocation4 [shape = 'f32[216,418]{1,0:T(8,128)}', space=vmem, size = 0x6c000, scoped, tag = 'scratch operand']
  %s0 = inlined_call_operand.vmem [shape: f32[2,4,4,512], index: 0, kind: input, shape index: {}]
  %s1 = inlined_call_operand.vmem [shape: f32[96,64], index: 1, kind: input, shape index: {}]
  %s2 = inlined_call_operand.vmem [shape: f32[6,1], index: 2, kind: input, shape index: {}]
  %s3 = inlined_call_operand.vmem [shape: f32[64,216], index: 3, kind: input, shape index: {}]
  %s4 = inlined_call_operand.vmem [shape: f32[16,1], index: 4, kind: input, shape index: {}]
  %s5 = inlined_call_operand.vmem [shape: f32[2,16,418], index: 5, kind: output, shape index: {}]
  %s6 = sld [smem:[#allocation0]]
  $region53: #{net_forward.2} parent=0
    _
  %s8 = ssub.s32 1, %s6
  %s9 = scalar_select 0, %s8, %s6
  loop: start=0, step=1, limit=4
  $region2: #{net_forward.2} parent=0 // loop_pre_header
    _
  $region3: #{net_forward.2} parent=0 // loop_header
    %s11 = sphi 0, %s15
    %p12 = scmp.ge.s32.totalorder %s11, 4
    %s21 = sphi 0, %s23
    %s24 = sphi 0, %s21
    %s25 = sphi 0, %s24
    %s41 = sphi 0, %s25
    %s45 = sphi 0, %s45
    %s47 = sphi 0, %s45
    %s48 = sphi 0, %s47
    %s62 = sphi 0, %s48
    %s66 = sphi 0, %s66
    %s68 = sphi 0, %s66
    %s69 = sphi 0, %s68
    %s83 = sphi 0, %s69
    %s87 = sphi 0, %s87
    %s89 = sphi 0, %s87
    %s90 = sphi 0, %s89
    %s104 = sphi 0, %s90
    %s108 = sphi 0, %s108
    %s110 = sphi 0, %s108
    %s111 = sphi 0, %s110
    %s125 = sphi 0, %s111
    %s131 = sphi 0, %s133
    %s134 = sphi 0, %s131
    %s135 = sphi 0, %s134
    %s151 = sphi 0, %s135
  $region4: #{net_forward.2} parent=0 // loop_header_branch
    %14 = sbr.rel (%p12) target = $region8
  $region5: #{net_forward.2} parent=0 // loop_body
    %s16 = ssub.s32 %s11, 1
    %s17 = ssub.s32 %s11, 2
    %s18 = sadd.s32 %s11, 1
    %s19 = ssub.s32 %s11, %s18
    %p20 = scmp.eq.s32.totalorder %s19, 0
    %s22 = sadd.s32 %s21, 1
    %s23 = scalar_select %p20, %s21, %s22
    %p26 = pneg %p20
    %p27 = scmp.eq.s32.totalorder %s11, 1
    %p28 = por %p26, %p27
    %p29 = scmp.ne.s32.totalorder %s21, %s24
    %p30 = scmp.eq.s32.totalorder %s11, 0
    %p31 = por %p29, %p30
    %p32 = scmp.ne.s32.totalorder %s21, %s24
    %p33 = scmp.eq.s32.totalorder %s16, 1
    %p34 = por %p32, %p33
    %p35 = scmp.ne.s32.totalorder %s24, %s25
    %p36 = scmp.eq.s32.totalorder %s16, 0
    %p37 = por %p35, %p36
    %p38 = scmp.ne.s32.totalorder %s24, %s25
    %p39 = scmp.eq.s32.totalorder %s17, 1
    %p40 = por %p38, %p39
    %p42 = scmp.ne.s32.totalorder %s25, %s41
    %p43 = scmp.eq.s32.totalorder %s17, 0
    %p44 = por %p42, %p43
    %s46 = sadd.s32 %s45, 1
    %p49 = scmp.eq.s32.totalorder %s11, 1
    %p50 = scmp.ne.s32.totalorder %s45, %s47
    %p51 = scmp.eq.s32.totalorder %s11, 0
    %p52 = por %p50, %p51
    %p53 = scmp.ne.s32.totalorder %s45, %s47
    %p54 = scmp.eq.s32.totalorder %s16, 1
    %p55 = por %p53, %p54
    %p56 = scmp.ne.s32.totalorder %s47, %s48
    %p57 = scmp.eq.s32.totalorder %s16, 0
    %p58 = por %p56, %p57
    %p59 = scmp.ne.s32.totalorder %s47, %s48
    %p60 = scmp.eq.s32.totalorder %s17, 1
    %p61 = por %p59, %p60
    %p63 = scmp.ne.s32.totalorder %s48, %s62
    %p64 = scmp.eq.s32.totalorder %s17, 0
    %p65 = por %p63, %p64
    %s67 = sadd.s32 %s66, 1
    %p70 = scmp.eq.s32.totalorder %s11, 1
    %p71 = scmp.ne.s32.totalorder %s66, %s68
    %p72 = scmp.eq.s32.totalorder %s11, 0
    %p73 = por %p71, %p72
    %p74 = scmp.ne.s32.totalorder %s66, %s68
    %p75 = scmp.eq.s32.totalorder %s16, 1
    %p76 = por %p74, %p75
    %p77 = scmp.ne.s32.totalorder %s68, %s69
    %p78 = scmp.eq.s32.totalorder %s16, 0
    %p79 = por %p77, %p78
    %p80 = scmp.ne.s32.totalorder %s68, %s69
    %p81 = scmp.eq.s32.totalorder %s17, 1
    %p82 = por %p80, %p81
    %p84 = scmp.ne.s32.totalorder %s69, %s83
    %p85 = scmp.eq.s32.totalorder %s17, 0
    %p86 = por %p84, %p85
    %s88 = sadd.s32 %s87, 1
    %p91 = scmp.eq.s32.totalorder %s11, 1
    %p92 = scmp.ne.s32.totalorder %s87, %s89
    %p93 = scmp.eq.s32.totalorder %s11, 0
    %p94 = por %p92, %p93
    %p95 = scmp.ne.s32.totalorder %s87, %s89
    %p96 = scmp.eq.s32.totalorder %s16, 1
    %p97 = por %p95, %p96
    %p98 = scmp.ne.s32.totalorder %s89, %s90
    %p99 = scmp.eq.s32.totalorder %s16, 0
    %p100 = por %p98, %p99
    %p101 = scmp.ne.s32.totalorder %s89, %s90
    %p102 = scmp.eq.s32.totalorder %s17, 1
    %p103 = por %p101, %p102
    %p105 = scmp.ne.s32.totalorder %s90, %s104
    %p106 = scmp.eq.s32.totalorder %s17, 0
    %p107 = por %p105, %p106
    %s109 = sadd.s32 %s108, 1
    %p112 = scmp.eq.s32.totalorder %s11, 1
    %p113 = scmp.ne.s32.totalorder %s108, %s110
    %p114 = scmp.eq.s32.totalorder %s11, 0
    %p115 = por %p113, %p114
    %p116 = scmp.ne.s32.totalorder %s108, %s110
    %p117 = scmp.eq.s32.totalorder %s16, 1
    %p118 = por %p116, %p117
    %p119 = scmp.ne.s32.totalorder %s110, %s111
    %p120 = scmp.eq.s32.totalorder %s16, 0
    %p121 = por %p119, %p120
    %p122 = scmp.ne.s32.totalorder %s110, %s111
    %p123 = scmp.eq.s32.totalorder %s17, 1
    %p124 = por %p122, %p123
    %p126 = scmp.ne.s32.totalorder %s111, %s125
    %p127 = scmp.eq.s32.totalorder %s17, 0
    %p128 = por %p126, %p127
    %s129 = ssub.s32 %s11, %s18
    %p130 = scmp.eq.s32.totalorder %s129, 0
    %s132 = sadd.s32 %s131, 1
    %s133 = scalar_select %p130, %s131, %s132
    %p136 = pneg %p130
    %p137 = scmp.eq.s32.totalorder %s11, 1
    %p138 = por %p136, %p137
    %p139 = scmp.ne.s32.totalorder %s131, %s134
    %p140 = scmp.eq.s32.totalorder %s11, 0
    %p141 = por %p139, %p140
    %p142 = scmp.ne.s32.totalorder %s131, %s134
    %p143 = scmp.eq.s32.totalorder %s16, 1
    %p144 = por %p142, %p143
    %p145 = scmp.ne.s32.totalorder %s134, %s135
    %p146 = scmp.eq.s32.totalorder %s16, 0
    %p147 = por %p145, %p146
    %p148 = scmp.ne.s32.totalorder %s134, %s135
    %p149 = scmp.eq.s32.totalorder %s17, 1
    %p150 = por %p148, %p149
    %p152 = scmp.ne.s32.totalorder %s135, %s151
    %p153 = scmp.eq.s32.totalorder %s17, 0
    %p154 = por %p152, %p153
    %p155 = scmp.le.s32.totalorder 1, %s11
    %p156 = scmp.lt.s32.totalorder %s11, 3
    %p157 = pnand %p155, %p156
    %p158 = pneg %p157
    // Predicated region
    $region9: #{net_forward.2} parent=5 // pred_check
      _
    $region10: #{net_forward.2} parent=5 // pred_check_branch
      %160 = sbr.rel (%p157) target = $region12
    $region11: #{net_forward.2} parent=5 // pred_region
      %s161 = ssub.s32 %s11, 1
      // Predicated region
      $region13: #{net_forward.2} parent=11 // pred_check
        %p162 = pneg %p58
      $region14: #{net_forward.2} parent=11 // pred_check_branch
        %164 = sbr.rel (%p162) target = $region16
      $region15: #{net_forward.2} parent=11 // pred_region
        _
      $region16: #{net_forward.2} parent=11 // pred_fallthru
        _
      // Predicated region
      $region17: #{net_forward.2} parent=11 // pred_check
        %p165 = pneg %p79
      $region18: #{net_forward.2} parent=11 // pred_check_branch
        %167 = sbr.rel (%p165) target = $region20
      $region19: #{net_forward.2} parent=11 // pred_region
        _
      $region20: #{net_forward.2} parent=11 // pred_fallthru
        _
      // Predicated region
      $region21: #{net_forward.2} parent=11 // pred_check
        %p168 = pneg %p100
      $region22: #{net_forward.2} parent=11 // pred_check_branch
        %170 = sbr.rel (%p168) target = $region24
      $region23: #{net_forward.2} parent=11 // pred_region
        _
      $region24: #{net_forward.2} parent=11 // pred_fallthru
        _
      // Predicated region
      $region25: #{net_forward.2} parent=11 // pred_check
        %p171 = pneg %p121
      $region26: #{net_forward.2} parent=11 // pred_check_branch
        %173 = sbr.rel (%p171) target = $region28
      $region27: #{net_forward.2} parent=11 // pred_region
        _
      $region28: #{net_forward.2} parent=11 // pred_fallthru
        _
    $region12: #{net_forward.2} parent=5 // pred_fallthru
      _
    %p174 = scmp.lt.s32.totalorder %s11, 2
    // Predicated region
    $region29: #{net_forward.2} parent=5 // pred_check
      %p175 = pneg %p174
    $region30: #{net_forward.2} parent=5 // pred_check_branch
      %177 = sbr.rel (%p175) target = $region32
    $region31: #{net_forward.2} parent=5 // pred_region
      // Predicated region
      $region33: #{net_forward.2} parent=31 // pred_check
        %p178 = pneg %p31
      $region34: #{net_forward.2} parent=31 // pred_check_branch
        %180 = sbr.rel (%p178) target = $region36
      $region35: #{net_forward.2} parent=31 // pred_region
        %p181 = scmp.lt.s32.totalorder %s11, 1
        %s182 = scalar_select %p181, %s11, 1
        %s183 = smul.addr %s182, 16
        %s184 = smul.addr %s183, 4
        %s185 = scalar_lea.vmem %s0, %s184
      $region36: #{net_forward.2} parent=31 // pred_fallthru
        _
    $region32: #{net_forward.2} parent=5 // pred_fallthru
      _
    %p186 = scmp.le.s32.totalorder 1, %s11
    %p187 = scmp.lt.s32.totalorder %s11, 3
    %p188 = pnand %p186, %p187
    %p189 = pneg %p188
    // Predicated region
    $region37: #{net_forward.2} parent=5 // pred_check
      _
    $region38: #{net_forward.2} parent=5 // pred_check_branch
      %191 = sbr.rel (%p188) target = $region40
    $region39: #{net_forward.2} parent=5 // pred_region
      %s192 = ssub.s32 %s11, 1
      %p193 = scmp.lt.s32.totalorder %s16, 1
      %s194 = scalar_select %p193, %s16, 1
      %s195 = smul.addr %s194, 16
      %s196 = smul.addr %s195, 4
      %s197 = scalar_lea.vmem %s0, %s196
      %p198 = pneg %p37
      %p199 = pneg %p34
      %p200 = pneg %p58
      %p201 = pneg %p55
      %p202 = pneg %p79
      %p203 = pneg %p76
      %p204 = pneg %p100
      %p205 = pneg %p97
      %p206 = pneg %p121
      %p207 = pneg %p118
      %p208 = pneg %p147
      %p209 = pneg %p144
      %p210 = scmp.lt.s32.totalorder %s16, 1
      %s211 = scalar_select %p210, %s16, 1
      %s212 = smul.addr %s211, 8
      %s213 = smul.addr %s212, 8
      %s214 = scalar_lea.vmem %s5, %s213
      %p215 = scmp.lt.s32.totalorder %s16, 1
      %s216 = scalar_select %p215, %s16, 1
      %s217 = smul.addr %s216, 16
      %s218 = smul.addr %s217, 4
      %s219 = scalar_lea.vmem %s0, %s218
      %p220 = scmp.lt.s32.totalorder %s16, 1
      %s221 = scalar_select %p220, %s16, 1
      %s222 = smul.addr %s221, 8
      %s223 = smul.addr %s222, 8
      %s224 = scalar_lea.vmem %s5, %s223
      %v225 = vld [vmem:[%s219] ss:$4 sm:$0xf]
      %v226 = vlaneseq
      %vm227 = vcmp.ge.s32.totalorder %v226, 0
      %vm228 = vcmp.lt.s32.totalorder %v226, 464
      %vm229 = vmand %vm227, %vm228
      %230 = vst.msk [vmem:[#allocation2] ss:$8 sm:$0xf] %vm229, %v225
      %231 = vst.msk [vmem:[#allocation2] ss:$8 sm:$0x0] %vm229, %v225
      %s232 = scalar_lea.vmem %s219, 1
      %v233 = vld [vmem:[%s232] ss:$4 sm:$0xf]
      %s234 = scalar_lea.vmem [#allocation2], 1
      %235 = vst.msk [vmem:[%s234] ss:$8 sm:$0xf] %vm229, %v233
      %236 = vst.msk [vmem:[%s234] ss:$8 sm:$0x0] %vm229, %v233
      %s237 = scalar_lea.vmem %s219, 2
      %v238 = vld [vmem:[%s237] ss:$4 sm:$0xf]
      %s239 = scalar_lea.vmem [#allocation2], 2
      %240 = vst.msk [vmem:[%s239] ss:$8 sm:$0xf] %vm229, %v238
      %241 = vst.msk [vmem:[%s239] ss:$8 sm:$0x0] %vm229, %v238
      %s242 = scalar_lea.vmem %s219, 3
      %v243 = vld [vmem:[%s242] ss:$4 sm:$0xf]
      %s244 = scalar_lea.vmem [#allocation2], 3
      %245 = vst.msk [vmem:[%s244] ss:$8 sm:$0xf] %vm229, %v243
      %246 = vst.msk [vmem:[%s244] ss:$8 sm:$0x0] %vm229, %v243
      %v247 = vld [vmem:[%s219] ss:$4 sm:$0xf]
      %249 = vrot.lane.b32.xlu0 %v247, 127
      %v250 = vpop.permute.xlu0 %249
      %v251 = vrot.slane %v250, 1
      %vm252 = vcmask 1039360
      %v253 = vsel %vm252, %v250, %v251
      %s255 = scalar_lea.vmem [#allocation2], 4
      %256 = vst.msk [vmem:[%s255] ss:$8 sm:$0xf] %vm229, %v253
      %257 = vst.msk [vmem:[%s255] ss:$8 sm:$0x0] %vm229, %v253
      %v258 = vld [vmem:[%s232] ss:$4 sm:$0xf]
      %260 = vrot.lane.b32.xlu0 %v258, 127
      %v261 = vpop.permute.xlu0 %260
      %v262 = vrot.slane %v261, 1
      %v263 = vsel %vm252, %v261, %v262
      %s265 = scalar_lea.vmem [#allocation2], 5
      %266 = vst.msk [vmem:[%s265] ss:$8 sm:$0xf] %vm229, %v263
      %267 = vst.msk [vmem:[%s265] ss:$8 sm:$0x0] %vm229, %v263
      %v268 = vld [vmem:[%s237] ss:$4 sm:$0xf]
      %270 = vrot.lane.b32.xlu0 %v268, 127
      %v271 = vpop.permute.xlu0 %270
      %v272 = vrot.slane %v271, 1
      %v273 = vsel %vm252, %v271, %v272
      %s275 = scalar_lea.vmem [#allocation2], 6
      %276 = vst.msk [vmem:[%s275] ss:$8 sm:$0xf] %vm229, %v273
      %277 = vst.msk [vmem:[%s275] ss:$8 sm:$0x0] %vm229, %v273
      %v278 = vld [vmem:[%s242] ss:$4 sm:$0xf]
      %280 = vrot.lane.b32.xlu0 %v278, 127
      %v281 = vpop.permute.xlu0 %280
      %v282 = vrot.slane %v281, 1
      %v283 = vsel %vm252, %v281, %v282
      %s285 = scalar_lea.vmem [#allocation2], 7
      %286 = vst.msk [vmem:[%s285] ss:$8 sm:$0xf] %vm229, %v283
      %287 = vst.msk [vmem:[%s285] ss:$8 sm:$0x0] %vm229, %v283
      %s288 = scalar_lea.vmem %s219, 16
      %v289 = vld [vmem:[%s288] ss:$4 sm:$0xf]
      %s290 = scalar_lea.vmem [#allocation2], 32
      %291 = vst.msk [vmem:[%s290] ss:$8 sm:$0xf] %vm229, %v289
      %292 = vst.msk [vmem:[%s290] ss:$8 sm:$0x0] %vm229, %v289
      %s293 = scalar_lea.vmem %s288, 1
      %v294 = vld [vmem:[%s293] ss:$4 sm:$0xf]
      %s295 = scalar_lea.vmem [#allocation2], 33
      %296 = vst.msk [vmem:[%s295] ss:$8 sm:$0xf] %vm229, %v294
      %297 = vst.msk [vmem:[%s295] ss:$8 sm:$0x0] %vm229, %v294
      %s298 = scalar_lea.vmem %s288, 2
      %v299 = vld [vmem:[%s298] ss:$4 sm:$0xf]
      %s300 = scalar_lea.vmem [#allocation2], 34
      %301 = vst.msk [vmem:[%s300] ss:$8 sm:$0xf] %vm229, %v299
      %302 = vst.msk [vmem:[%s300] ss:$8 sm:$0x0] %vm229, %v299
      %s303 = scalar_lea.vmem %s288, 3
      %v304 = vld [vmem:[%s303] ss:$4 sm:$0xf]
      %s305 = scalar_lea.vmem [#allocation2], 35
      %306 = vst.msk [vmem:[%s305] ss:$8 sm:$0xf] %vm229, %v304
      %307 = vst.msk [vmem:[%s305] ss:$8 sm:$0x0] %vm229, %v304
      %v308 = vld [vmem:[%s288] ss:$4 sm:$0xf]
      %310 = vrot.lane.b32.xlu0 %v308, 127
      %v311 = vpop.permute.xlu0 %310
      %v312 = vrot.slane %v311, 1
      %v313 = vsel %vm252, %v311, %v312
      %s315 = scalar_lea.vmem [#allocation2], 36
      %316 = vst.msk [vmem:[%s315] ss:$8 sm:$0xf] %vm229, %v313
      %317 = vst.msk [vmem:[%s315] ss:$8 sm:$0x0] %vm229, %v313
      %v318 = vld [vmem:[%s293] ss:$4 sm:$0xf]
      %320 = vrot.lane.b32.xlu0 %v318, 127
      %v321 = vpop.permute.xlu0 %320
      %v322 = vrot.slane %v321, 1
      %v323 = vsel %vm252, %v321, %v322
      %s325 = scalar_lea.vmem [#allocation2], 37
      %326 = vst.msk [vmem:[%s325] ss:$8 sm:$0xf] %vm229, %v323
      %327 = vst.msk [vmem:[%s325] ss:$8 sm:$0x0] %vm229, %v323
      %v328 = vld [vmem:[%s298] ss:$4 sm:$0xf]
      %330 = vrot.lane.b32.xlu0 %v328, 127
      %v331 = vpop.permute.xlu0 %330
      %v332 = vrot.slane %v331, 1
      %v333 = vsel %vm252, %v331, %v332
      %s335 = scalar_lea.vmem [#allocation2], 38
      %336 = vst.msk [vmem:[%s335] ss:$8 sm:$0xf] %vm229, %v333
      %337 = vst.msk [vmem:[%s335] ss:$8 sm:$0x0] %vm229, %v333
      %v338 = vld [vmem:[%s303] ss:$4 sm:$0xf]
      %340 = vrot.lane.b32.xlu0 %v338, 127
      %v341 = vpop.permute.xlu0 %340
      %v342 = vrot.slane %v341, 1
      %v343 = vsel %vm252, %v341, %v342
      %s345 = scalar_lea.vmem [#allocation2], 39
      %346 = vst.msk [vmem:[%s345] ss:$8 sm:$0xf] %vm229, %v343
      %347 = vst.msk [vmem:[%s345] ss:$8 sm:$0x0] %vm229, %v343
      %s348 = scalar_lea.vmem %s219, 32
      %v349 = vld [vmem:[%s348] ss:$4 sm:$0xf]
      %s350 = scalar_lea.vmem [#allocation2], 64
      %351 = vst.msk [vmem:[%s350] ss:$8 sm:$0xf] %vm229, %v349
      %352 = vst.msk [vmem:[%s350] ss:$8 sm:$0x0] %vm229, %v349
      %s353 = scalar_lea.vmem %s348, 1
      %v354 = vld [vmem:[%s353] ss:$4 sm:$0xf]
      %s355 = scalar_lea.vmem [#allocation2], 65
      %356 = vst.msk [vmem:[%s355] ss:$8 sm:$0xf] %vm229, %v354
      %357 = vst.msk [vmem:[%s355] ss:$8 sm:$0x0] %vm229, %v354
      %s358 = scalar_lea.vmem %s348, 2
      %v359 = vld [vmem:[%s358] ss:$4 sm:$0xf]
      %s360 = scalar_lea.vmem [#allocation2], 66
      %361 = vst.msk [vmem:[%s360] ss:$8 sm:$0xf] %vm229, %v359
      %362 = vst.msk [vmem:[%s360] ss:$8 sm:$0x0] %vm229, %v359
      %s363 = scalar_lea.vmem %s348, 3
      %v364 = vld [vmem:[%s363] ss:$4 sm:$0xf]
      %s365 = scalar_lea.vmem [#allocation2], 67
      %366 = vst.msk [vmem:[%s365] ss:$8 sm:$0xf] %vm229, %v364
      %367 = vst.msk [vmem:[%s365] ss:$8 sm:$0x0] %vm229, %v364
      %v368 = vld [vmem:[%s348] ss:$4 sm:$0xf]
      %370 = vrot.lane.b32.xlu0 %v368, 127
      %v371 = vpop.permute.xlu0 %370
      %v372 = vrot.slane %v371, 1
      %v373 = vsel %vm252, %v371, %v372
      %s375 = scalar_lea.vmem [#allocation2], 68
      %376 = vst.msk [vmem:[%s375] ss:$8 sm:$0xf] %vm229, %v373
      %377 = vst.msk [vmem:[%s375] ss:$8 sm:$0x0] %vm229, %v373
      %v378 = vld [vmem:[%s353] ss:$4 sm:$0xf]
      %380 = vrot.lane.b32.xlu0 %v378, 127
      %v381 = vpop.permute.xlu0 %380
      %v382 = vrot.slane %v381, 1
      %v383 = vsel %vm252, %v381, %v382
      %s385 = scalar_lea.vmem [#allocation2], 69
      %386 = vst.msk [vmem:[%s385] ss:$8 sm:$0xf] %vm229, %v383
      %387 = vst.msk [vmem:[%s385] ss:$8 sm:$0x0] %vm229, %v383
      %v388 = vld [vmem:[%s358] ss:$4 sm:$0xf]
      %390 = vrot.lane.b32.xlu0 %v388, 127
      %v391 = vpop.permute.xlu0 %390
      %v392 = vrot.slane %v391, 1
      %v393 = vsel %vm252, %v391, %v392
      %s395 = scalar_lea.vmem [#allocation2], 70
      %396 = vst.msk [vmem:[%s395] ss:$8 sm:$0xf] %vm229, %v393
      %397 = vst.msk [vmem:[%s395] ss:$8 sm:$0x0] %vm229, %v393
      %v398 = vld [vmem:[%s363] ss:$4 sm:$0xf]
      %400 = vrot.lane.b32.xlu0 %v398, 127
      %v401 = vpop.permute.xlu0 %400
      %v402 = vrot.slane %v401, 1
      %v403 = vsel %vm252, %v401, %v402
      %s405 = scalar_lea.vmem [#allocation2], 71
      %406 = vst.msk [vmem:[%s405] ss:$8 sm:$0xf] %vm229, %v403
      %407 = vst.msk [vmem:[%s405] ss:$8 sm:$0x0] %vm229, %v403
      %s408 = scalar_lea.vmem %s219, 48
      %v409 = vld [vmem:[%s408] ss:$4 sm:$0xf]
      %s410 = scalar_lea.vmem [#allocation2], 96
      %411 = vst.msk [vmem:[%s410] ss:$8 sm:$0xf] %vm229, %v409
      %412 = vst.msk [vmem:[%s410] ss:$8 sm:$0x0] %vm229, %v409
      %s413 = scalar_lea.vmem %s408, 1
      %v414 = vld [vmem:[%s413] ss:$4 sm:$0xf]
      %s415 = scalar_lea.vmem [#allocation2], 97
      %416 = vst.msk [vmem:[%s415] ss:$8 sm:$0xf] %vm229, %v414
      %417 = vst.msk [vmem:[%s415] ss:$8 sm:$0x0] %vm229, %v414
      %s418 = scalar_lea.vmem %s408, 2
      %v419 = vld [vmem:[%s418] ss:$4 sm:$0xf]
      %s420 = scalar_lea.vmem [#allocation2], 98
      %421 = vst.msk [vmem:[%s420] ss:$8 sm:$0xf] %vm229, %v419
      %422 = vst.msk [vmem:[%s420] ss:$8 sm:$0x0] %vm229, %v419
      %s423 = scalar_lea.vmem %s408, 3
      %v424 = vld [vmem:[%s423] ss:$4 sm:$0xf]
      %s425 = scalar_lea.vmem [#allocation2], 99
      %426 = vst.msk [vmem:[%s425] ss:$8 sm:$0xf] %vm229, %v424
      %427 = vst.msk [vmem:[%s425] ss:$8 sm:$0x0] %vm229, %v424
      %v428 = vld [vmem:[%s408] ss:$4 sm:$0xf]
      %430 = vrot.lane.b32.xlu0 %v428, 127
      %v431 = vpop.permute.xlu0 %430
      %v432 = vrot.slane %v431, 1
      %v433 = vsel %vm252, %v431, %v432
      %s435 = scalar_lea.vmem [#allocation2], 100
      %436 = vst.msk [vmem:[%s435] ss:$8 sm:$0xf] %vm229, %v433
      %437 = vst.msk [vmem:[%s435] ss:$8 sm:$0x0] %vm229, %v433
      %v438 = vld [vmem:[%s413] ss:$4 sm:$0xf]
      %440 = vrot.lane.b32.xlu0 %v438, 127
      %v441 = vpop.permute.xlu0 %440
      %v442 = vrot.slane %v441, 1
      %v443 = vsel %vm252, %v441, %v442
      %s445 = scalar_lea.vmem [#allocation2], 101
      %446 = vst.msk [vmem:[%s445] ss:$8 sm:$0xf] %vm229, %v443
      %447 = vst.msk [vmem:[%s445] ss:$8 sm:$0x0] %vm229, %v443
      %v448 = vld [vmem:[%s418] ss:$4 sm:$0xf]
      %450 = vrot.lane.b32.xlu0 %v448, 127
      %v451 = vpop.permute.xlu0 %450
      %v452 = vrot.slane %v451, 1
      %v453 = vsel %vm252, %v451, %v452
      %s455 = scalar_lea.vmem [#allocation2], 102
      %456 = vst.msk [vmem:[%s455] ss:$8 sm:$0xf] %vm229, %v453
      %457 = vst.msk [vmem:[%s455] ss:$8 sm:$0x0] %vm229, %v453
      %v458 = vld [vmem:[%s423] ss:$4 sm:$0xf]
      %460 = vrot.lane.b32.xlu0 %v458, 127
      %v461 = vpop.permute.xlu0 %460
      %v462 = vrot.slane %v461, 1
      %v463 = vsel %vm252, %v461, %v462
      %s465 = scalar_lea.vmem [#allocation2], 103
      %466 = vst.msk [vmem:[%s465] ss:$8 sm:$0xf] %vm229, %v463
      %467 = vst.msk [vmem:[%s465] ss:$8 sm:$0x0] %vm229, %v463
      %v468 = vld [vmem:[%s219] ss:$4 sm:$0xf]
      %470 = vrot.lane.b32.xlu0 %v468, 106
      %v471 = vpop.permute.xlu0 %470
      %v472 = vrot.slane %v471, 1
      %vm473 = vcmask 867328
      %v474 = vsel %vm473, %v471, %v472
      %s476 = scalar_lea.vmem [#allocation2], 128
      %477 = vst.msk [vmem:[%s476] ss:$8 sm:$0xf] %vm229, %v474
      %478 = vst.msk [vmem:[%s476] ss:$8 sm:$0x0] %vm229, %v474
      %v479 = vld [vmem:[%s232] ss:$4 sm:$0xf]
      %481 = vrot.lane.b32.xlu0 %v479, 106
      %v482 = vpop.permute.xlu0 %481
      %v483 = vrot.slane %v482, 1
      %v484 = vsel %vm473, %v482, %v483
      %s486 = scalar_lea.vmem [#allocation2], 129
      %487 = vst.msk [vmem:[%s486] ss:$8 sm:$0xf] %vm229, %v484
      %488 = vst.msk [vmem:[%s486] ss:$8 sm:$0x0] %vm229, %v484
      %v489 = vld [vmem:[%s237] ss:$4 sm:$0xf]
      %491 = vrot.lane.b32.xlu0 %v489, 106
      %v492 = vpop.permute.xlu0 %491
      %v493 = vrot.slane %v492, 1
      %v494 = vsel %vm473, %v492, %v493
      %s496 = scalar_lea.vmem [#allocation2], 130
      %497 = vst.msk [vmem:[%s496] ss:$8 sm:$0xf] %vm229, %v494
      %498 = vst.msk [vmem:[%s496] ss:$8 sm:$0x0] %vm229, %v494
      %v499 = vld [vmem:[%s242] ss:$4 sm:$0xf]
      %501 = vrot.lane.b32.xlu0 %v499, 106
      %v502 = vpop.permute.xlu0 %501
      %v503 = vrot.slane %v502, 1
      %v504 = vsel %vm473, %v502, %v503
      %s506 = scalar_lea.vmem [#allocation2], 131
      %507 = vst.msk [vmem:[%s506] ss:$8 sm:$0xf] %vm229, %v504
      %508 = vst.msk [vmem:[%s506] ss:$8 sm:$0x0] %vm229, %v504
      %v509 = vld [vmem:[%s219] ss:$4 sm:$0xf]
      %511 = vrot.lane.b32.xlu0 %v509, 105
      %v512 = vpop.permute.xlu0 %511
      %v513 = vrot.slane %v512, 1
      %vm514 = vcmask 859136
      %v515 = vsel %vm514, %v512, %v513
      %s517 = scalar_lea.vmem [#allocation2], 132
      %518 = vst.msk [vmem:[%s517] ss:$8 sm:$0xf] %vm229, %v515
      %519 = vst.msk [vmem:[%s517] ss:$8 sm:$0x0] %vm229, %v515
      %v520 = vld [vmem:[%s232] ss:$4 sm:$0xf]
      %522 = vrot.lane.b32.xlu0 %v520, 105
      %v523 = vpop.permute.xlu0 %522
      %v524 = vrot.slane %v523, 1
      %v525 = vsel %vm514, %v523, %v524
      %s527 = scalar_lea.vmem [#allocation2], 133
      %528 = vst.msk [vmem:[%s527] ss:$8 sm:$0xf] %vm229, %v525
      %529 = vst.msk [vmem:[%s527] ss:$8 sm:$0x0] %vm229, %v525
      %v530 = vld [vmem:[%s237] ss:$4 sm:$0xf]
      %532 = vrot.lane.b32.xlu0 %v530, 105
      %v533 = vpop.permute.xlu0 %532
      %v534 = vrot.slane %v533, 1
      %v535 = vsel %vm514, %v533, %v534
      %s537 = scalar_lea.vmem [#allocation2], 134
      %538 = vst.msk [vmem:[%s537] ss:$8 sm:$0xf] %vm229, %v535
      %539 = vst.msk [vmem:[%s537] ss:$8 sm:$0x0] %vm229, %v535
      %v540 = vld [vmem:[%s242] ss:$4 sm:$0xf]
      %542 = vrot.lane.b32.xlu0 %v540, 105
      %v543 = vpop.permute.xlu0 %542
      %v544 = vrot.slane %v543, 1
      %v545 = vsel %vm514, %v543, %v544
      %s547 = scalar_lea.vmem [#allocation2], 135
      %548 = vst.msk [vmem:[%s547] ss:$8 sm:$0xf] %vm229, %v545
      %549 = vst.msk [vmem:[%s547] ss:$8 sm:$0x0] %vm229, %v545
      %v550 = vld [vmem:[%s288] ss:$4 sm:$0xf]
      %552 = vrot.lane.b32.xlu0 %v550, 106
      %v553 = vpop.permute.xlu0 %552
      %v554 = vrot.slane %v553, 1
      %v555 = vsel %vm473, %v553, %v554
      %s557 = scalar_lea.vmem [#allocation2], 160
      %558 = vst.msk [vmem:[%s557] ss:$8 sm:$0xf] %vm229, %v555
      %559 = vst.msk [vmem:[%s557] ss:$8 sm:$0x0] %vm229, %v555
      %v560 = vld [vmem:[%s293] ss:$4 sm:$0xf]
      %562 = vrot.lane.b32.xlu0 %v560, 106
      %v563 = vpop.permute.xlu0 %562
      %v564 = vrot.slane %v563, 1
      %v565 = vsel %vm473, %v563, %v564
      %s567 = scalar_lea.vmem [#allocation2], 161
      %568 = vst.msk [vmem:[%s567] ss:$8 sm:$0xf] %vm229, %v565
      %569 = vst.msk [vmem:[%s567] ss:$8 sm:$0x0] %vm229, %v565
      %v570 = vld [vmem:[%s298] ss:$4 sm:$0xf]
      %572 = vrot.lane.b32.xlu0 %v570, 106
      %v573 = vpop.permute.xlu0 %572
      %v574 = vrot.slane %v573, 1
      %v575 = vsel %vm473, %v573, %v574
      %s577 = scalar_lea.vmem [#allocation2], 162
      %578 = vst.msk [vmem:[%s577] ss:$8 sm:$0xf] %vm229, %v575
      %579 = vst.msk [vmem:[%s577] ss:$8 sm:$0x0] %vm229, %v575
      %v580 = vld [vmem:[%s303] ss:$4 sm:$0xf]
      %582 = vrot.lane.b32.xlu0 %v580, 106
      %v583 = vpop.permute.xlu0 %582
      %v584 = vrot.slane %v583, 1
      %v585 = vsel %vm473, %v583, %v584
      %s587 = scalar_lea.vmem [#allocation2], 163
      %588 = vst.msk [vmem:[%s587] ss:$8 sm:$0xf] %vm229, %v585
      %589 = vst.msk [vmem:[%s587] ss:$8 sm:$0x0] %vm229, %v585
      %v590 = vld [vmem:[%s288] ss:$4 sm:$0xf]
      %592 = vrot.lane.b32.xlu0 %v590, 105
      %v593 = vpop.permute.xlu0 %592
      %v594 = vrot.slane %v593, 1
      %v595 = vsel %vm514, %v593, %v594
      %s597 = scalar_lea.vmem [#allocation2], 164
      %598 = vst.msk [vmem:[%s597] ss:$8 sm:$0xf] %vm229, %v595
      %599 = vst.msk [vmem:[%s597] ss:$8 sm:$0x0] %vm229, %v595
      %v600 = vld [vmem:[%s293] ss:$4 sm:$0xf]
      %602 = vrot.lane.b32.xlu0 %v600, 105
      %v603 = vpop.permute.xlu0 %602
      %v604 = vrot.slane %v603, 1
      %v605 = vsel %vm514, %v603, %v604
      %s607 = scalar_lea.vmem [#allocation2], 165
      %608 = vst.msk [vmem:[%s607] ss:$8 sm:$0xf] %vm229, %v605
      %609 = vst.msk [vmem:[%s607] ss:$8 sm:$0x0] %vm229, %v605
      %v610 = vld [vmem:[%s298] ss:$4 sm:$0xf]
      %612 = vrot.lane.b32.xlu0 %v610, 105
      %v613 = vpop.permute.xlu0 %612
      %v614 = vrot.slane %v613, 1
      %v615 = vsel %vm514, %v613, %v614
      %s617 = scalar_lea.vmem [#allocation2], 166
      %618 = vst.msk [vmem:[%s617] ss:$8 sm:$0xf] %vm229, %v615
      %619 = vst.msk [vmem:[%s617] ss:$8 sm:$0x0] %vm229, %v615
      %v620 = vld [vmem:[%s303] ss:$4 sm:$0xf]
      %622 = vrot.lane.b32.xlu0 %v620, 105
      %v623 = vpop.permute.xlu0 %622
      %v624 = vrot.slane %v623, 1
      %v625 = vsel %vm514, %v623, %v624
      %s627 = scalar_lea.vmem [#allocation2], 167
      %628 = vst.msk [vmem:[%s627] ss:$8 sm:$0xf] %vm229, %v625
      %629 = vst.msk [vmem:[%s627] ss:$8 sm:$0x0] %vm229, %v625
      %v630 = vld [vmem:[%s348] ss:$4 sm:$0xf]
      %632 = vrot.lane.b32.xlu0 %v630, 106
      %v633 = vpop.permute.xlu0 %632
      %v634 = vrot.slane %v633, 1
      %v635 = vsel %vm473, %v633, %v634
      %s637 = scalar_lea.vmem [#allocation2], 192
      %638 = vst.msk [vmem:[%s637] ss:$8 sm:$0xf] %vm229, %v635
      %639 = vst.msk [vmem:[%s637] ss:$8 sm:$0x0] %vm229, %v635
      %v640 = vld [vmem:[%s353] ss:$4 sm:$0xf]
      %642 = vrot.lane.b32.xlu0 %v640, 106
      %v643 = vpop.permute.xlu0 %642
      %v644 = vrot.slane %v643, 1
      %v645 = vsel %vm473, %v643, %v644
      %s647 = scalar_lea.vmem [#allocation2], 193
      %648 = vst.msk [vmem:[%s647] ss:$8 sm:$0xf] %vm229, %v645
      %649 = vst.msk [vmem:[%s647] ss:$8 sm:$0x0] %vm229, %v645
      %v650 = vld [vmem:[%s358] ss:$4 sm:$0xf]
      %652 = vrot.lane.b32.xlu0 %v650, 106
      %v653 = vpop.permute.xlu0 %652
      %v654 = vrot.slane %v653, 1
      %v655 = vsel %vm473, %v653, %v654
      %s657 = scalar_lea.vmem [#allocation2], 194
      %658 = vst.msk [vmem:[%s657] ss:$8 sm:$0xf] %vm229, %v655
      %659 = vst.msk [vmem:[%s657] ss:$8 sm:$0x0] %vm229, %v655
      %v660 = vld [vmem:[%s363] ss:$4 sm:$0xf]
      %662 = vrot.lane.b32.xlu0 %v660, 106
      %v663 = vpop.permute.xlu0 %662
      %v664 = vrot.slane %v663, 1
      %v665 = vsel %vm473, %v663, %v664
      %s667 = scalar_lea.vmem [#allocation2], 195
      %668 = vst.msk [vmem:[%s667] ss:$8 sm:$0xf] %vm229, %v665
      %669 = vst.msk [vmem:[%s667] ss:$8 sm:$0x0] %vm229, %v665
      %v670 = vld [vmem:[%s348] ss:$4 sm:$0xf]
      %672 = vrot.lane.b32.xlu0 %v670, 105
      %v673 = vpop.permute.xlu0 %672
      %v674 = vrot.slane %v673, 1
      %v675 = vsel %vm514, %v673, %v674
      %s677 = scalar_lea.vmem [#allocation2], 196
      %678 = vst.msk [vmem:[%s677] ss:$8 sm:$0xf] %vm229, %v675
      %679 = vst.msk [vmem:[%s677] ss:$8 sm:$0x0] %vm229, %v675
      %v680 = vld [vmem:[%s353] ss:$4 sm:$0xf]
      %682 = vrot.lane.b32.xlu0 %v680, 105
      %v683 = vpop.permute.xlu0 %682
      %v684 = vrot.slane %v683, 1
      %v685 = vsel %vm514, %v683, %v684
      %s687 = scalar_lea.vmem [#allocation2], 197
      %688 = vst.msk [vmem:[%s687] ss:$8 sm:$0xf] %vm229, %v685
      %689 = vst.msk [vmem:[%s687] ss:$8 sm:$0x0] %vm229, %v685
      %v690 = vld [vmem:[%s358] ss:$4 sm:$0xf]
      %692 = vrot.lane.b32.xlu0 %v690, 105
      %v693 = vpop.permute.xlu0 %692
      %v694 = vrot.slane %v693, 1
      %v695 = vsel %vm514, %v693, %v694
      %s697 = scalar_lea.vmem [#allocation2], 198
      %698 = vst.msk [vmem:[%s697] ss:$8 sm:$0xf] %vm229, %v695
      %699 = vst.msk [vmem:[%s697] ss:$8 sm:$0x0] %vm229, %v695
      %v700 = vld [vmem:[%s363] ss:$4 sm:$0xf]
      %702 = vrot.lane.b32.xlu0 %v700, 105
      %v703 = vpop.permute.xlu0 %702
      %v704 = vrot.slane %v703, 1
      %v705 = vsel %vm514, %v703, %v704
      %s707 = scalar_lea.vmem [#allocation2], 199
      %708 = vst.msk [vmem:[%s707] ss:$8 sm:$0xf] %vm229, %v705
      %709 = vst.msk [vmem:[%s707] ss:$8 sm:$0x0] %vm229, %v705
      %v710 = vld [vmem:[%s408] ss:$4 sm:$0xf]
      %712 = vrot.lane.b32.xlu0 %v710, 106
      %v713 = vpop.permute.xlu0 %712
      %v714 = vrot.slane %v713, 1
      %v715 = vsel %vm473, %v713, %v714
      %s717 = scalar_lea.vmem [#allocation2], 224
      %718 = vst.msk [vmem:[%s717] ss:$8 sm:$0xf] %vm229, %v715
      %719 = vst.msk [vmem:[%s717] ss:$8 sm:$0x0] %vm229, %v715
      %v720 = vld [vmem:[%s413] ss:$4 sm:$0xf]
      %722 = vrot.lane.b32.xlu0 %v720, 106
      %v723 = vpop.permute.xlu0 %722
      %v724 = vrot.slane %v723, 1
      %v725 = vsel %vm473, %v723, %v724
      %s727 = scalar_lea.vmem [#allocation2], 225
      %728 = vst.msk [vmem:[%s727] ss:$8 sm:$0xf] %vm229, %v725
      %729 = vst.msk [vmem:[%s727] ss:$8 sm:$0x0] %vm229, %v725
      %v730 = vld [vmem:[%s418] ss:$4 sm:$0xf]
      %732 = vrot.lane.b32.xlu0 %v730, 106
      %v733 = vpop.permute.xlu0 %732
      %v734 = vrot.slane %v733, 1
      %v735 = vsel %vm473, %v733, %v734
      %s737 = scalar_lea.vmem [#allocation2], 226
      %738 = vst.msk [vmem:[%s737] ss:$8 sm:$0xf] %vm229, %v735
      %739 = vst.msk [vmem:[%s737] ss:$8 sm:$0x0] %vm229, %v735
      %v740 = vld [vmem:[%s423] ss:$4 sm:$0xf]
      %742 = vrot.lane.b32.xlu0 %v740, 106
      %v743 = vpop.permute.xlu0 %742
      %v744 = vrot.slane %v743, 1
      %v745 = vsel %vm473, %v743, %v744
      %s747 = scalar_lea.vmem [#allocation2], 227
      %748 = vst.msk [vmem:[%s747] ss:$8 sm:$0xf] %vm229, %v745
      %749 = vst.msk [vmem:[%s747] ss:$8 sm:$0x0] %vm229, %v745
      %v750 = vld [vmem:[%s408] ss:$4 sm:$0xf]
      %752 = vrot.lane.b32.xlu0 %v750, 105
      %v753 = vpop.permute.xlu0 %752
      %v754 = vrot.slane %v753, 1
      %v755 = vsel %vm514, %v753, %v754
      %s757 = scalar_lea.vmem [#allocation2], 228
      %758 = vst.msk [vmem:[%s757] ss:$8 sm:$0xf] %vm229, %v755
      %759 = vst.msk [vmem:[%s757] ss:$8 sm:$0x0] %vm229, %v755
      %v760 = vld [vmem:[%s413] ss:$4 sm:$0xf]
      %762 = vrot.lane.b32.xlu0 %v760, 105
      %v763 = vpop.permute.xlu0 %762
      %v764 = vrot.slane %v763, 1
      %v765 = vsel %vm514, %v763, %v764
      %s767 = scalar_lea.vmem [#allocation2], 229
      %768 = vst.msk [vmem:[%s767] ss:$8 sm:$0xf] %vm229, %v765
      %769 = vst.msk [vmem:[%s767] ss:$8 sm:$0x0] %vm229, %v765
      %v770 = vld [vmem:[%s418] ss:$4 sm:$0xf]
      %772 = vrot.lane.b32.xlu0 %v770, 105
      %v773 = vpop.permute.xlu0 %772
      %v774 = vrot.slane %v773, 1
      %v775 = vsel %vm514, %v773, %v774
      %s777 = scalar_lea.vmem [#allocation2], 230
      %778 = vst.msk [vmem:[%s777] ss:$8 sm:$0xf] %vm229, %v775
      %779 = vst.msk [vmem:[%s777] ss:$8 sm:$0x0] %vm229, %v775
      %v780 = vld [vmem:[%s423] ss:$4 sm:$0xf]
      %782 = vrot.lane.b32.xlu0 %v780, 105
      %v783 = vpop.permute.xlu0 %782
      %v784 = vrot.slane %v783, 1
      %v785 = vsel %vm514, %v783, %v784
      %s787 = scalar_lea.vmem [#allocation2], 231
      %788 = vst.msk [vmem:[%s787] ss:$8 sm:$0xf] %vm229, %v785
      %789 = vst.msk [vmem:[%s787] ss:$8 sm:$0x0] %vm229, %v785
      %v790 = vld [vmem:[%s1] sm:$0xff]
      %v791 = vld [vmem:[%s1 + $0x8] sm:$0xff]
      %v792 = vld [vmem:[%s1 + $0x10] sm:$0xff]
      %v793 = vld [vmem:[%s1 + $0x18] sm:$0xff]
      %v794 = vld [vmem:[%s1 + $0x20] sm:$0xff]
      %v795 = vld [vmem:[%s1 + $0x28] sm:$0xff]
      %v796 = vld [vmem:[%s1 + $0x30] sm:$0xff]
      %v797 = vld [vmem:[%s1 + $0x38] sm:$0xff]
      %v798 = vld [vmem:[%s1 + $0x40] sm:$0xff]
      %v799 = vld [vmem:[%s1 + $0x48] sm:$0xff]
      %v800 = vld [vmem:[%s1 + $0x50] sm:$0xff]
      %v801 = vld [vmem:[%s1 + $0x58] sm:$0xff]
      %v802 = vld [vmem:[#allocation2] sm:$0xff]
      %v803 = vld [vmem:[#allocation2 + $0x8] sm:$0xff]
      %v804 = vld [vmem:[#allocation2 + $0x10] sm:$0xff]
      %v805 = vld [vmem:[#allocation2 + $0x18] sm:$0xff]
      %v806 = vld [vmem:[#allocation2 + $0x20] sm:$0xff]
      %v807 = vld [vmem:[#allocation2 + $0x28] sm:$0xff]
      %v808 = vld [vmem:[#allocation2 + $0x30] sm:$0xff]
      %v809 = vld [vmem:[#allocation2 + $0x38] sm:$0xff]
      %v810 = vld [vmem:[#allocation2 + $0x40] sm:$0xff]
      %v811 = vld [vmem:[#allocation2 + $0x48] sm:$0xff]
      %v812 = vld [vmem:[#allocation2 + $0x50] sm:$0xff]
      %v813 = vld [vmem:[#allocation2 + $0x58] sm:$0xff]
      %v814 = vld [vmem:[#allocation2 + $0x60] sm:$0xff]
      %v815 = vld [vmem:[#allocation2 + $0x68] sm:$0xff]
      %v816 = vld [vmem:[#allocation2 + $0x70] sm:$0xff]
      %v817 = vld [vmem:[#allocation2 + $0x78] sm:$0xff]
      %v818 = vld [vmem:[#allocation2 + $0x80] sm:$0xff]
      %v819 = vld [vmem:[#allocation2 + $0x88] sm:$0xff]
      %v820 = vld [vmem:[#allocation2 + $0x90] sm:$0xff]
      %v821 = vld [vmem:[#allocation2 + $0x98] sm:$0xff]
      %v822 = vld [vmem:[#allocation2 + $0xa0] sm:$0xff]
      %v823 = vld [vmem:[#allocation2 + $0xa8] sm:$0xff]
      %v824 = vld [vmem:[#allocation2 + $0xb0] sm:$0xff]
      %v825 = vld [vmem:[#allocation2 + $0xb8] sm:$0xff]
      %v826 = vld [vmem:[#allocation2 + $0xc0] sm:$0xff]
      %v827 = vld [vmem:[#allocation2 + $0xc8] sm:$0xff]
      %v828 = vld [vmem:[#allocation2 + $0xd0] sm:$0xff]
      %v829 = vld [vmem:[#allocation2 + $0xd8] sm:$0xff]
      %v830 = vld [vmem:[#allocation2 + $0xe0] sm:$0xff]
      %v831 = vld [vmem:[#allocation2 + $0xe8] sm:$0xff]
      %v832 = vld [vmem:[#allocation2 + $0xf0] sm:$0xff]
      %v833 = vld [vmem:[#allocation2 + $0xf8] sm:$0xff]
      %vm834 = vcmask 523264
      %v836 = vsel %vm834, %v790, 0
      %v839 = vsel %vm834, %v791, 0
      %v842 = vsel %vm834, %v792, 0
      %v845 = vsel %vm834, %v793, 0
      %v848 = vsel %vm834, %v794, 0
      %v851 = vsel %vm834, %v795, 0
      %v854 = vsel %vm834, %v796, 0
      %v857 = vsel %vm834, %v797, 0
      %v860 = vsel %vm834, %v798, 0
      %v863 = vsel %vm834, %v799, 0
      %v866 = vsel %vm834, %v800, 0
      %v869 = vsel %vm834, %v801, 0
      %871 = vmatprep.subr.mxu0 %v803
      %872 = vmatpush1.msra.mxu0 %v802
      %873 = vmatprep.subr.mxu0 %v807
      %874 = vmatpush1.msra.mxu0 %v806
      %875 = vmatprep.subr.mxu0 %v811
      %876 = vmatpush1.msra.mxu0 %v810
      %877 = vmatprep.subr.mxu0 %v815
      %878 = vmatpush1.msra.mxu0 %v814
      %879 = vmatprep.subr.mxu0 %v819
      %880 = vmatpush1.msra.mxu0 %v818
      %881 = vmatprep.subr.mxu0 %v823
      %882 = vmatpush1.msra.mxu0 %v822
      %883 = vmatprep.subr.mxu0 %v827
      %884 = vmatpush1.msra.mxu0 %v826
      %885 = vmatprep.subr.mxu0 %v831
      %886 = vmatpush1.msra.mxu0 %v830
      %887 = vmatprep.subr.mxu0 0.0
      %888 = vmatpush1.msra.mxu0 0.0
      %889 = vmatprep.subr.mxu0 0.0
      %890 = vmatpush1.msra.mxu0 0.0
      %891 = vmatprep.subr.mxu0 0.0
      %892 = vmatpush1.msra.mxu0 0.0
      %893 = vmatprep.subr.mxu0 0.0
      %894 = vmatpush1.msra.mxu0 0.0
      %895 = vmatprep.subr.mxu0 0.0
      %896 = vmatpush1.msra.mxu0 0.0
      %897 = vmatprep.subr.mxu0 0.0
      %898 = vmatpush1.msra.mxu0 0.0
      %899 = vmatprep.subr.mxu0 0.0
      %900 = vmatpush1.msra.mxu0 0.0
      %901 = vmatprep.subr.mxu0 0.0
      %902 = vmatpush1.msra.mxu0 0.0
      %903 = vmatprep.subr.mxu0 0.0
      %904 = vmatpush1.msra.mxu0 0.0
      %905 = vmatprep.subr.mxu0 0.0
      %906 = vmatpush1.msra.mxu0 0.0
      %907 = vmatprep.subr.mxu0 0.0
      %908 = vmatpush1.msra.mxu0 0.0
      %909 = vmatprep.subr.mxu0 0.0
      %910 = vmatpush1.msra.mxu0 0.0
      %911 = vmatprep.subr.mxu0 0.0
      %912 = vmatpush1.msra.mxu0 0.0
      %913 = vmatprep.subr.mxu0 0.0
      %914 = vmatpush1.msra.mxu0 0.0
      %915 = vmatprep.subr.mxu0 0.0
      %916 = vmatpush1.msra.mxu0 0.0
      %917 = vmatprep.subr.mxu0 0.0
      %918 = vmatpush1.msra.mxu0 0.0
      %919 = vmatprep.subr.mxu0 0.0
      %920 = vmatpush1.msra.mxu0 0.0
      %921 = vmatprep.subr.mxu0 0.0
      %922 = vmatpush1.msra.mxu0 0.0
      %923 = vmatprep.subr.mxu0 0.0
      %924 = vmatpush1.msra.mxu0 0.0
      %925 = vmatprep.subr.mxu0 0.0
      %926 = vmatpush1.msra.mxu0 0.0
      %927 = vmatprep.subr.mxu0 0.0
      %928 = vmatpush1.msra.mxu0 0.0
      %929 = vmatprep.subr.mxu0 0.0
      %930 = vmatpush1.msra.mxu0 0.0
      %931 = vmatprep.subr.mxu0 0.0
      %932 = vmatpush1.msra.mxu0 0.0
      %933 = vmatprep.subr.mxu0 0.0
      %934 = vmatpush1.msra.mxu0 0.0
      %935 = vmatprep.mubr.f32.mxu0 0.0
      %936 = vmatmul.mubr.f32.gmra.mrb[0].mxu0 %v836
      %v937 = vpop.f32.mrb[0].mxu0
      %v938 = vadd.f32 0.0, %v937
      %v939 = vpop.f32.mrb[0].mxu0
      %v940 = vadd.f32 0.0, %v939
      %941 = vmatprep.mubr.f32.mxu0 0.0
      %942 = vmatmul.mubr.f32.gmra.mrb[0].mxu0 %v839
      %v943 = vpop.f32.mrb[0].mxu0
      %v944 = vadd.f32 0.0, %v943
      %v945 = vpop.f32.mrb[0].mxu0
      %v946 = vadd.f32 0.0, %v945
      %947 = vmatprep.mubr.f32.mxu0 0.0
      %948 = vmatmul.mubr.f32.gmra.mrb[0].mxu0 %v842
      %v949 = vpop.f32.mrb[0].mxu0
      %v950 = vadd.f32 0.0, %v949
      %v951 = vpop.f32.mrb[0].mxu0
      %v952 = vadd.f32 0.0, %v951
      %953 = vmatprep.mubr.f32.mxu0 0.0
      %954 = vmatmul.mubr.f32.gmra.mrb[0].mxu0 %v845
      %v955 = vpop.f32.mrb[0].mxu0
      %v956 = vadd.f32 0.0, %v955
      %v957 = vpop.f32.mrb[0].mxu0
      %v958 = vadd.f32 0.0, %v957
      %959 = vmatprep.mubr.f32.mxu0 0.0
      %960 = vmatmul.mubr.f32.gmra.mrb[0].mxu0 %v848
      %v961 = vpop.f32.mrb[0].mxu0
      %v962 = vadd.f32 0.0, %v961
      %v963 = vpop.f32.mrb[0].mxu0
      %v964 = vadd.f32 0.0, %v963
      %965 = vmatprep.mubr.f32.mxu0 0.0
      %966 = vmatmul.mubr.f32.gmra.mrb[0].mxu0 %v851
      %v967 = vpop.f32.mrb[0].mxu0
      %v968 = vadd.f32 0.0, %v967
      %v969 = vpop.f32.mrb[0].mxu0
      %v970 = vadd.f32 0.0, %v969
      %971 = vmatprep.mubr.f32.mxu0 0.0
      %972 = vmatmul.mubr.f32.gmra.mrb[0].mxu0 %v854
      %v973 = vpop.f32.mrb[0].mxu0
      %v974 = vadd.f32 0.0, %v973
      %v975 = vpop.f32.mrb[0].mxu0
      %v976 = vadd.f32 0.0, %v975
      %977 = vmatprep.mubr.f32.mxu0 0.0
      %978 = vmatmul.mubr.f32.gmra.mrb[0].mxu0 %v857
      %v979 = vpop.f32.mrb[0].mxu0
      %v980 = vadd.f32 0.0, %v979
      %v981 = vpop.f32.mrb[0].mxu0
      %v982 = vadd.f32 0.0, %v981
      %983 = vmatprep.mubr.f32.mxu0 0.0
      %984 = vmatmul.mubr.f32.gmra.mrb[0].mxu0 %v860
      %v985 = vpop.f32.mrb[0].mxu0
      %v986 = vadd.f32 0.0, %v985
      %v987 = vpop.f32.mrb[0].mxu0
      %v988 = vadd.f32 0.0, %v987
      %989 = vmatprep.mubr.f32.mxu0 0.0
      %990 = vmatmul.mubr.f32.gmra.mrb[0].mxu0 %v863
      %v991 = vpop.f32.mrb[0].mxu0
      %v992 = vadd.f32 0.0, %v991
      %v993 = vpop.f32.mrb[0].mxu0
      %v994 = vadd.f32 0.0, %v993
      %995 = vmatprep.mubr.f32.mxu0 0.0
      %996 = vmatmul.mubr.f32.gmra.mrb[0].mxu0 %v866
      %v997 = vpop.f32.mrb[0].mxu0
      %v998 = vadd.f32 0.0, %v997
      %v999 = vpop.f32.mrb[0].mxu0
      %v1000 = vadd.f32 0.0, %v999
      %1001 = vmatprep.mubr.f32.mxu0 0.0
      %1002 = vmatmul.mubr.f32.gmra.mrb[0].mxu0 %v869
      %v1003 = vpop.f32.mrb[0].mxu0
      %v1004 = vadd.f32 0.0, %v1003
      %v1005 = vpop.f32.mrb[0].mxu0
      %v1006 = vadd.f32 0.0, %v1005
      %1007 = vdwg.mxu0
      %1008 = vmatprep.subr.mxu0 %v805
      %1009 = vmatpush1.msra.mxu0 %v804
      %1010 = vmatprep.subr.mxu0 %v809
      %1011 = vmatpush1.msra.mxu0 %v808
      %1012 = vmatprep.subr.mxu0 %v813
      %1013 = vmatpush1.msra.mxu0 %v812
      %1014 = vmatprep.subr.mxu0 %v817
      %1015 = vmatpush1.msra.mxu0 %v816
      %1016 = vmatprep.subr.mxu0 %v821
      %1017 = vmatpush1.msra.mxu0 %v820
      %1018 = vmatprep.subr.mxu0 %v825
      %1019 = vmatpush1.msra.mxu0 %v824
      %1020 = vmatprep.subr.mxu0 %v829
      %1021 = vmatpush1.msra.mxu0 %v828
      %1022 = vmatprep.subr.mxu0 %v833
      %1023 = vmatpush1.msra.mxu0 %v832
      %1024 = vmatprep.subr.mxu0 0.0
      %1025 = vmatpush1.msra.mxu0 0.0
      %1026 = vmatprep.subr.mxu0 0.0
      %1027 = vmatpush1.msra.mxu0 0.0
      %1028 = vmatprep.subr.mxu0 0.0
      %1029 = vmatpush1.msra.mxu0 0.0
      %1030 = vmatprep.subr.mxu0 0.0
      %1031 = vmatpush1.msra.mxu0 0.0
      %1032 = vmatprep.subr.mxu0 0.0
      %1033 = vmatpush1.msra.mxu0 0.0
      %1034 = vmatprep.subr.mxu0 0.0
      %1035 = vmatpush1.msra.mxu0 0.0
      %1036 = vmatprep.subr.mxu0 0.0
      %1037 = vmatpush1.msra.mxu0 0.0
      %1038 = vmatprep.subr.mxu0 0.0
      %1039 = vmatpush1.msra.mxu0 0.0
      %1040 = vmatprep.subr.mxu0 0.0
      %1041 = vmatpush1.msra.mxu0 0.0
      %1042 = vmatprep.subr.mxu0 0.0
      %1043 = vmatpush1.msra.mxu0 0.0
      %1044 = vmatprep.subr.mxu0 0.0
      %1045 = vmatpush1.msra.mxu0 0.0
      %1046 = vmatprep.subr.mxu0 0.0
      %1047 = vmatpush1.msra.mxu0 0.0
      %1048 = vmatprep.subr.mxu0 0.0
      %1049 = vmatpush1.msra.mxu0 0.0
      %1050 = vmatprep.subr.mxu0 0.0
      %1051 = vmatpush1.msra.mxu0 0.0
      %1052 = vmatprep.subr.mxu0 0.0
      %1053 = vmatpush1.msra.mxu0 0.0
      %1054 = vmatprep.subr.mxu0 0.0
      %1055 = vmatpush1.msra.mxu0 0.0
      %1056 = vmatprep.subr.mxu0 0.0
      %1057 = vmatpush1.msra.mxu0 0.0
      %1058 = vmatprep.subr.mxu0 0.0
      %1059 = vmatpush1.msra.mxu0 0.0
      %1060 = vmatprep.subr.mxu0 0.0
      %1061 = vmatpush1.msra.mxu0 0.0
      %1062 = vmatprep.subr.mxu0 0.0
      %1063 = vmatpush1.msra.mxu0 0.0
      %1064 = vmatprep.subr.mxu0 0.0
      %1065 = vmatpush1.msra.mxu0 0.0
      %1066 = vmatprep.subr.mxu0 0.0
      %1067 = vmatpush1.msra.mxu0 0.0
      %1068 = vmatprep.subr.mxu0 0.0
      %1069 = vmatpush1.msra.mxu0 0.0
      %1070 = vmatprep.subr.mxu0 0.0
      %1071 = vmatpush1.msra.mxu0 0.0
      %1072 = vmatprep.mubr.f32.mxu0 0.0
      %1073 = vmatmul.mubr.f32.gmra.mrb[0].mxu0 %v836
      %v1074 = vpop.f32.mrb[0].mxu0
      %v1075 = vadd.f32 0.0, %v1074
      %v1076 = vpop.f32.mrb[0].mxu0
      %v1077 = vadd.f32 0.0, %v1076
      %1078 = vmatprep.mubr.f32.mxu0 0.0
      %1079 = vmatmul.mubr.f32.gmra.mrb[0].mxu0 %v839
      %v1080 = vpop.f32.mrb[0].mxu0
      %v1081 = vadd.f32 0.0, %v1080
      %v1082 = vpop.f32.mrb[0].mxu0
      %v1083 = vadd.f32 0.0, %v1082
      %1084 = vmatprep.mubr.f32.mxu0 0.0
      %1085 = vmatmul.mubr.f32.gmra.mrb[0].mxu0 %v842
      %v1086 = vpop.f32.mrb[0].mxu0
      %v1087 = vadd.f32 0.0, %v1086
      %v1088 = vpop.f32.mrb[0].mxu0
      %v1089 = vadd.f32 0.0, %v1088
      %1090 = vmatprep.mubr.f32.mxu0 0.0
      %1091 = vmatmul.mubr.f32.gmra.mrb[0].mxu0 %v845
      %v1092 = vpop.f32.mrb[0].mxu0
      %v1093 = vadd.f32 0.0, %v1092
      %v1094 = vpop.f32.mrb[0].mxu0
      %v1095 = vadd.f32 0.0, %v1094
      %1096 = vmatprep.mubr.f32.mxu0 0.0
      %1097 = vmatmul.mubr.f32.gmra.mrb[0].mxu0 %v848
      %v1098 = vpop.f32.mrb[0].mxu0
      %v1099 = vadd.f32 0.0, %v1098
      %v1100 = vpop.f32.mrb[0].mxu0
      %v1101 = vadd.f32 0.0, %v1100
      %1102 = vmatprep.mubr.f32.mxu0 0.0
      %1103 = vmatmul.mubr.f32.gmra.mrb[0].mxu0 %v851
      %v1104 = vpop.f32.mrb[0].mxu0
      %v1105 = vadd.f32 0.0, %v1104
      %v1106 = vpop.f32.mrb[0].mxu0
      %v1107 = vadd.f32 0.0, %v1106
      %1108 = vmatprep.mubr.f32.mxu0 0.0
      %1109 = vmatmul.mubr.f32.gmra.mrb[0].mxu0 %v854
      %v1110 = vpop.f32.mrb[0].mxu0
      %v1111 = vadd.f32 0.0, %v1110
      %v1112 = vpop.f32.mrb[0].mxu0
      %v1113 = vadd.f32 0.0, %v1112
      %1114 = vmatprep.mubr.f32.mxu0 0.0
      %1115 = vmatmul.mubr.f32.gmra.mrb[0].mxu0 %v857
      %v1116 = vpop.f32.mrb[0].mxu0
      %v1117 = vadd.f32 0.0, %v1116
      %v1118 = vpop.f32.mrb[0].mxu0
      %v1119 = vadd.f32 0.0, %v1118
      %1120 = vmatprep.mubr.f32.mxu0 0.0
      %1121 = vmatmul.mubr.f32.gmra.mrb[0].mxu0 %v860
      %v1122 = vpop.f32.mrb[0].mxu0
      %v1123 = vadd.f32 0.0, %v1122
      %v1124 = vpop.f32.mrb[0].mxu0
      %v1125 = vadd.f32 0.0, %v1124
      %1126 = vmatprep.mubr.f32.mxu0 0.0
      %1127 = vmatmul.mubr.f32.gmra.mrb[0].mxu0 %v863
      %v1128 = vpop.f32.mrb[0].mxu0
      %v1129 = vadd.f32 0.0, %v1128
      %v1130 = vpop.f32.mrb[0].mxu0
      %v1131 = vadd.f32 0.0, %v1130
      %1132 = vmatprep.mubr.f32.mxu0 0.0
      %1133 = vmatmul.mubr.f32.gmra.mrb[0].mxu0 %v866
      %v1134 = vpop.f32.mrb[0].mxu0
      %v1135 = vadd.f32 0.0, %v1134
      %v1136 = vpop.f32.mrb[0].mxu0
      %v1137 = vadd.f32 0.0, %v1136
      %1138 = vmatprep.mubr.f32.mxu0 0.0
      %1139 = vmatmul.mubr.f32.gmra.mrb[0].mxu0 %v869
      %v1140 = vpop.f32.mrb[0].mxu0
      %v1141 = vadd.f32 0.0, %v1140
      %v1142 = vpop.f32.mrb[0].mxu0
      %v1143 = vadd.f32 0.0, %v1142
      %1144 = vdwg.mxu0
      %vm1153 = vcmask 1041408
      %v1154 = vrot.slane %v938, 6
      %v1155 = vrot.slane %v944, 6
      %v1156 = vsel %vm1153, %v1154, %v1155
      %v1157 = vrot.slane %v940, 6
      %v1158 = vrot.slane %v946, 6
      %v1159 = vsel %vm1153, %v1157, %v1158
      %v1160 = vrot.slane %v1075, 6
      %v1161 = vrot.slane %v1081, 6
      %v1162 = vsel %vm1153, %v1160, %v1161
      %v1163 = vrot.slane %v1077, 6
      %v1164 = vrot.slane %v1083, 6
      %v1165 = vsel %vm1153, %v1163, %v1164
      %v1170 = vmax.f32 %v938, %v1156
      %v1171 = vmax.f32 %v940, %v1159
      %v1172 = vmax.f32 %v1075, %v1162
      %v1173 = vmax.f32 %v1077, %v1165
      %vm1178 = vcmask 1043456
      %v1179 = vrot.slane %v944, 4
      %v1180 = vrot.slane %v950, 4
      %v1181 = vsel %vm1178, %v1179, %v1180
      %v1182 = vrot.slane %v946, 4
      %v1183 = vrot.slane %v952, 4
      %v1184 = vsel %vm1178, %v1182, %v1183
      %v1185 = vrot.slane %v1081, 4
      %v1186 = vrot.slane %v1087, 4
      %v1187 = vsel %vm1178, %v1185, %v1186
      %v1188 = vrot.slane %v1083, 4
      %v1189 = vrot.slane %v1089, 4
      %v1190 = vsel %vm1178, %v1188, %v1189
      %v1195 = vmax.f32 %v1170, %v1181
      %v1196 = vmax.f32 %v1171, %v1184
      %v1197 = vmax.f32 %v1172, %v1187
      %v1198 = vmax.f32 %v1173, %v1190
      %v1199 = vrot.slane %v950, 2
      %v1200 = vrot.slane %v952, 2
      %v1201 = vrot.slane %v1087, 2
      %v1202 = vrot.slane %v1089, 2
      %v1207 = vmax.f32 %v1195, %v1199
      %v1208 = vmax.f32 %v1196, %v1200
      %v1209 = vmax.f32 %v1197, %v1201
      %v1210 = vmax.f32 %v1198, %v1202
      %v1211 = vld [vmem:[%s2] sm:$0x3f]
      %1213 = vset.pattern.permute.xlu0 0
      %1214 = vperm.xlu0 %1213, %v1211
      %v1215 = vpop.permute.xlu0 %1214
      %v1217 = vadd.f32 %v1207, %v1215
      %v1218 = vadd.f32 %v1208, %v1215
      %v1219 = vadd.f32 %v1209, %v1215
      %v1220 = vadd.f32 %v1210, %v1215
      %v1221 = vmax.f32 %v1217, 0.0
      %v1222 = vmax.f32 %v1218, 0.0
      %v1223 = vmax.f32 %v1219, 0.0
      %v1224 = vmax.f32 %v1220, 0.0
      %1225 = vst [vmem:[#allocation3] sm:$0x3f] %v1221
      %1226 = vst [vmem:[#allocation3 + $0x8] sm:$0x3f] %v1222
      %1227 = vst [vmem:[#allocation3 + $0x10] sm:$0x3f] %v1223
      %vm1228 = vcmask 652288
      %1229 = vst.msk [vmem:[#allocation3 + $0x18] sm:$0x3f] %vm1228, %v1224
      %v1238 = vrot.slane %v956, 6
      %v1239 = vrot.slane %v962, 6
      %v1240 = vsel %vm1153, %v1238, %v1239
      %v1241 = vrot.slane %v958, 6
      %v1242 = vrot.slane %v964, 6
      %v1243 = vsel %vm1153, %v1241, %v1242
      %v1244 = vrot.slane %v1093, 6
      %v1245 = vrot.slane %v1099, 6
      %v1246 = vsel %vm1153, %v1244, %v1245
      %v1247 = vrot.slane %v1095, 6
      %v1248 = vrot.slane %v1101, 6
      %v1249 = vsel %vm1153, %v1247, %v1248
      %v1254 = vmax.f32 %v956, %v1240
      %v1255 = vmax.f32 %v958, %v1243
      %v1256 = vmax.f32 %v1093, %v1246
      %v1257 = vmax.f32 %v1095, %v1249
      %v1262 = vrot.slane %v962, 4
      %v1263 = vrot.slane %v968, 4
      %v1264 = vsel %vm1178, %v1262, %v1263
      %v1265 = vrot.slane %v964, 4
      %v1266 = vrot.slane %v970, 4
      %v1267 = vsel %vm1178, %v1265, %v1266
      %v1268 = vrot.slane %v1099, 4
      %v1269 = vrot.slane %v1105, 4
      %v1270 = vsel %vm1178, %v1268, %v1269
      %v1271 = vrot.slane %v1101, 4
      %v1272 = vrot.slane %v1107, 4
      %v1273 = vsel %vm1178, %v1271, %v1272
      %v1278 = vmax.f32 %v1254, %v1264
      %v1279 = vmax.f32 %v1255, %v1267
      %v1280 = vmax.f32 %v1256, %v1270
      %v1281 = vmax.f32 %v1257, %v1273
      %v1282 = vrot.slane %v968, 2
      %v1283 = vrot.slane %v970, 2
      %v1284 = vrot.slane %v1105, 2
      %v1285 = vrot.slane %v1107, 2
      %v1290 = vmax.f32 %v1278, %v1282
      %v1291 = vmax.f32 %v1279, %v1283
      %v1292 = vmax.f32 %v1280, %v1284
      %v1293 = vmax.f32 %v1281, %v1285
      %v1294 = vld [vmem:[%s2] sm:$0x3f]
      %1296 = vset.pattern.permute.xlu0 0
      %1297 = vperm.xlu0 %1296, %v1294
      %v1298 = vpop.permute.xlu0 %1297
      %v1300 = vadd.f32 %v1290, %v1298
      %v1301 = vadd.f32 %v1291, %v1298
      %v1302 = vadd.f32 %v1292, %v1298
      %v1303 = vadd.f32 %v1293, %v1298
      %v1304 = vmax.f32 %v1300, 0.0
      %v1305 = vmax.f32 %v1301, 0.0
      %v1306 = vmax.f32 %v1302, 0.0
      %v1307 = vmax.f32 %v1303, 0.0
      %s1308 = scalar_lea.vmem [#allocation3], 32
      %1309 = vst [vmem:[%s1308] sm:$0x3f] %v1304
      %1310 = vst [vmem:[%s1308 + $0x8] sm:$0x3f] %v1305
      %1311 = vst [vmem:[%s1308 + $0x10] sm:$0x3f] %v1306
      %1312 = vst.msk [vmem:[%s1308 + $0x18] sm:$0x3f] %vm1228, %v1307
      %v1321 = vrot.slane %v974, 6
      %v1322 = vrot.slane %v980, 6
      %v1323 = vsel %vm1153, %v1321, %v1322
      %v1324 = vrot.slane %v976, 6
      %v1325 = vrot.slane %v982, 6
      %v1326 = vsel %vm1153, %v1324, %v1325
      %v1327 = vrot.slane %v1111, 6
      %v1328 = vrot.slane %v1117, 6
      %v1329 = vsel %vm1153, %v1327, %v1328
      %v1330 = vrot.slane %v1113, 6
      %v1331 = vrot.slane %v1119, 6
      %v1332 = vsel %vm1153, %v1330, %v1331
      %v1337 = vmax.f32 %v974, %v1323
      %v1338 = vmax.f32 %v976, %v1326
      %v1339 = vmax.f32 %v1111, %v1329
      %v1340 = vmax.f32 %v1113, %v1332
      %v1345 = vrot.slane %v980, 4
      %v1346 = vrot.slane %v986, 4
      %v1347 = vsel %vm1178, %v1345, %v1346
      %v1348 = vrot.slane %v982, 4
      %v1349 = vrot.slane %v988, 4
      %v1350 = vsel %vm1178, %v1348, %v1349
      %v1351 = vrot.slane %v1117, 4
      %v1352 = vrot.slane %v1123, 4
      %v1353 = vsel %vm1178, %v1351, %v1352
      %v1354 = vrot.slane %v1119, 4
      %v1355 = vrot.slane %v1125, 4
      %v1356 = vsel %vm1178, %v1354, %v1355
      %v1361 = vmax.f32 %v1337, %v1347
      %v1362 = vmax.f32 %v1338, %v1350
      %v1363 = vmax.f32 %v1339, %v1353
      %v1364 = vmax.f32 %v1340, %v1356
      %v1365 = vrot.slane %v986, 2
      %v1366 = vrot.slane %v988, 2
      %v1367 = vrot.slane %v1123, 2
      %v1368 = vrot.slane %v1125, 2
      %v1373 = vmax.f32 %v1361, %v1365
      %v1374 = vmax.f32 %v1362, %v1366
      %v1375 = vmax.f32 %v1363, %v1367
      %v1376 = vmax.f32 %v1364, %v1368
      %v1377 = vld [vmem:[%s2] sm:$0x3f]
      %1379 = vset.pattern.permute.xlu0 0
      %1380 = vperm.xlu0 %1379, %v1377
      %v1381 = vpop.permute.xlu0 %1380
      %v1383 = vadd.f32 %v1373, %v1381
      %v1384 = vadd.f32 %v1374, %v1381
      %v1385 = vadd.f32 %v1375, %v1381
      %v1386 = vadd.f32 %v1376, %v1381
      %v1387 = vmax.f32 %v1383, 0.0
      %v1388 = vmax.f32 %v1384, 0.0
      %v1389 = vmax.f32 %v1385, 0.0
      %v1390 = vmax.f32 %v1386, 0.0
      %s1391 = scalar_lea.vmem [#allocation3], 64
      %1392 = vst [vmem:[%s1391] sm:$0x3f] %v1387
      %1393 = vst [vmem:[%s1391 + $0x8] sm:$0x3f] %v1388
      %1394 = vst [vmem:[%s1391 + $0x10] sm:$0x3f] %v1389
      %1395 = vst.msk [vmem:[%s1391 + $0x18] sm:$0x3f] %vm1228, %v1390
      %v1404 = vrot.slane %v992, 6
      %v1405 = vrot.slane %v998, 6
      %v1406 = vsel %vm1153, %v1404, %v1405
      %v1407 = vrot.slane %v994, 6
      %v1408 = vrot.slane %v1000, 6
      %v1409 = vsel %vm1153, %v1407, %v1408
      %v1410 = vrot.slane %v1129, 6
      %v1411 = vrot.slane %v1135, 6
      %v1412 = vsel %vm1153, %v1410, %v1411
      %v1413 = vrot.slane %v1131, 6
      %v1414 = vrot.slane %v1137, 6
      %v1415 = vsel %vm1153, %v1413, %v1414
      %v1420 = vmax.f32 %v992, %v1406
      %v1421 = vmax.f32 %v994, %v1409
      %v1422 = vmax.f32 %v1129, %v1412
      %v1423 = vmax.f32 %v1131, %v1415
      %v1428 = vrot.slane %v998, 4
      %v1429 = vrot.slane %v1004, 4
      %v1430 = vsel %vm1178, %v1428, %v1429
      %v1431 = vrot.slane %v1000, 4
      %v1432 = vrot.slane %v1006, 4
      %v1433 = vsel %vm1178, %v1431, %v1432
      %v1434 = vrot.slane %v1135, 4
      %v1435 = vrot.slane %v1141, 4
      %v1436 = vsel %vm1178, %v1434, %v1435
      %v1437 = vrot.slane %v1137, 4
      %v1438 = vrot.slane %v1143, 4
      %v1439 = vsel %vm1178, %v1437, %v1438
      %v1444 = vmax.f32 %v1420, %v1430
      %v1445 = vmax.f32 %v1421, %v1433
      %v1446 = vmax.f32 %v1422, %v1436
      %v1447 = vmax.f32 %v1423, %v1439
      %v1448 = vrot.slane %v1004, 2
      %v1449 = vrot.slane %v1006, 2
      %v1450 = vrot.slane %v1141, 2
      %v1451 = vrot.slane %v1143, 2
      %v1456 = vmax.f32 %v1444, %v1448
      %v1457 = vmax.f32 %v1445, %v1449
      %v1458 = vmax.f32 %v1446, %v1450
      %v1459 = vmax.f32 %v1447, %v1451
      %v1460 = vld [vmem:[%s2] sm:$0x3f]
      %1462 = vset.pattern.permute.xlu0 0
      %1463 = vperm.xlu0 %1462, %v1460
      %v1464 = vpop.permute.xlu0 %1463
      %v1466 = vadd.f32 %v1456, %v1464
      %v1467 = vadd.f32 %v1457, %v1464
      %v1468 = vadd.f32 %v1458, %v1464
      %v1469 = vadd.f32 %v1459, %v1464
      %v1470 = vmax.f32 %v1466, 0.0
      %v1471 = vmax.f32 %v1467, 0.0
      %v1472 = vmax.f32 %v1468, 0.0
      %v1473 = vmax.f32 %v1469, 0.0
      %s1474 = scalar_lea.vmem [#allocation3], 96
      %1475 = vst [vmem:[%s1474] sm:$0x3f] %v1470
      %1476 = vst [vmem:[%s1474 + $0x8] sm:$0x3f] %v1471
      %1477 = vst [vmem:[%s1474 + $0x10] sm:$0x3f] %v1472
      %1478 = vst.msk [vmem:[%s1474 + $0x18] sm:$0x3f] %vm1228, %v1473
      %v1479 = vld [vmem:[#allocation3] sm:$0x3f]
      %v1480 = vld [vmem:[#allocation3 + $0x8] sm:$0x3f]
      %v1481 = vld [vmem:[#allocation3 + $0x10] sm:$0x3f]
      %v1482 = vld [vmem:[#allocation3 + $0x18] sm:$0x3f]
      %1483 = vst [vmem:[#allocation4] sm:$0x3f] %v1479
      %1484 = vst [vmem:[#allocation4 + $0x8] sm:$0x3f] %v1480
      %1485 = vst [vmem:[#allocation4 + $0x10] sm:$0x3f] %v1481
      %vm1486 = vcmask 275456
      %1487 = vst.msk [vmem:[#allocation4 + $0x18] sm:$0x3f] %vm1486, %v1482
      %v1488 = vld [vmem:[%s1308] sm:$0x3f]
      %v1489 = vld [vmem:[%s1308 + $0x8] sm:$0x3f]
      %v1490 = vld [vmem:[%s1308 + $0x10] sm:$0x3f]
      %v1491 = vld [vmem:[%s1308 + $0x18] sm:$0x3f]
      %v1496 = vrot.slane %v1488, 2
      %v1497 = vrot.slane %v1489, 2
      %v1498 = vrot.slane %v1490, 2
      %v1499 = vrot.slane %v1491, 2
      %1504 = vst [vmem:[#allocation4] sm:$0xc0] %v1496
      %1505 = vst [vmem:[#allocation4 + $0x8] sm:$0xc0] %v1497
      %1506 = vst [vmem:[#allocation4 + $0x10] sm:$0xc0] %v1498
      %vm1507 = vcmask 277510
      %1508 = vst.msk [vmem:[#allocation4 + $0x18] sm:$0xc0] %vm1507, %v1499
      %1509 = vst [vmem:[#allocation4 + $0x20] sm:$0xf] %v1496
      %1510 = vst [vmem:[#allocation4 + $0x28] sm:$0xf] %v1497
      %1511 = vst [vmem:[#allocation4 + $0x30] sm:$0xf] %v1498
      %vm1512 = vcmask 273408
      %1513 = vst.msk [vmem:[#allocation4 + $0x38] sm:$0xf] %vm1512, %v1499
      %v1514 = vld [vmem:[#allocation3] sm:$0x3f]
      %v1515 = vld [vmem:[#allocation3 + $0x8] sm:$0x3f]
      %v1516 = vld [vmem:[#allocation3 + $0x10] sm:$0x3f]
      %v1517 = vld [vmem:[#allocation3 + $0x18] sm:$0x3f]
      %v1522 = vrot.slane %v1514, 4
      %v1523 = vrot.slane %v1515, 4
      %v1524 = vrot.slane %v1516, 4
      %v1525 = vrot.slane %v1517, 4
      %1526 = vrot.lane.b32.xlu0 %v1522, 127
      %v1527 = vpop.permute.xlu0 %1526
      %1528 = vrot.lane.b32.xlu0 %v1523, 127
      %v1529 = vpop.permute.xlu0 %1528
      %1530 = vrot.lane.b32.xlu0 %v1524, 127
      %v1531 = vpop.permute.xlu0 %1530
      %1532 = vrot.lane.b32.xlu0 %v1525, 127
      %v1533 = vpop.permute.xlu0 %1532
      %v1534 = vsel %vm252, %v1527, %v1529
      %v1535 = vsel %vm252, %v1529, %v1531
      %v1536 = vsel %vm252, %v1531, %v1533
      %1541 = vst [vmem:[#allocation4 + $0x20] sm:$0xf0] %v1534
      %1542 = vst [vmem:[#allocation4 + $0x28] sm:$0xf0] %v1535
      %1543 = vst [vmem:[#allocation4 + $0x30] sm:$0xf0] %v1536
      %vm1544 = vcmask 277508
      %1545 = vst.msk [vmem:[#allocation4 + $0x38] sm:$0xf0] %vm1544, %v1533
      %1546 = vst [vmem:[#allocation4 + $0x40] sm:$0x3] %v1534
      %1547 = vst [vmem:[#allocation4 + $0x48] sm:$0x3] %v1535
      %1548 = vst [vmem:[#allocation4 + $0x50] sm:$0x3] %v1536
      %vm1549 = vcmask 271360
      %1550 = vst.msk [vmem:[#allocation4 + $0x58] sm:$0x3] %vm1549, %v1533
      %v1551 = vld [vmem:[%s1308] sm:$0x3f]
      %v1552 = vld [vmem:[%s1308 + $0x8] sm:$0x3f]
      %v1553 = vld [vmem:[%s1308 + $0x10] sm:$0x3f]
      %v1554 = vld [vmem:[%s1308 + $0x18] sm:$0x3f]
      %v1559 = vrot.slane %v1551, 6
      %v1560 = vrot.slane %v1552, 6
      %v1561 = vrot.slane %v1553, 6
      %v1562 = vrot.slane %v1554, 6
      %1563 = vrot.lane.b32.xlu0 %v1559, 127
      %v1564 = vpop.permute.xlu0 %1563
      %1565 = vrot.lane.b32.xlu0 %v1560, 127
      %v1566 = vpop.permute.xlu0 %1565
      %1567 = vrot.lane.b32.xlu0 %v1561, 127
      %v1568 = vpop.permute.xlu0 %1567
      %1569 = vrot.lane.b32.xlu0 %v1562, 127
      %v1570 = vpop.permute.xlu0 %1569
      %v1571 = vsel %vm252, %v1564, %v1566
      %v1572 = vsel %vm252, %v1566, %v1568
      %v1573 = vsel %vm252, %v1568, %v1570
      %1578 = vst [vmem:[#allocation4 + $0x40] sm:$0xfc] %v1571
      %1579 = vst [vmem:[#allocation4 + $0x48] sm:$0xfc] %v1572
      %1580 = vst [vmem:[#allocation4 + $0x50] sm:$0xfc] %v1573
      %vm1581 = vcmask 277506
      %1582 = vst.msk [vmem:[#allocation4 + $0x58] sm:$0xfc] %vm1581, %v1570
      %v1583 = vld [vmem:[#allocation3] sm:$0x3f]
      %v1584 = vld [vmem:[#allocation3 + $0x8] sm:$0x3f]
      %v1585 = vld [vmem:[#allocation3 + $0x10] sm:$0x3f]
      %v1586 = vld [vmem:[#allocation3 + $0x18] sm:$0x3f]
      %1591 = vrot.lane.b32.xlu0 %v1583, 126
      %v1592 = vpop.permute.xlu0 %1591
      %1593 = vrot.lane.b32.xlu0 %v1584, 126
      %v1594 = vpop.permute.xlu0 %1593
      %1595 = vrot.lane.b32.xlu0 %v1585, 126
      %v1596 = vpop.permute.xlu0 %1595
      %1597 = vrot.lane.b32.xlu0 %v1586, 126
      %v1598 = vpop.permute.xlu0 %1597
      %vm1599 = vcmask 1031168
      %v1600 = vsel %vm1599, %v1592, %v1594
      %v1601 = vsel %vm1599, %v1594, %v1596
      %v1602 = vsel %vm1599, %v1596, %v1598
      %1607 = vst [vmem:[#allocation4 + $0x60] sm:$0x3f] %v1600
      %1608 = vst [vmem:[#allocation4 + $0x68] sm:$0x3f] %v1601
      %1609 = vst [vmem:[#allocation4 + $0x70] sm:$0x3f] %v1602
      %1610 = vst.msk [vmem:[#allocation4 + $0x78] sm:$0x3f] %vm1486, %v1598
      %v1611 = vld [vmem:[%s1308] sm:$0x3f]
      %v1612 = vld [vmem:[%s1308 + $0x8] sm:$0x3f]
      %v1613 = vld [vmem:[%s1308 + $0x10] sm:$0x3f]
      %v1614 = vld [vmem:[%s1308 + $0x18] sm:$0x3f]
      %v1619 = vrot.slane %v1611, 2
      %v1620 = vrot.slane %v1612, 2
      %v1621 = vrot.slane %v1613, 2
      %v1622 = vrot.slane %v1614, 2
      %1623 = vrot.lane.b32.xlu0 %v1619, 126
      %v1624 = vpop.permute.xlu0 %1623
      %1625 = vrot.lane.b32.xlu0 %v1620, 126
      %v1626 = vpop.permute.xlu0 %1625
      %1627 = vrot.lane.b32.xlu0 %v1621, 126
      %v1628 = vpop.permute.xlu0 %1627
      %1629 = vrot.lane.b32.xlu0 %v1622, 126
      %v1630 = vpop.permute.xlu0 %1629
      %v1631 = vsel %vm1599, %v1624, %v1626
      %v1632 = vsel %vm1599, %v1626, %v1628
      %v1633 = vsel %vm1599, %v1628, %v1630
      %1638 = vst [vmem:[#allocation4 + $0x60] sm:$0xc0] %v1631
      %1639 = vst [vmem:[#allocation4 + $0x68] sm:$0xc0] %v1632
      %1640 = vst [vmem:[#allocation4 + $0x70] sm:$0xc0] %v1633
      %1641 = vst.msk [vmem:[#allocation4 + $0x78] sm:$0xc0] %vm1507, %v1630
      %1642 = vst [vmem:[#allocation4 + $0x80] sm:$0xf] %v1631
      %1643 = vst [vmem:[#allocation4 + $0x88] sm:$0xf] %v1632
      %1644 = vst [vmem:[#allocation4 + $0x90] sm:$0xf] %v1633
      %1645 = vst.msk [vmem:[#allocation4 + $0x98] sm:$0xf] %vm1512, %v1630
      %v1646 = vld [vmem:[%s1391] sm:$0x3f]
      %v1647 = vld [vmem:[%s1391 + $0x8] sm:$0x3f]
      %v1648 = vld [vmem:[%s1391 + $0x10] sm:$0x3f]
      %v1649 = vld [vmem:[%s1391 + $0x18] sm:$0x3f]
      %v1654 = vrot.slane %v1646, 4
      %v1655 = vrot.slane %v1647, 4
      %v1656 = vrot.slane %v1648, 4
      %v1657 = vrot.slane %v1649, 4
      %1662 = vst [vmem:[#allocation4 + $0x80] sm:$0xf0] %v1654
      %1663 = vst [vmem:[#allocation4 + $0x88] sm:$0xf0] %v1655
      %1664 = vst [vmem:[#allocation4 + $0x90] sm:$0xf0] %v1656
      %1665 = vst.msk [vmem:[#allocation4 + $0x98] sm:$0xf0] %vm1544, %v1657
      %1666 = vst [vmem:[#allocation4 + $0xa0] sm:$0x3] %v1654
      %1667 = vst [vmem:[#allocation4 + $0xa8] sm:$0x3] %v1655
      %1668 = vst [vmem:[#allocation4 + $0xb0] sm:$0x3] %v1656
      %1669 = vst.msk [vmem:[#allocation4 + $0xb8] sm:$0x3] %vm1549, %v1657
      %v1670 = vld [vmem:[%s1474] sm:$0x3f]
      %v1671 = vld [vmem:[%s1474 + $0x8] sm:$0x3f]
      %v1672 = vld [vmem:[%s1474 + $0x10] sm:$0x3f]
      %v1673 = vld [vmem:[%s1474 + $0x18] sm:$0x3f]
      %v1678 = vrot.slane %v1670, 6
      %v1679 = vrot.slane %v1671, 6
      %v1680 = vrot.slane %v1672, 6
      %v1681 = vrot.slane %v1673, 6
      %1686 = vst [vmem:[#allocation4 + $0xa0] sm:$0xfc] %v1678
      %1687 = vst [vmem:[#allocation4 + $0xa8] sm:$0xfc] %v1679
      %1688 = vst [vmem:[#allocation4 + $0xb0] sm:$0xfc] %v1680
      %1689 = vst.msk [vmem:[#allocation4 + $0xb8] sm:$0xfc] %vm1581, %v1681
      %v1690 = vld [vmem:[%s1391] sm:$0x3f]
      %v1691 = vld [vmem:[%s1391 + $0x8] sm:$0x3f]
      %v1692 = vld [vmem:[%s1391 + $0x10] sm:$0x3f]
      %v1693 = vld [vmem:[%s1391 + $0x18] sm:$0x3f]
      %1698 = vrot.lane.b32.xlu0 %v1690, 127
      %v1699 = vpop.permute.xlu0 %1698
      %1700 = vrot.lane.b32.xlu0 %v1691, 127
      %v1701 = vpop.permute.xlu0 %1700
      %1702 = vrot.lane.b32.xlu0 %v1692, 127
      %v1703 = vpop.permute.xlu0 %1702
      %1704 = vrot.lane.b32.xlu0 %v1693, 127
      %v1705 = vpop.permute.xlu0 %1704
      %v1706 = vsel %vm252, %v1699, %v1701
      %v1707 = vsel %vm252, %v1701, %v1703
      %v1708 = vsel %vm252, %v1703, %v1705
      %1713 = vst [vmem:[#allocation4 + $0xc0] sm:$0x3f] %v1706
      %1714 = vst [vmem:[#allocation4 + $0xc8] sm:$0x3f] %v1707
      %1715 = vst [vmem:[#allocation4 + $0xd0] sm:$0x3f] %v1708
      %1716 = vst.msk [vmem:[#allocation4 + $0xd8] sm:$0x3f] %vm1486, %v1705
      %v1717 = vld [vmem:[%s1474] sm:$0x3f]
      %v1718 = vld [vmem:[%s1474 + $0x8] sm:$0x3f]
      %v1719 = vld [vmem:[%s1474 + $0x10] sm:$0x3f]
      %v1720 = vld [vmem:[%s1474 + $0x18] sm:$0x3f]
      %v1725 = vrot.slane %v1717, 2
      %v1726 = vrot.slane %v1718, 2
      %v1727 = vrot.slane %v1719, 2
      %v1728 = vrot.slane %v1720, 2
      %1729 = vrot.lane.b32.xlu0 %v1725, 127
      %v1730 = vpop.permute.xlu0 %1729
      %1731 = vrot.lane.b32.xlu0 %v1726, 127
      %v1732 = vpop.permute.xlu0 %1731
      %1733 = vrot.lane.b32.xlu0 %v1727, 127
      %v1734 = vpop.permute.xlu0 %1733
      %1735 = vrot.lane.b32.xlu0 %v1728, 127
      %v1736 = vpop.permute.xlu0 %1735
      %v1737 = vsel %vm252, %v1730, %v1732
      %v1738 = vsel %vm252, %v1732, %v1734
      %v1739 = vsel %vm252, %v1734, %v1736
      %1744 = vst [vmem:[#allocation4 + $0xc0] sm:$0xc0] %v1737
      %1745 = vst [vmem:[#allocation4 + $0xc8] sm:$0xc0] %v1738
      %1746 = vst [vmem:[#allocation4 + $0xd0] sm:$0xc0] %v1739
      %1747 = vst.msk [vmem:[#allocation4 + $0xd8] sm:$0xc0] %vm1507, %v1736
      %1748 = vst [vmem:[#allocation4 + $0xe0] sm:$0xf] %v1737
      %1749 = vst [vmem:[#allocation4 + $0xe8] sm:$0xf] %v1738
      %1750 = vst [vmem:[#allocation4 + $0xf0] sm:$0xf] %v1739
      %1751 = vst.msk [vmem:[#allocation4 + $0xf8] sm:$0xf] %vm1512, %v1736
      %v1752 = vld [vmem:[%s1391] sm:$0x3f]
      %v1753 = vld [vmem:[%s1391 + $0x8] sm:$0x3f]
      %v1754 = vld [vmem:[%s1391 + $0x10] sm:$0x3f]
      %v1755 = vld [vmem:[%s1391 + $0x18] sm:$0x3f]
      %v1760 = vrot.slane %v1752, 4
      %v1761 = vrot.slane %v1753, 4
      %v1762 = vrot.slane %v1754, 4
      %v1763 = vrot.slane %v1755, 4
      %1764 = vrot.lane.b32.xlu0 %v1760, 126
      %v1765 = vpop.permute.xlu0 %1764
      %1766 = vrot.lane.b32.xlu0 %v1761, 126
      %v1767 = vpop.permute.xlu0 %1766
      %1768 = vrot.lane.b32.xlu0 %v1762, 126
      %v1769 = vpop.permute.xlu0 %1768
      %1770 = vrot.lane.b32.xlu0 %v1763, 126
      %v1771 = vpop.permute.xlu0 %1770
      %v1772 = vsel %vm1599, %v1765, %v1767
      %v1773 = vsel %vm1599, %v1767, %v1769
      %v1774 = vsel %vm1599, %v1769, %v1771
      %1779 = vst [vmem:[#allocation4 + $0xe0] sm:$0xf0] %v1772
      %1780 = vst [vmem:[#allocation4 + $0xe8] sm:$0xf0] %v1773
      %1781 = vst [vmem:[#allocation4 + $0xf0] sm:$0xf0] %v1774
      %1782 = vst.msk [vmem:[#allocation4 + $0xf8] sm:$0xf0] %vm1544, %v1771
      %1783 = vst [vmem:[#allocation4 + $0x100] sm:$0x3] %v1772
      %1784 = vst [vmem:[#allocation4 + $0x108] sm:$0x3] %v1773
      %1785 = vst [vmem:[#allocation4 + $0x110] sm:$0x3] %v1774
      %1786 = vst.msk [vmem:[#allocation4 + $0x118] sm:$0x3] %vm1549, %v1771
      %v1787 = vld [vmem:[%s1474] sm:$0x3f]
      %v1788 = vld [vmem:[%s1474 + $0x8] sm:$0x3f]
      %v1789 = vld [vmem:[%s1474 + $0x10] sm:$0x3f]
      %v1790 = vld [vmem:[%s1474 + $0x18] sm:$0x3f]
      %v1795 = vrot.slane %v1787, 6
      %v1796 = vrot.slane %v1788, 6
      %v1797 = vrot.slane %v1789, 6
      %v1798 = vrot.slane %v1790, 6
      %1799 = vrot.lane.b32.xlu0 %v1795, 126
      %v1800 = vpop.permute.xlu0 %1799
      %1801 = vrot.lane.b32.xlu0 %v1796, 126
      %v1802 = vpop.permute.xlu0 %1801
      %1803 = vrot.lane.b32.xlu0 %v1797, 126
      %v1804 = vpop.permute.xlu0 %1803
      %1805 = vrot.lane.b32.xlu0 %v1798, 126
      %v1806 = vpop.permute.xlu0 %1805
      %v1807 = vsel %vm1599, %v1800, %v1802
      %v1808 = vsel %vm1599, %v1802, %v1804
      %v1809 = vsel %vm1599, %v1804, %v1806
      %1814 = vst [vmem:[#allocation4 + $0x100] sm:$0xfc] %v1807
      %1815 = vst [vmem:[#allocation4 + $0x108] sm:$0xfc] %v1808
      %1816 = vst [vmem:[#allocation4 + $0x110] sm:$0xfc] %v1809
      %1817 = vst.msk [vmem:[#allocation4 + $0x118] sm:$0xfc] %vm1581, %v1806
      %v1818 = vld [vmem:[#allocation3] sm:$0x3f]
      %v1819 = vld [vmem:[#allocation3 + $0x8] sm:$0x3f]
      %v1820 = vld [vmem:[#allocation3 + $0x10] sm:$0x3f]
      %v1821 = vld [vmem:[#allocation3 + $0x18] sm:$0x3f]
      %1826 = vrot.lane.b32.xlu0 %v1818, 106
      %v1827 = vpop.permute.xlu0 %1826
      %1828 = vrot.lane.b32.xlu0 %v1819, 106
      %v1829 = vpop.permute.xlu0 %1828
      %1830 = vrot.lane.b32.xlu0 %v1820, 106
      %v1831 = vpop.permute.xlu0 %1830
      %1832 = vrot.lane.b32.xlu0 %v1821, 106
      %v1833 = vpop.permute.xlu0 %1832
      %v1834 = vsel %vm473, %v1827, %v1829
      %v1835 = vsel %vm473, %v1829, %v1831
      %v1836 = vsel %vm473, %v1831, %v1833
      %1841 = vst [vmem:[#allocation4 + $0x120] sm:$0x3f] %v1834
      %1842 = vst [vmem:[#allocation4 + $0x128] sm:$0x3f] %v1835
      %1843 = vst [vmem:[#allocation4 + $0x130] sm:$0x3f] %v1836
      %1844 = vst.msk [vmem:[#allocation4 + $0x138] sm:$0x3f] %vm1486, %v1833
      %v1845 = vld [vmem:[%s1308] sm:$0x3f]
      %v1846 = vld [vmem:[%s1308 + $0x8] sm:$0x3f]
      %v1847 = vld [vmem:[%s1308 + $0x10] sm:$0x3f]
      %v1848 = vld [vmem:[%s1308 + $0x18] sm:$0x3f]
      %v1853 = vrot.slane %v1845, 2
      %v1854 = vrot.slane %v1846, 2
      %v1855 = vrot.slane %v1847, 2
      %v1856 = vrot.slane %v1848, 2
      %1857 = vrot.lane.b32.xlu0 %v1853, 106
      %v1858 = vpop.permute.xlu0 %1857
      %1859 = vrot.lane.b32.xlu0 %v1854, 106
      %v1860 = vpop.permute.xlu0 %1859
      %1861 = vrot.lane.b32.xlu0 %v1855, 106
      %v1862 = vpop.permute.xlu0 %1861
      %1863 = vrot.lane.b32.xlu0 %v1856, 106
      %v1864 = vpop.permute.xlu0 %1863
      %v1865 = vsel %vm473, %v1858, %v1860
      %v1866 = vsel %vm473, %v1860, %v1862
      %v1867 = vsel %vm473, %v1862, %v1864
      %1872 = vst [vmem:[#allocation4 + $0x120] sm:$0xc0] %v1865
      %1873 = vst [vmem:[#allocation4 + $0x128] sm:$0xc0] %v1866
      %1874 = vst [vmem:[#allocation4 + $0x130] sm:$0xc0] %v1867
      %1875 = vst.msk [vmem:[#allocation4 + $0x138] sm:$0xc0] %vm1507, %v1864
      %1876 = vst [vmem:[#allocation4 + $0x140] sm:$0xf] %v1865
      %1877 = vst [vmem:[#allocation4 + $0x148] sm:$0xf] %v1866
      %1878 = vst [vmem:[#allocation4 + $0x150] sm:$0xf] %v1867
      %1879 = vst.msk [vmem:[#allocation4 + $0x158] sm:$0xf] %vm1512, %v1864
      %v1880 = vld [vmem:[#allocation3] sm:$0x3f]
      %v1881 = vld [vmem:[#allocation3 + $0x8] sm:$0x3f]
      %v1882 = vld [vmem:[#allocation3 + $0x10] sm:$0x3f]
      %v1883 = vld [vmem:[#allocation3 + $0x18] sm:$0x3f]
      %v1888 = vrot.slane %v1880, 4
      %v1889 = vrot.slane %v1881, 4
      %v1890 = vrot.slane %v1882, 4
      %v1891 = vrot.slane %v1883, 4
      %1892 = vrot.lane.b32.xlu0 %v1888, 105
      %v1893 = vpop.permute.xlu0 %1892
      %1894 = vrot.lane.b32.xlu0 %v1889, 105
      %v1895 = vpop.permute.xlu0 %1894
      %1896 = vrot.lane.b32.xlu0 %v1890, 105
      %v1897 = vpop.permute.xlu0 %1896
      %1898 = vrot.lane.b32.xlu0 %v1891, 105
      %v1899 = vpop.permute.xlu0 %1898
      %v1900 = vsel %vm514, %v1893, %v1895
      %v1901 = vsel %vm514, %v1895, %v1897
      %v1902 = vsel %vm514, %v1897, %v1899
      %1907 = vst [vmem:[#allocation4 + $0x140] sm:$0xf0] %v1900
      %1908 = vst [vmem:[#allocation4 + $0x148] sm:$0xf0] %v1901
      %1909 = vst [vmem:[#allocation4 + $0x150] sm:$0xf0] %v1902
      %1910 = vst.msk [vmem:[#allocation4 + $0x158] sm:$0xf0] %vm1544, %v1899
      %1911 = vst [vmem:[#allocation4 + $0x160] sm:$0x3] %v1900
      %1912 = vst [vmem:[#allocation4 + $0x168] sm:$0x3] %v1901
      %1913 = vst [vmem:[#allocation4 + $0x170] sm:$0x3] %v1902
      %1914 = vst.msk [vmem:[#allocation4 + $0x178] sm:$0x3] %vm1549, %v1899
      %v1915 = vld [vmem:[%s1308] sm:$0x3f]
      %v1916 = vld [vmem:[%s1308 + $0x8] sm:$0x3f]
      %v1917 = vld [vmem:[%s1308 + $0x10] sm:$0x3f]
      %v1918 = vld [vmem:[%s1308 + $0x18] sm:$0x3f]
      %v1923 = vrot.slane %v1915, 6
      %v1924 = vrot.slane %v1916, 6
      %v1925 = vrot.slane %v1917, 6
      %v1926 = vrot.slane %v1918, 6
      %1927 = vrot.lane.b32.xlu0 %v1923, 105
      %v1928 = vpop.permute.xlu0 %1927
      %1929 = vrot.lane.b32.xlu0 %v1924, 105
      %v1930 = vpop.permute.xlu0 %1929
      %1931 = vrot.lane.b32.xlu0 %v1925, 105
      %v1932 = vpop.permute.xlu0 %1931
      %1933 = vrot.lane.b32.xlu0 %v1926, 105
      %v1934 = vpop.permute.xlu0 %1933
      %v1935 = vsel %vm514, %v1928, %v1930
      %v1936 = vsel %vm514, %v1930, %v1932
      %v1937 = vsel %vm514, %v1932, %v1934
      %1942 = vst [vmem:[#allocation4 + $0x160] sm:$0xfc] %v1935
      %1943 = vst [vmem:[#allocation4 + $0x168] sm:$0xfc] %v1936
      %1944 = vst [vmem:[#allocation4 + $0x170] sm:$0xfc] %v1937
      %1945 = vst.msk [vmem:[#allocation4 + $0x178] sm:$0xfc] %vm1581, %v1934
      %v1946 = vld [vmem:[#allocation3] sm:$0x3f]
      %v1947 = vld [vmem:[#allocation3 + $0x8] sm:$0x3f]
      %v1948 = vld [vmem:[#allocation3 + $0x10] sm:$0x3f]
      %v1949 = vld [vmem:[#allocation3 + $0x18] sm:$0x3f]
      %1954 = vrot.lane.b32.xlu0 %v1946, 104
      %v1955 = vpop.permute.xlu0 %1954
      %1956 = vrot.lane.b32.xlu0 %v1947, 104
      %v1957 = vpop.permute.xlu0 %1956
      %1958 = vrot.lane.b32.xlu0 %v1948, 104
      %v1959 = vpop.permute.xlu0 %1958
      %1960 = vrot.lane.b32.xlu0 %v1949, 104
      %v1961 = vpop.permute.xlu0 %1960
      %vm1962 = vcmask 850944
      %v1963 = vsel %vm1962, %v1955, %v1957
      %v1964 = vsel %vm1962, %v1957, %v1959
      %v1965 = vsel %vm1962, %v1959, %v1961
      %1970 = vst [vmem:[#allocation4 + $0x180] sm:$0x3f] %v1963
      %1971 = vst [vmem:[#allocation4 + $0x188] sm:$0x3f] %v1964
      %1972 = vst [vmem:[#allocation4 + $0x190] sm:$0x3f] %v1965
      %1973 = vst.msk [vmem:[#allocation4 + $0x198] sm:$0x3f] %vm1486, %v1961
      %v1974 = vld [vmem:[%s1308] sm:$0x3f]
      %v1975 = vld [vmem:[%s1308 + $0x8] sm:$0x3f]
      %v1976 = vld [vmem:[%s1308 + $0x10] sm:$0x3f]
      %v1977 = vld [vmem:[%s1308 + $0x18] sm:$0x3f]
      %v1982 = vrot.slane %v1974, 2
      %v1983 = vrot.slane %v1975, 2
      %v1984 = vrot.slane %v1976, 2
      %v1985 = vrot.slane %v1977, 2
      %1986 = vrot.lane.b32.xlu0 %v1982, 104
      %v1987 = vpop.permute.xlu0 %1986
      %1988 = vrot.lane.b32.xlu0 %v1983, 104
      %v1989 = vpop.permute.xlu0 %1988
      %1990 = vrot.lane.b32.xlu0 %v1984, 104
      %v1991 = vpop.permute.xlu0 %1990
      %1992 = vrot.lane.b32.xlu0 %v1985, 104
      %v1993 = vpop.permute.xlu0 %1992
      %v1994 = vsel %vm1962, %v1987, %v1989
      %v1995 = vsel %vm1962, %v1989, %v1991
      %v1996 = vsel %vm1962, %v1991, %v1993
      %2001 = vst [vmem:[#allocation4 + $0x180] sm:$0xc0] %v1994
      %2002 = vst [vmem:[#allocation4 + $0x188] sm:$0xc0] %v1995
      %2003 = vst [vmem:[#allocation4 + $0x190] sm:$0xc0] %v1996
      %2004 = vst.msk [vmem:[#allocation4 + $0x198] sm:$0xc0] %vm1507, %v1993
      %2005 = vst [vmem:[#allocation4 + $0x1a0] sm:$0xf] %v1994
      %2006 = vst [vmem:[#allocation4 + $0x1a8] sm:$0xf] %v1995
      %2007 = vst [vmem:[#allocation4 + $0x1b0] sm:$0xf] %v1996
      %2008 = vst.msk [vmem:[#allocation4 + $0x1b8] sm:$0xf] %vm1512, %v1993
      %v2009 = vld [vmem:[%s1391] sm:$0x3f]
      %v2010 = vld [vmem:[%s1391 + $0x8] sm:$0x3f]
      %v2011 = vld [vmem:[%s1391 + $0x10] sm:$0x3f]
      %v2012 = vld [vmem:[%s1391 + $0x18] sm:$0x3f]
      %v2017 = vrot.slane %v2009, 4
      %v2018 = vrot.slane %v2010, 4
      %v2019 = vrot.slane %v2011, 4
      %v2020 = vrot.slane %v2012, 4
      %2021 = vrot.lane.b32.xlu0 %v2017, 106
      %v2022 = vpop.permute.xlu0 %2021
      %2023 = vrot.lane.b32.xlu0 %v2018, 106
      %v2024 = vpop.permute.xlu0 %2023
      %2025 = vrot.lane.b32.xlu0 %v2019, 106
      %v2026 = vpop.permute.xlu0 %2025
      %2027 = vrot.lane.b32.xlu0 %v2020, 106
      %v2028 = vpop.permute.xlu0 %2027
      %v2029 = vsel %vm473, %v2022, %v2024
      %v2030 = vsel %vm473, %v2024, %v2026
      %v2031 = vsel %vm473, %v2026, %v2028
      %2036 = vst [vmem:[#allocation4 + $0x1a0] sm:$0xf0] %v2029
      %2037 = vst [vmem:[#allocation4 + $0x1a8] sm:$0xf0] %v2030
      %2038 = vst [vmem:[#allocation4 + $0x1b0] sm:$0xf0] %v2031
      %2039 = vst.msk [vmem:[#allocation4 + $0x1b8] sm:$0xf0] %vm1544, %v2028
      %2040 = vst [vmem:[#allocation4 + $0x1c0] sm:$0x3] %v2029
      %2041 = vst [vmem:[#allocation4 + $0x1c8] sm:$0x3] %v2030
      %2042 = vst [vmem:[#allocation4 + $0x1d0] sm:$0x3] %v2031
      %2043 = vst.msk [vmem:[#allocation4 + $0x1d8] sm:$0x3] %vm1549, %v2028
      %v2044 = vld [vmem:[%s1474] sm:$0x3f]
      %v2045 = vld [vmem:[%s1474 + $0x8] sm:$0x3f]
      %v2046 = vld [vmem:[%s1474 + $0x10] sm:$0x3f]
      %v2047 = vld [vmem:[%s1474 + $0x18] sm:$0x3f]
      %v2052 = vrot.slane %v2044, 6
      %v2053 = vrot.slane %v2045, 6
      %v2054 = vrot.slane %v2046, 6
      %v2055 = vrot.slane %v2047, 6
      %2056 = vrot.lane.b32.xlu0 %v2052, 106
      %v2057 = vpop.permute.xlu0 %2056
      %2058 = vrot.lane.b32.xlu0 %v2053, 106
      %v2059 = vpop.permute.xlu0 %2058
      %2060 = vrot.lane.b32.xlu0 %v2054, 106
      %v2061 = vpop.permute.xlu0 %2060
      %2062 = vrot.lane.b32.xlu0 %v2055, 106
      %v2063 = vpop.permute.xlu0 %2062
      %v2064 = vsel %vm473, %v2057, %v2059
      %v2065 = vsel %vm473, %v2059, %v2061
      %v2066 = vsel %vm473, %v2061, %v2063
      %2071 = vst [vmem:[#allocation4 + $0x1c0] sm:$0xfc] %v2064
      %2072 = vst [vmem:[#allocation4 + $0x1c8] sm:$0xfc] %v2065
      %2073 = vst [vmem:[#allocation4 + $0x1d0] sm:$0xfc] %v2066
      %2074 = vst.msk [vmem:[#allocation4 + $0x1d8] sm:$0xfc] %vm1581, %v2063
      %v2075 = vld [vmem:[%s1391] sm:$0x3f]
      %v2076 = vld [vmem:[%s1391 + $0x8] sm:$0x3f]
      %v2077 = vld [vmem:[%s1391 + $0x10] sm:$0x3f]
      %v2078 = vld [vmem:[%s1391 + $0x18] sm:$0x3f]
      %2083 = vrot.lane.b32.xlu0 %v2075, 105
      %v2084 = vpop.permute.xlu0 %2083
      %2085 = vrot.lane.b32.xlu0 %v2076, 105
      %v2086 = vpop.permute.xlu0 %2085
      %2087 = vrot.lane.b32.xlu0 %v2077, 105
      %v2088 = vpop.permute.xlu0 %2087
      %2089 = vrot.lane.b32.xlu0 %v2078, 105
      %v2090 = vpop.permute.xlu0 %2089
      %v2091 = vsel %vm514, %v2084, %v2086
      %v2092 = vsel %vm514, %v2086, %v2088
      %v2093 = vsel %vm514, %v2088, %v2090
      %2098 = vst [vmem:[#allocation4 + $0x1e0] sm:$0x3f] %v2091
      %2099 = vst [vmem:[#allocation4 + $0x1e8] sm:$0x3f] %v2092
      %2100 = vst [vmem:[#allocation4 + $0x1f0] sm:$0x3f] %v2093
      %2101 = vst.msk [vmem:[#allocation4 + $0x1f8] sm:$0x3f] %vm1486, %v2090
      %v2102 = vld [vmem:[%s1474] sm:$0x3f]
      %v2103 = vld [vmem:[%s1474 + $0x8] sm:$0x3f]
      %v2104 = vld [vmem:[%s1474 + $0x10] sm:$0x3f]
      %v2105 = vld [vmem:[%s1474 + $0x18] sm:$0x3f]
      %v2110 = vrot.slane %v2102, 2
      %v2111 = vrot.slane %v2103, 2
      %v2112 = vrot.slane %v2104, 2
      %v2113 = vrot.slane %v2105, 2
      %2114 = vrot.lane.b32.xlu0 %v2110, 105
      %v2115 = vpop.permute.xlu0 %2114
      %2116 = vrot.lane.b32.xlu0 %v2111, 105
      %v2117 = vpop.permute.xlu0 %2116
      %2118 = vrot.lane.b32.xlu0 %v2112, 105
      %v2119 = vpop.permute.xlu0 %2118
      %2120 = vrot.lane.b32.xlu0 %v2113, 105
      %v2121 = vpop.permute.xlu0 %2120
      %v2122 = vsel %vm514, %v2115, %v2117
      %v2123 = vsel %vm514, %v2117, %v2119
      %v2124 = vsel %vm514, %v2119, %v2121
      %2129 = vst [vmem:[#allocation4 + $0x1e0] sm:$0xc0] %v2122
      %2130 = vst [vmem:[#allocation4 + $0x1e8] sm:$0xc0] %v2123
      %2131 = vst [vmem:[#allocation4 + $0x1f0] sm:$0xc0] %v2124
      %2132 = vst.msk [vmem:[#allocation4 + $0x1f8] sm:$0xc0] %vm1507, %v2121
      %2133 = vst [vmem:[#allocation4 + $0x200] sm:$0xf] %v2122
      %2134 = vst [vmem:[#allocation4 + $0x208] sm:$0xf] %v2123
      %2135 = vst [vmem:[#allocation4 + $0x210] sm:$0xf] %v2124
      %2136 = vst.msk [vmem:[#allocation4 + $0x218] sm:$0xf] %vm1512, %v2121
      %v2137 = vld [vmem:[%s1391] sm:$0x3f]
      %v2138 = vld [vmem:[%s1391 + $0x8] sm:$0x3f]
      %v2139 = vld [vmem:[%s1391 + $0x10] sm:$0x3f]
      %v2140 = vld [vmem:[%s1391 + $0x18] sm:$0x3f]
      %v2145 = vrot.slane %v2137, 4
      %v2146 = vrot.slane %v2138, 4
      %v2147 = vrot.slane %v2139, 4
      %v2148 = vrot.slane %v2140, 4
      %2149 = vrot.lane.b32.xlu0 %v2145, 104
      %v2150 = vpop.permute.xlu0 %2149
      %2151 = vrot.lane.b32.xlu0 %v2146, 104
      %v2152 = vpop.permute.xlu0 %2151
      %2153 = vrot.lane.b32.xlu0 %v2147, 104
      %v2154 = vpop.permute.xlu0 %2153
      %2155 = vrot.lane.b32.xlu0 %v2148, 104
      %v2156 = vpop.permute.xlu0 %2155
      %v2157 = vsel %vm1962, %v2150, %v2152
      %v2158 = vsel %vm1962, %v2152, %v2154
      %v2159 = vsel %vm1962, %v2154, %v2156
      %2164 = vst [vmem:[#allocation4 + $0x200] sm:$0xf0] %v2157
      %2165 = vst [vmem:[#allocation4 + $0x208] sm:$0xf0] %v2158
      %2166 = vst [vmem:[#allocation4 + $0x210] sm:$0xf0] %v2159
      %2167 = vst.msk [vmem:[#allocation4 + $0x218] sm:$0xf0] %vm1544, %v2156
      %2168 = vst [vmem:[#allocation4 + $0x220] sm:$0x3] %v2157
      %2169 = vst [vmem:[#allocation4 + $0x228] sm:$0x3] %v2158
      %2170 = vst [vmem:[#allocation4 + $0x230] sm:$0x3] %v2159
      %2171 = vst.msk [vmem:[#allocation4 + $0x238] sm:$0x3] %vm1549, %v2156
      %v2172 = vld [vmem:[%s1474] sm:$0x3f]
      %v2173 = vld [vmem:[%s1474 + $0x8] sm:$0x3f]
      %v2174 = vld [vmem:[%s1474 + $0x10] sm:$0x3f]
      %v2175 = vld [vmem:[%s1474 + $0x18] sm:$0x3f]
      %v2180 = vrot.slane %v2172, 6
      %v2181 = vrot.slane %v2173, 6
      %v2182 = vrot.slane %v2174, 6
      %v2183 = vrot.slane %v2175, 6
      %2184 = vrot.lane.b32.xlu0 %v2180, 104
      %v2185 = vpop.permute.xlu0 %2184
      %2186 = vrot.lane.b32.xlu0 %v2181, 104
      %v2187 = vpop.permute.xlu0 %2186
      %2188 = vrot.lane.b32.xlu0 %v2182, 104
      %v2189 = vpop.permute.xlu0 %2188
      %2190 = vrot.lane.b32.xlu0 %v2183, 104
      %v2191 = vpop.permute.xlu0 %2190
      %v2192 = vsel %vm1962, %v2185, %v2187
      %v2193 = vsel %vm1962, %v2187, %v2189
      %v2194 = vsel %vm1962, %v2189, %v2191
      %2199 = vst [vmem:[#allocation4 + $0x220] sm:$0xfc] %v2192
      %2200 = vst [vmem:[#allocation4 + $0x228] sm:$0xfc] %v2193
      %2201 = vst [vmem:[#allocation4 + $0x230] sm:$0xfc] %v2194
      %2202 = vst.msk [vmem:[#allocation4 + $0x238] sm:$0xfc] %vm1581, %v2191
      %v2203 = vld [vmem:[#allocation3] sm:$0x3f]
      %v2204 = vld [vmem:[#allocation3 + $0x8] sm:$0x3f]
      %v2205 = vld [vmem:[#allocation3 + $0x10] sm:$0x3f]
      %v2206 = vld [vmem:[#allocation3 + $0x18] sm:$0x3f]
      %2211 = vrot.lane.b32.xlu0 %v2203, 84
      %v2212 = vpop.permute.xlu0 %2211
      %2213 = vrot.lane.b32.xlu0 %v2204, 84
      %v2214 = vpop.permute.xlu0 %2213
      %2215 = vrot.lane.b32.xlu0 %v2205, 84
      %v2216 = vpop.permute.xlu0 %2215
      %2217 = vrot.lane.b32.xlu0 %v2206, 84
      %v2218 = vpop.permute.xlu0 %2217
      %vm2219 = vcmask 687104
      %v2220 = vsel %vm2219, %v2212, %v2214
      %v2221 = vsel %vm2219, %v2214, %v2216
      %v2222 = vsel %vm2219, %v2216, %v2218
      %2227 = vst [vmem:[#allocation4 + $0x240] sm:$0x3f] %v2220
      %2228 = vst [vmem:[#allocation4 + $0x248] sm:$0x3f] %v2221
      %2229 = vst [vmem:[#allocation4 + $0x250] sm:$0x3f] %v2222
      %2230 = vst.msk [vmem:[#allocation4 + $0x258] sm:$0x3f] %vm1486, %v2218
      %v2231 = vld [vmem:[%s1308] sm:$0x3f]
      %v2232 = vld [vmem:[%s1308 + $0x8] sm:$0x3f]
      %v2233 = vld [vmem:[%s1308 + $0x10] sm:$0x3f]
      %v2234 = vld [vmem:[%s1308 + $0x18] sm:$0x3f]
      %v2239 = vrot.slane %v2231, 2
      %v2240 = vrot.slane %v2232, 2
      %v2241 = vrot.slane %v2233, 2
      %v2242 = vrot.slane %v2234, 2
      %2243 = vrot.lane.b32.xlu0 %v2239, 84
      %v2244 = vpop.permute.xlu0 %2243
      %2245 = vrot.lane.b32.xlu0 %v2240, 84
      %v2246 = vpop.permute.xlu0 %2245
      %2247 = vrot.lane.b32.xlu0 %v2241, 84
      %v2248 = vpop.permute.xlu0 %2247
      %2249 = vrot.lane.b32.xlu0 %v2242, 84
      %v2250 = vpop.permute.xlu0 %2249
      %v2251 = vsel %vm2219, %v2244, %v2246
      %v2252 = vsel %vm2219, %v2246, %v2248
      %v2253 = vsel %vm2219, %v2248, %v2250
      %2258 = vst [vmem:[#allocation4 + $0x240] sm:$0xc0] %v2251
      %2259 = vst [vmem:[#allocation4 + $0x248] sm:$0xc0] %v2252
      %2260 = vst [vmem:[#allocation4 + $0x250] sm:$0xc0] %v2253
      %2261 = vst.msk [vmem:[#allocation4 + $0x258] sm:$0xc0] %vm1507, %v2250
      %2262 = vst [vmem:[#allocation4 + $0x260] sm:$0xf] %v2251
      %2263 = vst [vmem:[#allocation4 + $0x268] sm:$0xf] %v2252
      %2264 = vst [vmem:[#allocation4 + $0x270] sm:$0xf] %v2253
      %2265 = vst.msk [vmem:[#allocation4 + $0x278] sm:$0xf] %vm1512, %v2250
      %v2266 = vld [vmem:[#allocation3] sm:$0x3f]
      %v2267 = vld [vmem:[#allocation3 + $0x8] sm:$0x3f]
      %v2268 = vld [vmem:[#allocation3 + $0x10] sm:$0x3f]
      %v2269 = vld [vmem:[#allocation3 + $0x18] sm:$0x3f]
      %v2274 = vrot.slane %v2266, 4
      %v2275 = vrot.slane %v2267, 4
      %v2276 = vrot.slane %v2268, 4
      %v2277 = vrot.slane %v2269, 4
      %2278 = vrot.lane.b32.xlu0 %v2274, 83
      %v2279 = vpop.permute.xlu0 %2278
      %2280 = vrot.lane.b32.xlu0 %v2275, 83
      %v2281 = vpop.permute.xlu0 %2280
      %2282 = vrot.lane.b32.xlu0 %v2276, 83
      %v2283 = vpop.permute.xlu0 %2282
      %2284 = vrot.lane.b32.xlu0 %v2277, 83
      %v2285 = vpop.permute.xlu0 %2284
      %vm2286 = vcmask 678912
      %v2287 = vsel %vm2286, %v2279, %v2281
      %v2288 = vsel %vm2286, %v2281, %v2283
      %v2289 = vsel %vm2286, %v2283, %v2285
      %2294 = vst [vmem:[#allocation4 + $0x260] sm:$0xf0] %v2287
      %2295 = vst [vmem:[#allocation4 + $0x268] sm:$0xf0] %v2288
      %2296 = vst [vmem:[#allocation4 + $0x270] sm:$0xf0] %v2289
      %2297 = vst.msk [vmem:[#allocation4 + $0x278] sm:$0xf0] %vm1544, %v2285
      %2298 = vst [vmem:[#allocation4 + $0x280] sm:$0x3] %v2287
      %2299 = vst [vmem:[#allocation4 + $0x288] sm:$0x3] %v2288
      %2300 = vst [vmem:[#allocation4 + $0x290] sm:$0x3] %v2289
      %2301 = vst.msk [vmem:[#allocation4 + $0x298] sm:$0x3] %vm1549, %v2285
      %v2302 = vld [vmem:[%s1308] sm:$0x3f]
      %v2303 = vld [vmem:[%s1308 + $0x8] sm:$0x3f]
      %v2304 = vld [vmem:[%s1308 + $0x10] sm:$0x3f]
      %v2305 = vld [vmem:[%s1308 + $0x18] sm:$0x3f]
      %v2310 = vrot.slane %v2302, 6
      %v2311 = vrot.slane %v2303, 6
      %v2312 = vrot.slane %v2304, 6
      %v2313 = vrot.slane %v2305, 6
      %2314 = vrot.lane.b32.xlu0 %v2310, 83
      %v2315 = vpop.permute.xlu0 %2314
      %2316 = vrot.lane.b32.xlu0 %v2311, 83
      %v2317 = vpop.permute.xlu0 %2316
      %2318 = vrot.lane.b32.xlu0 %v2312, 83
      %v2319 = vpop.permute.xlu0 %2318
      %2320 = vrot.lane.b32.xlu0 %v2313, 83
      %v2321 = vpop.permute.xlu0 %2320
      %v2322 = vsel %vm2286, %v2315, %v2317
      %v2323 = vsel %vm2286, %v2317, %v2319
      %v2324 = vsel %vm2286, %v2319, %v2321
      %2329 = vst [vmem:[#allocation4 + $0x280] sm:$0xfc] %v2322
      %2330 = vst [vmem:[#allocation4 + $0x288] sm:$0xfc] %v2323
      %2331 = vst [vmem:[#allocation4 + $0x290] sm:$0xfc] %v2324
      %2332 = vst.msk [vmem:[#allocation4 + $0x298] sm:$0xfc] %vm1581, %v2321
      %v2333 = vld [vmem:[#allocation3] sm:$0x3f]
      %v2334 = vld [vmem:[#allocation3 + $0x8] sm:$0x3f]
      %v2335 = vld [vmem:[#allocation3 + $0x10] sm:$0x3f]
      %v2336 = vld [vmem:[#allocation3 + $0x18] sm:$0x3f]
      %2341 = vrot.lane.b32.xlu0 %v2333, 82
      %v2342 = vpop.permute.xlu0 %2341
      %2343 = vrot.lane.b32.xlu0 %v2334, 82
      %v2344 = vpop.permute.xlu0 %2343
      %2345 = vrot.lane.b32.xlu0 %v2335, 82
      %v2346 = vpop.permute.xlu0 %2345
      %2347 = vrot.lane.b32.xlu0 %v2336, 82
      %v2348 = vpop.permute.xlu0 %2347
      %vm2349 = vcmask 670720
      %v2350 = vsel %vm2349, %v2342, %v2344
      %v2351 = vsel %vm2349, %v2344, %v2346
      %v2352 = vsel %vm2349, %v2346, %v2348
      %2357 = vst [vmem:[#allocation4 + $0x2a0] sm:$0x3f] %v2350
      %2358 = vst [vmem:[#allocation4 + $0x2a8] sm:$0x3f] %v2351
      %2359 = vst [vmem:[#allocation4 + $0x2b0] sm:$0x3f] %v2352
      %2360 = vst.msk [vmem:[#allocation4 + $0x2b8] sm:$0x3f] %vm1486, %v2348
      %v2361 = vld [vmem:[%s1308] sm:$0x3f]
      %v2362 = vld [vmem:[%s1308 + $0x8] sm:$0x3f]
      %v2363 = vld [vmem:[%s1308 + $0x10] sm:$0x3f]
      %v2364 = vld [vmem:[%s1308 + $0x18] sm:$0x3f]
      %v2369 = vrot.slane %v2361, 2
      %v2370 = vrot.slane %v2362, 2
      %v2371 = vrot.slane %v2363, 2
      %v2372 = vrot.slane %v2364, 2
      %2373 = vrot.lane.b32.xlu0 %v2369, 82
      %v2374 = vpop.permute.xlu0 %2373
      %2375 = vrot.lane.b32.xlu0 %v2370, 82
      %v2376 = vpop.permute.xlu0 %2375
      %2377 = vrot.lane.b32.xlu0 %v2371, 82
      %v2378 = vpop.permute.xlu0 %2377
      %2379 = vrot.lane.b32.xlu0 %v2372, 82
      %v2380 = vpop.permute.xlu0 %2379
      %v2381 = vsel %vm2349, %v2374, %v2376
      %v2382 = vsel %vm2349, %v2376, %v2378
      %v2383 = vsel %vm2349, %v2378, %v2380
      %2388 = vst [vmem:[#allocation4 + $0x2a0] sm:$0xc0] %v2381
      %2389 = vst [vmem:[#allocation4 + $0x2a8] sm:$0xc0] %v2382
      %2390 = vst [vmem:[#allocation4 + $0x2b0] sm:$0xc0] %v2383
      %2391 = vst.msk [vmem:[#allocation4 + $0x2b8] sm:$0xc0] %vm1507, %v2380
      %2392 = vst [vmem:[#allocation4 + $0x2c0] sm:$0xf] %v2381
      %2393 = vst [vmem:[#allocation4 + $0x2c8] sm:$0xf] %v2382
      %2394 = vst [vmem:[#allocation4 + $0x2d0] sm:$0xf] %v2383
      %2395 = vst.msk [vmem:[#allocation4 + $0x2d8] sm:$0xf] %vm1512, %v2380
      %v2396 = vld [vmem:[%s1391] sm:$0x3f]
      %v2397 = vld [vmem:[%s1391 + $0x8] sm:$0x3f]
      %v2398 = vld [vmem:[%s1391 + $0x10] sm:$0x3f]
      %v2399 = vld [vmem:[%s1391 + $0x18] sm:$0x3f]
      %v2404 = vrot.slane %v2396, 4
      %v2405 = vrot.slane %v2397, 4
      %v2406 = vrot.slane %v2398, 4
      %v2407 = vrot.slane %v2399, 4
      %2408 = vrot.lane.b32.xlu0 %v2404, 84
      %v2409 = vpop.permute.xlu0 %2408
      %2410 = vrot.lane.b32.xlu0 %v2405, 84
      %v2411 = vpop.permute.xlu0 %2410
      %2412 = vrot.lane.b32.xlu0 %v2406, 84
      %v2413 = vpop.permute.xlu0 %2412
      %2414 = vrot.lane.b32.xlu0 %v2407, 84
      %v2415 = vpop.permute.xlu0 %2414
      %v2416 = vsel %vm2219, %v2409, %v2411
      %v2417 = vsel %vm2219, %v2411, %v2413
      %v2418 = vsel %vm2219, %v2413, %v2415
      %2423 = vst [vmem:[#allocation4 + $0x2c0] sm:$0xf0] %v2416
      %2424 = vst [vmem:[#allocation4 + $0x2c8] sm:$0xf0] %v2417
      %2425 = vst [vmem:[#allocation4 + $0x2d0] sm:$0xf0] %v2418
      %2426 = vst.msk [vmem:[#allocation4 + $0x2d8] sm:$0xf0] %vm1544, %v2415
      %2427 = vst [vmem:[#allocation4 + $0x2e0] sm:$0x3] %v2416
      %2428 = vst [vmem:[#allocation4 + $0x2e8] sm:$0x3] %v2417
      %2429 = vst [vmem:[#allocation4 + $0x2f0] sm:$0x3] %v2418
      %2430 = vst.msk [vmem:[#allocation4 + $0x2f8] sm:$0x3] %vm1549, %v2415
      %v2431 = vld [vmem:[%s1474] sm:$0x3f]
      %v2432 = vld [vmem:[%s1474 + $0x8] sm:$0x3f]
      %v2433 = vld [vmem:[%s1474 + $0x10] sm:$0x3f]
      %v2434 = vld [vmem:[%s1474 + $0x18] sm:$0x3f]
      %v2439 = vrot.slane %v2431, 6
      %v2440 = vrot.slane %v2432, 6
      %v2441 = vrot.slane %v2433, 6
      %v2442 = vrot.slane %v2434, 6
      %2443 = vrot.lane.b32.xlu0 %v2439, 84
      %v2444 = vpop.permute.xlu0 %2443
      %2445 = vrot.lane.b32.xlu0 %v2440, 84
      %v2446 = vpop.permute.xlu0 %2445
      %2447 = vrot.lane.b32.xlu0 %v2441, 84
      %v2448 = vpop.permute.xlu0 %2447
      %2449 = vrot.lane.b32.xlu0 %v2442, 84
      %v2450 = vpop.permute.xlu0 %2449
      %v2451 = vsel %vm2219, %v2444, %v2446
      %v2452 = vsel %vm2219, %v2446, %v2448
      %v2453 = vsel %vm2219, %v2448, %v2450
      %2458 = vst [vmem:[#allocation4 + $0x2e0] sm:$0xfc] %v2451
      %2459 = vst [vmem:[#allocation4 + $0x2e8] sm:$0xfc] %v2452
      %2460 = vst [vmem:[#allocation4 + $0x2f0] sm:$0xfc] %v2453
      %2461 = vst.msk [vmem:[#allocation4 + $0x2f8] sm:$0xfc] %vm1581, %v2450
      %v2462 = vld [vmem:[%s1391] sm:$0x3f]
      %v2463 = vld [vmem:[%s1391 + $0x8] sm:$0x3f]
      %v2464 = vld [vmem:[%s1391 + $0x10] sm:$0x3f]
      %v2465 = vld [vmem:[%s1391 + $0x18] sm:$0x3f]
      %2470 = vrot.lane.b32.xlu0 %v2462, 83
      %v2471 = vpop.permute.xlu0 %2470
      %2472 = vrot.lane.b32.xlu0 %v2463, 83
      %v2473 = vpop.permute.xlu0 %2472
      %2474 = vrot.lane.b32.xlu0 %v2464, 83
      %v2475 = vpop.permute.xlu0 %2474
      %2476 = vrot.lane.b32.xlu0 %v2465, 83
      %v2477 = vpop.permute.xlu0 %2476
      %v2478 = vsel %vm2286, %v2471, %v2473
      %v2479 = vsel %vm2286, %v2473, %v2475
      %v2480 = vsel %vm2286, %v2475, %v2477
      %2485 = vst [vmem:[#allocation4 + $0x300] sm:$0x3f] %v2478
      %2486 = vst [vmem:[#allocation4 + $0x308] sm:$0x3f] %v2479
      %2487 = vst [vmem:[#allocation4 + $0x310] sm:$0x3f] %v2480
      %2488 = vst.msk [vmem:[#allocation4 + $0x318] sm:$0x3f] %vm1486, %v2477
      %v2489 = vld [vmem:[%s1474] sm:$0x3f]
      %v2490 = vld [vmem:[%s1474 + $0x8] sm:$0x3f]
      %v2491 = vld [vmem:[%s1474 + $0x10] sm:$0x3f]
      %v2492 = vld [vmem:[%s1474 + $0x18] sm:$0x3f]
      %v2497 = vrot.slane %v2489, 2
      %v2498 = vrot.slane %v2490, 2
      %v2499 = vrot.slane %v2491, 2
      %v2500 = vrot.slane %v2492, 2
      %2501 = vrot.lane.b32.xlu0 %v2497, 83
      %v2502 = vpop.permute.xlu0 %2501
      %2503 = vrot.lane.b32.xlu0 %v2498, 83
      %v2504 = vpop.permute.xlu0 %2503
      %2505 = vrot.lane.b32.xlu0 %v2499, 83
      %v2506 = vpop.permute.xlu0 %2505
      %2507 = vrot.lane.b32.xlu0 %v2500, 83
      %v2508 = vpop.permute.xlu0 %2507
      %v2509 = vsel %vm2286, %v2502, %v2504
      %v2510 = vsel %vm2286, %v2504, %v2506
      %v2511 = vsel %vm2286, %v2506, %v2508
      %2516 = vst [vmem:[#allocation4 + $0x300] sm:$0xc0] %v2509
      %2517 = vst [vmem:[#allocation4 + $0x308] sm:$0xc0] %v2510
      %2518 = vst [vmem:[#allocation4 + $0x310] sm:$0xc0] %v2511
      %2519 = vst.msk [vmem:[#allocation4 + $0x318] sm:$0xc0] %vm1507, %v2508
      %2520 = vst [vmem:[#allocation4 + $0x320] sm:$0xf] %v2509
      %2521 = vst [vmem:[#allocation4 + $0x328] sm:$0xf] %v2510
      %2522 = vst [vmem:[#allocation4 + $0x330] sm:$0xf] %v2511
      %2523 = vst.msk [vmem:[#allocation4 + $0x338] sm:$0xf] %vm1512, %v2508
      %v2524 = vld [vmem:[%s1391] sm:$0x3f]
      %v2525 = vld [vmem:[%s1391 + $0x8] sm:$0x3f]
      %v2526 = vld [vmem:[%s1391 + $0x10] sm:$0x3f]
      %v2527 = vld [vmem:[%s1391 + $0x18] sm:$0x3f]
      %v2532 = vrot.slane %v2524, 4
      %v2533 = vrot.slane %v2525, 4
      %v2534 = vrot.slane %v2526, 4
      %v2535 = vrot.slane %v2527, 4
      %2536 = vrot.lane.b32.xlu0 %v2532, 82
      %v2537 = vpop.permute.xlu0 %2536
      %2538 = vrot.lane.b32.xlu0 %v2533, 82
      %v2539 = vpop.permute.xlu0 %2538
      %2540 = vrot.lane.b32.xlu0 %v2534, 82
      %v2541 = vpop.permute.xlu0 %2540
      %2542 = vrot.lane.b32.xlu0 %v2535, 82
      %v2543 = vpop.permute.xlu0 %2542
      %v2544 = vsel %vm2349, %v2537, %v2539
      %v2545 = vsel %vm2349, %v2539, %v2541
      %v2546 = vsel %vm2349, %v2541, %v2543
      %2551 = vst [vmem:[#allocation4 + $0x320] sm:$0xf0] %v2544
      %2552 = vst [vmem:[#allocation4 + $0x328] sm:$0xf0] %v2545
      %2553 = vst [vmem:[#allocation4 + $0x330] sm:$0xf0] %v2546
      %2554 = vst.msk [vmem:[#allocation4 + $0x338] sm:$0xf0] %vm1544, %v2543
      %2555 = vst [vmem:[#allocation4 + $0x340] sm:$0x3] %v2544
      %2556 = vst [vmem:[#allocation4 + $0x348] sm:$0x3] %v2545
      %2557 = vst [vmem:[#allocation4 + $0x350] sm:$0x3] %v2546
      %2558 = vst.msk [vmem:[#allocation4 + $0x358] sm:$0x3] %vm1549, %v2543
      %v2559 = vld [vmem:[%s1474] sm:$0x3f]
      %v2560 = vld [vmem:[%s1474 + $0x8] sm:$0x3f]
      %v2561 = vld [vmem:[%s1474 + $0x10] sm:$0x3f]
      %v2562 = vld [vmem:[%s1474 + $0x18] sm:$0x3f]
      %v2567 = vrot.slane %v2559, 6
      %v2568 = vrot.slane %v2560, 6
      %v2569 = vrot.slane %v2561, 6
      %v2570 = vrot.slane %v2562, 6
      %2571 = vrot.lane.b32.xlu0 %v2567, 82
      %v2572 = vpop.permute.xlu0 %2571
      %2573 = vrot.lane.b32.xlu0 %v2568, 82
      %v2574 = vpop.permute.xlu0 %2573
      %2575 = vrot.lane.b32.xlu0 %v2569, 82
      %v2576 = vpop.permute.xlu0 %2575
      %2577 = vrot.lane.b32.xlu0 %v2570, 82
      %v2578 = vpop.permute.xlu0 %2577
      %v2579 = vsel %vm2349, %v2572, %v2574
      %v2580 = vsel %vm2349, %v2574, %v2576
      %v2581 = vsel %vm2349, %v2576, %v2578
      %2586 = vst [vmem:[#allocation4 + $0x340] sm:$0xfc] %v2579
      %2587 = vst [vmem:[#allocation4 + $0x348] sm:$0xfc] %v2580
      %2588 = vst [vmem:[#allocation4 + $0x350] sm:$0xfc] %v2581
      %2589 = vst.msk [vmem:[#allocation4 + $0x358] sm:$0xfc] %vm1581, %v2578
      %v2590 = vld [vmem:[%s3] sm:$0xff]
      %v2591 = vld [vmem:[%s3 + $0x8] sm:$0xff]
      %v2592 = vld [vmem:[%s3 + $0x10] sm:$0xff]
      %v2593 = vld [vmem:[%s3 + $0x18] sm:$0xff]
      %v2594 = vld [vmem:[%s3 + $0x20] sm:$0xff]
      %v2595 = vld [vmem:[%s3 + $0x28] sm:$0xff]
      %v2596 = vld [vmem:[%s3 + $0x30] sm:$0xff]
      %v2597 = vld [vmem:[%s3 + $0x38] sm:$0xff]
      %v2598 = vld [vmem:[%s3 + $0x40] sm:$0xff]
      %v2599 = vld [vmem:[%s3 + $0x48] sm:$0xff]
      %v2600 = vld [vmem:[%s3 + $0x50] sm:$0xff]
      %v2601 = vld [vmem:[%s3 + $0x58] sm:$0xff]
      %v2602 = vld [vmem:[%s3 + $0x60] sm:$0xff]
      %v2603 = vld [vmem:[%s3 + $0x68] sm:$0xff]
      %v2604 = vld [vmem:[%s3 + $0x70] sm:$0xff]
      %v2605 = vld [vmem:[%s3 + $0x78] sm:$0xff]
      %v2606 = vld [vmem:[#allocation4] sm:$0xff]
      %v2607 = vld [vmem:[#allocation4 + $0x8] sm:$0xff]
      %v2608 = vld [vmem:[#allocation4 + $0x10] sm:$0xff]
      %v2609 = vld [vmem:[#allocation4 + $0x18] sm:$0xff]
      %v2610 = vld [vmem:[#allocation4 + $0x20] sm:$0xff]
      %v2611 = vld [vmem:[#allocation4 + $0x28] sm:$0xff]
      %v2612 = vld [vmem:[#allocation4 + $0x30] sm:$0xff]
      %v2613 = vld [vmem:[#allocation4 + $0x38] sm:$0xff]
      %v2614 = vld [vmem:[#allocation4 + $0x40] sm:$0xff]
      %v2615 = vld [vmem:[#allocation4 + $0x48] sm:$0xff]
      %v2616 = vld [vmem:[#allocation4 + $0x50] sm:$0xff]
      %v2617 = vld [vmem:[#allocation4 + $0x58] sm:$0xff]
      %v2618 = vld [vmem:[#allocation4 + $0x60] sm:$0xff]
      %v2619 = vld [vmem:[#allocation4 + $0x68] sm:$0xff]
      %v2620 = vld [vmem:[#allocation4 + $0x70] sm:$0xff]
      %v2621 = vld [vmem:[#allocation4 + $0x78] sm:$0xff]
      %v2622 = vld [vmem:[#allocation4 + $0x80] sm:$0xff]
      %v2623 = vld [vmem:[#allocation4 + $0x88] sm:$0xff]
      %v2624 = vld [vmem:[#allocation4 + $0x90] sm:$0xff]
      %v2625 = vld [vmem:[#allocation4 + $0x98] sm:$0xff]
      %v2626 = vld [vmem:[#allocation4 + $0xa0] sm:$0xff]
      %v2627 = vld [vmem:[#allocation4 + $0xa8] sm:$0xff]
      %v2628 = vld [vmem:[#allocation4 + $0xb0] sm:$0xff]
      %v2629 = vld [vmem:[#allocation4 + $0xb8] sm:$0xff]
      %v2630 = vld [vmem:[#allocation4 + $0xc0] sm:$0xff]
      %v2631 = vld [vmem:[#allocation4 + $0xc8] sm:$0xff]
      %v2632 = vld [vmem:[#allocation4 + $0xd0] sm:$0xff]
      %v2633 = vld [vmem:[#allocation4 + $0xd8] sm:$0xff]
      %v2634 = vld [vmem:[#allocation4 + $0xe0] sm:$0xff]
      %v2635 = vld [vmem:[#allocation4 + $0xe8] sm:$0xff]
      %v2636 = vld [vmem:[#allocation4 + $0xf0] sm:$0xff]
      %v2637 = vld [vmem:[#allocation4 + $0xf8] sm:$0xff]
      %v2638 = vld [vmem:[#allocation4 + $0x100] sm:$0xff]
      %v2639 = vld [vmem:[#allocation4 + $0x108] sm:$0xff]
      %v2640 = vld [vmem:[#allocation4 + $0x110] sm:$0xff]
      %v2641 = vld [vmem:[#allocation4 + $0x118] sm:$0xff]
      %v2642 = vld [vmem:[#allocation4 + $0x120] sm:$0xff]
      %v2643 = vld [vmem:[#allocation4 + $0x128] sm:$0xff]
      %v2644 = vld [vmem:[#allocation4 + $0x130] sm:$0xff]
      %v2645 = vld [vmem:[#allocation4 + $0x138] sm:$0xff]
      %v2646 = vld [vmem:[#allocation4 + $0x140] sm:$0xff]
      %v2647 = vld [vmem:[#allocation4 + $0x148] sm:$0xff]
      %v2648 = vld [vmem:[#allocation4 + $0x150] sm:$0xff]
      %v2649 = vld [vmem:[#allocation4 + $0x158] sm:$0xff]
      %v2650 = vld [vmem:[#allocation4 + $0x160] sm:$0xff]
      %v2651 = vld [vmem:[#allocation4 + $0x168] sm:$0xff]
      %v2652 = vld [vmem:[#allocation4 + $0x170] sm:$0xff]
      %v2653 = vld [vmem:[#allocation4 + $0x178] sm:$0xff]
      %v2654 = vld [vmem:[#allocation4 + $0x180] sm:$0xff]
      %v2655 = vld [vmem:[#allocation4 + $0x188] sm:$0xff]
      %v2656 = vld [vmem:[#allocation4 + $0x190] sm:$0xff]
      %v2657 = vld [vmem:[#allocation4 + $0x198] sm:$0xff]
      %v2658 = vld [vmem:[#allocation4 + $0x1a0] sm:$0xff]
      %v2659 = vld [vmem:[#allocation4 + $0x1a8] sm:$0xff]
      %v2660 = vld [vmem:[#allocation4 + $0x1b0] sm:$0xff]
      %v2661 = vld [vmem:[#allocation4 + $0x1b8] sm:$0xff]
      %v2662 = vld [vmem:[#allocation4 + $0x1c0] sm:$0xff]
      %v2663 = vld [vmem:[#allocation4 + $0x1c8] sm:$0xff]
      %v2664 = vld [vmem:[#allocation4 + $0x1d0] sm:$0xff]
      %v2665 = vld [vmem:[#allocation4 + $0x1d8] sm:$0xff]
      %v2666 = vld [vmem:[#allocation4 + $0x1e0] sm:$0xff]
      %v2667 = vld [vmem:[#allocation4 + $0x1e8] sm:$0xff]
      %v2668 = vld [vmem:[#allocation4 + $0x1f0] sm:$0xff]
      %v2669 = vld [vmem:[#allocation4 + $0x1f8] sm:$0xff]
      %v2670 = vld [vmem:[#allocation4 + $0x200] sm:$0xff]
      %v2671 = vld [vmem:[#allocation4 + $0x208] sm:$0xff]
      %v2672 = vld [vmem:[#allocation4 + $0x210] sm:$0xff]
      %v2673 = vld [vmem:[#allocation4 + $0x218] sm:$0xff]
      %v2674 = vld [vmem:[#allocation4 + $0x220] sm:$0xff]
      %v2675 = vld [vmem:[#allocation4 + $0x228] sm:$0xff]
      %v2676 = vld [vmem:[#allocation4 + $0x230] sm:$0xff]
      %v2677 = vld [vmem:[#allocation4 + $0x238] sm:$0xff]
      %v2678 = vld [vmem:[#allocation4 + $0x240] sm:$0xff]
      %v2679 = vld [vmem:[#allocation4 + $0x248] sm:$0xff]
      %v2680 = vld [vmem:[#allocation4 + $0x250] sm:$0xff]
      %v2681 = vld [vmem:[#allocation4 + $0x258] sm:$0xff]
      %v2682 = vld [vmem:[#allocation4 + $0x260] sm:$0xff]
      %v2683 = vld [vmem:[#allocation4 + $0x268] sm:$0xff]
      %v2684 = vld [vmem:[#allocation4 + $0x270] sm:$0xff]
      %v2685 = vld [vmem:[#allocation4 + $0x278] sm:$0xff]
      %v2686 = vld [vmem:[#allocation4 + $0x280] sm:$0xff]
      %v2687 = vld [vmem:[#allocation4 + $0x288] sm:$0xff]
      %v2688 = vld [vmem:[#allocation4 + $0x290] sm:$0xff]
      %v2689 = vld [vmem:[#allocation4 + $0x298] sm:$0xff]
      %v2690 = vld [vmem:[#allocation4 + $0x2a0] sm:$0xff]
      %v2691 = vld [vmem:[#allocation4 + $0x2a8] sm:$0xff]
      %v2692 = vld [vmem:[#allocation4 + $0x2b0] sm:$0xff]
      %v2693 = vld [vmem:[#allocation4 + $0x2b8] sm:$0xff]
      %v2694 = vld [vmem:[#allocation4 + $0x2c0] sm:$0xff]
      %v2695 = vld [vmem:[#allocation4 + $0x2c8] sm:$0xff]
      %v2696 = vld [vmem:[#allocation4 + $0x2d0] sm:$0xff]
      %v2697 = vld [vmem:[#allocation4 + $0x2d8] sm:$0xff]
      %v2698 = vld [vmem:[#allocation4 + $0x2e0] sm:$0xff]
      %v2699 = vld [vmem:[#allocation4 + $0x2e8] sm:$0xff]
      %v2700 = vld [vmem:[#allocation4 + $0x2f0] sm:$0xff]
      %v2701 = vld [vmem:[#allocation4 + $0x2f8] sm:$0xff]
      %v2702 = vld [vmem:[#allocation4 + $0x300] sm:$0xff]
      %v2703 = vld [vmem:[#allocation4 + $0x308] sm:$0xff]
      %v2704 = vld [vmem:[#allocation4 + $0x310] sm:$0xff]
      %v2705 = vld [vmem:[#allocation4 + $0x318] sm:$0xff]
      %v2706 = vld [vmem:[#allocation4 + $0x320] sm:$0xff]
      %v2707 = vld [vmem:[#allocation4 + $0x328] sm:$0xff]
      %v2708 = vld [vmem:[#allocation4 + $0x330] sm:$0xff]
      %v2709 = vld [vmem:[#allocation4 + $0x338] sm:$0xff]
      %v2710 = vld [vmem:[#allocation4 + $0x340] sm:$0xff]
      %v2711 = vld [vmem:[#allocation4 + $0x348] sm:$0xff]
      %v2712 = vld [vmem:[#allocation4 + $0x350] sm:$0xff]
      %v2713 = vld [vmem:[#allocation4 + $0x358] sm:$0xff]
      %vm2714 = vcmask 719872
      %v2716 = vsel %vm2714, %v2591, 0
      %v2719 = vsel %vm2714, %v2593, 0
      %v2722 = vsel %vm2714, %v2595, 0
      %v2725 = vsel %vm2714, %v2597, 0
      %v2728 = vsel %vm2714, %v2599, 0
      %v2731 = vsel %vm2714, %v2601, 0
      %v2734 = vsel %vm2714, %v2603, 0
      %v2737 = vsel %vm2714, %v2605, 0
      %2739 = vmatprep.subr.mxu0 %v2607
      %2740 = vmatpush1.msra.mxu0 %v2606
      %2741 = vmatprep.subr.mxu0 %v2611
      %2742 = vmatpush1.msra.mxu0 %v2610
      %2743 = vmatprep.subr.mxu0 %v2615
      %2744 = vmatpush1.msra.mxu0 %v2614
      %2745 = vmatprep.subr.mxu0 %v2619
      %2746 = vmatpush1.msra.mxu0 %v2618
      %2747 = vmatprep.subr.mxu0 %v2623
      %2748 = vmatpush1.msra.mxu0 %v2622
      %2749 = vmatprep.subr.mxu0 %v2627
      %2750 = vmatpush1.msra.mxu0 %v2626
      %2751 = vmatprep.subr.mxu0 %v2631
      %2752 = vmatpush1.msra.mxu0 %v2630
      %2753 = vmatprep.subr.mxu0 %v2635
      %2754 = vmatpush1.msra.mxu0 %v2634
      %2755 = vmatprep.subr.mxu0 %v2639
      %2756 = vmatpush1.msra.mxu0 %v2638
      %2757 = vmatprep.subr.mxu0 %v2643
      %2758 = vmatpush1.msra.mxu0 %v2642
      %2759 = vmatprep.subr.mxu0 %v2647
      %2760 = vmatpush1.msra.mxu0 %v2646
      %2761 = vmatprep.subr.mxu0 %v2651
      %2762 = vmatpush1.msra.mxu0 %v2650
      %2763 = vmatprep.subr.mxu0 %v2655
      %2764 = vmatpush1.msra.mxu0 %v2654
      %2765 = vmatprep.subr.mxu0 %v2659
      %2766 = vmatpush1.msra.mxu0 %v2658
      %2767 = vmatprep.subr.mxu0 %v2663
      %2768 = vmatpush1.msra.mxu0 %v2662
      %2769 = vmatprep.subr.mxu0 %v2667
      %2770 = vmatpush1.msra.mxu0 %v2666
      %2771 = vmatprep.subr.mxu0 %v2671
      %2772 = vmatpush1.msra.mxu0 %v2670
      %2773 = vmatprep.subr.mxu0 %v2675
      %2774 = vmatpush1.msra.mxu0 %v2674
      %2775 = vmatprep.subr.mxu0 %v2679
      %2776 = vmatpush1.msra.mxu0 %v2678
      %2777 = vmatprep.subr.mxu0 %v2683
      %2778 = vmatpush1.msra.mxu0 %v2682
      %2779 = vmatprep.subr.mxu0 %v2687
      %2780 = vmatpush1.msra.mxu0 %v2686
      %2781 = vmatprep.subr.mxu0 %v2691
      %2782 = vmatpush1.msra.mxu0 %v2690
      %2783 = vmatprep.subr.mxu0 %v2695
      %2784 = vmatpush1.msra.mxu0 %v2694
      %2785 = vmatprep.subr.mxu0 %v2699
      %2786 = vmatpush1.msra.mxu0 %v2698
      %2787 = vmatprep.subr.mxu0 %v2703
      %2788 = vmatpush1.msra.mxu0 %v2702
      %2789 = vmatprep.subr.mxu0 %v2707
      %2790 = vmatpush1.msra.mxu0 %v2706
      %2791 = vmatprep.subr.mxu0 %v2711
      %2792 = vmatpush1.msra.mxu0 %v2710
      %2793 = vmatprep.subr.mxu0 0.0
      %2794 = vmatpush1.msra.mxu0 0.0
      %2795 = vmatprep.subr.mxu0 0.0
      %2796 = vmatpush1.msra.mxu0 0.0
      %2797 = vmatprep.subr.mxu0 0.0
      %2798 = vmatpush1.msra.mxu0 0.0
      %2799 = vmatprep.subr.mxu0 0.0
      %2800 = vmatpush1.msra.mxu0 0.0
      %2801 = vmatprep.subr.mxu0 0.0
      %2802 = vmatpush1.msra.mxu0 0.0
      %2803 = vmatprep.mubr.f32.mxu0 %v2716
      %2804 = vmatmul.mubr.f32.gmra.mrb[0].mxu0 %v2590
      %v2805 = vpop.f32.mrb[0].mxu0
      %v2806 = vadd.f32 0.0, %v2805
      %v2807 = vpop.f32.mrb[0].mxu0
      %v2808 = vadd.f32 0.0, %v2807
      %2809 = vmatprep.mubr.f32.mxu0 %v2719
      %2810 = vmatmul.mubr.f32.gmra.mrb[0].mxu0 %v2592
      %v2811 = vpop.f32.mrb[0].mxu0
      %v2812 = vadd.f32 0.0, %v2811
      %v2813 = vpop.f32.mrb[0].mxu0
      %v2814 = vadd.f32 0.0, %v2813
      %2815 = vmatprep.mubr.f32.mxu0 %v2722
      %2816 = vmatmul.mubr.f32.gmra.mrb[0].mxu0 %v2594
      %v2817 = vpop.f32.mrb[0].mxu0
      %v2818 = vadd.f32 0.0, %v2817
      %v2819 = vpop.f32.mrb[0].mxu0
      %v2820 = vadd.f32 0.0, %v2819
      %2821 = vmatprep.mubr.f32.mxu0 %v2725
      %2822 = vmatmul.mubr.f32.gmra.mrb[0].mxu0 %v2596
      %v2823 = vpop.f32.mrb[0].mxu0
      %v2824 = vadd.f32 0.0, %v2823
      %v2825 = vpop.f32.mrb[0].mxu0
      %v2826 = vadd.f32 0.0, %v2825
      %2827 = vmatprep.mubr.f32.mxu0 %v2728
      %2828 = vmatmul.mubr.f32.gmra.mrb[0].mxu0 %v2598
      %v2829 = vpop.f32.mrb[0].mxu0
      %v2830 = vadd.f32 0.0, %v2829
      %v2831 = vpop.f32.mrb[0].mxu0
      %v2832 = vadd.f32 0.0, %v2831
      %2833 = vmatprep.mubr.f32.mxu0 %v2731
      %2834 = vmatmul.mubr.f32.gmra.mrb[0].mxu0 %v2600
      %v2835 = vpop.f32.mrb[0].mxu0
      %v2836 = vadd.f32 0.0, %v2835
      %v2837 = vpop.f32.mrb[0].mxu0
      %v2838 = vadd.f32 0.0, %v2837
      %2839 = vmatprep.mubr.f32.mxu0 %v2734
      %2840 = vmatmul.mubr.f32.gmra.mrb[0].mxu0 %v2602
      %v2841 = vpop.f32.mrb[0].mxu0
      %v2842 = vadd.f32 0.0, %v2841
      %v2843 = vpop.f32.mrb[0].mxu0
      %v2844 = vadd.f32 0.0, %v2843
      %2845 = vmatprep.mubr.f32.mxu0 %v2737
      %2846 = vmatmul.mubr.f32.gmra.mrb[0].mxu0 %v2604
      %v2847 = vpop.f32.mrb[0].mxu0
      %v2848 = vadd.f32 0.0, %v2847
      %v2849 = vpop.f32.mrb[0].mxu0
      %v2850 = vadd.f32 0.0, %v2849
      %2851 = vdwg.mxu0
      %2852 = vmatprep.subr.mxu0 %v2609
      %2853 = vmatpush1.msra.mxu0 %v2608
      %2854 = vmatprep.subr.mxu0 %v2613
      %2855 = vmatpush1.msra.mxu0 %v2612
      %2856 = vmatprep.subr.mxu0 %v2617
      %2857 = vmatpush1.msra.mxu0 %v2616
      %2858 = vmatprep.subr.mxu0 %v2621
      %2859 = vmatpush1.msra.mxu0 %v2620
      %2860 = vmatprep.subr.mxu0 %v2625
      %2861 = vmatpush1.msra.mxu0 %v2624
      %2862 = vmatprep.subr.mxu0 %v2629
      %2863 = vmatpush1.msra.mxu0 %v2628
      %2864 = vmatprep.subr.mxu0 %v2633
      %2865 = vmatpush1.msra.mxu0 %v2632
      %2866 = vmatprep.subr.mxu0 %v2637
      %2867 = vmatpush1.msra.mxu0 %v2636
      %2868 = vmatprep.subr.mxu0 %v2641
      %2869 = vmatpush1.msra.mxu0 %v2640
      %2870 = vmatprep.subr.mxu0 %v2645
      %2871 = vmatpush1.msra.mxu0 %v2644
      %2872 = vmatprep.subr.mxu0 %v2649
      %2873 = vmatpush1.msra.mxu0 %v2648
      %2874 = vmatprep.subr.mxu0 %v2653
      %2875 = vmatpush1.msra.mxu0 %v2652
      %2876 = vmatprep.subr.mxu0 %v2657
      %2877 = vmatpush1.msra.mxu0 %v2656
      %2878 = vmatprep.subr.mxu0 %v2661
      %2879 = vmatpush1.msra.mxu0 %v2660
      %2880 = vmatprep.subr.mxu0 %v2665
      %2881 = vmatpush1.msra.mxu0 %v2664
      %2882 = vmatprep.subr.mxu0 %v2669
      %2883 = vmatpush1.msra.mxu0 %v2668
      %2884 = vmatprep.subr.mxu0 %v2673
      %2885 = vmatpush1.msra.mxu0 %v2672
      %2886 = vmatprep.subr.mxu0 %v2677
      %2887 = vmatpush1.msra.mxu0 %v2676
      %2888 = vmatprep.subr.mxu0 %v2681
      %2889 = vmatpush1.msra.mxu0 %v2680
      %2890 = vmatprep.subr.mxu0 %v2685
      %2891 = vmatpush1.msra.mxu0 %v2684
      %2892 = vmatprep.subr.mxu0 %v2689
      %2893 = vmatpush1.msra.mxu0 %v2688
      %2894 = vmatprep.subr.mxu0 %v2693
      %2895 = vmatpush1.msra.mxu0 %v2692
      %2896 = vmatprep.subr.mxu0 %v2697
      %2897 = vmatpush1.msra.mxu0 %v2696
      %2898 = vmatprep.subr.mxu0 %v2701
      %2899 = vmatpush1.msra.mxu0 %v2700
      %2900 = vmatprep.subr.mxu0 %v2705
      %2901 = vmatpush1.msra.mxu0 %v2704
      %2902 = vmatprep.subr.mxu0 %v2709
      %2903 = vmatpush1.msra.mxu0 %v2708
      %2904 = vmatprep.subr.mxu0 %v2713
      %2905 = vmatpush1.msra.mxu0 %v2712
      %2906 = vmatprep.subr.mxu0 0.0
      %2907 = vmatpush1.msra.mxu0 0.0
      %2908 = vmatprep.subr.mxu0 0.0
      %2909 = vmatpush1.msra.mxu0 0.0
      %2910 = vmatprep.subr.mxu0 0.0
      %2911 = vmatpush1.msra.mxu0 0.0
      %2912 = vmatprep.subr.mxu0 0.0
      %2913 = vmatpush1.msra.mxu0 0.0
      %2914 = vmatprep.subr.mxu0 0.0
      %2915 = vmatpush1.msra.mxu0 0.0
      %2916 = vmatprep.mubr.f32.mxu0 %v2716
      %2917 = vmatmul.mubr.f32.gmra.mrb[0].mxu0 %v2590
      %v2918 = vpop.f32.mrb[0].mxu0
      %v2919 = vadd.f32 0.0, %v2918
      %v2920 = vpop.f32.mrb[0].mxu0
      %v2921 = vadd.f32 0.0, %v2920
      %2922 = vmatprep.mubr.f32.mxu0 %v2719
      %2923 = vmatmul.mubr.f32.gmra.mrb[0].mxu0 %v2592
      %v2924 = vpop.f32.mrb[0].mxu0
      %v2925 = vadd.f32 0.0, %v2924
      %v2926 = vpop.f32.mrb[0].mxu0
      %v2927 = vadd.f32 0.0, %v2926
      %2928 = vmatprep.mubr.f32.mxu0 %v2722
      %2929 = vmatmul.mubr.f32.gmra.mrb[0].mxu0 %v2594
      %v2930 = vpop.f32.mrb[0].mxu0
      %v2931 = vadd.f32 0.0, %v2930
      %v2932 = vpop.f32.mrb[0].mxu0
      %v2933 = vadd.f32 0.0, %v2932
      %2934 = vmatprep.mubr.f32.mxu0 %v2725
      %2935 = vmatmul.mubr.f32.gmra.mrb[0].mxu0 %v2596
      %v2936 = vpop.f32.mrb[0].mxu0
      %v2937 = vadd.f32 0.0, %v2936
      %v2938 = vpop.f32.mrb[0].mxu0
      %v2939 = vadd.f32 0.0, %v2938
      %2940 = vmatprep.mubr.f32.mxu0 %v2728
      %2941 = vmatmul.mubr.f32.gmra.mrb[0].mxu0 %v2598
      %v2942 = vpop.f32.mrb[0].mxu0
      %v2943 = vadd.f32 0.0, %v2942
      %v2944 = vpop.f32.mrb[0].mxu0
      %v2945 = vadd.f32 0.0, %v2944
      %2946 = vmatprep.mubr.f32.mxu0 %v2731
      %2947 = vmatmul.mubr.f32.gmra.mrb[0].mxu0 %v2600
      %v2948 = vpop.f32.mrb[0].mxu0
      %v2949 = vadd.f32 0.0, %v2948
      %v2950 = vpop.f32.mrb[0].mxu0
      %v2951 = vadd.f32 0.0, %v2950
      %2952 = vmatprep.mubr.f32.mxu0 %v2734
      %2953 = vmatmul.mubr.f32.gmra.mrb[0].mxu0 %v2602
      %v2954 = vpop.f32.mrb[0].mxu0
      %v2955 = vadd.f32 0.0, %v2954
      %v2956 = vpop.f32.mrb[0].mxu0
      %v2957 = vadd.f32 0.0, %v2956
      %2958 = vmatprep.mubr.f32.mxu0 %v2737
      %2959 = vmatmul.mubr.f32.gmra.mrb[0].mxu0 %v2604
      %v2960 = vpop.f32.mrb[0].mxu0
      %v2961 = vadd.f32 0.0, %v2960
      %v2962 = vpop.f32.mrb[0].mxu0
      %v2963 = vadd.f32 0.0, %v2962
      %2964 = vdwg.mxu0
      %v2965 = vmax.f32 %v2806, %v2818
      %v2966 = vmax.f32 %v2808, %v2820
      %v2967 = vmax.f32 %v2919, %v2931
      %v2968 = vmax.f32 %v2921, %v2933
      %v2969 = vmax.f32 %v2812, %v2824
      %v2970 = vmax.f32 %v2814, %v2826
      %v2971 = vmax.f32 %v2925, %v2937
      %v2972 = vmax.f32 %v2927, %v2939
      %v2973 = vmax.f32 %v2965, %v2830
      %v2974 = vmax.f32 %v2966, %v2832
      %v2975 = vmax.f32 %v2967, %v2943
      %v2976 = vmax.f32 %v2968, %v2945
      %v2977 = vmax.f32 %v2969, %v2836
      %v2978 = vmax.f32 %v2970, %v2838
      %v2979 = vmax.f32 %v2971, %v2949
      %v2980 = vmax.f32 %v2972, %v2951
      %v2981 = vmax.f32 %v2973, %v2842
      %v2982 = vmax.f32 %v2974, %v2844
      %v2983 = vmax.f32 %v2975, %v2955
      %v2984 = vmax.f32 %v2976, %v2957
      %v2985 = vmax.f32 %v2977, %v2848
      %v2986 = vmax.f32 %v2978, %v2850
      %v2987 = vmax.f32 %v2979, %v2961
      %v2988 = vmax.f32 %v2980, %v2963
      %v2989 = vld [vmem:[%s4] sm:$0xff]
      %v2990 = vld [vmem:[%s4 + $0x8] sm:$0xff]
      %2992 = vset.pattern.permute.xlu0 0
      %2993 = vperm.xlu0 %2992, %v2989
      %v2994 = vpop.permute.xlu0 %2993
      %2997 = vset.pattern.permute.xlu0 0
      %2998 = vperm.xlu0 %2997, %v2990
      %v2999 = vpop.permute.xlu0 %2998
      %v3001 = vadd.f32 %v2981, %v2994
      %v3002 = vadd.f32 %v2982, %v2994
      %v3003 = vadd.f32 %v2983, %v2994
      %v3004 = vadd.f32 %v2984, %v2994
      %v3005 = vadd.f32 %v2985, %v2999
      %v3006 = vadd.f32 %v2986, %v2999
      %v3007 = vadd.f32 %v2987, %v2999
      %v3008 = vadd.f32 %v2988, %v2999
      %v3009 = vmax.f32 %v3001, 0.0
      %v3010 = vmax.f32 %v3002, 0.0
      %v3011 = vmax.f32 %v3003, 0.0
      %v3012 = vmax.f32 %v3004, 0.0
      %v3013 = vmax.f32 %v3005, 0.0
      %v3014 = vmax.f32 %v3006, 0.0
      %v3015 = vmax.f32 %v3007, 0.0
      %v3016 = vmax.f32 %v3008, 0.0
      %3017 = vst [vmem:[%s224] sm:$0xff] %v3009
      %3018 = vst [vmem:[%s224 + $0x8] sm:$0xff] %v3010
      %3019 = vst [vmem:[%s224 + $0x10] sm:$0xff] %v3011
      %vm3020 = vcmask 277504
      %3021 = vst.msk [vmem:[%s224 + $0x18] sm:$0xff] %vm3020, %v3012
      %3022 = vst [vmem:[%s224 + $0x20] sm:$0xff] %v3013
      %3023 = vst [vmem:[%s224 + $0x28] sm:$0xff] %v3014
      %3024 = vst [vmem:[%s224 + $0x30] sm:$0xff] %v3015
      %3025 = vst.msk [vmem:[%s224 + $0x38] sm:$0xff] %vm3020, %v3016
      %p3026 = scmp.lt.s32.totalorder %s16, 1
      %s3027 = scalar_select %p3026, %s16, 1
      %s3028 = smul.addr %s3027, 8
      %s3029 = smul.addr %s3028, 8
      %s3030 = scalar_lea.vmem %s5, %s3029
      // Predicated region
      $region41: #{net_forward.2} parent=39 // pred_check
        %p3031 = pneg %p144
      $region42: #{net_forward.2} parent=39 // pred_check_branch
        %3033 = sbr.rel (%p3031) target = $region44
      $region43: #{net_forward.2} parent=39 // pred_region
        _
      $region44: #{net_forward.2} parent=39 // pred_fallthru
        _
    $region40: #{net_forward.2} parent=5 // pred_fallthru
      _
    %p3034 = scmp.le.s32.totalorder 2, %s11
    // Predicated region
    $region45: #{net_forward.2} parent=5 // pred_check
      %p3035 = pneg %p3034
    $region46: #{net_forward.2} parent=5 // pred_check_branch
      %3037 = sbr.rel (%p3035) target = $region48
    $region47: #{net_forward.2} parent=5 // pred_region
      %s3038 = ssub.s32 %s11, 2
      // Predicated region
      $region49: #{net_forward.2} parent=47 // pred_check
        %p3039 = pneg %p150
      $region50: #{net_forward.2} parent=47 // pred_check_branch
        %3041 = sbr.rel (%p3039) target = $region52
      $region51: #{net_forward.2} parent=47 // pred_region
        %p3042 = scmp.lt.s32.totalorder %s17, 1
        %s3043 = scalar_select %p3042, %s17, 1
        %s3044 = smul.addr %s3043, 8
        %s3045 = smul.addr %s3044, 8
        %s3046 = scalar_lea.vmem %s5, %s3045
      $region52: #{net_forward.2} parent=47 // pred_fallthru
        _
    $region48: #{net_forward.2} parent=5 // pred_fallthru
      _
  $region6: #{net_forward.2} parent=0 // loop_footer
    %s15 = sadd.s32 1, %s11
  $region7: #{net_forward.2} parent=0 // loop_footer_branch
    %10 = sbr.rel target = $region3
  $region8: #{net_forward.2} parent=0 // loop_exit
    _

// kernel: net_forward.3
$region0: #{net_forward.3}
  #allocation0 [shape = 'u32[]', space=smem, size = 0x4, offset = 0x4, fixed_abs, tag = 'smem constant byte address 0x4 - core index']
  #allocation1 [shape = 'u32[144,128]{1,0:T(1,128)}', space=vmem, size = 0x12000, scoped, tag = 'internal scratch']
  %s0 = inlined_call_operand.vmem [shape: bf16[2,5776], index: 0, kind: input, shape index: {}]
  %s1 = inlined_call_operand.vmem [shape: bf16[5776,120], index: 1, kind: input, shape index: {}]
  %s2 = inlined_call_operand.vmem [shape: f32[1,120], index: 2, kind: input, shape index: {}]
  %s3 = inlined_call_operand.vmem [shape: bf16[120,84], index: 3, kind: input, shape index: {}]
  %s4 = inlined_call_operand.vmem [shape: f32[1,84], index: 4, kind: input, shape index: {}]
  %s5 = inlined_call_operand.vmem [shape: bf16[84,10], index: 5, kind: input, shape index: {}]
  %s6 = inlined_call_operand.vmem [shape: f32[1,10], index: 6, kind: input, shape index: {}]
  %s7 = inlined_call_operand.hbm [shape: f32[2,10], index: 7, kind: output, shape index: {}]
  %s8 = sld [smem:[#allocation0]]
  $region38: #{net_forward.3} parent=0
    _
  %s10 = ssub.s32 1, %s8
  %s11 = scalar_select 0, %s10, %s8
  $region1: #{net_forward.3} parent=0
    #allocation2 [shape = 'u8[1024]{0}', space=vmem, size = 0x400, scoped, tag = 'output window, operand 0, single buffered']
    #allocation3 [shape = 's32[1]{0}', space=sflag, size = 0x4, scoped, tag = 'scoped memory for net_forward.3']
    %12 = vsyncpa [#allocation3], 0
    // Predicated region
    $region2: #{net_forward.3} parent=1 // pred_check
      _
    $region3: #{net_forward.3} parent=1 // pred_check_branch
      %14 = sbr.rel (0) target = $region5
    $region4: #{net_forward.3} parent=1 // pred_region
      _
    $region5: #{net_forward.3} parent=1 // pred_fallthru
      _
    // Predicated region
    $region6: #{net_forward.3} parent=1 // pred_check
      _
    $region7: #{net_forward.3} parent=1 // pred_check_branch
      %16 = sbr.rel (0) target = $region9
    $region8: #{net_forward.3} parent=1 // pred_region
      _
    $region9: #{net_forward.3} parent=1 // pred_fallthru
      _
    // Predicated region
    $region10: #{net_forward.3} parent=1 // pred_check
      _
    $region11: #{net_forward.3} parent=1 // pred_check_branch
      %18 = sbr.rel (0) target = $region13
    $region12: #{net_forward.3} parent=1 // pred_region
      _
    $region13: #{net_forward.3} parent=1 // pred_fallthru
      _
    // Predicated region
    $region14: #{net_forward.3} parent=1 // pred_check
      _
    $region15: #{net_forward.3} parent=1 // pred_check_branch
      %20 = sbr.rel (0) target = $region17
    $region16: #{net_forward.3} parent=1 // pred_region
      _
    $region17: #{net_forward.3} parent=1 // pred_fallthru
      _
    // Predicated region
    $region18: #{net_forward.3} parent=1 // pred_check
      _
    $region19: #{net_forward.3} parent=1 // pred_check_branch
      %22 = sbr.rel (0) target = $region21
    $region20: #{net_forward.3} parent=1 // pred_region
      _
    $region21: #{net_forward.3} parent=1 // pred_fallthru
      _
    // Predicated region
    $region22: #{net_forward.3} parent=1 // pred_check
      _
    $region23: #{net_forward.3} parent=1 // pred_check_branch
      %24 = sbr.rel (0) target = $region25
    $region24: #{net_forward.3} parent=1 // pred_region
      _
    $region25: #{net_forward.3} parent=1 // pred_fallthru
      _
    // Predicated region
    $region26: #{net_forward.3} parent=1 // pred_check
      _
    $region27: #{net_forward.3} parent=1 // pred_check_branch
      %26 = sbr.rel (0) target = $region29
    $region28: #{net_forward.3} parent=1 // pred_region
      _
    $region29: #{net_forward.3} parent=1 // pred_fallthru
      _
    %v28 = vld [vmem:[%s0] sm:$0xff]
    %v29 = vld [vmem:[%s0 + $0x8] sm:$0xff]
    %v30 = vld [vmem:[%s0 + $0x10] sm:$0xff]
    %v31 = vld [vmem:[%s0 + $0x18] sm:$0xff]
    %v32 = vld [vmem:[%s0 + $0x20] sm:$0xff]
    %v33 = vld [vmem:[%s0 + $0x28] sm:$0x3f]
    %v34 = vld [vmem:[%s1] sm:$0xf]
    %v35 = vld [vmem:[%s1 + $0x4] sm:$0xf]
    %v36 = vld [vmem:[%s1 + $0x8] sm:$0xf]
    %v37 = vld [vmem:[%s1 + $0xc] sm:$0xf]
    %v38 = vld [vmem:[%s1 + $0x10] sm:$0xf]
    %v39 = vld [vmem:[%s1 + $0x14] sm:$0xf]
    %v40 = vld [vmem:[%s1 + $0x18] sm:$0xf]
    %v41 = vld [vmem:[%s1 + $0x1c] sm:$0xf]
    %v42 = vld [vmem:[%s1 + $0x20] sm:$0xf]
    %v43 = vld [vmem:[%s1 + $0x24] sm:$0xf]
    %v44 = vld [vmem:[%s1 + $0x28] sm:$0xf]
    %v45 = vld [vmem:[%s1 + $0x2c] sm:$0xf]
    %v46 = vld [vmem:[%s1 + $0x30] sm:$0xf]
    %v47 = vld [vmem:[%s1 + $0x34] sm:$0xf]
    %v48 = vld [vmem:[%s1 + $0x38] sm:$0xf]
    %v49 = vld [vmem:[%s1 + $0x3c] sm:$0xf]
    %v50 = vld [vmem:[%s1 + $0x40] sm:$0xf]
    %v51 = vld [vmem:[%s1 + $0x44] sm:$0xf]
    %v52 = vld [vmem:[%s1 + $0x48] sm:$0xf]
    %v53 = vld [vmem:[%s1 + $0x4c] sm:$0xf]
    %v54 = vld [vmem:[%s1 + $0x50] sm:$0xf]
    %v55 = vld [vmem:[%s1 + $0x54] sm:$0xf]
    %v56 = vld [vmem:[%s1 + $0x58] sm:$0xf]
    %v57 = vld [vmem:[%s1 + $0x5c] sm:$0xf]
    %v58 = vld [vmem:[%s1 + $0x60] sm:$0xf]
    %v59 = vld [vmem:[%s1 + $0x64] sm:$0xf]
    %v60 = vld [vmem:[%s1 + $0x68] sm:$0xf]
    %v61 = vld [vmem:[%s1 + $0x6c] sm:$0xf]
    %v62 = vld [vmem:[%s1 + $0x70] sm:$0xf]
    %v63 = vld [vmem:[%s1 + $0x74] sm:$0xf]
    %v64 = vld [vmem:[%s1 + $0x78] sm:$0xf]
    %v65 = vld [vmem:[%s1 + $0x7c] sm:$0xf]
    %v66 = vld [vmem:[%s1 + $0x80] sm:$0xf]
    %v67 = vld [vmem:[%s1 + $0x84] sm:$0xf]
    %v68 = vld [vmem:[%s1 + $0x88] sm:$0xf]
    %v69 = vld [vmem:[%s1 + $0x8c] sm:$0xf]
    %v70 = vld [vmem:[%s1 + $0x90] sm:$0xf]
    %v71 = vld [vmem:[%s1 + $0x94] sm:$0xf]
    %v72 = vld [vmem:[%s1 + $0x98] sm:$0xf]
    %v73 = vld [vmem:[%s1 + $0x9c] sm:$0xf]
    %v74 = vld [vmem:[%s1 + $0xa0] sm:$0xf]
    %v75 = vld [vmem:[%s1 + $0xa4] sm:$0xf]
    %v76 = vld [vmem:[%s1 + $0xa8] sm:$0xf]
    %v77 = vld [vmem:[%s1 + $0xac] sm:$0xf]
    %v78 = vld [vmem:[%s1 + $0xb0] sm:$0xf]
    %v79 = vld [vmem:[%s1 + $0xb4] sm:$0xf]
    %v80 = vld [vmem:[%s1 + $0xb8] sm:$0xf]
    %v81 = vld [vmem:[%s1 + $0xbc] sm:$0xf]
    %v82 = vld [vmem:[%s1 + $0xc0] sm:$0xf]
    %v83 = vld [vmem:[%s1 + $0xc4] sm:$0xf]
    %v84 = vld [vmem:[%s1 + $0xc8] sm:$0xf]
    %v85 = vld [vmem:[%s1 + $0xcc] sm:$0xf]
    %v86 = vld [vmem:[%s1 + $0xd0] sm:$0xf]
    %v87 = vld [vmem:[%s1 + $0xd4] sm:$0xf]
    %v88 = vld [vmem:[%s1 + $0xd8] sm:$0xf]
    %v89 = vld [vmem:[%s1 + $0xdc] sm:$0xf]
    %v90 = vld [vmem:[%s1 + $0xe0] sm:$0xf]
    %v91 = vld [vmem:[%s1 + $0xe4] sm:$0xf]
    %v92 = vld [vmem:[%s1 + $0xe8] sm:$0xf]
    %v93 = vld [vmem:[%s1 + $0xec] sm:$0xf]
    %v94 = vld [vmem:[%s1 + $0xf0] sm:$0xf]
    %v95 = vld [vmem:[%s1 + $0xf4] sm:$0xf]
    %v96 = vld [vmem:[%s1 + $0xf8] sm:$0xf]
    %v97 = vld [vmem:[%s1 + $0xfc] sm:$0xf]
    %v98 = vld [vmem:[%s1 + $0x100] sm:$0xf]
    %v99 = vld [vmem:[%s1 + $0x104] sm:$0xf]
    %v100 = vld [vmem:[%s1 + $0x108] sm:$0xf]
    %v101 = vld [vmem:[%s1 + $0x10c] sm:$0xf]
    %v102 = vld [vmem:[%s1 + $0x110] sm:$0xf]
    %v103 = vld [vmem:[%s1 + $0x114] sm:$0xf]
    %v104 = vld [vmem:[%s1 + $0x118] sm:$0xf]
    %v105 = vld [vmem:[%s1 + $0x11c] sm:$0xf]
    %v106 = vld [vmem:[%s1 + $0x120] sm:$0xf]
    %v107 = vld [vmem:[%s1 + $0x124] sm:$0xf]
    %v108 = vld [vmem:[%s1 + $0x128] sm:$0xf]
    %v109 = vld [vmem:[%s1 + $0x12c] sm:$0xf]
    %v110 = vld [vmem:[%s1 + $0x130] sm:$0xf]
    %v111 = vld [vmem:[%s1 + $0x134] sm:$0xf]
    %v112 = vld [vmem:[%s1 + $0x138] sm:$0xf]
    %v113 = vld [vmem:[%s1 + $0x13c] sm:$0xf]
    %v114 = vld [vmem:[%s1 + $0x140] sm:$0xf]
    %v115 = vld [vmem:[%s1 + $0x144] sm:$0xf]
    %v116 = vld [vmem:[%s1 + $0x148] sm:$0xf]
    %v117 = vld [vmem:[%s1 + $0x14c] sm:$0xf]
    %v118 = vld [vmem:[%s1 + $0x150] sm:$0xf]
    %v119 = vld [vmem:[%s1 + $0x154] sm:$0xf]
    %v120 = vld [vmem:[%s1 + $0x158] sm:$0xf]
    %v121 = vld [vmem:[%s1 + $0x15c] sm:$0xf]
    %v122 = vld [vmem:[%s1 + $0x160] sm:$0xf]
    %v123 = vld [vmem:[%s1 + $0x164] sm:$0xf]
    %v124 = vld [vmem:[%s1 + $0x168] sm:$0xf]
    %v125 = vld [vmem:[%s1 + $0x16c] sm:$0xf]
    %v126 = vld [vmem:[%s1 + $0x170] sm:$0xf]
    %v127 = vld [vmem:[%s1 + $0x174] sm:$0xf]
    %v128 = vld [vmem:[%s1 + $0x178] sm:$0xf]
    %v129 = vld [vmem:[%s1 + $0x17c] sm:$0xf]
    %v130 = vld [vmem:[%s1 + $0x180] sm:$0xf]
    %v131 = vld [vmem:[%s1 + $0x184] sm:$0xf]
    %v132 = vld [vmem:[%s1 + $0x188] sm:$0xf]
    %v133 = vld [vmem:[%s1 + $0x18c] sm:$0xf]
    %v134 = vld [vmem:[%s1 + $0x190] sm:$0xf]
    %v135 = vld [vmem:[%s1 + $0x194] sm:$0xf]
    %v136 = vld [vmem:[%s1 + $0x198] sm:$0xf]
    %v137 = vld [vmem:[%s1 + $0x19c] sm:$0xf]
    %v138 = vld [vmem:[%s1 + $0x1a0] sm:$0xf]
    %v139 = vld [vmem:[%s1 + $0x1a4] sm:$0xf]
    %v140 = vld [vmem:[%s1 + $0x1a8] sm:$0xf]
    %v141 = vld [vmem:[%s1 + $0x1ac] sm:$0xf]
    %v142 = vld [vmem:[%s1 + $0x1b0] sm:$0xf]
    %v143 = vld [vmem:[%s1 + $0x1b4] sm:$0xf]
    %v144 = vld [vmem:[%s1 + $0x1b8] sm:$0xf]
    %v145 = vld [vmem:[%s1 + $0x1bc] sm:$0xf]
    %v146 = vld [vmem:[%s1 + $0x1c0] sm:$0xf]
    %v147 = vld [vmem:[%s1 + $0x1c4] sm:$0xf]
    %v148 = vld [vmem:[%s1 + $0x1c8] sm:$0xf]
    %v149 = vld [vmem:[%s1 + $0x1cc] sm:$0xf]
    %v150 = vld [vmem:[%s1 + $0x1d0] sm:$0xf]
    %v151 = vld [vmem:[%s1 + $0x1d4] sm:$0xf]
    %v152 = vld [vmem:[%s1 + $0x1d8] sm:$0xf]
    %v153 = vld [vmem:[%s1 + $0x1dc] sm:$0xf]
    %v154 = vld [vmem:[%s1 + $0x1e0] sm:$0xf]
    %v155 = vld [vmem:[%s1 + $0x1e4] sm:$0xf]
    %v156 = vld [vmem:[%s1 + $0x1e8] sm:$0xf]
    %v157 = vld [vmem:[%s1 + $0x1ec] sm:$0xf]
    %v158 = vld [vmem:[%s1 + $0x1f0] sm:$0xf]
    %v159 = vld [vmem:[%s1 + $0x1f4] sm:$0xf]
    %v160 = vld [vmem:[%s1 + $0x1f8] sm:$0xf]
    %v161 = vld [vmem:[%s1 + $0x1fc] sm:$0xf]
    %v162 = vld [vmem:[%s1 + $0x200] sm:$0xf]
    %v163 = vld [vmem:[%s1 + $0x204] sm:$0xf]
    %v164 = vld [vmem:[%s1 + $0x208] sm:$0xf]
    %v165 = vld [vmem:[%s1 + $0x20c] sm:$0xf]
    %v166 = vld [vmem:[%s1 + $0x210] sm:$0xf]
    %v167 = vld [vmem:[%s1 + $0x214] sm:$0xf]
    %v168 = vld [vmem:[%s1 + $0x218] sm:$0xf]
    %v169 = vld [vmem:[%s1 + $0x21c] sm:$0xf]
    %v170 = vld [vmem:[%s1 + $0x220] sm:$0xf]
    %v171 = vld [vmem:[%s1 + $0x224] sm:$0xf]
    %v172 = vld [vmem:[%s1 + $0x228] sm:$0xf]
    %v173 = vld [vmem:[%s1 + $0x22c] sm:$0xf]
    %v174 = vld [vmem:[%s1 + $0x230] sm:$0xf]
    %v175 = vld [vmem:[%s1 + $0x234] sm:$0xf]
    %v176 = vld [vmem:[%s1 + $0x238] sm:$0xf]
    %v177 = vld [vmem:[%s1 + $0x23c] sm:$0xf]
    %v178 = vld [vmem:[%s1 + $0x240] sm:$0xf]
    %v179 = vld [vmem:[%s1 + $0x244] sm:$0xf]
    %v180 = vld [vmem:[%s1 + $0x248] sm:$0xf]
    %v181 = vld [vmem:[%s1 + $0x24c] sm:$0xf]
    %v182 = vld [vmem:[%s1 + $0x250] sm:$0xf]
    %v183 = vld [vmem:[%s1 + $0x254] sm:$0xf]
    %v184 = vld [vmem:[%s1 + $0x258] sm:$0xf]
    %v185 = vld [vmem:[%s1 + $0x25c] sm:$0xf]
    %v186 = vld [vmem:[%s1 + $0x260] sm:$0xf]
    %v187 = vld [vmem:[%s1 + $0x264] sm:$0xf]
    %v188 = vld [vmem:[%s1 + $0x268] sm:$0xf]
    %v189 = vld [vmem:[%s1 + $0x26c] sm:$0xf]
    %v190 = vld [vmem:[%s1 + $0x270] sm:$0xf]
    %v191 = vld [vmem:[%s1 + $0x274] sm:$0xf]
    %v192 = vld [vmem:[%s1 + $0x278] sm:$0xf]
    %v193 = vld [vmem:[%s1 + $0x27c] sm:$0xf]
    %v194 = vld [vmem:[%s1 + $0x280] sm:$0xf]
    %v195 = vld [vmem:[%s1 + $0x284] sm:$0xf]
    %v196 = vld [vmem:[%s1 + $0x288] sm:$0xf]
    %v197 = vld [vmem:[%s1 + $0x28c] sm:$0xf]
    %v198 = vld [vmem:[%s1 + $0x290] sm:$0xf]
    %v199 = vld [vmem:[%s1 + $0x294] sm:$0xf]
    %v200 = vld [vmem:[%s1 + $0x298] sm:$0xf]
    %v201 = vld [vmem:[%s1 + $0x29c] sm:$0xf]
    %v202 = vld [vmem:[%s1 + $0x2a0] sm:$0xf]
    %v203 = vld [vmem:[%s1 + $0x2a4] sm:$0xf]
    %v204 = vld [vmem:[%s1 + $0x2a8] sm:$0xf]
    %v205 = vld [vmem:[%s1 + $0x2ac] sm:$0xf]
    %v206 = vld [vmem:[%s1 + $0x2b0] sm:$0xf]
    %v207 = vld [vmem:[%s1 + $0x2b4] sm:$0xf]
    %v208 = vld [vmem:[%s1 + $0x2b8] sm:$0xf]
    %v209 = vld [vmem:[%s1 + $0x2bc] sm:$0xf]
    %v210 = vld [vmem:[%s1 + $0x2c0] sm:$0xf]
    %v211 = vld [vmem:[%s1 + $0x2c4] sm:$0xf]
    %v212 = vld [vmem:[%s1 + $0x2c8] sm:$0xf]
    %v213 = vld [vmem:[%s1 + $0x2cc] sm:$0xf]
    %v214 = vld [vmem:[%s1 + $0x2d0] sm:$0xf]
    %v215 = vld [vmem:[%s1 + $0x2d4] sm:$0xf]
    %v216 = vld [vmem:[%s1 + $0x2d8] sm:$0xf]
    %v217 = vld [vmem:[%s1 + $0x2dc] sm:$0xf]
    %v218 = vld [vmem:[%s1 + $0x2e0] sm:$0xf]
    %v219 = vld [vmem:[%s1 + $0x2e4] sm:$0xf]
    %v220 = vld [vmem:[%s1 + $0x2e8] sm:$0xf]
    %v221 = vld [vmem:[%s1 + $0x2ec] sm:$0xf]
    %v222 = vld [vmem:[%s1 + $0x2f0] sm:$0xf]
    %v223 = vld [vmem:[%s1 + $0x2f4] sm:$0xf]
    %v224 = vld [vmem:[%s1 + $0x2f8] sm:$0xf]
    %v225 = vld [vmem:[%s1 + $0x2fc] sm:$0xf]
    %v226 = vld [vmem:[%s1 + $0x300] sm:$0xf]
    %v227 = vld [vmem:[%s1 + $0x304] sm:$0xf]
    %v228 = vld [vmem:[%s1 + $0x308] sm:$0xf]
    %v229 = vld [vmem:[%s1 + $0x30c] sm:$0xf]
    %v230 = vld [vmem:[%s1 + $0x310] sm:$0xf]
    %v231 = vld [vmem:[%s1 + $0x314] sm:$0xf]
    %v232 = vld [vmem:[%s1 + $0x318] sm:$0xf]
    %v233 = vld [vmem:[%s1 + $0x31c] sm:$0xf]
    %v234 = vld [vmem:[%s1 + $0x320] sm:$0xf]
    %v235 = vld [vmem:[%s1 + $0x324] sm:$0xf]
    %v236 = vld [vmem:[%s1 + $0x328] sm:$0xf]
    %v237 = vld [vmem:[%s1 + $0x32c] sm:$0xf]
    %v238 = vld [vmem:[%s1 + $0x330] sm:$0xf]
    %v239 = vld [vmem:[%s1 + $0x334] sm:$0xf]
    %v240 = vld [vmem:[%s1 + $0x338] sm:$0xf]
    %v241 = vld [vmem:[%s1 + $0x33c] sm:$0xf]
    %v242 = vld [vmem:[%s1 + $0x340] sm:$0xf]
    %v243 = vld [vmem:[%s1 + $0x344] sm:$0xf]
    %v244 = vld [vmem:[%s1 + $0x348] sm:$0xf]
    %v245 = vld [vmem:[%s1 + $0x34c] sm:$0xf]
    %v246 = vld [vmem:[%s1 + $0x350] sm:$0xf]
    %v247 = vld [vmem:[%s1 + $0x354] sm:$0xf]
    %v248 = vld [vmem:[%s1 + $0x358] sm:$0xf]
    %v249 = vld [vmem:[%s1 + $0x35c] sm:$0xf]
    %v250 = vld [vmem:[%s1 + $0x360] sm:$0xf]
    %v251 = vld [vmem:[%s1 + $0x364] sm:$0xf]
    %v252 = vld [vmem:[%s1 + $0x368] sm:$0xf]
    %v253 = vld [vmem:[%s1 + $0x36c] sm:$0xf]
    %v254 = vld [vmem:[%s1 + $0x370] sm:$0xf]
    %v255 = vld [vmem:[%s1 + $0x374] sm:$0xf]
    %v256 = vld [vmem:[%s1 + $0x378] sm:$0xf]
    %v257 = vld [vmem:[%s1 + $0x37c] sm:$0xf]
    %v258 = vld [vmem:[%s1 + $0x380] sm:$0xf]
    %v259 = vld [vmem:[%s1 + $0x384] sm:$0xf]
    %v260 = vld [vmem:[%s1 + $0x388] sm:$0xf]
    %v261 = vld [vmem:[%s1 + $0x38c] sm:$0xf]
    %v262 = vld [vmem:[%s1 + $0x390] sm:$0xf]
    %v263 = vld [vmem:[%s1 + $0x394] sm:$0xf]
    %v264 = vld [vmem:[%s1 + $0x398] sm:$0xf]
    %v265 = vld [vmem:[%s1 + $0x39c] sm:$0xf]
    %v266 = vld [vmem:[%s1 + $0x3a0] sm:$0xf]
    %v267 = vld [vmem:[%s1 + $0x3a4] sm:$0xf]
    %v268 = vld [vmem:[%s1 + $0x3a8] sm:$0xf]
    %v269 = vld [vmem:[%s1 + $0x3ac] sm:$0xf]
    %v270 = vld [vmem:[%s1 + $0x3b0] sm:$0xf]
    %v271 = vld [vmem:[%s1 + $0x3b4] sm:$0xf]
    %v272 = vld [vmem:[%s1 + $0x3b8] sm:$0xf]
    %v273 = vld [vmem:[%s1 + $0x3bc] sm:$0xf]
    %v274 = vld [vmem:[%s1 + $0x3c0] sm:$0xf]
    %v275 = vld [vmem:[%s1 + $0x3c4] sm:$0xf]
    %v276 = vld [vmem:[%s1 + $0x3c8] sm:$0xf]
    %v277 = vld [vmem:[%s1 + $0x3cc] sm:$0xf]
    %v278 = vld [vmem:[%s1 + $0x3d0] sm:$0xf]
    %v279 = vld [vmem:[%s1 + $0x3d4] sm:$0xf]
    %v280 = vld [vmem:[%s1 + $0x3d8] sm:$0xf]
    %v281 = vld [vmem:[%s1 + $0x3dc] sm:$0xf]
    %v282 = vld [vmem:[%s1 + $0x3e0] sm:$0xf]
    %v283 = vld [vmem:[%s1 + $0x3e4] sm:$0xf]
    %v284 = vld [vmem:[%s1 + $0x3e8] sm:$0xf]
    %v285 = vld [vmem:[%s1 + $0x3ec] sm:$0xf]
    %v286 = vld [vmem:[%s1 + $0x3f0] sm:$0xf]
    %v287 = vld [vmem:[%s1 + $0x3f4] sm:$0xf]
    %v288 = vld [vmem:[%s1 + $0x3f8] sm:$0xf]
    %v289 = vld [vmem:[%s1 + $0x3fc] sm:$0xf]
    %v290 = vld [vmem:[%s1 + $0x400] sm:$0xf]
    %v291 = vld [vmem:[%s1 + $0x404] sm:$0xf]
    %v292 = vld [vmem:[%s1 + $0x408] sm:$0xf]
    %v293 = vld [vmem:[%s1 + $0x40c] sm:$0xf]
    %v294 = vld [vmem:[%s1 + $0x410] sm:$0xf]
    %v295 = vld [vmem:[%s1 + $0x414] sm:$0xf]
    %v296 = vld [vmem:[%s1 + $0x418] sm:$0xf]
    %v297 = vld [vmem:[%s1 + $0x41c] sm:$0xf]
    %v298 = vld [vmem:[%s1 + $0x420] sm:$0xf]
    %v299 = vld [vmem:[%s1 + $0x424] sm:$0xf]
    %v300 = vld [vmem:[%s1 + $0x428] sm:$0xf]
    %v301 = vld [vmem:[%s1 + $0x42c] sm:$0xf]
    %v302 = vld [vmem:[%s1 + $0x430] sm:$0xf]
    %v303 = vld [vmem:[%s1 + $0x434] sm:$0xf]
    %v304 = vld [vmem:[%s1 + $0x438] sm:$0xf]
    %v305 = vld [vmem:[%s1 + $0x43c] sm:$0xf]
    %v306 = vld [vmem:[%s1 + $0x440] sm:$0xf]
    %v307 = vld [vmem:[%s1 + $0x444] sm:$0xf]
    %v308 = vld [vmem:[%s1 + $0x448] sm:$0xf]
    %v309 = vld [vmem:[%s1 + $0x44c] sm:$0xf]
    %v310 = vld [vmem:[%s1 + $0x450] sm:$0xf]
    %v311 = vld [vmem:[%s1 + $0x454] sm:$0xf]
    %v312 = vld [vmem:[%s1 + $0x458] sm:$0xf]
    %v313 = vld [vmem:[%s1 + $0x45c] sm:$0xf]
    %v314 = vld [vmem:[%s1 + $0x460] sm:$0xf]
    %v315 = vld [vmem:[%s1 + $0x464] sm:$0xf]
    %v316 = vld [vmem:[%s1 + $0x468] sm:$0xf]
    %v317 = vld [vmem:[%s1 + $0x46c] sm:$0xf]
    %v318 = vld [vmem:[%s1 + $0x470] sm:$0xf]
    %v319 = vld [vmem:[%s1 + $0x474] sm:$0xf]
    %v320 = vld [vmem:[%s1 + $0x478] sm:$0xf]
    %v321 = vld [vmem:[%s1 + $0x47c] sm:$0xf]
    %v322 = vld [vmem:[%s1 + $0x480] sm:$0xf]
    %v323 = vld [vmem:[%s1 + $0x484] sm:$0xf]
    %v324 = vld [vmem:[%s1 + $0x488] sm:$0xf]
    %v325 = vld [vmem:[%s1 + $0x48c] sm:$0xf]
    %v326 = vld [vmem:[%s1 + $0x490] sm:$0xf]
    %v327 = vld [vmem:[%s1 + $0x494] sm:$0xf]
    %v328 = vld [vmem:[%s1 + $0x498] sm:$0xf]
    %v329 = vld [vmem:[%s1 + $0x49c] sm:$0xf]
    %v330 = vld [vmem:[%s1 + $0x4a0] sm:$0xf]
    %v331 = vld [vmem:[%s1 + $0x4a4] sm:$0xf]
    %v332 = vld [vmem:[%s1 + $0x4a8] sm:$0xf]
    %v333 = vld [vmem:[%s1 + $0x4ac] sm:$0xf]
    %v334 = vld [vmem:[%s1 + $0x4b0] sm:$0xf]
    %v335 = vld [vmem:[%s1 + $0x4b4] sm:$0xf]
    %v336 = vld [vmem:[%s1 + $0x4b8] sm:$0xf]
    %v337 = vld [vmem:[%s1 + $0x4bc] sm:$0xf]
    %v338 = vld [vmem:[%s1 + $0x4c0] sm:$0xf]
    %v339 = vld [vmem:[%s1 + $0x4c4] sm:$0xf]
    %v340 = vld [vmem:[%s1 + $0x4c8] sm:$0xf]
    %v341 = vld [vmem:[%s1 + $0x4cc] sm:$0xf]
    %v342 = vld [vmem:[%s1 + $0x4d0] sm:$0xf]
    %v343 = vld [vmem:[%s1 + $0x4d4] sm:$0xf]
    %v344 = vld [vmem:[%s1 + $0x4d8] sm:$0xf]
    %v345 = vld [vmem:[%s1 + $0x4dc] sm:$0xf]
    %v346 = vld [vmem:[%s1 + $0x4e0] sm:$0xf]
    %v347 = vld [vmem:[%s1 + $0x4e4] sm:$0xf]
    %v348 = vld [vmem:[%s1 + $0x4e8] sm:$0xf]
    %v349 = vld [vmem:[%s1 + $0x4ec] sm:$0xf]
    %v350 = vld [vmem:[%s1 + $0x4f0] sm:$0xf]
    %v351 = vld [vmem:[%s1 + $0x4f4] sm:$0xf]
    %v352 = vld [vmem:[%s1 + $0x4f8] sm:$0xf]
    %v353 = vld [vmem:[%s1 + $0x4fc] sm:$0xf]
    %v354 = vld [vmem:[%s1 + $0x500] sm:$0xf]
    %v355 = vld [vmem:[%s1 + $0x504] sm:$0xf]
    %v356 = vld [vmem:[%s1 + $0x508] sm:$0xf]
    %v357 = vld [vmem:[%s1 + $0x50c] sm:$0xf]
    %v358 = vld [vmem:[%s1 + $0x510] sm:$0xf]
    %v359 = vld [vmem:[%s1 + $0x514] sm:$0xf]
    %v360 = vld [vmem:[%s1 + $0x518] sm:$0xf]
    %v361 = vld [vmem:[%s1 + $0x51c] sm:$0xf]
    %v362 = vld [vmem:[%s1 + $0x520] sm:$0xf]
    %v363 = vld [vmem:[%s1 + $0x524] sm:$0xf]
    %v364 = vld [vmem:[%s1 + $0x528] sm:$0xf]
    %v365 = vld [vmem:[%s1 + $0x52c] sm:$0xf]
    %v366 = vld [vmem:[%s1 + $0x530] sm:$0xf]
    %v367 = vld [vmem:[%s1 + $0x534] sm:$0xf]
    %v368 = vld [vmem:[%s1 + $0x538] sm:$0xf]
    %v369 = vld [vmem:[%s1 + $0x53c] sm:$0xf]
    %v370 = vld [vmem:[%s1 + $0x540] sm:$0xf]
    %v371 = vld [vmem:[%s1 + $0x544] sm:$0xf]
    %v372 = vld [vmem:[%s1 + $0x548] sm:$0xf]
    %v373 = vld [vmem:[%s1 + $0x54c] sm:$0xf]
    %v374 = vld [vmem:[%s1 + $0x550] sm:$0xf]
    %v375 = vld [vmem:[%s1 + $0x554] sm:$0xf]
    %v376 = vld [vmem:[%s1 + $0x558] sm:$0xf]
    %v377 = vld [vmem:[%s1 + $0x55c] sm:$0xf]
    %v378 = vld [vmem:[%s1 + $0x560] sm:$0xf]
    %v379 = vld [vmem:[%s1 + $0x564] sm:$0xf]
    %v380 = vld [vmem:[%s1 + $0x568] sm:$0xf]
    %v381 = vld [vmem:[%s1 + $0x56c] sm:$0xf]
    %v382 = vld [vmem:[%s1 + $0x570] sm:$0xf]
    %v383 = vld [vmem:[%s1 + $0x574] sm:$0xf]
    %v384 = vld [vmem:[%s1 + $0x578] sm:$0xf]
    %v385 = vld [vmem:[%s1 + $0x57c] sm:$0xf]
    %v386 = vld [vmem:[%s1 + $0x580] sm:$0xf]
    %v387 = vld [vmem:[%s1 + $0x584] sm:$0xf]
    %v388 = vld [vmem:[%s1 + $0x588] sm:$0xf]
    %v389 = vld [vmem:[%s1 + $0x58c] sm:$0xf]
    %v390 = vld [vmem:[%s1 + $0x590] sm:$0xf]
    %v391 = vld [vmem:[%s1 + $0x594] sm:$0xf]
    %v392 = vld [vmem:[%s1 + $0x598] sm:$0xf]
    %v393 = vld [vmem:[%s1 + $0x59c] sm:$0xf]
    %v394 = vld [vmem:[%s1 + $0x5a0] sm:$0xf]
    %v395 = vld [vmem:[%s1 + $0x5a4] sm:$0xf]
    %v396 = vld [vmem:[%s1 + $0x5a8] sm:$0xf]
    %v397 = vld [vmem:[%s1 + $0x5ac] sm:$0xf]
    %v398 = vld [vmem:[%s1 + $0x5b0] sm:$0xf]
    %v399 = vld [vmem:[%s1 + $0x5b4] sm:$0xf]
    %v400 = vld [vmem:[%s1 + $0x5b8] sm:$0xf]
    %v401 = vld [vmem:[%s1 + $0x5bc] sm:$0xf]
    %v402 = vld [vmem:[%s1 + $0x5c0] sm:$0xf]
    %v403 = vld [vmem:[%s1 + $0x5c4] sm:$0xf]
    %v404 = vld [vmem:[%s1 + $0x5c8] sm:$0xf]
    %v405 = vld [vmem:[%s1 + $0x5cc] sm:$0xf]
    %v406 = vld [vmem:[%s1 + $0x5d0] sm:$0xf]
    %v407 = vld [vmem:[%s1 + $0x5d4] sm:$0xf]
    %v408 = vld [vmem:[%s1 + $0x5d8] sm:$0xf]
    %v409 = vld [vmem:[%s1 + $0x5dc] sm:$0xf]
    %v410 = vld [vmem:[%s1 + $0x5e0] sm:$0xf]
    %v411 = vld [vmem:[%s1 + $0x5e4] sm:$0xf]
    %v412 = vld [vmem:[%s1 + $0x5e8] sm:$0xf]
    %v413 = vld [vmem:[%s1 + $0x5ec] sm:$0xf]
    %v414 = vld [vmem:[%s1 + $0x5f0] sm:$0xf]
    %v415 = vld [vmem:[%s1 + $0x5f4] sm:$0xf]
    %v416 = vld [vmem:[%s1 + $0x5f8] sm:$0xf]
    %v417 = vld [vmem:[%s1 + $0x5fc] sm:$0xf]
    %v418 = vld [vmem:[%s1 + $0x600] sm:$0xf]
    %v419 = vld [vmem:[%s1 + $0x604] sm:$0xf]
    %v420 = vld [vmem:[%s1 + $0x608] sm:$0xf]
    %v421 = vld [vmem:[%s1 + $0x60c] sm:$0xf]
    %v422 = vld [vmem:[%s1 + $0x610] sm:$0xf]
    %v423 = vld [vmem:[%s1 + $0x614] sm:$0xf]
    %v424 = vld [vmem:[%s1 + $0x618] sm:$0xf]
    %v425 = vld [vmem:[%s1 + $0x61c] sm:$0xf]
    %v426 = vld [vmem:[%s1 + $0x620] sm:$0xf]
    %v427 = vld [vmem:[%s1 + $0x624] sm:$0xf]
    %v428 = vld [vmem:[%s1 + $0x628] sm:$0xf]
    %v429 = vld [vmem:[%s1 + $0x62c] sm:$0xf]
    %v430 = vld [vmem:[%s1 + $0x630] sm:$0xf]
    %v431 = vld [vmem:[%s1 + $0x634] sm:$0xf]
    %v432 = vld [vmem:[%s1 + $0x638] sm:$0xf]
    %v433 = vld [vmem:[%s1 + $0x63c] sm:$0xf]
    %v434 = vld [vmem:[%s1 + $0x640] sm:$0xf]
    %v435 = vld [vmem:[%s1 + $0x644] sm:$0xf]
    %v436 = vld [vmem:[%s1 + $0x648] sm:$0xf]
    %v437 = vld [vmem:[%s1 + $0x64c] sm:$0xf]
    %v438 = vld [vmem:[%s1 + $0x650] sm:$0xf]
    %v439 = vld [vmem:[%s1 + $0x654] sm:$0xf]
    %v440 = vld [vmem:[%s1 + $0x658] sm:$0xf]
    %v441 = vld [vmem:[%s1 + $0x65c] sm:$0xf]
    %v442 = vld [vmem:[%s1 + $0x660] sm:$0xf]
    %v443 = vld [vmem:[%s1 + $0x664] sm:$0xf]
    %v444 = vld [vmem:[%s1 + $0x668] sm:$0xf]
    %v445 = vld [vmem:[%s1 + $0x66c] sm:$0xf]
    %v446 = vld [vmem:[%s1 + $0x670] sm:$0xf]
    %v447 = vld [vmem:[%s1 + $0x674] sm:$0xf]
    %v448 = vld [vmem:[%s1 + $0x678] sm:$0xf]
    %v449 = vld [vmem:[%s1 + $0x67c] sm:$0xf]
    %v450 = vld [vmem:[%s1 + $0x680] sm:$0xf]
    %v451 = vld [vmem:[%s1 + $0x684] sm:$0xf]
    %v452 = vld [vmem:[%s1 + $0x688] sm:$0xf]
    %v453 = vld [vmem:[%s1 + $0x68c] sm:$0xf]
    %v454 = vld [vmem:[%s1 + $0x690] sm:$0xf]
    %v455 = vld [vmem:[%s1 + $0x694] sm:$0xf]
    %v456 = vld [vmem:[%s1 + $0x698] sm:$0xf]
    %v457 = vld [vmem:[%s1 + $0x69c] sm:$0xf]
    %v458 = vld [vmem:[%s1 + $0x6a0] sm:$0xf]
    %v459 = vld [vmem:[%s1 + $0x6a4] sm:$0xf]
    %v460 = vld [vmem:[%s1 + $0x6a8] sm:$0xf]
    %v461 = vld [vmem:[%s1 + $0x6ac] sm:$0xf]
    %v462 = vld [vmem:[%s1 + $0x6b0] sm:$0xf]
    %v463 = vld [vmem:[%s1 + $0x6b4] sm:$0xf]
    %v464 = vld [vmem:[%s1 + $0x6b8] sm:$0xf]
    %v465 = vld [vmem:[%s1 + $0x6bc] sm:$0xf]
    %v466 = vld [vmem:[%s1 + $0x6c0] sm:$0xf]
    %v467 = vld [vmem:[%s1 + $0x6c4] sm:$0xf]
    %v468 = vld [vmem:[%s1 + $0x6c8] sm:$0xf]
    %v469 = vld [vmem:[%s1 + $0x6cc] sm:$0xf]
    %v470 = vld [vmem:[%s1 + $0x6d0] sm:$0xf]
    %v471 = vld [vmem:[%s1 + $0x6d4] sm:$0xf]
    %v472 = vld [vmem:[%s1 + $0x6d8] sm:$0xf]
    %v473 = vld [vmem:[%s1 + $0x6dc] sm:$0xf]
    %v474 = vld [vmem:[%s1 + $0x6e0] sm:$0xf]
    %v475 = vld [vmem:[%s1 + $0x6e4] sm:$0xf]
    %v476 = vld [vmem:[%s1 + $0x6e8] sm:$0xf]
    %v477 = vld [vmem:[%s1 + $0x6ec] sm:$0xf]
    %v478 = vld [vmem:[%s1 + $0x6f0] sm:$0xf]
    %v479 = vld [vmem:[%s1 + $0x6f4] sm:$0xf]
    %v480 = vld [vmem:[%s1 + $0x6f8] sm:$0xf]
    %v481 = vld [vmem:[%s1 + $0x6fc] sm:$0xf]
    %v482 = vld [vmem:[%s1 + $0x700] sm:$0xf]
    %v483 = vld [vmem:[%s1 + $0x704] sm:$0xf]
    %v484 = vld [vmem:[%s1 + $0x708] sm:$0xf]
    %v485 = vld [vmem:[%s1 + $0x70c] sm:$0xf]
    %v486 = vld [vmem:[%s1 + $0x710] sm:$0xf]
    %v487 = vld [vmem:[%s1 + $0x714] sm:$0xf]
    %v488 = vld [vmem:[%s1 + $0x718] sm:$0xf]
    %v489 = vld [vmem:[%s1 + $0x71c] sm:$0xf]
    %v490 = vld [vmem:[%s1 + $0x720] sm:$0xf]
    %v491 = vld [vmem:[%s1 + $0x724] sm:$0xf]
    %v492 = vld [vmem:[%s1 + $0x728] sm:$0xf]
    %v493 = vld [vmem:[%s1 + $0x72c] sm:$0xf]
    %v494 = vld [vmem:[%s1 + $0x730] sm:$0xf]
    %v495 = vld [vmem:[%s1 + $0x734] sm:$0xf]
    %v496 = vld [vmem:[%s1 + $0x738] sm:$0xf]
    %v497 = vld [vmem:[%s1 + $0x73c] sm:$0xf]
    %v498 = vld [vmem:[%s1 + $0x740] sm:$0xf]
    %v499 = vld [vmem:[%s1 + $0x744] sm:$0xf]
    %v500 = vld [vmem:[%s1 + $0x748] sm:$0xf]
    %v501 = vld [vmem:[%s1 + $0x74c] sm:$0xf]
    %v502 = vld [vmem:[%s1 + $0x750] sm:$0xf]
    %v503 = vld [vmem:[%s1 + $0x754] sm:$0xf]
    %v504 = vld [vmem:[%s1 + $0x758] sm:$0xf]
    %v505 = vld [vmem:[%s1 + $0x75c] sm:$0xf]
    %v506 = vld [vmem:[%s1 + $0x760] sm:$0xf]
    %v507 = vld [vmem:[%s1 + $0x764] sm:$0xf]
    %v508 = vld [vmem:[%s1 + $0x768] sm:$0xf]
    %v509 = vld [vmem:[%s1 + $0x76c] sm:$0xf]
    %v510 = vld [vmem:[%s1 + $0x770] sm:$0xf]
    %v511 = vld [vmem:[%s1 + $0x774] sm:$0xf]
    %v512 = vld [vmem:[%s1 + $0x778] sm:$0xf]
    %v513 = vld [vmem:[%s1 + $0x77c] sm:$0xf]
    %v514 = vld [vmem:[%s1 + $0x780] sm:$0xf]
    %v515 = vld [vmem:[%s1 + $0x784] sm:$0xf]
    %v516 = vld [vmem:[%s1 + $0x788] sm:$0xf]
    %v517 = vld [vmem:[%s1 + $0x78c] sm:$0xf]
    %v518 = vld [vmem:[%s1 + $0x790] sm:$0xf]
    %v519 = vld [vmem:[%s1 + $0x794] sm:$0xf]
    %v520 = vld [vmem:[%s1 + $0x798] sm:$0xf]
    %v521 = vld [vmem:[%s1 + $0x79c] sm:$0xf]
    %v522 = vld [vmem:[%s1 + $0x7a0] sm:$0xf]
    %v523 = vld [vmem:[%s1 + $0x7a4] sm:$0xf]
    %v524 = vld [vmem:[%s1 + $0x7a8] sm:$0xf]
    %v525 = vld [vmem:[%s1 + $0x7ac] sm:$0xf]
    %v526 = vld [vmem:[%s1 + $0x7b0] sm:$0xf]
    %v527 = vld [vmem:[%s1 + $0x7b4] sm:$0xf]
    %v528 = vld [vmem:[%s1 + $0x7b8] sm:$0xf]
    %v529 = vld [vmem:[%s1 + $0x7bc] sm:$0xf]
    %v530 = vld [vmem:[%s1 + $0x7c0] sm:$0xf]
    %v531 = vld [vmem:[%s1 + $0x7c4] sm:$0xf]
    %v532 = vld [vmem:[%s1 + $0x7c8] sm:$0xf]
    %v533 = vld [vmem:[%s1 + $0x7cc] sm:$0xf]
    %v534 = vld [vmem:[%s1 + $0x7d0] sm:$0xf]
    %v535 = vld [vmem:[%s1 + $0x7d4] sm:$0xf]
    %v536 = vld [vmem:[%s1 + $0x7d8] sm:$0xf]
    %v537 = vld [vmem:[%s1 + $0x7dc] sm:$0xf]
    %v538 = vld [vmem:[%s1 + $0x7e0] sm:$0xf]
    %v539 = vld [vmem:[%s1 + $0x7e4] sm:$0xf]
    %v540 = vld [vmem:[%s1 + $0x7e8] sm:$0xf]
    %v541 = vld [vmem:[%s1 + $0x7ec] sm:$0xf]
    %v542 = vld [vmem:[%s1 + $0x7f0] sm:$0xf]
    %v543 = vld [vmem:[%s1 + $0x7f4] sm:$0xf]
    %v544 = vld [vmem:[%s1 + $0x7f8] sm:$0xf]
    %v545 = vld [vmem:[%s1 + $0x7fc] sm:$0xf]
    %v546 = vld [vmem:[%s1 + $0x800] sm:$0xf]
    %v547 = vld [vmem:[%s1 + $0x804] sm:$0xf]
    %v548 = vld [vmem:[%s1 + $0x808] sm:$0xf]
    %v549 = vld [vmem:[%s1 + $0x80c] sm:$0xf]
    %v550 = vld [vmem:[%s1 + $0x810] sm:$0xf]
    %v551 = vld [vmem:[%s1 + $0x814] sm:$0xf]
    %v552 = vld [vmem:[%s1 + $0x818] sm:$0xf]
    %v553 = vld [vmem:[%s1 + $0x81c] sm:$0xf]
    %v554 = vld [vmem:[%s1 + $0x820] sm:$0xf]
    %v555 = vld [vmem:[%s1 + $0x824] sm:$0xf]
    %v556 = vld [vmem:[%s1 + $0x828] sm:$0xf]
    %v557 = vld [vmem:[%s1 + $0x82c] sm:$0xf]
    %v558 = vld [vmem:[%s1 + $0x830] sm:$0xf]
    %v559 = vld [vmem:[%s1 + $0x834] sm:$0xf]
    %v560 = vld [vmem:[%s1 + $0x838] sm:$0xf]
    %v561 = vld [vmem:[%s1 + $0x83c] sm:$0xf]
    %v562 = vld [vmem:[%s1 + $0x840] sm:$0xf]
    %v563 = vld [vmem:[%s1 + $0x844] sm:$0xf]
    %v564 = vld [vmem:[%s1 + $0x848] sm:$0xf]
    %v565 = vld [vmem:[%s1 + $0x84c] sm:$0xf]
    %v566 = vld [vmem:[%s1 + $0x850] sm:$0xf]
    %v567 = vld [vmem:[%s1 + $0x854] sm:$0xf]
    %v568 = vld [vmem:[%s1 + $0x858] sm:$0xf]
    %v569 = vld [vmem:[%s1 + $0x85c] sm:$0xf]
    %v570 = vld [vmem:[%s1 + $0x860] sm:$0xf]
    %v571 = vld [vmem:[%s1 + $0x864] sm:$0xf]
    %v572 = vld [vmem:[%s1 + $0x868] sm:$0xf]
    %v573 = vld [vmem:[%s1 + $0x86c] sm:$0xf]
    %v574 = vld [vmem:[%s1 + $0x870] sm:$0xf]
    %v575 = vld [vmem:[%s1 + $0x874] sm:$0xf]
    %v576 = vld [vmem:[%s1 + $0x878] sm:$0xf]
    %v577 = vld [vmem:[%s1 + $0x87c] sm:$0xf]
    %v578 = vld [vmem:[%s1 + $0x880] sm:$0xf]
    %v579 = vld [vmem:[%s1 + $0x884] sm:$0xf]
    %v580 = vld [vmem:[%s1 + $0x888] sm:$0xf]
    %v581 = vld [vmem:[%s1 + $0x88c] sm:$0xf]
    %v582 = vld [vmem:[%s1 + $0x890] sm:$0xf]
    %v583 = vld [vmem:[%s1 + $0x894] sm:$0xf]
    %v584 = vld [vmem:[%s1 + $0x898] sm:$0xf]
    %v585 = vld [vmem:[%s1 + $0x89c] sm:$0xf]
    %v586 = vld [vmem:[%s1 + $0x8a0] sm:$0xf]
    %v587 = vld [vmem:[%s1 + $0x8a4] sm:$0xf]
    %v588 = vld [vmem:[%s1 + $0x8a8] sm:$0xf]
    %v589 = vld [vmem:[%s1 + $0x8ac] sm:$0xf]
    %v590 = vld [vmem:[%s1 + $0x8b0] sm:$0xf]
    %v591 = vld [vmem:[%s1 + $0x8b4] sm:$0xf]
    %v592 = vld [vmem:[%s1 + $0x8b8] sm:$0xf]
    %v593 = vld [vmem:[%s1 + $0x8bc] sm:$0xf]
    %v594 = vld [vmem:[%s1 + $0x8c0] sm:$0xf]
    %v595 = vld [vmem:[%s1 + $0x8c4] sm:$0xf]
    %v596 = vld [vmem:[%s1 + $0x8c8] sm:$0xf]
    %v597 = vld [vmem:[%s1 + $0x8cc] sm:$0xf]
    %v598 = vld [vmem:[%s1 + $0x8d0] sm:$0xf]
    %v599 = vld [vmem:[%s1 + $0x8d4] sm:$0xf]
    %v600 = vld [vmem:[%s1 + $0x8d8] sm:$0xf]
    %v601 = vld [vmem:[%s1 + $0x8dc] sm:$0xf]
    %v602 = vld [vmem:[%s1 + $0x8e0] sm:$0xf]
    %v603 = vld [vmem:[%s1 + $0x8e4] sm:$0xf]
    %v604 = vld [vmem:[%s1 + $0x8e8] sm:$0xf]
    %v605 = vld [vmem:[%s1 + $0x8ec] sm:$0xf]
    %v606 = vld [vmem:[%s1 + $0x8f0] sm:$0xf]
    %v607 = vld [vmem:[%s1 + $0x8f4] sm:$0xf]
    %v608 = vld [vmem:[%s1 + $0x8f8] sm:$0xf]
    %v609 = vld [vmem:[%s1 + $0x8fc] sm:$0xf]
    %v610 = vld [vmem:[%s1 + $0x900] sm:$0xf]
    %v611 = vld [vmem:[%s1 + $0x904] sm:$0xf]
    %v612 = vld [vmem:[%s1 + $0x908] sm:$0xf]
    %v613 = vld [vmem:[%s1 + $0x90c] sm:$0xf]
    %v614 = vld [vmem:[%s1 + $0x910] sm:$0xf]
    %v615 = vld [vmem:[%s1 + $0x914] sm:$0xf]
    %v616 = vld [vmem:[%s1 + $0x918] sm:$0xf]
    %v617 = vld [vmem:[%s1 + $0x91c] sm:$0xf]
    %v618 = vld [vmem:[%s1 + $0x920] sm:$0xf]
    %v619 = vld [vmem:[%s1 + $0x924] sm:$0xf]
    %v620 = vld [vmem:[%s1 + $0x928] sm:$0xf]
    %v621 = vld [vmem:[%s1 + $0x92c] sm:$0xf]
    %v622 = vld [vmem:[%s1 + $0x930] sm:$0xf]
    %v623 = vld [vmem:[%s1 + $0x934] sm:$0xf]
    %v624 = vld [vmem:[%s1 + $0x938] sm:$0xf]
    %v625 = vld [vmem:[%s1 + $0x93c] sm:$0xf]
    %v626 = vld [vmem:[%s1 + $0x940] sm:$0xf]
    %v627 = vld [vmem:[%s1 + $0x944] sm:$0xf]
    %v628 = vld [vmem:[%s1 + $0x948] sm:$0xf]
    %v629 = vld [vmem:[%s1 + $0x94c] sm:$0xf]
    %v630 = vld [vmem:[%s1 + $0x950] sm:$0xf]
    %v631 = vld [vmem:[%s1 + $0x954] sm:$0xf]
    %v632 = vld [vmem:[%s1 + $0x958] sm:$0xf]
    %v633 = vld [vmem:[%s1 + $0x95c] sm:$0xf]
    %v634 = vld [vmem:[%s1 + $0x960] sm:$0xf]
    %v635 = vld [vmem:[%s1 + $0x964] sm:$0xf]
    %v636 = vld [vmem:[%s1 + $0x968] sm:$0xf]
    %v637 = vld [vmem:[%s1 + $0x96c] sm:$0xf]
    %v638 = vld [vmem:[%s1 + $0x970] sm:$0xf]
    %v639 = vld [vmem:[%s1 + $0x974] sm:$0xf]
    %v640 = vld [vmem:[%s1 + $0x978] sm:$0xf]
    %v641 = vld [vmem:[%s1 + $0x97c] sm:$0xf]
    %v642 = vld [vmem:[%s1 + $0x980] sm:$0xf]
    %v643 = vld [vmem:[%s1 + $0x984] sm:$0xf]
    %v644 = vld [vmem:[%s1 + $0x988] sm:$0xf]
    %v645 = vld [vmem:[%s1 + $0x98c] sm:$0xf]
    %v646 = vld [vmem:[%s1 + $0x990] sm:$0xf]
    %v647 = vld [vmem:[%s1 + $0x994] sm:$0xf]
    %v648 = vld [vmem:[%s1 + $0x998] sm:$0xf]
    %v649 = vld [vmem:[%s1 + $0x99c] sm:$0xf]
    %v650 = vld [vmem:[%s1 + $0x9a0] sm:$0xf]
    %v651 = vld [vmem:[%s1 + $0x9a4] sm:$0xf]
    %v652 = vld [vmem:[%s1 + $0x9a8] sm:$0xf]
    %v653 = vld [vmem:[%s1 + $0x9ac] sm:$0xf]
    %v654 = vld [vmem:[%s1 + $0x9b0] sm:$0xf]
    %v655 = vld [vmem:[%s1 + $0x9b4] sm:$0xf]
    %v656 = vld [vmem:[%s1 + $0x9b8] sm:$0xf]
    %v657 = vld [vmem:[%s1 + $0x9bc] sm:$0xf]
    %v658 = vld [vmem:[%s1 + $0x9c0] sm:$0xf]
    %v659 = vld [vmem:[%s1 + $0x9c4] sm:$0xf]
    %v660 = vld [vmem:[%s1 + $0x9c8] sm:$0xf]
    %v661 = vld [vmem:[%s1 + $0x9cc] sm:$0xf]
    %v662 = vld [vmem:[%s1 + $0x9d0] sm:$0xf]
    %v663 = vld [vmem:[%s1 + $0x9d4] sm:$0xf]
    %v664 = vld [vmem:[%s1 + $0x9d8] sm:$0xf]
    %v665 = vld [vmem:[%s1 + $0x9dc] sm:$0xf]
    %v666 = vld [vmem:[%s1 + $0x9e0] sm:$0xf]
    %v667 = vld [vmem:[%s1 + $0x9e4] sm:$0xf]
    %v668 = vld [vmem:[%s1 + $0x9e8] sm:$0xf]
    %v669 = vld [vmem:[%s1 + $0x9ec] sm:$0xf]
    %v670 = vld [vmem:[%s1 + $0x9f0] sm:$0xf]
    %v671 = vld [vmem:[%s1 + $0x9f4] sm:$0xf]
    %v672 = vld [vmem:[%s1 + $0x9f8] sm:$0xf]
    %v673 = vld [vmem:[%s1 + $0x9fc] sm:$0xf]
    %v674 = vld [vmem:[%s1 + $0xa00] sm:$0xf]
    %v675 = vld [vmem:[%s1 + $0xa04] sm:$0xf]
    %v676 = vld [vmem:[%s1 + $0xa08] sm:$0xf]
    %v677 = vld [vmem:[%s1 + $0xa0c] sm:$0xf]
    %v678 = vld [vmem:[%s1 + $0xa10] sm:$0xf]
    %v679 = vld [vmem:[%s1 + $0xa14] sm:$0xf]
    %v680 = vld [vmem:[%s1 + $0xa18] sm:$0xf]
    %v681 = vld [vmem:[%s1 + $0xa1c] sm:$0xf]
    %v682 = vld [vmem:[%s1 + $0xa20] sm:$0xf]
    %v683 = vld [vmem:[%s1 + $0xa24] sm:$0xf]
    %v684 = vld [vmem:[%s1 + $0xa28] sm:$0xf]
    %v685 = vld [vmem:[%s1 + $0xa2c] sm:$0xf]
    %v686 = vld [vmem:[%s1 + $0xa30] sm:$0xf]
    %v687 = vld [vmem:[%s1 + $0xa34] sm:$0xf]
    %v688 = vld [vmem:[%s1 + $0xa38] sm:$0xf]
    %v689 = vld [vmem:[%s1 + $0xa3c] sm:$0xf]
    %v690 = vld [vmem:[%s1 + $0xa40] sm:$0xf]
    %v691 = vld [vmem:[%s1 + $0xa44] sm:$0xf]
    %v692 = vld [vmem:[%s1 + $0xa48] sm:$0xf]
    %v693 = vld [vmem:[%s1 + $0xa4c] sm:$0xf]
    %v694 = vld [vmem:[%s1 + $0xa50] sm:$0xf]
    %v695 = vld [vmem:[%s1 + $0xa54] sm:$0xf]
    %v696 = vld [vmem:[%s1 + $0xa58] sm:$0xf]
    %v697 = vld [vmem:[%s1 + $0xa5c] sm:$0xf]
    %v698 = vld [vmem:[%s1 + $0xa60] sm:$0xf]
    %v699 = vld [vmem:[%s1 + $0xa64] sm:$0xf]
    %v700 = vld [vmem:[%s1 + $0xa68] sm:$0xf]
    %v701 = vld [vmem:[%s1 + $0xa6c] sm:$0xf]
    %v702 = vld [vmem:[%s1 + $0xa70] sm:$0xf]
    %v703 = vld [vmem:[%s1 + $0xa74] sm:$0xf]
    %v704 = vld [vmem:[%s1 + $0xa78] sm:$0xf]
    %v705 = vld [vmem:[%s1 + $0xa7c] sm:$0xf]
    %v706 = vld [vmem:[%s1 + $0xa80] sm:$0xf]
    %v707 = vld [vmem:[%s1 + $0xa84] sm:$0xf]
    %v708 = vld [vmem:[%s1 + $0xa88] sm:$0xf]
    %v709 = vld [vmem:[%s1 + $0xa8c] sm:$0xf]
    %v710 = vld [vmem:[%s1 + $0xa90] sm:$0xf]
    %v711 = vld [vmem:[%s1 + $0xa94] sm:$0xf]
    %v712 = vld [vmem:[%s1 + $0xa98] sm:$0xf]
    %v713 = vld [vmem:[%s1 + $0xa9c] sm:$0xf]
    %v714 = vld [vmem:[%s1 + $0xaa0] sm:$0xf]
    %v715 = vld [vmem:[%s1 + $0xaa4] sm:$0xf]
    %v716 = vld [vmem:[%s1 + $0xaa8] sm:$0xf]
    %v717 = vld [vmem:[%s1 + $0xaac] sm:$0xf]
    %v718 = vld [vmem:[%s1 + $0xab0] sm:$0xf]
    %v719 = vld [vmem:[%s1 + $0xab4] sm:$0xf]
    %v720 = vld [vmem:[%s1 + $0xab8] sm:$0xf]
    %v721 = vld [vmem:[%s1 + $0xabc] sm:$0xf]
    %v722 = vld [vmem:[%s1 + $0xac0] sm:$0xf]
    %v723 = vld [vmem:[%s1 + $0xac4] sm:$0xf]
    %v724 = vld [vmem:[%s1 + $0xac8] sm:$0xf]
    %v725 = vld [vmem:[%s1 + $0xacc] sm:$0xf]
    %v726 = vld [vmem:[%s1 + $0xad0] sm:$0xf]
    %v727 = vld [vmem:[%s1 + $0xad4] sm:$0xf]
    %v728 = vld [vmem:[%s1 + $0xad8] sm:$0xf]
    %v729 = vld [vmem:[%s1 + $0xadc] sm:$0xf]
    %v730 = vld [vmem:[%s1 + $0xae0] sm:$0xf]
    %v731 = vld [vmem:[%s1 + $0xae4] sm:$0xf]
    %v732 = vld [vmem:[%s1 + $0xae8] sm:$0xf]
    %v733 = vld [vmem:[%s1 + $0xaec] sm:$0xf]
    %v734 = vld [vmem:[%s1 + $0xaf0] sm:$0xf]
    %v735 = vld [vmem:[%s1 + $0xaf4] sm:$0xf]
    %v736 = vld [vmem:[%s1 + $0xaf8] sm:$0xf]
    %v737 = vld [vmem:[%s1 + $0xafc] sm:$0xf]
    %v738 = vld [vmem:[%s1 + $0xb00] sm:$0xf]
    %v739 = vld [vmem:[%s1 + $0xb04] sm:$0xf]
    %v740 = vld [vmem:[%s1 + $0xb08] sm:$0xf]
    %v741 = vld [vmem:[%s1 + $0xb0c] sm:$0xf]
    %v742 = vld [vmem:[%s1 + $0xb10] sm:$0xf]
    %v743 = vld [vmem:[%s1 + $0xb14] sm:$0xf]
    %v744 = vld [vmem:[%s1 + $0xb18] sm:$0xf]
    %v745 = vld [vmem:[%s1 + $0xb1c] sm:$0xf]
    %v746 = vld [vmem:[%s1 + $0xb20] sm:$0xf]
    %v747 = vld [vmem:[%s1 + $0xb24] sm:$0xf]
    %v748 = vld [vmem:[%s1 + $0xb28] sm:$0xf]
    %v749 = vld [vmem:[%s1 + $0xb2c] sm:$0xf]
    %v750 = vld [vmem:[%s1 + $0xb30] sm:$0xf]
    %v751 = vld [vmem:[%s1 + $0xb34] sm:$0xf]
    %v752 = vld [vmem:[%s1 + $0xb38] sm:$0xf]
    %v753 = vld [vmem:[%s1 + $0xb3c] sm:$0xf]
    %v754 = vld [vmem:[%s1 + $0xb40] sm:$0xf]
    %v755 = vld [vmem:[%s1 + $0xb44] sm:$0xf]
    %v756 = vld [vmem:[%s2] sm:$0x1]
    %v758 = vlaneseq
    %v759 = vshrl.u32 %v758, 7
    %v760 = vsub.s32 0, %v759
    %v761 = vrot.slane %v756, %v760
    %v769 = vcombine.high %v28, %v28
    %v771 = vunpack.c.l.s4 1966171168
    %v772 = vunpack.c.0.s8 %v771
    %v773 = vlaneseq
    %v774 = vshrl.u32 %v773, 7
    %v775 = vsub.s32 %v772, %v774
    %v776 = vrot.slane %v28, %v775
    %v778 = vunpack.c.l.s4 1966171168
    %v779 = vunpack.c.0.s8 %v778
    %v780 = vlaneseq
    %v781 = vshrl.u32 %v780, 7
    %v782 = vsub.s32 %v779, %v781
    %v783 = vrot.slane %v769, %v782
    %v784 = vcombine.high %v776, %v776
    %v785 = vcombine.high %v783, %v783
    %v787 = vunpack.c.l.s4 1966171168
    %v788 = vunpack.c.0.s8 %v787
    %v789 = vlaneseq
    %v790 = vshrl.u32 %v789, 7
    %v791 = vsub.s32 %v788, %v790
    %v792 = vrot.slane %v776, %v791
    %v794 = vunpack.c.l.s4 1966171168
    %v795 = vunpack.c.0.s8 %v794
    %v796 = vlaneseq
    %v797 = vshrl.u32 %v796, 7
    %v798 = vsub.s32 %v795, %v797
    %v799 = vrot.slane %v783, %v798
    %v801 = vunpack.c.l.s4 1966171168
    %v802 = vunpack.c.0.s8 %v801
    %v803 = vlaneseq
    %v804 = vshrl.u32 %v803, 7
    %v805 = vsub.s32 %v802, %v804
    %v806 = vrot.slane %v784, %v805
    %v808 = vunpack.c.l.s4 1966171168
    %v809 = vunpack.c.0.s8 %v808
    %v810 = vlaneseq
    %v811 = vshrl.u32 %v810, 7
    %v812 = vsub.s32 %v809, %v811
    %v813 = vrot.slane %v785, %v812
    %v814 = vcombine.high %v792, %v792
    %v815 = vcombine.high %v799, %v799
    %v816 = vcombine.high %v806, %v806
    %v817 = vcombine.high %v813, %v813
    %v818 = vcombine.high %v29, %v29
    %v820 = vunpack.c.l.s4 1966171168
    %v821 = vunpack.c.0.s8 %v820
    %v822 = vlaneseq
    %v823 = vshrl.u32 %v822, 7
    %v824 = vsub.s32 %v821, %v823
    %v825 = vrot.slane %v29, %v824
    %v827 = vunpack.c.l.s4 1966171168
    %v828 = vunpack.c.0.s8 %v827
    %v829 = vlaneseq
    %v830 = vshrl.u32 %v829, 7
    %v831 = vsub.s32 %v828, %v830
    %v832 = vrot.slane %v818, %v831
    %v833 = vcombine.high %v825, %v825
    %v834 = vcombine.high %v832, %v832
    %v836 = vunpack.c.l.s4 1966171168
    %v837 = vunpack.c.0.s8 %v836
    %v838 = vlaneseq
    %v839 = vshrl.u32 %v838, 7
    %v840 = vsub.s32 %v837, %v839
    %v841 = vrot.slane %v825, %v840
    %v843 = vunpack.c.l.s4 1966171168
    %v844 = vunpack.c.0.s8 %v843
    %v845 = vlaneseq
    %v846 = vshrl.u32 %v845, 7
    %v847 = vsub.s32 %v844, %v846
    %v848 = vrot.slane %v832, %v847
    %v850 = vunpack.c.l.s4 1966171168
    %v851 = vunpack.c.0.s8 %v850
    %v852 = vlaneseq
    %v853 = vshrl.u32 %v852, 7
    %v854 = vsub.s32 %v851, %v853
    %v855 = vrot.slane %v833, %v854
    %v857 = vunpack.c.l.s4 1966171168
    %v858 = vunpack.c.0.s8 %v857
    %v859 = vlaneseq
    %v860 = vshrl.u32 %v859, 7
    %v861 = vsub.s32 %v858, %v860
    %v862 = vrot.slane %v834, %v861
    %v863 = vcombine.high %v841, %v841
    %v864 = vcombine.high %v848, %v848
    %v865 = vcombine.high %v855, %v855
    %v866 = vcombine.high %v862, %v862
    %v867 = vcombine.high %v30, %v30
    %v869 = vunpack.c.l.s4 1966171168
    %v870 = vunpack.c.0.s8 %v869
    %v871 = vlaneseq
    %v872 = vshrl.u32 %v871, 7
    %v873 = vsub.s32 %v870, %v872
    %v874 = vrot.slane %v30, %v873
    %v876 = vunpack.c.l.s4 1966171168
    %v877 = vunpack.c.0.s8 %v876
    %v878 = vlaneseq
    %v879 = vshrl.u32 %v878, 7
    %v880 = vsub.s32 %v877, %v879
    %v881 = vrot.slane %v867, %v880
    %v882 = vcombine.high %v874, %v874
    %v883 = vcombine.high %v881, %v881
    %v885 = vunpack.c.l.s4 1966171168
    %v886 = vunpack.c.0.s8 %v885
    %v887 = vlaneseq
    %v888 = vshrl.u32 %v887, 7
    %v889 = vsub.s32 %v886, %v888
    %v890 = vrot.slane %v874, %v889
    %v892 = vunpack.c.l.s4 1966171168
    %v893 = vunpack.c.0.s8 %v892
    %v894 = vlaneseq
    %v895 = vshrl.u32 %v894, 7
    %v896 = vsub.s32 %v893, %v895
    %v897 = vrot.slane %v881, %v896
    %v899 = vunpack.c.l.s4 1966171168
    %v900 = vunpack.c.0.s8 %v899
    %v901 = vlaneseq
    %v902 = vshrl.u32 %v901, 7
    %v903 = vsub.s32 %v900, %v902
    %v904 = vrot.slane %v882, %v903
    %v906 = vunpack.c.l.s4 1966171168
    %v907 = vunpack.c.0.s8 %v906
    %v908 = vlaneseq
    %v909 = vshrl.u32 %v908, 7
    %v910 = vsub.s32 %v907, %v909
    %v911 = vrot.slane %v883, %v910
    %v912 = vcombine.high %v890, %v890
    %v913 = vcombine.high %v897, %v897
    %v914 = vcombine.high %v904, %v904
    %v915 = vcombine.high %v911, %v911
    %v916 = vcombine.high %v31, %v31
    %v918 = vunpack.c.l.s4 1966171168
    %v919 = vunpack.c.0.s8 %v918
    %v920 = vlaneseq
    %v921 = vshrl.u32 %v920, 7
    %v922 = vsub.s32 %v919, %v921
    %v923 = vrot.slane %v31, %v922
    %v925 = vunpack.c.l.s4 1966171168
    %v926 = vunpack.c.0.s8 %v925
    %v927 = vlaneseq
    %v928 = vshrl.u32 %v927, 7
    %v929 = vsub.s32 %v926, %v928
    %v930 = vrot.slane %v916, %v929
    %v931 = vcombine.high %v923, %v923
    %v932 = vcombine.high %v930, %v930
    %v934 = vunpack.c.l.s4 1966171168
    %v935 = vunpack.c.0.s8 %v934
    %v936 = vlaneseq
    %v937 = vshrl.u32 %v936, 7
    %v938 = vsub.s32 %v935, %v937
    %v939 = vrot.slane %v923, %v938
    %v941 = vunpack.c.l.s4 1966171168
    %v942 = vunpack.c.0.s8 %v941
    %v943 = vlaneseq
    %v944 = vshrl.u32 %v943, 7
    %v945 = vsub.s32 %v942, %v944
    %v946 = vrot.slane %v930, %v945
    %v948 = vunpack.c.l.s4 1966171168
    %v949 = vunpack.c.0.s8 %v948
    %v950 = vlaneseq
    %v951 = vshrl.u32 %v950, 7
    %v952 = vsub.s32 %v949, %v951
    %v953 = vrot.slane %v931, %v952
    %v955 = vunpack.c.l.s4 1966171168
    %v956 = vunpack.c.0.s8 %v955
    %v957 = vlaneseq
    %v958 = vshrl.u32 %v957, 7
    %v959 = vsub.s32 %v956, %v958
    %v960 = vrot.slane %v932, %v959
    %v961 = vcombine.high %v939, %v939
    %v962 = vcombine.high %v946, %v946
    %v963 = vcombine.high %v953, %v953
    %v964 = vcombine.high %v960, %v960
    %v965 = vcombine.high %v32, %v32
    %v967 = vunpack.c.l.s4 1966171168
    %v968 = vunpack.c.0.s8 %v967
    %v969 = vlaneseq
    %v970 = vshrl.u32 %v969, 7
    %v971 = vsub.s32 %v968, %v970
    %v972 = vrot.slane %v32, %v971
    %v974 = vunpack.c.l.s4 1966171168
    %v975 = vunpack.c.0.s8 %v974
    %v976 = vlaneseq
    %v977 = vshrl.u32 %v976, 7
    %v978 = vsub.s32 %v975, %v977
    %v979 = vrot.slane %v965, %v978
    %v980 = vcombine.high %v972, %v972
    %v981 = vcombine.high %v979, %v979
    %v983 = vunpack.c.l.s4 1966171168
    %v984 = vunpack.c.0.s8 %v983
    %v985 = vlaneseq
    %v986 = vshrl.u32 %v985, 7
    %v987 = vsub.s32 %v984, %v986
    %v988 = vrot.slane %v972, %v987
    %v990 = vunpack.c.l.s4 1966171168
    %v991 = vunpack.c.0.s8 %v990
    %v992 = vlaneseq
    %v993 = vshrl.u32 %v992, 7
    %v994 = vsub.s32 %v991, %v993
    %v995 = vrot.slane %v979, %v994
    %v997 = vunpack.c.l.s4 1966171168
    %v998 = vunpack.c.0.s8 %v997
    %v999 = vlaneseq
    %v1000 = vshrl.u32 %v999, 7
    %v1001 = vsub.s32 %v998, %v1000
    %v1002 = vrot.slane %v980, %v1001
    %v1004 = vunpack.c.l.s4 1966171168
    %v1005 = vunpack.c.0.s8 %v1004
    %v1006 = vlaneseq
    %v1007 = vshrl.u32 %v1006, 7
    %v1008 = vsub.s32 %v1005, %v1007
    %v1009 = vrot.slane %v981, %v1008
    %v1010 = vcombine.high %v988, %v988
    %v1011 = vcombine.high %v995, %v995
    %v1012 = vcombine.high %v1002, %v1002
    %v1013 = vcombine.high %v1009, %v1009
    %v1014 = vcombine.high %v33, %v33
    %v1016 = vunpack.c.l.s4 1966171168
    %v1017 = vunpack.c.0.s8 %v1016
    %v1018 = vlaneseq
    %v1019 = vshrl.u32 %v1018, 7
    %v1020 = vsub.s32 %v1017, %v1019
    %v1021 = vrot.slane %v33, %v1020
    %v1023 = vunpack.c.l.s4 1966171168
    %v1024 = vunpack.c.0.s8 %v1023
    %v1025 = vlaneseq
    %v1026 = vshrl.u32 %v1025, 7
    %v1027 = vsub.s32 %v1024, %v1026
    %v1028 = vrot.slane %v1014, %v1027
    %v1029 = vcombine.high %v1021, %v1021
    %v1030 = vcombine.high %v1028, %v1028
    %v1032 = vunpack.c.l.s4 1966171168
    %v1033 = vunpack.c.0.s8 %v1032
    %v1034 = vlaneseq
    %v1035 = vshrl.u32 %v1034, 7
    %v1036 = vsub.s32 %v1033, %v1035
    %v1037 = vrot.slane %v1021, %v1036
    %v1039 = vunpack.c.l.s4 1966171168
    %v1040 = vunpack.c.0.s8 %v1039
    %v1041 = vlaneseq
    %v1042 = vshrl.u32 %v1041, 7
    %v1043 = vsub.s32 %v1040, %v1042
    %v1044 = vrot.slane %v1028, %v1043
    %v1046 = vunpack.c.l.s4 1966171168
    %v1047 = vunpack.c.0.s8 %v1046
    %v1048 = vlaneseq
    %v1049 = vshrl.u32 %v1048, 7
    %v1050 = vsub.s32 %v1047, %v1049
    %v1051 = vrot.slane %v1029, %v1050
    %v1053 = vunpack.c.l.s4 1966171168
    %v1054 = vunpack.c.0.s8 %v1053
    %v1055 = vlaneseq
    %v1056 = vshrl.u32 %v1055, 7
    %v1057 = vsub.s32 %v1054, %v1056
    %v1058 = vrot.slane %v1030, %v1057
    %v1059 = vcombine.high %v1037, %v1037
    %v1060 = vcombine.high %v1051, %v1051
    %v1828 = vunpack.c.l.b16 %v34
    %v1829 = vunpack.c.l.b16 %v35
    %v1830 = vunpack.c.l.b16 %v36
    %v1831 = vunpack.c.l.b16 %v37
    %v1832 = vunpack.c.l.b16 %v38
    %v1833 = vunpack.c.l.b16 %v39
    %v1834 = vunpack.c.l.b16 %v40
    %v1835 = vunpack.c.l.b16 %v41
    %v1836 = vunpack.c.l.b16 %v42
    %v1837 = vunpack.c.l.b16 %v43
    %v1838 = vunpack.c.l.b16 %v44
    %v1839 = vunpack.c.l.b16 %v45
    %v1840 = vunpack.c.l.b16 %v46
    %v1841 = vunpack.c.l.b16 %v47
    %v1842 = vunpack.c.l.b16 %v48
    %v1843 = vunpack.c.l.b16 %v49
    %v1844 = vunpack.c.l.b16 %v50
    %v1845 = vunpack.c.l.b16 %v51
    %v1846 = vunpack.c.l.b16 %v52
    %v1847 = vunpack.c.l.b16 %v53
    %v1848 = vunpack.c.l.b16 %v54
    %v1849 = vunpack.c.l.b16 %v55
    %v1850 = vunpack.c.l.b16 %v56
    %v1851 = vunpack.c.l.b16 %v57
    %v1852 = vunpack.c.l.b16 %v58
    %v1853 = vunpack.c.l.b16 %v59
    %v1854 = vunpack.c.l.b16 %v60
    %v1855 = vunpack.c.l.b16 %v61
    %v1856 = vunpack.c.l.b16 %v62
    %v1857 = vunpack.c.l.b16 %v63
    %v1858 = vunpack.c.l.b16 %v64
    %v1859 = vunpack.c.l.b16 %v65
    %v1860 = vunpack.c.l.b16 %v66
    %v1861 = vunpack.c.l.b16 %v67
    %v1862 = vunpack.c.l.b16 %v68
    %v1863 = vunpack.c.l.b16 %v69
    %v1864 = vunpack.c.l.b16 %v70
    %v1865 = vunpack.c.l.b16 %v71
    %v1866 = vunpack.c.l.b16 %v72
    %v1867 = vunpack.c.l.b16 %v73
    %v1868 = vunpack.c.l.b16 %v74
    %v1869 = vunpack.c.l.b16 %v75
    %v1870 = vunpack.c.l.b16 %v76
    %v1871 = vunpack.c.l.b16 %v77
    %v1872 = vunpack.c.l.b16 %v78
    %v1873 = vunpack.c.l.b16 %v79
    %v1874 = vunpack.c.l.b16 %v80
    %v1875 = vunpack.c.l.b16 %v81
    %v1876 = vunpack.c.l.b16 %v82
    %v1877 = vunpack.c.l.b16 %v83
    %v1878 = vunpack.c.l.b16 %v84
    %v1879 = vunpack.c.l.b16 %v85
    %v1880 = vunpack.c.l.b16 %v86
    %v1881 = vunpack.c.l.b16 %v87
    %v1882 = vunpack.c.l.b16 %v88
    %v1883 = vunpack.c.l.b16 %v89
    %v1884 = vunpack.c.l.b16 %v90
    %v1885 = vunpack.c.l.b16 %v91
    %v1886 = vunpack.c.l.b16 %v92
    %v1887 = vunpack.c.l.b16 %v93
    %v1888 = vunpack.c.l.b16 %v94
    %v1889 = vunpack.c.l.b16 %v95
    %v1890 = vunpack.c.l.b16 %v96
    %v1891 = vunpack.c.l.b16 %v97
    %v1892 = vunpack.c.l.b16 %v98
    %v1893 = vunpack.c.l.b16 %v99
    %v1894 = vunpack.c.l.b16 %v100
    %v1895 = vunpack.c.l.b16 %v101
    %v1896 = vunpack.c.l.b16 %v102
    %v1897 = vunpack.c.l.b16 %v103
    %v1898 = vunpack.c.l.b16 %v104
    %v1899 = vunpack.c.l.b16 %v105
    %v1900 = vunpack.c.l.b16 %v106
    %v1901 = vunpack.c.l.b16 %v107
    %v1902 = vunpack.c.l.b16 %v108
    %v1903 = vunpack.c.l.b16 %v109
    %v1904 = vunpack.c.l.b16 %v110
    %v1905 = vunpack.c.l.b16 %v111
    %v1906 = vunpack.c.l.b16 %v112
    %v1907 = vunpack.c.l.b16 %v113
    %v1908 = vunpack.c.l.b16 %v114
    %v1909 = vunpack.c.l.b16 %v115
    %v1910 = vunpack.c.l.b16 %v116
    %v1911 = vunpack.c.l.b16 %v117
    %v1912 = vunpack.c.l.b16 %v118
    %v1913 = vunpack.c.l.b16 %v119
    %v1914 = vunpack.c.l.b16 %v120
    %v1915 = vunpack.c.l.b16 %v121
    %v1916 = vunpack.c.l.b16 %v122
    %v1917 = vunpack.c.l.b16 %v123
    %v1918 = vunpack.c.l.b16 %v124
    %v1919 = vunpack.c.l.b16 %v125
    %v1920 = vunpack.c.l.b16 %v126
    %v1921 = vunpack.c.l.b16 %v127
    %v1922 = vunpack.c.l.b16 %v128
    %v1923 = vunpack.c.l.b16 %v129
    %v1924 = vunpack.c.l.b16 %v130
    %v1925 = vunpack.c.l.b16 %v131
    %v1926 = vunpack.c.l.b16 %v132
    %v1927 = vunpack.c.l.b16 %v133
    %v1928 = vunpack.c.l.b16 %v134
    %v1929 = vunpack.c.l.b16 %v135
    %v1930 = vunpack.c.l.b16 %v136
    %v1931 = vunpack.c.l.b16 %v137
    %v1932 = vunpack.c.l.b16 %v138
    %v1933 = vunpack.c.l.b16 %v139
    %v1934 = vunpack.c.l.b16 %v140
    %v1935 = vunpack.c.l.b16 %v141
    %v1936 = vunpack.c.l.b16 %v142
    %v1937 = vunpack.c.l.b16 %v143
    %v1938 = vunpack.c.l.b16 %v144
    %v1939 = vunpack.c.l.b16 %v145
    %v1940 = vunpack.c.l.b16 %v146
    %v1941 = vunpack.c.l.b16 %v147
    %v1942 = vunpack.c.l.b16 %v148
    %v1943 = vunpack.c.l.b16 %v149
    %v1944 = vunpack.c.l.b16 %v150
    %v1945 = vunpack.c.l.b16 %v151
    %v1946 = vunpack.c.l.b16 %v152
    %v1947 = vunpack.c.l.b16 %v153
    %v1948 = vunpack.c.l.b16 %v154
    %v1949 = vunpack.c.l.b16 %v155
    %v1950 = vunpack.c.l.b16 %v156
    %v1951 = vunpack.c.l.b16 %v157
    %v1952 = vunpack.c.l.b16 %v158
    %v1953 = vunpack.c.l.b16 %v159
    %v1954 = vunpack.c.l.b16 %v160
    %v1955 = vunpack.c.l.b16 %v161
    %v1956 = vunpack.c.l.b16 %v162
    %v1957 = vunpack.c.l.b16 %v163
    %v1958 = vunpack.c.l.b16 %v164
    %v1959 = vunpack.c.l.b16 %v165
    %v1960 = vunpack.c.l.b16 %v166
    %v1961 = vunpack.c.l.b16 %v167
    %v1962 = vunpack.c.l.b16 %v168
    %v1963 = vunpack.c.l.b16 %v169
    %v1964 = vunpack.c.l.b16 %v170
    %v1965 = vunpack.c.l.b16 %v171
    %v1966 = vunpack.c.l.b16 %v172
    %v1967 = vunpack.c.l.b16 %v173
    %v1968 = vunpack.c.l.b16 %v174
    %v1969 = vunpack.c.l.b16 %v175
    %v1970 = vunpack.c.l.b16 %v176
    %v1971 = vunpack.c.l.b16 %v177
    %v1972 = vunpack.c.l.b16 %v178
    %v1973 = vunpack.c.l.b16 %v179
    %v1974 = vunpack.c.l.b16 %v180
    %v1975 = vunpack.c.l.b16 %v181
    %v1976 = vunpack.c.l.b16 %v182
    %v1977 = vunpack.c.l.b16 %v183
    %v1978 = vunpack.c.l.b16 %v184
    %v1979 = vunpack.c.l.b16 %v185
    %v1980 = vunpack.c.l.b16 %v186
    %v1981 = vunpack.c.l.b16 %v187
    %v1982 = vunpack.c.l.b16 %v188
    %v1983 = vunpack.c.l.b16 %v189
    %v1984 = vunpack.c.l.b16 %v190
    %v1985 = vunpack.c.l.b16 %v191
    %v1986 = vunpack.c.l.b16 %v192
    %v1987 = vunpack.c.l.b16 %v193
    %v1988 = vunpack.c.l.b16 %v194
    %v1989 = vunpack.c.l.b16 %v195
    %v1990 = vunpack.c.l.b16 %v196
    %v1991 = vunpack.c.l.b16 %v197
    %v1992 = vunpack.c.l.b16 %v198
    %v1993 = vunpack.c.l.b16 %v199
    %v1994 = vunpack.c.l.b16 %v200
    %v1995 = vunpack.c.l.b16 %v201
    %v1996 = vunpack.c.l.b16 %v202
    %v1997 = vunpack.c.l.b16 %v203
    %v1998 = vunpack.c.l.b16 %v204
    %v1999 = vunpack.c.l.b16 %v205
    %v2000 = vunpack.c.l.b16 %v206
    %v2001 = vunpack.c.l.b16 %v207
    %v2002 = vunpack.c.l.b16 %v208
    %v2003 = vunpack.c.l.b16 %v209
    %v2004 = vunpack.c.l.b16 %v210
    %v2005 = vunpack.c.l.b16 %v211
    %v2006 = vunpack.c.l.b16 %v212
    %v2007 = vunpack.c.l.b16 %v213
    %v2008 = vunpack.c.l.b16 %v214
    %v2009 = vunpack.c.l.b16 %v215
    %v2010 = vunpack.c.l.b16 %v216
    %v2011 = vunpack.c.l.b16 %v217
    %v2012 = vunpack.c.l.b16 %v218
    %v2013 = vunpack.c.l.b16 %v219
    %v2014 = vunpack.c.l.b16 %v220
    %v2015 = vunpack.c.l.b16 %v221
    %v2016 = vunpack.c.l.b16 %v222
    %v2017 = vunpack.c.l.b16 %v223
    %v2018 = vunpack.c.l.b16 %v224
    %v2019 = vunpack.c.l.b16 %v225
    %v2020 = vunpack.c.l.b16 %v226
    %v2021 = vunpack.c.l.b16 %v227
    %v2022 = vunpack.c.l.b16 %v228
    %v2023 = vunpack.c.l.b16 %v229
    %v2024 = vunpack.c.l.b16 %v230
    %v2025 = vunpack.c.l.b16 %v231
    %v2026 = vunpack.c.l.b16 %v232
    %v2027 = vunpack.c.l.b16 %v233
    %v2028 = vunpack.c.l.b16 %v234
    %v2029 = vunpack.c.l.b16 %v235
    %v2030 = vunpack.c.l.b16 %v236
    %v2031 = vunpack.c.l.b16 %v237
    %v2032 = vunpack.c.l.b16 %v238
    %v2033 = vunpack.c.l.b16 %v239
    %v2034 = vunpack.c.l.b16 %v240
    %v2035 = vunpack.c.l.b16 %v241
    %v2036 = vunpack.c.l.b16 %v242
    %v2037 = vunpack.c.l.b16 %v243
    %v2038 = vunpack.c.l.b16 %v244
    %v2039 = vunpack.c.l.b16 %v245
    %v2040 = vunpack.c.l.b16 %v246
    %v2041 = vunpack.c.l.b16 %v247
    %v2042 = vunpack.c.l.b16 %v248
    %v2043 = vunpack.c.l.b16 %v249
    %v2044 = vunpack.c.l.b16 %v250
    %v2045 = vunpack.c.l.b16 %v251
    %v2046 = vunpack.c.l.b16 %v252
    %v2047 = vunpack.c.l.b16 %v253
    %v2048 = vunpack.c.l.b16 %v254
    %v2049 = vunpack.c.l.b16 %v255
    %v2050 = vunpack.c.l.b16 %v256
    %v2051 = vunpack.c.l.b16 %v257
    %v2052 = vunpack.c.l.b16 %v258
    %v2053 = vunpack.c.l.b16 %v259
    %v2054 = vunpack.c.l.b16 %v260
    %v2055 = vunpack.c.l.b16 %v261
    %v2056 = vunpack.c.l.b16 %v262
    %v2057 = vunpack.c.l.b16 %v263
    %v2058 = vunpack.c.l.b16 %v264
    %v2059 = vunpack.c.l.b16 %v265
    %v2060 = vunpack.c.l.b16 %v266
    %v2061 = vunpack.c.l.b16 %v267
    %v2062 = vunpack.c.l.b16 %v268
    %v2063 = vunpack.c.l.b16 %v269
    %v2064 = vunpack.c.l.b16 %v270
    %v2065 = vunpack.c.l.b16 %v271
    %v2066 = vunpack.c.l.b16 %v272
    %v2067 = vunpack.c.l.b16 %v273
    %v2068 = vunpack.c.l.b16 %v274
    %v2069 = vunpack.c.l.b16 %v275
    %v2070 = vunpack.c.l.b16 %v276
    %v2071 = vunpack.c.l.b16 %v277
    %v2072 = vunpack.c.l.b16 %v278
    %v2073 = vunpack.c.l.b16 %v279
    %v2074 = vunpack.c.l.b16 %v280
    %v2075 = vunpack.c.l.b16 %v281
    %v2076 = vunpack.c.l.b16 %v282
    %v2077 = vunpack.c.l.b16 %v283
    %v2078 = vunpack.c.l.b16 %v284
    %v2079 = vunpack.c.l.b16 %v285
    %v2080 = vunpack.c.l.b16 %v286
    %v2081 = vunpack.c.l.b16 %v287
    %v2082 = vunpack.c.l.b16 %v288
    %v2083 = vunpack.c.l.b16 %v289
    %v2084 = vunpack.c.l.b16 %v290
    %v2085 = vunpack.c.l.b16 %v291
    %v2086 = vunpack.c.l.b16 %v292
    %v2087 = vunpack.c.l.b16 %v293
    %v2088 = vunpack.c.l.b16 %v294
    %v2089 = vunpack.c.l.b16 %v295
    %v2090 = vunpack.c.l.b16 %v296
    %v2091 = vunpack.c.l.b16 %v297
    %v2092 = vunpack.c.l.b16 %v298
    %v2093 = vunpack.c.l.b16 %v299
    %v2094 = vunpack.c.l.b16 %v300
    %v2095 = vunpack.c.l.b16 %v301
    %v2096 = vunpack.c.l.b16 %v302
    %v2097 = vunpack.c.l.b16 %v303
    %v2098 = vunpack.c.l.b16 %v304
    %v2099 = vunpack.c.l.b16 %v305
    %v2100 = vunpack.c.l.b16 %v306
    %v2101 = vunpack.c.l.b16 %v307
    %v2102 = vunpack.c.l.b16 %v308
    %v2103 = vunpack.c.l.b16 %v309
    %v2104 = vunpack.c.l.b16 %v310
    %v2105 = vunpack.c.l.b16 %v311
    %v2106 = vunpack.c.l.b16 %v312
    %v2107 = vunpack.c.l.b16 %v313
    %v2108 = vunpack.c.l.b16 %v314
    %v2109 = vunpack.c.l.b16 %v315
    %v2110 = vunpack.c.l.b16 %v316
    %v2111 = vunpack.c.l.b16 %v317
    %v2112 = vunpack.c.l.b16 %v318
    %v2113 = vunpack.c.l.b16 %v319
    %v2114 = vunpack.c.l.b16 %v320
    %v2115 = vunpack.c.l.b16 %v321
    %v2116 = vunpack.c.l.b16 %v322
    %v2117 = vunpack.c.l.b16 %v323
    %v2118 = vunpack.c.l.b16 %v324
    %v2119 = vunpack.c.l.b16 %v325
    %v2120 = vunpack.c.l.b16 %v326
    %v2121 = vunpack.c.l.b16 %v327
    %v2122 = vunpack.c.l.b16 %v328
    %v2123 = vunpack.c.l.b16 %v329
    %v2124 = vunpack.c.l.b16 %v330
    %v2125 = vunpack.c.l.b16 %v331
    %v2126 = vunpack.c.l.b16 %v332
    %v2127 = vunpack.c.l.b16 %v333
    %v2128 = vunpack.c.l.b16 %v334
    %v2129 = vunpack.c.l.b16 %v335
    %v2130 = vunpack.c.l.b16 %v336
    %v2131 = vunpack.c.l.b16 %v337
    %v2132 = vunpack.c.l.b16 %v338
    %v2133 = vunpack.c.l.b16 %v339
    %v2134 = vunpack.c.l.b16 %v340
    %v2135 = vunpack.c.l.b16 %v341
    %v2136 = vunpack.c.l.b16 %v342
    %v2137 = vunpack.c.l.b16 %v343
    %v2138 = vunpack.c.l.b16 %v344
    %v2139 = vunpack.c.l.b16 %v345
    %v2140 = vunpack.c.l.b16 %v346
    %v2141 = vunpack.c.l.b16 %v347
    %v2142 = vunpack.c.l.b16 %v348
    %v2143 = vunpack.c.l.b16 %v349
    %v2144 = vunpack.c.l.b16 %v350
    %v2145 = vunpack.c.l.b16 %v351
    %v2146 = vunpack.c.l.b16 %v352
    %v2147 = vunpack.c.l.b16 %v353
    %v2148 = vunpack.c.l.b16 %v354
    %v2149 = vunpack.c.l.b16 %v355
    %v2150 = vunpack.c.l.b16 %v356
    %v2151 = vunpack.c.l.b16 %v357
    %v2152 = vunpack.c.l.b16 %v358
    %v2153 = vunpack.c.l.b16 %v359
    %v2154 = vunpack.c.l.b16 %v360
    %v2155 = vunpack.c.l.b16 %v361
    %v2156 = vunpack.c.l.b16 %v362
    %v2157 = vunpack.c.l.b16 %v363
    %v2158 = vunpack.c.l.b16 %v364
    %v2159 = vunpack.c.l.b16 %v365
    %v2160 = vunpack.c.l.b16 %v366
    %v2161 = vunpack.c.l.b16 %v367
    %v2162 = vunpack.c.l.b16 %v368
    %v2163 = vunpack.c.l.b16 %v369
    %v2164 = vunpack.c.l.b16 %v370
    %v2165 = vunpack.c.l.b16 %v371
    %v2166 = vunpack.c.l.b16 %v372
    %v2167 = vunpack.c.l.b16 %v373
    %v2168 = vunpack.c.l.b16 %v374
    %v2169 = vunpack.c.l.b16 %v375
    %v2170 = vunpack.c.l.b16 %v376
    %v2171 = vunpack.c.l.b16 %v377
    %v2172 = vunpack.c.l.b16 %v378
    %v2173 = vunpack.c.l.b16 %v379
    %v2174 = vunpack.c.l.b16 %v380
    %v2175 = vunpack.c.l.b16 %v381
    %v2176 = vunpack.c.l.b16 %v382
    %v2177 = vunpack.c.l.b16 %v383
    %v2178 = vunpack.c.l.b16 %v384
    %v2179 = vunpack.c.l.b16 %v385
    %v2180 = vunpack.c.l.b16 %v386
    %v2181 = vunpack.c.l.b16 %v387
    %v2182 = vunpack.c.l.b16 %v388
    %v2183 = vunpack.c.l.b16 %v389
    %v2184 = vunpack.c.l.b16 %v390
    %v2185 = vunpack.c.l.b16 %v391
    %v2186 = vunpack.c.l.b16 %v392
    %v2187 = vunpack.c.l.b16 %v393
    %v2188 = vunpack.c.l.b16 %v394
    %v2189 = vunpack.c.l.b16 %v395
    %v2190 = vunpack.c.l.b16 %v396
    %v2191 = vunpack.c.l.b16 %v397
    %v2192 = vunpack.c.l.b16 %v398
    %v2193 = vunpack.c.l.b16 %v399
    %v2194 = vunpack.c.l.b16 %v400
    %v2195 = vunpack.c.l.b16 %v401
    %v2196 = vunpack.c.l.b16 %v402
    %v2197 = vunpack.c.l.b16 %v403
    %v2198 = vunpack.c.l.b16 %v404
    %v2199 = vunpack.c.l.b16 %v405
    %v2200 = vunpack.c.l.b16 %v406
    %v2201 = vunpack.c.l.b16 %v407
    %v2202 = vunpack.c.l.b16 %v408
    %v2203 = vunpack.c.l.b16 %v409
    %v2204 = vunpack.c.l.b16 %v410
    %v2205 = vunpack.c.l.b16 %v411
    %v2206 = vunpack.c.l.b16 %v412
    %v2207 = vunpack.c.l.b16 %v413
    %v2208 = vunpack.c.l.b16 %v414
    %v2209 = vunpack.c.l.b16 %v415
    %v2210 = vunpack.c.l.b16 %v416
    %v2211 = vunpack.c.l.b16 %v417
    %v2212 = vunpack.c.l.b16 %v418
    %v2213 = vunpack.c.l.b16 %v419
    %v2214 = vunpack.c.l.b16 %v420
    %v2215 = vunpack.c.l.b16 %v421
    %v2216 = vunpack.c.l.b16 %v422
    %v2217 = vunpack.c.l.b16 %v423
    %v2218 = vunpack.c.l.b16 %v424
    %v2219 = vunpack.c.l.b16 %v425
    %v2220 = vunpack.c.l.b16 %v426
    %v2221 = vunpack.c.l.b16 %v427
    %v2222 = vunpack.c.l.b16 %v428
    %v2223 = vunpack.c.l.b16 %v429
    %v2224 = vunpack.c.l.b16 %v430
    %v2225 = vunpack.c.l.b16 %v431
    %v2226 = vunpack.c.l.b16 %v432
    %v2227 = vunpack.c.l.b16 %v433
    %v2228 = vunpack.c.l.b16 %v434
    %v2229 = vunpack.c.l.b16 %v435
    %v2230 = vunpack.c.l.b16 %v436
    %v2231 = vunpack.c.l.b16 %v437
    %v2232 = vunpack.c.l.b16 %v438
    %v2233 = vunpack.c.l.b16 %v439
    %v2234 = vunpack.c.l.b16 %v440
    %v2235 = vunpack.c.l.b16 %v441
    %v2236 = vunpack.c.l.b16 %v442
    %v2237 = vunpack.c.l.b16 %v443
    %v2238 = vunpack.c.l.b16 %v444
    %v2239 = vunpack.c.l.b16 %v445
    %v2240 = vunpack.c.l.b16 %v446
    %v2241 = vunpack.c.l.b16 %v447
    %v2242 = vunpack.c.l.b16 %v448
    %v2243 = vunpack.c.l.b16 %v449
    %v2244 = vunpack.c.l.b16 %v450
    %v2245 = vunpack.c.l.b16 %v451
    %v2246 = vunpack.c.l.b16 %v452
    %v2247 = vunpack.c.l.b16 %v453
    %v2248 = vunpack.c.l.b16 %v454
    %v2249 = vunpack.c.l.b16 %v455
    %v2250 = vunpack.c.l.b16 %v456
    %v2251 = vunpack.c.l.b16 %v457
    %v2252 = vunpack.c.l.b16 %v458
    %v2253 = vunpack.c.l.b16 %v459
    %v2254 = vunpack.c.l.b16 %v460
    %v2255 = vunpack.c.l.b16 %v461
    %v2256 = vunpack.c.l.b16 %v462
    %v2257 = vunpack.c.l.b16 %v463
    %v2258 = vunpack.c.l.b16 %v464
    %v2259 = vunpack.c.l.b16 %v465
    %v2260 = vunpack.c.l.b16 %v466
    %v2261 = vunpack.c.l.b16 %v467
    %v2262 = vunpack.c.l.b16 %v468
    %v2263 = vunpack.c.l.b16 %v469
    %v2264 = vunpack.c.l.b16 %v470
    %v2265 = vunpack.c.l.b16 %v471
    %v2266 = vunpack.c.l.b16 %v472
    %v2267 = vunpack.c.l.b16 %v473
    %v2268 = vunpack.c.l.b16 %v474
    %v2269 = vunpack.c.l.b16 %v475
    %v2270 = vunpack.c.l.b16 %v476
    %v2271 = vunpack.c.l.b16 %v477
    %v2272 = vunpack.c.l.b16 %v478
    %v2273 = vunpack.c.l.b16 %v479
    %v2274 = vunpack.c.l.b16 %v480
    %v2275 = vunpack.c.l.b16 %v481
    %v2276 = vunpack.c.l.b16 %v482
    %v2277 = vunpack.c.l.b16 %v483
    %v2278 = vunpack.c.l.b16 %v484
    %v2279 = vunpack.c.l.b16 %v485
    %v2280 = vunpack.c.l.b16 %v486
    %v2281 = vunpack.c.l.b16 %v487
    %v2282 = vunpack.c.l.b16 %v488
    %v2283 = vunpack.c.l.b16 %v489
    %v2284 = vunpack.c.l.b16 %v490
    %v2285 = vunpack.c.l.b16 %v491
    %v2286 = vunpack.c.l.b16 %v492
    %v2287 = vunpack.c.l.b16 %v493
    %v2288 = vunpack.c.l.b16 %v494
    %v2289 = vunpack.c.l.b16 %v495
    %v2290 = vunpack.c.l.b16 %v496
    %v2291 = vunpack.c.l.b16 %v497
    %v2292 = vunpack.c.l.b16 %v498
    %v2293 = vunpack.c.l.b16 %v499
    %v2294 = vunpack.c.l.b16 %v500
    %v2295 = vunpack.c.l.b16 %v501
    %v2296 = vunpack.c.l.b16 %v502
    %v2297 = vunpack.c.l.b16 %v503
    %v2298 = vunpack.c.l.b16 %v504
    %v2299 = vunpack.c.l.b16 %v505
    %v2300 = vunpack.c.l.b16 %v506
    %v2301 = vunpack.c.l.b16 %v507
    %v2302 = vunpack.c.l.b16 %v508
    %v2303 = vunpack.c.l.b16 %v509
    %v2304 = vunpack.c.l.b16 %v510
    %v2305 = vunpack.c.l.b16 %v511
    %v2306 = vunpack.c.l.b16 %v512
    %v2307 = vunpack.c.l.b16 %v513
    %v2308 = vunpack.c.l.b16 %v514
    %v2309 = vunpack.c.l.b16 %v515
    %v2310 = vunpack.c.l.b16 %v516
    %v2311 = vunpack.c.l.b16 %v517
    %v2312 = vunpack.c.l.b16 %v518
    %v2313 = vunpack.c.l.b16 %v519
    %v2314 = vunpack.c.l.b16 %v520
    %v2315 = vunpack.c.l.b16 %v521
    %v2316 = vunpack.c.l.b16 %v522
    %v2317 = vunpack.c.l.b16 %v523
    %v2318 = vunpack.c.l.b16 %v524
    %v2319 = vunpack.c.l.b16 %v525
    %v2320 = vunpack.c.l.b16 %v526
    %v2321 = vunpack.c.l.b16 %v527
    %v2322 = vunpack.c.l.b16 %v528
    %v2323 = vunpack.c.l.b16 %v529
    %v2324 = vunpack.c.l.b16 %v530
    %v2325 = vunpack.c.l.b16 %v531
    %v2326 = vunpack.c.l.b16 %v532
    %v2327 = vunpack.c.l.b16 %v533
    %v2328 = vunpack.c.l.b16 %v534
    %v2329 = vunpack.c.l.b16 %v535
    %v2330 = vunpack.c.l.b16 %v536
    %v2331 = vunpack.c.l.b16 %v537
    %v2332 = vunpack.c.l.b16 %v538
    %v2333 = vunpack.c.l.b16 %v539
    %v2334 = vunpack.c.l.b16 %v540
    %v2335 = vunpack.c.l.b16 %v541
    %v2336 = vunpack.c.l.b16 %v542
    %v2337 = vunpack.c.l.b16 %v543
    %v2338 = vunpack.c.l.b16 %v544
    %v2339 = vunpack.c.l.b16 %v545
    %v2340 = vunpack.c.l.b16 %v546
    %v2341 = vunpack.c.l.b16 %v547
    %v2342 = vunpack.c.l.b16 %v548
    %v2343 = vunpack.c.l.b16 %v549
    %v2344 = vunpack.c.l.b16 %v550
    %v2345 = vunpack.c.l.b16 %v551
    %v2346 = vunpack.c.l.b16 %v552
    %v2347 = vunpack.c.l.b16 %v553
    %v2348 = vunpack.c.l.b16 %v554
    %v2349 = vunpack.c.l.b16 %v555
    %v2350 = vunpack.c.l.b16 %v556
    %v2351 = vunpack.c.l.b16 %v557
    %v2352 = vunpack.c.l.b16 %v558
    %v2353 = vunpack.c.l.b16 %v559
    %v2354 = vunpack.c.l.b16 %v560
    %v2355 = vunpack.c.l.b16 %v561
    %v2356 = vunpack.c.l.b16 %v562
    %v2357 = vunpack.c.l.b16 %v563
    %v2358 = vunpack.c.l.b16 %v564
    %v2359 = vunpack.c.l.b16 %v565
    %v2360 = vunpack.c.l.b16 %v566
    %v2361 = vunpack.c.l.b16 %v567
    %v2362 = vunpack.c.l.b16 %v568
    %v2363 = vunpack.c.l.b16 %v569
    %v2364 = vunpack.c.l.b16 %v570
    %v2365 = vunpack.c.l.b16 %v571
    %v2366 = vunpack.c.l.b16 %v572
    %v2367 = vunpack.c.l.b16 %v573
    %v2368 = vunpack.c.l.b16 %v574
    %v2369 = vunpack.c.l.b16 %v575
    %v2370 = vunpack.c.l.b16 %v576
    %v2371 = vunpack.c.l.b16 %v577
    %v2372 = vunpack.c.l.b16 %v578
    %v2373 = vunpack.c.l.b16 %v579
    %v2374 = vunpack.c.l.b16 %v580
    %v2375 = vunpack.c.l.b16 %v581
    %v2376 = vunpack.c.l.b16 %v582
    %v2377 = vunpack.c.l.b16 %v583
    %v2378 = vunpack.c.l.b16 %v584
    %v2379 = vunpack.c.l.b16 %v585
    %v2380 = vunpack.c.l.b16 %v586
    %v2381 = vunpack.c.l.b16 %v587
    %v2382 = vunpack.c.l.b16 %v588
    %v2383 = vunpack.c.l.b16 %v589
    %v2384 = vunpack.c.l.b16 %v590
    %v2385 = vunpack.c.l.b16 %v591
    %v2386 = vunpack.c.l.b16 %v592
    %v2387 = vunpack.c.l.b16 %v593
    %v2388 = vunpack.c.l.b16 %v594
    %v2389 = vunpack.c.l.b16 %v595
    %v2390 = vunpack.c.l.b16 %v596
    %v2391 = vunpack.c.l.b16 %v597
    %v2392 = vunpack.c.l.b16 %v598
    %v2393 = vunpack.c.l.b16 %v599
    %v2394 = vunpack.c.l.b16 %v600
    %v2395 = vunpack.c.l.b16 %v601
    %v2396 = vunpack.c.l.b16 %v602
    %v2397 = vunpack.c.l.b16 %v603
    %v2398 = vunpack.c.l.b16 %v604
    %v2399 = vunpack.c.l.b16 %v605
    %v2400 = vunpack.c.l.b16 %v606
    %v2401 = vunpack.c.l.b16 %v607
    %v2402 = vunpack.c.l.b16 %v608
    %v2403 = vunpack.c.l.b16 %v609
    %v2404 = vunpack.c.l.b16 %v610
    %v2405 = vunpack.c.l.b16 %v611
    %v2406 = vunpack.c.l.b16 %v612
    %v2407 = vunpack.c.l.b16 %v613
    %v2408 = vunpack.c.l.b16 %v614
    %v2409 = vunpack.c.l.b16 %v615
    %v2410 = vunpack.c.l.b16 %v616
    %v2411 = vunpack.c.l.b16 %v617
    %v2412 = vunpack.c.l.b16 %v618
    %v2413 = vunpack.c.l.b16 %v619
    %v2414 = vunpack.c.l.b16 %v620
    %v2415 = vunpack.c.l.b16 %v621
    %v2416 = vunpack.c.l.b16 %v622
    %v2417 = vunpack.c.l.b16 %v623
    %v2418 = vunpack.c.l.b16 %v624
    %v2419 = vunpack.c.l.b16 %v625
    %v2420 = vunpack.c.l.b16 %v626
    %v2421 = vunpack.c.l.b16 %v627
    %v2422 = vunpack.c.l.b16 %v628
    %v2423 = vunpack.c.l.b16 %v629
    %v2424 = vunpack.c.l.b16 %v630
    %v2425 = vunpack.c.l.b16 %v631
    %v2426 = vunpack.c.l.b16 %v632
    %v2427 = vunpack.c.l.b16 %v633
    %v2428 = vunpack.c.l.b16 %v634
    %v2429 = vunpack.c.l.b16 %v635
    %v2430 = vunpack.c.l.b16 %v636
    %v2431 = vunpack.c.l.b16 %v637
    %v2432 = vunpack.c.l.b16 %v638
    %v2433 = vunpack.c.l.b16 %v639
    %v2434 = vunpack.c.l.b16 %v640
    %v2435 = vunpack.c.l.b16 %v641
    %v2436 = vunpack.c.l.b16 %v642
    %v2437 = vunpack.c.l.b16 %v643
    %v2438 = vunpack.c.l.b16 %v644
    %v2439 = vunpack.c.l.b16 %v645
    %v2440 = vunpack.c.l.b16 %v646
    %v2441 = vunpack.c.l.b16 %v647
    %v2442 = vunpack.c.l.b16 %v648
    %v2443 = vunpack.c.l.b16 %v649
    %v2444 = vunpack.c.l.b16 %v650
    %v2445 = vunpack.c.l.b16 %v651
    %v2446 = vunpack.c.l.b16 %v652
    %v2447 = vunpack.c.l.b16 %v653
    %v2448 = vunpack.c.l.b16 %v654
    %v2449 = vunpack.c.l.b16 %v655
    %v2450 = vunpack.c.l.b16 %v656
    %v2451 = vunpack.c.l.b16 %v657
    %v2452 = vunpack.c.l.b16 %v658
    %v2453 = vunpack.c.l.b16 %v659
    %v2454 = vunpack.c.l.b16 %v660
    %v2455 = vunpack.c.l.b16 %v661
    %v2456 = vunpack.c.l.b16 %v662
    %v2457 = vunpack.c.l.b16 %v663
    %v2458 = vunpack.c.l.b16 %v664
    %v2459 = vunpack.c.l.b16 %v665
    %v2460 = vunpack.c.l.b16 %v666
    %v2461 = vunpack.c.l.b16 %v667
    %v2462 = vunpack.c.l.b16 %v668
    %v2463 = vunpack.c.l.b16 %v669
    %v2464 = vunpack.c.l.b16 %v670
    %v2465 = vunpack.c.l.b16 %v671
    %v2466 = vunpack.c.l.b16 %v672
    %v2467 = vunpack.c.l.b16 %v673
    %v2468 = vunpack.c.l.b16 %v674
    %v2469 = vunpack.c.l.b16 %v675
    %v2470 = vunpack.c.l.b16 %v676
    %v2471 = vunpack.c.l.b16 %v677
    %v2472 = vunpack.c.l.b16 %v678
    %v2473 = vunpack.c.l.b16 %v679
    %v2474 = vunpack.c.l.b16 %v680
    %v2475 = vunpack.c.l.b16 %v681
    %v2476 = vunpack.c.l.b16 %v682
    %v2477 = vunpack.c.l.b16 %v683
    %v2478 = vunpack.c.l.b16 %v684
    %v2479 = vunpack.c.l.b16 %v685
    %v2480 = vunpack.c.l.b16 %v686
    %v2481 = vunpack.c.l.b16 %v687
    %v2482 = vunpack.c.l.b16 %v688
    %v2483 = vunpack.c.l.b16 %v689
    %v2484 = vunpack.c.l.b16 %v690
    %v2485 = vunpack.c.l.b16 %v691
    %v2486 = vunpack.c.l.b16 %v692
    %v2487 = vunpack.c.l.b16 %v693
    %v2488 = vunpack.c.l.b16 %v694
    %v2489 = vunpack.c.l.b16 %v695
    %v2490 = vunpack.c.l.b16 %v696
    %v2491 = vunpack.c.l.b16 %v697
    %v2492 = vunpack.c.l.b16 %v698
    %v2493 = vunpack.c.l.b16 %v699
    %v2494 = vunpack.c.l.b16 %v700
    %v2495 = vunpack.c.l.b16 %v701
    %v2496 = vunpack.c.l.b16 %v702
    %v2497 = vunpack.c.l.b16 %v703
    %v2498 = vunpack.c.l.b16 %v704
    %v2499 = vunpack.c.l.b16 %v705
    %v2500 = vunpack.c.l.b16 %v706
    %v2501 = vunpack.c.l.b16 %v707
    %v2502 = vunpack.c.l.b16 %v708
    %v2503 = vunpack.c.l.b16 %v709
    %v2504 = vunpack.c.l.b16 %v710
    %v2505 = vunpack.c.l.b16 %v711
    %v2506 = vunpack.c.l.b16 %v712
    %v2507 = vunpack.c.l.b16 %v713
    %v2508 = vunpack.c.l.b16 %v714
    %v2509 = vunpack.c.l.b16 %v715
    %v2510 = vunpack.c.l.b16 %v716
    %v2511 = vunpack.c.l.b16 %v717
    %v2512 = vunpack.c.l.b16 %v718
    %v2513 = vunpack.c.l.b16 %v719
    %v2514 = vunpack.c.l.b16 %v720
    %v2515 = vunpack.c.l.b16 %v721
    %v2516 = vunpack.c.l.b16 %v722
    %v2517 = vunpack.c.l.b16 %v723
    %v2518 = vunpack.c.l.b16 %v724
    %v2519 = vunpack.c.l.b16 %v725
    %v2520 = vunpack.c.l.b16 %v726
    %v2521 = vunpack.c.l.b16 %v727
    %v2522 = vunpack.c.l.b16 %v728
    %v2523 = vunpack.c.l.b16 %v729
    %v2524 = vunpack.c.l.b16 %v730
    %v2525 = vunpack.c.l.b16 %v731
    %v2526 = vunpack.c.l.b16 %v732
    %v2527 = vunpack.c.l.b16 %v733
    %v2528 = vunpack.c.l.b16 %v734
    %v2529 = vunpack.c.l.b16 %v735
    %v2530 = vunpack.c.l.b16 %v736
    %v2531 = vunpack.c.l.b16 %v737
    %v2532 = vunpack.c.l.b16 %v738
    %v2533 = vunpack.c.l.b16 %v739
    %v2534 = vunpack.c.l.b16 %v740
    %v2535 = vunpack.c.l.b16 %v741
    %v2536 = vunpack.c.l.b16 %v742
    %v2537 = vunpack.c.l.b16 %v743
    %v2538 = vunpack.c.l.b16 %v744
    %v2539 = vunpack.c.l.b16 %v745
    %v2540 = vunpack.c.l.b16 %v746
    %v2541 = vunpack.c.l.b16 %v747
    %v2542 = vunpack.c.l.b16 %v748
    %v2543 = vunpack.c.l.b16 %v749
    %v2544 = vunpack.c.l.b16 %v750
    %v2545 = vunpack.c.l.b16 %v751
    %v2546 = vunpack.c.l.b16 %v752
    %v2547 = vunpack.c.l.b16 %v753
    %v2548 = vunpack.c.l.b16 %v754
    %v2549 = vunpack.c.l.b16 %v755
    %v2550 = vpack.c.b16 %v1829, %v1828
    %v2551 = vpack.c.b16 %v1831, %v1830
    %v2552 = vpack.c.b16 %v1833, %v1832
    %v2553 = vpack.c.b16 %v1835, %v1834
    %v2554 = vpack.c.b16 %v1837, %v1836
    %v2555 = vpack.c.b16 %v1839, %v1838
    %v2556 = vpack.c.b16 %v1841, %v1840
    %v2557 = vpack.c.b16 %v1843, %v1842
    %v2558 = vpack.c.b16 %v1845, %v1844
    %v2559 = vpack.c.b16 %v1847, %v1846
    %v2560 = vpack.c.b16 %v1849, %v1848
    %v2561 = vpack.c.b16 %v1851, %v1850
    %v2562 = vpack.c.b16 %v1853, %v1852
    %v2563 = vpack.c.b16 %v1855, %v1854
    %v2564 = vpack.c.b16 %v1857, %v1856
    %v2565 = vpack.c.b16 %v1859, %v1858
    %v2566 = vpack.c.b16 %v1861, %v1860
    %v2567 = vpack.c.b16 %v1863, %v1862
    %v2568 = vpack.c.b16 %v1865, %v1864
    %v2569 = vpack.c.b16 %v1867, %v1866
    %v2570 = vpack.c.b16 %v1869, %v1868
    %v2571 = vpack.c.b16 %v1871, %v1870
    %v2572 = vpack.c.b16 %v1873, %v1872
    %v2573 = vpack.c.b16 %v1875, %v1874
    %v2574 = vpack.c.b16 %v1877, %v1876
    %v2575 = vpack.c.b16 %v1879, %v1878
    %v2576 = vpack.c.b16 %v1881, %v1880
    %v2577 = vpack.c.b16 %v1883, %v1882
    %v2578 = vpack.c.b16 %v1885, %v1884
    %v2579 = vpack.c.b16 %v1887, %v1886
    %v2580 = vpack.c.b16 %v1889, %v1888
    %v2581 = vpack.c.b16 %v1891, %v1890
    %v2582 = vpack.c.b16 %v1893, %v1892
    %v2583 = vpack.c.b16 %v1895, %v1894
    %v2584 = vpack.c.b16 %v1897, %v1896
    %v2585 = vpack.c.b16 %v1899, %v1898
    %v2586 = vpack.c.b16 %v1901, %v1900
    %v2587 = vpack.c.b16 %v1903, %v1902
    %v2588 = vpack.c.b16 %v1905, %v1904
    %v2589 = vpack.c.b16 %v1907, %v1906
    %v2590 = vpack.c.b16 %v1909, %v1908
    %v2591 = vpack.c.b16 %v1911, %v1910
    %v2592 = vpack.c.b16 %v1913, %v1912
    %v2593 = vpack.c.b16 %v1915, %v1914
    %v2594 = vpack.c.b16 %v1917, %v1916
    %v2595 = vpack.c.b16 %v1919, %v1918
    %v2596 = vpack.c.b16 %v1921, %v1920
    %v2597 = vpack.c.b16 %v1923, %v1922
    %v2598 = vpack.c.b16 %v1925, %v1924
    %v2599 = vpack.c.b16 %v1927, %v1926
    %v2600 = vpack.c.b16 %v1929, %v1928
    %v2601 = vpack.c.b16 %v1931, %v1930
    %v2602 = vpack.c.b16 %v1933, %v1932
    %v2603 = vpack.c.b16 %v1935, %v1934
    %v2604 = vpack.c.b16 %v1937, %v1936
    %v2605 = vpack.c.b16 %v1939, %v1938
    %v2606 = vpack.c.b16 %v1941, %v1940
    %v2607 = vpack.c.b16 %v1943, %v1942
    %v2608 = vpack.c.b16 %v1945, %v1944
    %v2609 = vpack.c.b16 %v1947, %v1946
    %v2610 = vpack.c.b16 %v1949, %v1948
    %v2611 = vpack.c.b16 %v1951, %v1950
    %v2612 = vpack.c.b16 %v1953, %v1952
    %v2613 = vpack.c.b16 %v1955, %v1954
    %v2614 = vpack.c.b16 %v1957, %v1956
    %v2615 = vpack.c.b16 %v1959, %v1958
    %v2616 = vpack.c.b16 %v1961, %v1960
    %v2617 = vpack.c.b16 %v1963, %v1962
    %v2618 = vpack.c.b16 %v1965, %v1964
    %v2619 = vpack.c.b16 %v1967, %v1966
    %v2620 = vpack.c.b16 %v1969, %v1968
    %v2621 = vpack.c.b16 %v1971, %v1970
    %v2622 = vpack.c.b16 %v1973, %v1972
    %v2623 = vpack.c.b16 %v1975, %v1974
    %v2624 = vpack.c.b16 %v1977, %v1976
    %v2625 = vpack.c.b16 %v1979, %v1978
    %v2626 = vpack.c.b16 %v1981, %v1980
    %v2627 = vpack.c.b16 %v1983, %v1982
    %v2628 = vpack.c.b16 %v1985, %v1984
    %v2629 = vpack.c.b16 %v1987, %v1986
    %v2630 = vpack.c.b16 %v1989, %v1988
    %v2631 = vpack.c.b16 %v1991, %v1990
    %v2632 = vpack.c.b16 %v1993, %v1992
    %v2633 = vpack.c.b16 %v1995, %v1994
    %v2634 = vpack.c.b16 %v1997, %v1996
    %v2635 = vpack.c.b16 %v1999, %v1998
    %v2636 = vpack.c.b16 %v2001, %v2000
    %v2637 = vpack.c.b16 %v2003, %v2002
    %v2638 = vpack.c.b16 %v2005, %v2004
    %v2639 = vpack.c.b16 %v2007, %v2006
    %v2640 = vpack.c.b16 %v2009, %v2008
    %v2641 = vpack.c.b16 %v2011, %v2010
    %v2642 = vpack.c.b16 %v2013, %v2012
    %v2643 = vpack.c.b16 %v2015, %v2014
    %v2644 = vpack.c.b16 %v2017, %v2016
    %v2645 = vpack.c.b16 %v2019, %v2018
    %v2646 = vpack.c.b16 %v2021, %v2020
    %v2647 = vpack.c.b16 %v2023, %v2022
    %v2648 = vpack.c.b16 %v2025, %v2024
    %v2649 = vpack.c.b16 %v2027, %v2026
    %v2650 = vpack.c.b16 %v2029, %v2028
    %v2651 = vpack.c.b16 %v2031, %v2030
    %v2652 = vpack.c.b16 %v2033, %v2032
    %v2653 = vpack.c.b16 %v2035, %v2034
    %v2654 = vpack.c.b16 %v2037, %v2036
    %v2655 = vpack.c.b16 %v2039, %v2038
    %v2656 = vpack.c.b16 %v2041, %v2040
    %v2657 = vpack.c.b16 %v2043, %v2042
    %v2658 = vpack.c.b16 %v2045, %v2044
    %v2659 = vpack.c.b16 %v2047, %v2046
    %v2660 = vpack.c.b16 %v2049, %v2048
    %v2661 = vpack.c.b16 %v2051, %v2050
    %v2662 = vpack.c.b16 %v2053, %v2052
    %v2663 = vpack.c.b16 %v2055, %v2054
    %v2664 = vpack.c.b16 %v2057, %v2056
    %v2665 = vpack.c.b16 %v2059, %v2058
    %v2666 = vpack.c.b16 %v2061, %v2060
    %v2667 = vpack.c.b16 %v2063, %v2062
    %v2668 = vpack.c.b16 %v2065, %v2064
    %v2669 = vpack.c.b16 %v2067, %v2066
    %v2670 = vpack.c.b16 %v2069, %v2068
    %v2671 = vpack.c.b16 %v2071, %v2070
    %v2672 = vpack.c.b16 %v2073, %v2072
    %v2673 = vpack.c.b16 %v2075, %v2074
    %v2674 = vpack.c.b16 %v2077, %v2076
    %v2675 = vpack.c.b16 %v2079, %v2078
    %v2676 = vpack.c.b16 %v2081, %v2080
    %v2677 = vpack.c.b16 %v2083, %v2082
    %v2678 = vpack.c.b16 %v2085, %v2084
    %v2679 = vpack.c.b16 %v2087, %v2086
    %v2680 = vpack.c.b16 %v2089, %v2088
    %v2681 = vpack.c.b16 %v2091, %v2090
    %v2682 = vpack.c.b16 %v2093, %v2092
    %v2683 = vpack.c.b16 %v2095, %v2094
    %v2684 = vpack.c.b16 %v2097, %v2096
    %v2685 = vpack.c.b16 %v2099, %v2098
    %v2686 = vpack.c.b16 %v2101, %v2100
    %v2687 = vpack.c.b16 %v2103, %v2102
    %v2688 = vpack.c.b16 %v2105, %v2104
    %v2689 = vpack.c.b16 %v2107, %v2106
    %v2690 = vpack.c.b16 %v2109, %v2108
    %v2691 = vpack.c.b16 %v2111, %v2110
    %v2692 = vpack.c.b16 %v2113, %v2112
    %v2693 = vpack.c.b16 %v2115, %v2114
    %v2694 = vpack.c.b16 %v2117, %v2116
    %v2695 = vpack.c.b16 %v2119, %v2118
    %v2696 = vpack.c.b16 %v2121, %v2120
    %v2697 = vpack.c.b16 %v2123, %v2122
    %v2698 = vpack.c.b16 %v2125, %v2124
    %v2699 = vpack.c.b16 %v2127, %v2126
    %v2700 = vpack.c.b16 %v2129, %v2128
    %v2701 = vpack.c.b16 %v2131, %v2130
    %v2702 = vpack.c.b16 %v2133, %v2132
    %v2703 = vpack.c.b16 %v2135, %v2134
    %v2704 = vpack.c.b16 %v2137, %v2136
    %v2705 = vpack.c.b16 %v2139, %v2138
    %v2706 = vpack.c.b16 %v2141, %v2140
    %v2707 = vpack.c.b16 %v2143, %v2142
    %v2708 = vpack.c.b16 %v2145, %v2144
    %v2709 = vpack.c.b16 %v2147, %v2146
    %v2710 = vpack.c.b16 %v2149, %v2148
    %v2711 = vpack.c.b16 %v2151, %v2150
    %v2712 = vpack.c.b16 %v2153, %v2152
    %v2713 = vpack.c.b16 %v2155, %v2154
    %v2714 = vpack.c.b16 %v2157, %v2156
    %v2715 = vpack.c.b16 %v2159, %v2158
    %v2716 = vpack.c.b16 %v2161, %v2160
    %v2717 = vpack.c.b16 %v2163, %v2162
    %v2718 = vpack.c.b16 %v2165, %v2164
    %v2719 = vpack.c.b16 %v2167, %v2166
    %v2720 = vpack.c.b16 %v2169, %v2168
    %v2721 = vpack.c.b16 %v2171, %v2170
    %v2722 = vpack.c.b16 %v2173, %v2172
    %v2723 = vpack.c.b16 %v2175, %v2174
    %v2724 = vpack.c.b16 %v2177, %v2176
    %v2725 = vpack.c.b16 %v2179, %v2178
    %v2726 = vpack.c.b16 %v2181, %v2180
    %v2727 = vpack.c.b16 %v2183, %v2182
    %v2728 = vpack.c.b16 %v2185, %v2184
    %v2729 = vpack.c.b16 %v2187, %v2186
    %v2730 = vpack.c.b16 %v2189, %v2188
    %v2731 = vpack.c.b16 %v2191, %v2190
    %v2732 = vpack.c.b16 %v2193, %v2192
    %v2733 = vpack.c.b16 %v2195, %v2194
    %v2734 = vpack.c.b16 %v2197, %v2196
    %v2735 = vpack.c.b16 %v2199, %v2198
    %v2736 = vpack.c.b16 %v2201, %v2200
    %v2737 = vpack.c.b16 %v2203, %v2202
    %v2738 = vpack.c.b16 %v2205, %v2204
    %v2739 = vpack.c.b16 %v2207, %v2206
    %v2740 = vpack.c.b16 %v2209, %v2208
    %v2741 = vpack.c.b16 %v2211, %v2210
    %v2742 = vpack.c.b16 %v2213, %v2212
    %v2743 = vpack.c.b16 %v2215, %v2214
    %v2744 = vpack.c.b16 %v2217, %v2216
    %v2745 = vpack.c.b16 %v2219, %v2218
    %v2746 = vpack.c.b16 %v2221, %v2220
    %v2747 = vpack.c.b16 %v2223, %v2222
    %v2748 = vpack.c.b16 %v2225, %v2224
    %v2749 = vpack.c.b16 %v2227, %v2226
    %v2750 = vpack.c.b16 %v2229, %v2228
    %v2751 = vpack.c.b16 %v2231, %v2230
    %v2752 = vpack.c.b16 %v2233, %v2232
    %v2753 = vpack.c.b16 %v2235, %v2234
    %v2754 = vpack.c.b16 %v2237, %v2236
    %v2755 = vpack.c.b16 %v2239, %v2238
    %v2756 = vpack.c.b16 %v2241, %v2240
    %v2757 = vpack.c.b16 %v2243, %v2242
    %v2758 = vpack.c.b16 %v2245, %v2244
    %v2759 = vpack.c.b16 %v2247, %v2246
    %v2760 = vpack.c.b16 %v2249, %v2248
    %v2761 = vpack.c.b16 %v2251, %v2250
    %v2762 = vpack.c.b16 %v2253, %v2252
    %v2763 = vpack.c.b16 %v2255, %v2254
    %v2764 = vpack.c.b16 %v2257, %v2256
    %v2765 = vpack.c.b16 %v2259, %v2258
    %v2766 = vpack.c.b16 %v2261, %v2260
    %v2767 = vpack.c.b16 %v2263, %v2262
    %v2768 = vpack.c.b16 %v2265, %v2264
    %v2769 = vpack.c.b16 %v2267, %v2266
    %v2770 = vpack.c.b16 %v2269, %v2268
    %v2771 = vpack.c.b16 %v2271, %v2270
    %v2772 = vpack.c.b16 %v2273, %v2272
    %v2773 = vpack.c.b16 %v2275, %v2274
    %v2774 = vpack.c.b16 %v2277, %v2276
    %v2775 = vpack.c.b16 %v2279, %v2278
    %v2776 = vpack.c.b16 %v2281, %v2280
    %v2777 = vpack.c.b16 %v2283, %v2282
    %v2778 = vpack.c.b16 %v2285, %v2284
    %v2779 = vpack.c.b16 %v2287, %v2286
    %v2780 = vpack.c.b16 %v2289, %v2288
    %v2781 = vpack.c.b16 %v2291, %v2290
    %v2782 = vpack.c.b16 %v2293, %v2292
    %v2783 = vpack.c.b16 %v2295, %v2294
    %v2784 = vpack.c.b16 %v2297, %v2296
    %v2785 = vpack.c.b16 %v2299, %v2298
    %v2786 = vpack.c.b16 %v2301, %v2300
    %v2787 = vpack.c.b16 %v2303, %v2302
    %v2788 = vpack.c.b16 %v2305, %v2304
    %v2789 = vpack.c.b16 %v2307, %v2306
    %v2790 = vpack.c.b16 %v2309, %v2308
    %v2791 = vpack.c.b16 %v2311, %v2310
    %v2792 = vpack.c.b16 %v2313, %v2312
    %v2793 = vpack.c.b16 %v2315, %v2314
    %v2794 = vpack.c.b16 %v2317, %v2316
    %v2795 = vpack.c.b16 %v2319, %v2318
    %v2796 = vpack.c.b16 %v2321, %v2320
    %v2797 = vpack.c.b16 %v2323, %v2322
    %v2798 = vpack.c.b16 %v2325, %v2324
    %v2799 = vpack.c.b16 %v2327, %v2326
    %v2800 = vpack.c.b16 %v2329, %v2328
    %v2801 = vpack.c.b16 %v2331, %v2330
    %v2802 = vpack.c.b16 %v2333, %v2332
    %v2803 = vpack.c.b16 %v2335, %v2334
    %v2804 = vpack.c.b16 %v2337, %v2336
    %v2805 = vpack.c.b16 %v2339, %v2338
    %v2806 = vpack.c.b16 %v2341, %v2340
    %v2807 = vpack.c.b16 %v2343, %v2342
    %v2808 = vpack.c.b16 %v2345, %v2344
    %v2809 = vpack.c.b16 %v2347, %v2346
    %v2810 = vpack.c.b16 %v2349, %v2348
    %v2811 = vpack.c.b16 %v2351, %v2350
    %v2812 = vpack.c.b16 %v2353, %v2352
    %v2813 = vpack.c.b16 %v2355, %v2354
    %v2814 = vpack.c.b16 %v2357, %v2356
    %v2815 = vpack.c.b16 %v2359, %v2358
    %v2816 = vpack.c.b16 %v2361, %v2360
    %v2817 = vpack.c.b16 %v2363, %v2362
    %v2818 = vpack.c.b16 %v2365, %v2364
    %v2819 = vpack.c.b16 %v2367, %v2366
    %v2820 = vpack.c.b16 %v2369, %v2368
    %v2821 = vpack.c.b16 %v2371, %v2370
    %v2822 = vpack.c.b16 %v2373, %v2372
    %v2823 = vpack.c.b16 %v2375, %v2374
    %v2824 = vpack.c.b16 %v2377, %v2376
    %v2825 = vpack.c.b16 %v2379, %v2378
    %v2826 = vpack.c.b16 %v2381, %v2380
    %v2827 = vpack.c.b16 %v2383, %v2382
    %v2828 = vpack.c.b16 %v2385, %v2384
    %v2829 = vpack.c.b16 %v2387, %v2386
    %v2830 = vpack.c.b16 %v2389, %v2388
    %v2831 = vpack.c.b16 %v2391, %v2390
    %v2832 = vpack.c.b16 %v2393, %v2392
    %v2833 = vpack.c.b16 %v2395, %v2394
    %v2834 = vpack.c.b16 %v2397, %v2396
    %v2835 = vpack.c.b16 %v2399, %v2398
    %v2836 = vpack.c.b16 %v2401, %v2400
    %v2837 = vpack.c.b16 %v2403, %v2402
    %v2838 = vpack.c.b16 %v2405, %v2404
    %v2839 = vpack.c.b16 %v2407, %v2406
    %v2840 = vpack.c.b16 %v2409, %v2408
    %v2841 = vpack.c.b16 %v2411, %v2410
    %v2842 = vpack.c.b16 %v2413, %v2412
    %v2843 = vpack.c.b16 %v2415, %v2414
    %v2844 = vpack.c.b16 %v2417, %v2416
    %v2845 = vpack.c.b16 %v2419, %v2418
    %v2846 = vpack.c.b16 %v2421, %v2420
    %v2847 = vpack.c.b16 %v2423, %v2422
    %v2848 = vpack.c.b16 %v2425, %v2424
    %v2849 = vpack.c.b16 %v2427, %v2426
    %v2850 = vpack.c.b16 %v2429, %v2428
    %v2851 = vpack.c.b16 %v2431, %v2430
    %v2852 = vpack.c.b16 %v2433, %v2432
    %v2853 = vpack.c.b16 %v2435, %v2434
    %v2854 = vpack.c.b16 %v2437, %v2436
    %v2855 = vpack.c.b16 %v2439, %v2438
    %v2856 = vpack.c.b16 %v2441, %v2440
    %v2857 = vpack.c.b16 %v2443, %v2442
    %v2858 = vpack.c.b16 %v2445, %v2444
    %v2859 = vpack.c.b16 %v2447, %v2446
    %v2860 = vpack.c.b16 %v2449, %v2448
    %v2861 = vpack.c.b16 %v2451, %v2450
    %v2862 = vpack.c.b16 %v2453, %v2452
    %v2863 = vpack.c.b16 %v2455, %v2454
    %v2864 = vpack.c.b16 %v2457, %v2456
    %v2865 = vpack.c.b16 %v2459, %v2458
    %v2866 = vpack.c.b16 %v2461, %v2460
    %v2867 = vpack.c.b16 %v2463, %v2462
    %v2868 = vpack.c.b16 %v2465, %v2464
    %v2869 = vpack.c.b16 %v2467, %v2466
    %v2870 = vpack.c.b16 %v2469, %v2468
    %v2871 = vpack.c.b16 %v2471, %v2470
    %v2872 = vpack.c.b16 %v2473, %v2472
    %v2873 = vpack.c.b16 %v2475, %v2474
    %v2874 = vpack.c.b16 %v2477, %v2476
    %v2875 = vpack.c.b16 %v2479, %v2478
    %v2876 = vpack.c.b16 %v2481, %v2480
    %v2877 = vpack.c.b16 %v2483, %v2482
    %v2878 = vpack.c.b16 %v2485, %v2484
    %v2879 = vpack.c.b16 %v2487, %v2486
    %v2880 = vpack.c.b16 %v2489, %v2488
    %v2881 = vpack.c.b16 %v2491, %v2490
    %v2882 = vpack.c.b16 %v2493, %v2492
    %v2883 = vpack.c.b16 %v2495, %v2494
    %v2884 = vpack.c.b16 %v2497, %v2496
    %v2885 = vpack.c.b16 %v2499, %v2498
    %v2886 = vpack.c.b16 %v2501, %v2500
    %v2887 = vpack.c.b16 %v2503, %v2502
    %v2888 = vpack.c.b16 %v2505, %v2504
    %v2889 = vpack.c.b16 %v2507, %v2506
    %v2890 = vpack.c.b16 %v2509, %v2508
    %v2891 = vpack.c.b16 %v2511, %v2510
    %v2892 = vpack.c.b16 %v2513, %v2512
    %v2893 = vpack.c.b16 %v2515, %v2514
    %v2894 = vpack.c.b16 %v2517, %v2516
    %v2895 = vpack.c.b16 %v2519, %v2518
    %v2896 = vpack.c.b16 %v2521, %v2520
    %v2897 = vpack.c.b16 %v2523, %v2522
    %v2898 = vpack.c.b16 %v2525, %v2524
    %v2899 = vpack.c.b16 %v2527, %v2526
    %v2900 = vpack.c.b16 %v2529, %v2528
    %v2901 = vpack.c.b16 %v2531, %v2530
    %v2902 = vpack.c.b16 %v2533, %v2532
    %v2903 = vpack.c.b16 %v2535, %v2534
    %v2904 = vpack.c.b16 %v2537, %v2536
    %v2905 = vpack.c.b16 %v2539, %v2538
    %v2906 = vpack.c.b16 %v2541, %v2540
    %v2907 = vpack.c.b16 %v2543, %v2542
    %v2908 = vpack.c.b16 %v2545, %v2544
    %v2909 = vpack.c.b16 %v2547, %v2546
    %v2910 = vpack.c.b16 %v2549, %v2548
    %vm3272 = vcmask 130048
    %v3274 = vsel %vm3272, %v1058, 0
    %3276 = vmatprep.subr.bf16.mxu0 0
    %3277 = vmatpush1.bf16.msra.mxu0 %v2550
    %3278 = vmatprep.subr.bf16.mxu0 0
    %3279 = vmatpush1.bf16.msra.mxu0 %v2551
    %3280 = vmatprep.subr.bf16.mxu0 0
    %3281 = vmatpush1.bf16.msra.mxu0 %v2552
    %3282 = vmatprep.subr.bf16.mxu0 0
    %3283 = vmatpush1.bf16.msra.mxu0 %v2553
    %3284 = vmatprep.subr.bf16.mxu0 0
    %3285 = vmatpush1.bf16.msra.mxu0 %v2554
    %3286 = vmatprep.subr.bf16.mxu0 0
    %3287 = vmatpush1.bf16.msra.mxu0 %v2555
    %3288 = vmatprep.subr.bf16.mxu0 0
    %3289 = vmatpush1.bf16.msra.mxu0 %v2556
    %3290 = vmatprep.subr.bf16.mxu0 0
    %3291 = vmatpush1.bf16.msra.mxu0 %v2557
    %3292 = vmatprep.subr.bf16.mxu0 0
    %3293 = vmatpush1.bf16.msra.mxu0 %v2558
    %3294 = vmatprep.subr.bf16.mxu0 0
    %3295 = vmatpush1.bf16.msra.mxu0 %v2559
    %3296 = vmatprep.subr.bf16.mxu0 0
    %3297 = vmatpush1.bf16.msra.mxu0 %v2560
    %3298 = vmatprep.subr.bf16.mxu0 0
    %3299 = vmatpush1.bf16.msra.mxu0 %v2561
    %3300 = vmatprep.subr.bf16.mxu0 0
    %3301 = vmatpush1.bf16.msra.mxu0 %v2562
    %3302 = vmatprep.subr.bf16.mxu0 0
    %3303 = vmatpush1.bf16.msra.mxu0 %v2563
    %3304 = vmatprep.subr.bf16.mxu0 0
    %3305 = vmatpush1.bf16.msra.mxu0 %v2564
    %3306 = vmatprep.subr.bf16.mxu0 0
    %3307 = vmatpush1.bf16.msra.mxu0 %v2565
    %3308 = vmatprep.mubr.bf16.mxu0 %v806
    %3309 = vmatmul.mubr.bf16.gmra.mrb[0].mxu0 %v792
    %v3310 = vpop.f32.mrb[0].mxu0
    %v3311 = vadd.f32 %v761, %v3310
    %v3312 = vpop.f32.mrb[0].mxu0
    %v3313 = vpop.f32.mrb[0].mxu0
    %v3314 = vpop.f32.mrb[0].mxu0
    %3315 = vdwg.mxu0
    %3316 = vmatprep.subr.bf16.mxu0 0
    %3317 = vmatpush1.bf16.msra.mxu0 %v2566
    %3318 = vmatprep.subr.bf16.mxu0 0
    %3319 = vmatpush1.bf16.msra.mxu0 %v2567
    %3320 = vmatprep.subr.bf16.mxu0 0
    %3321 = vmatpush1.bf16.msra.mxu0 %v2568
    %3322 = vmatprep.subr.bf16.mxu0 0
    %3323 = vmatpush1.bf16.msra.mxu0 %v2569
    %3324 = vmatprep.subr.bf16.mxu0 0
    %3325 = vmatpush1.bf16.msra.mxu0 %v2570
    %3326 = vmatprep.subr.bf16.mxu0 0
    %3327 = vmatpush1.bf16.msra.mxu0 %v2571
    %3328 = vmatprep.subr.bf16.mxu0 0
    %3329 = vmatpush1.bf16.msra.mxu0 %v2572
    %3330 = vmatprep.subr.bf16.mxu0 0
    %3331 = vmatpush1.bf16.msra.mxu0 %v2573
    %3332 = vmatprep.subr.bf16.mxu0 0
    %3333 = vmatpush1.bf16.msra.mxu0 %v2574
    %3334 = vmatprep.subr.bf16.mxu0 0
    %3335 = vmatpush1.bf16.msra.mxu0 %v2575
    %3336 = vmatprep.subr.bf16.mxu0 0
    %3337 = vmatpush1.bf16.msra.mxu0 %v2576
    %3338 = vmatprep.subr.bf16.mxu0 0
    %3339 = vmatpush1.bf16.msra.mxu0 %v2577
    %3340 = vmatprep.subr.bf16.mxu0 0
    %3341 = vmatpush1.bf16.msra.mxu0 %v2578
    %3342 = vmatprep.subr.bf16.mxu0 0
    %3343 = vmatpush1.bf16.msra.mxu0 %v2579
    %3344 = vmatprep.subr.bf16.mxu0 0
    %3345 = vmatpush1.bf16.msra.mxu0 %v2580
    %3346 = vmatprep.subr.bf16.mxu0 0
    %3347 = vmatpush1.bf16.msra.mxu0 %v2581
    %3348 = vmatprep.mubr.bf16.mxu0 %v816
    %3349 = vmatmul.mubr.bf16.gmra.mrb[0].mxu0 %v814
    %v3350 = vpop.f32.mrb[0].mxu0
    %v3351 = vadd.f32 %v3311, %v3350
    %v3352 = vpop.f32.mrb[0].mxu0
    %v3353 = vpop.f32.mrb[0].mxu0
    %v3354 = vpop.f32.mrb[0].mxu0
    %3355 = vdwg.mxu0
    %3356 = vmatprep.subr.bf16.mxu0 0
    %3357 = vmatpush1.bf16.msra.mxu0 %v2582
    %3358 = vmatprep.subr.bf16.mxu0 0
    %3359 = vmatpush1.bf16.msra.mxu0 %v2583
    %3360 = vmatprep.subr.bf16.mxu0 0
    %3361 = vmatpush1.bf16.msra.mxu0 %v2584
    %3362 = vmatprep.subr.bf16.mxu0 0
    %3363 = vmatpush1.bf16.msra.mxu0 %v2585
    %3364 = vmatprep.subr.bf16.mxu0 0
    %3365 = vmatpush1.bf16.msra.mxu0 %v2586
    %3366 = vmatprep.subr.bf16.mxu0 0
    %3367 = vmatpush1.bf16.msra.mxu0 %v2587
    %3368 = vmatprep.subr.bf16.mxu0 0
    %3369 = vmatpush1.bf16.msra.mxu0 %v2588
    %3370 = vmatprep.subr.bf16.mxu0 0
    %3371 = vmatpush1.bf16.msra.mxu0 %v2589
    %3372 = vmatprep.subr.bf16.mxu0 0
    %3373 = vmatpush1.bf16.msra.mxu0 %v2590
    %3374 = vmatprep.subr.bf16.mxu0 0
    %3375 = vmatpush1.bf16.msra.mxu0 %v2591
    %3376 = vmatprep.subr.bf16.mxu0 0
    %3377 = vmatpush1.bf16.msra.mxu0 %v2592
    %3378 = vmatprep.subr.bf16.mxu0 0
    %3379 = vmatpush1.bf16.msra.mxu0 %v2593
    %3380 = vmatprep.subr.bf16.mxu0 0
    %3381 = vmatpush1.bf16.msra.mxu0 %v2594
    %3382 = vmatprep.subr.bf16.mxu0 0
    %3383 = vmatpush1.bf16.msra.mxu0 %v2595
    %3384 = vmatprep.subr.bf16.mxu0 0
    %3385 = vmatpush1.bf16.msra.mxu0 %v2596
    %3386 = vmatprep.subr.bf16.mxu0 0
    %3387 = vmatpush1.bf16.msra.mxu0 %v2597
    %3388 = vmatprep.mubr.bf16.mxu0 %v813
    %3389 = vmatmul.mubr.bf16.gmra.mrb[0].mxu0 %v799
    %v3390 = vpop.f32.mrb[0].mxu0
    %v3391 = vadd.f32 %v3351, %v3390
    %v3392 = vpop.f32.mrb[0].mxu0
    %v3393 = vpop.f32.mrb[0].mxu0
    %v3394 = vpop.f32.mrb[0].mxu0
    %3395 = vdwg.mxu0
    %3396 = vmatprep.subr.bf16.mxu0 0
    %3397 = vmatpush1.bf16.msra.mxu0 %v2598
    %3398 = vmatprep.subr.bf16.mxu0 0
    %3399 = vmatpush1.bf16.msra.mxu0 %v2599
    %3400 = vmatprep.subr.bf16.mxu0 0
    %3401 = vmatpush1.bf16.msra.mxu0 %v2600
    %3402 = vmatprep.subr.bf16.mxu0 0
    %3403 = vmatpush1.bf16.msra.mxu0 %v2601
    %3404 = vmatprep.subr.bf16.mxu0 0
    %3405 = vmatpush1.bf16.msra.mxu0 %v2602
    %3406 = vmatprep.subr.bf16.mxu0 0
    %3407 = vmatpush1.bf16.msra.mxu0 %v2603
    %3408 = vmatprep.subr.bf16.mxu0 0
    %3409 = vmatpush1.bf16.msra.mxu0 %v2604
    %3410 = vmatprep.subr.bf16.mxu0 0
    %3411 = vmatpush1.bf16.msra.mxu0 %v2605
    %3412 = vmatprep.subr.bf16.mxu0 0
    %3413 = vmatpush1.bf16.msra.mxu0 %v2606
    %3414 = vmatprep.subr.bf16.mxu0 0
    %3415 = vmatpush1.bf16.msra.mxu0 %v2607
    %3416 = vmatprep.subr.bf16.mxu0 0
    %3417 = vmatpush1.bf16.msra.mxu0 %v2608
    %3418 = vmatprep.subr.bf16.mxu0 0
    %3419 = vmatpush1.bf16.msra.mxu0 %v2609
    %3420 = vmatprep.subr.bf16.mxu0 0
    %3421 = vmatpush1.bf16.msra.mxu0 %v2610
    %3422 = vmatprep.subr.bf16.mxu0 0
    %3423 = vmatpush1.bf16.msra.mxu0 %v2611
    %3424 = vmatprep.subr.bf16.mxu0 0
    %3425 = vmatpush1.bf16.msra.mxu0 %v2612
    %3426 = vmatprep.subr.bf16.mxu0 0
    %3427 = vmatpush1.bf16.msra.mxu0 %v2613
    %3428 = vmatprep.mubr.bf16.mxu0 %v817
    %3429 = vmatmul.mubr.bf16.gmra.mrb[0].mxu0 %v815
    %v3430 = vpop.f32.mrb[0].mxu0
    %v3431 = vadd.f32 %v3391, %v3430
    %v3432 = vpop.f32.mrb[0].mxu0
    %v3433 = vpop.f32.mrb[0].mxu0
    %v3434 = vpop.f32.mrb[0].mxu0
    %3435 = vdwg.mxu0
    %3436 = vmatprep.subr.bf16.mxu0 0
    %3437 = vmatpush1.bf16.msra.mxu0 %v2614
    %3438 = vmatprep.subr.bf16.mxu0 0
    %3439 = vmatpush1.bf16.msra.mxu0 %v2615
    %3440 = vmatprep.subr.bf16.mxu0 0
    %3441 = vmatpush1.bf16.msra.mxu0 %v2616
    %3442 = vmatprep.subr.bf16.mxu0 0
    %3443 = vmatpush1.bf16.msra.mxu0 %v2617
    %3444 = vmatprep.subr.bf16.mxu0 0
    %3445 = vmatpush1.bf16.msra.mxu0 %v2618
    %3446 = vmatprep.subr.bf16.mxu0 0
    %3447 = vmatpush1.bf16.msra.mxu0 %v2619
    %3448 = vmatprep.subr.bf16.mxu0 0
    %3449 = vmatpush1.bf16.msra.mxu0 %v2620
    %3450 = vmatprep.subr.bf16.mxu0 0
    %3451 = vmatpush1.bf16.msra.mxu0 %v2621
    %3452 = vmatprep.subr.bf16.mxu0 0
    %3453 = vmatpush1.bf16.msra.mxu0 %v2622
    %3454 = vmatprep.subr.bf16.mxu0 0
    %3455 = vmatpush1.bf16.msra.mxu0 %v2623
    %3456 = vmatprep.subr.bf16.mxu0 0
    %3457 = vmatpush1.bf16.msra.mxu0 %v2624
    %3458 = vmatprep.subr.bf16.mxu0 0
    %3459 = vmatpush1.bf16.msra.mxu0 %v2625
    %3460 = vmatprep.subr.bf16.mxu0 0
    %3461 = vmatpush1.bf16.msra.mxu0 %v2626
    %3462 = vmatprep.subr.bf16.mxu0 0
    %3463 = vmatpush1.bf16.msra.mxu0 %v2627
    %3464 = vmatprep.subr.bf16.mxu0 0
    %3465 = vmatpush1.bf16.msra.mxu0 %v2628
    %3466 = vmatprep.subr.bf16.mxu0 0
    %3467 = vmatpush1.bf16.msra.mxu0 %v2629
    %3468 = vmatprep.mubr.bf16.mxu0 %v855
    %3469 = vmatmul.mubr.bf16.gmra.mrb[0].mxu0 %v841
    %v3470 = vpop.f32.mrb[0].mxu0
    %v3471 = vadd.f32 %v3431, %v3470
    %v3472 = vpop.f32.mrb[0].mxu0
    %v3473 = vpop.f32.mrb[0].mxu0
    %v3474 = vpop.f32.mrb[0].mxu0
    %3475 = vdwg.mxu0
    %3476 = vmatprep.subr.bf16.mxu0 0
    %3477 = vmatpush1.bf16.msra.mxu0 %v2630
    %3478 = vmatprep.subr.bf16.mxu0 0
    %3479 = vmatpush1.bf16.msra.mxu0 %v2631
    %3480 = vmatprep.subr.bf16.mxu0 0
    %3481 = vmatpush1.bf16.msra.mxu0 %v2632
    %3482 = vmatprep.subr.bf16.mxu0 0
    %3483 = vmatpush1.bf16.msra.mxu0 %v2633
    %3484 = vmatprep.subr.bf16.mxu0 0
    %3485 = vmatpush1.bf16.msra.mxu0 %v2634
    %3486 = vmatprep.subr.bf16.mxu0 0
    %3487 = vmatpush1.bf16.msra.mxu0 %v2635
    %3488 = vmatprep.subr.bf16.mxu0 0
    %3489 = vmatpush1.bf16.msra.mxu0 %v2636
    %3490 = vmatprep.subr.bf16.mxu0 0
    %3491 = vmatpush1.bf16.msra.mxu0 %v2637
    %3492 = vmatprep.subr.bf16.mxu0 0
    %3493 = vmatpush1.bf16.msra.mxu0 %v2638
    %3494 = vmatprep.subr.bf16.mxu0 0
    %3495 = vmatpush1.bf16.msra.mxu0 %v2639
    %3496 = vmatprep.subr.bf16.mxu0 0
    %3497 = vmatpush1.bf16.msra.mxu0 %v2640
    %3498 = vmatprep.subr.bf16.mxu0 0
    %3499 = vmatpush1.bf16.msra.mxu0 %v2641
    %3500 = vmatprep.subr.bf16.mxu0 0
    %3501 = vmatpush1.bf16.msra.mxu0 %v2642
    %3502 = vmatprep.subr.bf16.mxu0 0
    %3503 = vmatpush1.bf16.msra.mxu0 %v2643
    %3504 = vmatprep.subr.bf16.mxu0 0
    %3505 = vmatpush1.bf16.msra.mxu0 %v2644
    %3506 = vmatprep.subr.bf16.mxu0 0
    %3507 = vmatpush1.bf16.msra.mxu0 %v2645
    %3508 = vmatprep.mubr.bf16.mxu0 %v865
    %3509 = vmatmul.mubr.bf16.gmra.mrb[0].mxu0 %v863
    %v3510 = vpop.f32.mrb[0].mxu0
    %v3511 = vadd.f32 %v3471, %v3510
    %v3512 = vpop.f32.mrb[0].mxu0
    %v3513 = vpop.f32.mrb[0].mxu0
    %v3514 = vpop.f32.mrb[0].mxu0
    %3515 = vdwg.mxu0
    %3516 = vmatprep.subr.bf16.mxu0 0
    %3517 = vmatpush1.bf16.msra.mxu0 %v2646
    %3518 = vmatprep.subr.bf16.mxu0 0
    %3519 = vmatpush1.bf16.msra.mxu0 %v2647
    %3520 = vmatprep.subr.bf16.mxu0 0
    %3521 = vmatpush1.bf16.msra.mxu0 %v2648
    %3522 = vmatprep.subr.bf16.mxu0 0
    %3523 = vmatpush1.bf16.msra.mxu0 %v2649
    %3524 = vmatprep.subr.bf16.mxu0 0
    %3525 = vmatpush1.bf16.msra.mxu0 %v2650
    %3526 = vmatprep.subr.bf16.mxu0 0
    %3527 = vmatpush1.bf16.msra.mxu0 %v2651
    %3528 = vmatprep.subr.bf16.mxu0 0
    %3529 = vmatpush1.bf16.msra.mxu0 %v2652
    %3530 = vmatprep.subr.bf16.mxu0 0
    %3531 = vmatpush1.bf16.msra.mxu0 %v2653
    %3532 = vmatprep.subr.bf16.mxu0 0
    %3533 = vmatpush1.bf16.msra.mxu0 %v2654
    %3534 = vmatprep.subr.bf16.mxu0 0
    %3535 = vmatpush1.bf16.msra.mxu0 %v2655
    %3536 = vmatprep.subr.bf16.mxu0 0
    %3537 = vmatpush1.bf16.msra.mxu0 %v2656
    %3538 = vmatprep.subr.bf16.mxu0 0
    %3539 = vmatpush1.bf16.msra.mxu0 %v2657
    %3540 = vmatprep.subr.bf16.mxu0 0
    %3541 = vmatpush1.bf16.msra.mxu0 %v2658
    %3542 = vmatprep.subr.bf16.mxu0 0
    %3543 = vmatpush1.bf16.msra.mxu0 %v2659
    %3544 = vmatprep.subr.bf16.mxu0 0
    %3545 = vmatpush1.bf16.msra.mxu0 %v2660
    %3546 = vmatprep.subr.bf16.mxu0 0
    %3547 = vmatpush1.bf16.msra.mxu0 %v2661
    %3548 = vmatprep.mubr.bf16.mxu0 %v862
    %3549 = vmatmul.mubr.bf16.gmra.mrb[0].mxu0 %v848
    %v3550 = vpop.f32.mrb[0].mxu0
    %v3551 = vadd.f32 %v3511, %v3550
    %v3552 = vpop.f32.mrb[0].mxu0
    %v3553 = vpop.f32.mrb[0].mxu0
    %v3554 = vpop.f32.mrb[0].mxu0
    %3555 = vdwg.mxu0
    %3556 = vmatprep.subr.bf16.mxu0 0
    %3557 = vmatpush1.bf16.msra.mxu0 %v2662
    %3558 = vmatprep.subr.bf16.mxu0 0
    %3559 = vmatpush1.bf16.msra.mxu0 %v2663
    %3560 = vmatprep.subr.bf16.mxu0 0
    %3561 = vmatpush1.bf16.msra.mxu0 %v2664
    %3562 = vmatprep.subr.bf16.mxu0 0
    %3563 = vmatpush1.bf16.msra.mxu0 %v2665
    %3564 = vmatprep.subr.bf16.mxu0 0
    %3565 = vmatpush1.bf16.msra.mxu0 %v2666
    %3566 = vmatprep.subr.bf16.mxu0 0
    %3567 = vmatpush1.bf16.msra.mxu0 %v2667
    %3568 = vmatprep.subr.bf16.mxu0 0
    %3569 = vmatpush1.bf16.msra.mxu0 %v2668
    %3570 = vmatprep.subr.bf16.mxu0 0
    %3571 = vmatpush1.bf16.msra.mxu0 %v2669
    %3572 = vmatprep.subr.bf16.mxu0 0
    %3573 = vmatpush1.bf16.msra.mxu0 %v2670
    %3574 = vmatprep.subr.bf16.mxu0 0
    %3575 = vmatpush1.bf16.msra.mxu0 %v2671
    %3576 = vmatprep.subr.bf16.mxu0 0
    %3577 = vmatpush1.bf16.msra.mxu0 %v2672
    %3578 = vmatprep.subr.bf16.mxu0 0
    %3579 = vmatpush1.bf16.msra.mxu0 %v2673
    %3580 = vmatprep.subr.bf16.mxu0 0
    %3581 = vmatpush1.bf16.msra.mxu0 %v2674
    %3582 = vmatprep.subr.bf16.mxu0 0
    %3583 = vmatpush1.bf16.msra.mxu0 %v2675
    %3584 = vmatprep.subr.bf16.mxu0 0
    %3585 = vmatpush1.bf16.msra.mxu0 %v2676
    %3586 = vmatprep.subr.bf16.mxu0 0
    %3587 = vmatpush1.bf16.msra.mxu0 %v2677
    %3588 = vmatprep.mubr.bf16.mxu0 %v866
    %3589 = vmatmul.mubr.bf16.gmra.mrb[0].mxu0 %v864
    %v3590 = vpop.f32.mrb[0].mxu0
    %v3591 = vadd.f32 %v3551, %v3590
    %v3592 = vpop.f32.mrb[0].mxu0
    %v3593 = vpop.f32.mrb[0].mxu0
    %v3594 = vpop.f32.mrb[0].mxu0
    %3595 = vdwg.mxu0
    %3596 = vmatprep.subr.bf16.mxu0 0
    %3597 = vmatpush1.bf16.msra.mxu0 %v2678
    %3598 = vmatprep.subr.bf16.mxu0 0
    %3599 = vmatpush1.bf16.msra.mxu0 %v2679
    %3600 = vmatprep.subr.bf16.mxu0 0
    %3601 = vmatpush1.bf16.msra.mxu0 %v2680
    %3602 = vmatprep.subr.bf16.mxu0 0
    %3603 = vmatpush1.bf16.msra.mxu0 %v2681
    %3604 = vmatprep.subr.bf16.mxu0 0
    %3605 = vmatpush1.bf16.msra.mxu0 %v2682
    %3606 = vmatprep.subr.bf16.mxu0 0
    %3607 = vmatpush1.bf16.msra.mxu0 %v2683
    %3608 = vmatprep.subr.bf16.mxu0 0
    %3609 = vmatpush1.bf16.msra.mxu0 %v2684
    %3610 = vmatprep.subr.bf16.mxu0 0
    %3611 = vmatpush1.bf16.msra.mxu0 %v2685
    %3612 = vmatprep.subr.bf16.mxu0 0
    %3613 = vmatpush1.bf16.msra.mxu0 %v2686
    %3614 = vmatprep.subr.bf16.mxu0 0
    %3615 = vmatpush1.bf16.msra.mxu0 %v2687
    %3616 = vmatprep.subr.bf16.mxu0 0
    %3617 = vmatpush1.bf16.msra.mxu0 %v2688
    %3618 = vmatprep.subr.bf16.mxu0 0
    %3619 = vmatpush1.bf16.msra.mxu0 %v2689
    %3620 = vmatprep.subr.bf16.mxu0 0
    %3621 = vmatpush1.bf16.msra.mxu0 %v2690
    %3622 = vmatprep.subr.bf16.mxu0 0
    %3623 = vmatpush1.bf16.msra.mxu0 %v2691
    %3624 = vmatprep.subr.bf16.mxu0 0
    %3625 = vmatpush1.bf16.msra.mxu0 %v2692
    %3626 = vmatprep.subr.bf16.mxu0 0
    %3627 = vmatpush1.bf16.msra.mxu0 %v2693
    %3628 = vmatprep.mubr.bf16.mxu0 %v904
    %3629 = vmatmul.mubr.bf16.gmra.mrb[0].mxu0 %v890
    %v3630 = vpop.f32.mrb[0].mxu0
    %v3631 = vadd.f32 %v3591, %v3630
    %v3632 = vpop.f32.mrb[0].mxu0
    %v3633 = vpop.f32.mrb[0].mxu0
    %v3634 = vpop.f32.mrb[0].mxu0
    %3635 = vdwg.mxu0
    %3636 = vmatprep.subr.bf16.mxu0 0
    %3637 = vmatpush1.bf16.msra.mxu0 %v2694
    %3638 = vmatprep.subr.bf16.mxu0 0
    %3639 = vmatpush1.bf16.msra.mxu0 %v2695
    %3640 = vmatprep.subr.bf16.mxu0 0
    %3641 = vmatpush1.bf16.msra.mxu0 %v2696
    %3642 = vmatprep.subr.bf16.mxu0 0
    %3643 = vmatpush1.bf16.msra.mxu0 %v2697
    %3644 = vmatprep.subr.bf16.mxu0 0
    %3645 = vmatpush1.bf16.msra.mxu0 %v2698
    %3646 = vmatprep.subr.bf16.mxu0 0
    %3647 = vmatpush1.bf16.msra.mxu0 %v2699
    %3648 = vmatprep.subr.bf16.mxu0 0
    %3649 = vmatpush1.bf16.msra.mxu0 %v2700
    %3650 = vmatprep.subr.bf16.mxu0 0
    %3651 = vmatpush1.bf16.msra.mxu0 %v2701
    %3652 = vmatprep.subr.bf16.mxu0 0
    %3653 = vmatpush1.bf16.msra.mxu0 %v2702
    %3654 = vmatprep.subr.bf16.mxu0 0
    %3655 = vmatpush1.bf16.msra.mxu0 %v2703
    %3656 = vmatprep.subr.bf16.mxu0 0
    %3657 = vmatpush1.bf16.msra.mxu0 %v2704
    %3658 = vmatprep.subr.bf16.mxu0 0
    %3659 = vmatpush1.bf16.msra.mxu0 %v2705
    %3660 = vmatprep.subr.bf16.mxu0 0
    %3661 = vmatpush1.bf16.msra.mxu0 %v2706
    %3662 = vmatprep.subr.bf16.mxu0 0
    %3663 = vmatpush1.bf16.msra.mxu0 %v2707
    %3664 = vmatprep.subr.bf16.mxu0 0
    %3665 = vmatpush1.bf16.msra.mxu0 %v2708
    %3666 = vmatprep.subr.bf16.mxu0 0
    %3667 = vmatpush1.bf16.msra.mxu0 %v2709
    %3668 = vmatprep.mubr.bf16.mxu0 %v914
    %3669 = vmatmul.mubr.bf16.gmra.mrb[0].mxu0 %v912
    %v3670 = vpop.f32.mrb[0].mxu0
    %v3671 = vadd.f32 %v3631, %v3670
    %v3672 = vpop.f32.mrb[0].mxu0
    %v3673 = vpop.f32.mrb[0].mxu0
    %v3674 = vpop.f32.mrb[0].mxu0
    %3675 = vdwg.mxu0
    %3676 = vmatprep.subr.bf16.mxu0 0
    %3677 = vmatpush1.bf16.msra.mxu0 %v2710
    %3678 = vmatprep.subr.bf16.mxu0 0
    %3679 = vmatpush1.bf16.msra.mxu0 %v2711
    %3680 = vmatprep.subr.bf16.mxu0 0
    %3681 = vmatpush1.bf16.msra.mxu0 %v2712
    %3682 = vmatprep.subr.bf16.mxu0 0
    %3683 = vmatpush1.bf16.msra.mxu0 %v2713
    %3684 = vmatprep.subr.bf16.mxu0 0
    %3685 = vmatpush1.bf16.msra.mxu0 %v2714
    %3686 = vmatprep.subr.bf16.mxu0 0
    %3687 = vmatpush1.bf16.msra.mxu0 %v2715
    %3688 = vmatprep.subr.bf16.mxu0 0
    %3689 = vmatpush1.bf16.msra.mxu0 %v2716
    %3690 = vmatprep.subr.bf16.mxu0 0
    %3691 = vmatpush1.bf16.msra.mxu0 %v2717
    %3692 = vmatprep.subr.bf16.mxu0 0
    %3693 = vmatpush1.bf16.msra.mxu0 %v2718
    %3694 = vmatprep.subr.bf16.mxu0 0
    %3695 = vmatpush1.bf16.msra.mxu0 %v2719
    %3696 = vmatprep.subr.bf16.mxu0 0
    %3697 = vmatpush1.bf16.msra.mxu0 %v2720
    %3698 = vmatprep.subr.bf16.mxu0 0
    %3699 = vmatpush1.bf16.msra.mxu0 %v2721
    %3700 = vmatprep.subr.bf16.mxu0 0
    %3701 = vmatpush1.bf16.msra.mxu0 %v2722
    %3702 = vmatprep.subr.bf16.mxu0 0
    %3703 = vmatpush1.bf16.msra.mxu0 %v2723
    %3704 = vmatprep.subr.bf16.mxu0 0
    %3705 = vmatpush1.bf16.msra.mxu0 %v2724
    %3706 = vmatprep.subr.bf16.mxu0 0
    %3707 = vmatpush1.bf16.msra.mxu0 %v2725
    %3708 = vmatprep.mubr.bf16.mxu0 %v911
    %3709 = vmatmul.mubr.bf16.gmra.mrb[0].mxu0 %v897
    %v3710 = vpop.f32.mrb[0].mxu0
    %v3711 = vadd.f32 %v3671, %v3710
    %v3712 = vpop.f32.mrb[0].mxu0
    %v3713 = vpop.f32.mrb[0].mxu0
    %v3714 = vpop.f32.mrb[0].mxu0
    %3715 = vdwg.mxu0
    %3716 = vmatprep.subr.bf16.mxu0 0
    %3717 = vmatpush1.bf16.msra.mxu0 %v2726
    %3718 = vmatprep.subr.bf16.mxu0 0
    %3719 = vmatpush1.bf16.msra.mxu0 %v2727
    %3720 = vmatprep.subr.bf16.mxu0 0
    %3721 = vmatpush1.bf16.msra.mxu0 %v2728
    %3722 = vmatprep.subr.bf16.mxu0 0
    %3723 = vmatpush1.bf16.msra.mxu0 %v2729
    %3724 = vmatprep.subr.bf16.mxu0 0
    %3725 = vmatpush1.bf16.msra.mxu0 %v2730
    %3726 = vmatprep.subr.bf16.mxu0 0
    %3727 = vmatpush1.bf16.msra.mxu0 %v2731
    %3728 = vmatprep.subr.bf16.mxu0 0
    %3729 = vmatpush1.bf16.msra.mxu0 %v2732
    %3730 = vmatprep.subr.bf16.mxu0 0
    %3731 = vmatpush1.bf16.msra.mxu0 %v2733
    %3732 = vmatprep.subr.bf16.mxu0 0
    %3733 = vmatpush1.bf16.msra.mxu0 %v2734
    %3734 = vmatprep.subr.bf16.mxu0 0
    %3735 = vmatpush1.bf16.msra.mxu0 %v2735
    %3736 = vmatprep.subr.bf16.mxu0 0
    %3737 = vmatpush1.bf16.msra.mxu0 %v2736
    %3738 = vmatprep.subr.bf16.mxu0 0
    %3739 = vmatpush1.bf16.msra.mxu0 %v2737
    %3740 = vmatprep.subr.bf16.mxu0 0
    %3741 = vmatpush1.bf16.msra.mxu0 %v2738
    %3742 = vmatprep.subr.bf16.mxu0 0
    %3743 = vmatpush1.bf16.msra.mxu0 %v2739
    %3744 = vmatprep.subr.bf16.mxu0 0
    %3745 = vmatpush1.bf16.msra.mxu0 %v2740
    %3746 = vmatprep.subr.bf16.mxu0 0
    %3747 = vmatpush1.bf16.msra.mxu0 %v2741
    %3748 = vmatprep.mubr.bf16.mxu0 %v915
    %3749 = vmatmul.mubr.bf16.gmra.mrb[0].mxu0 %v913
    %v3750 = vpop.f32.mrb[0].mxu0
    %v3751 = vadd.f32 %v3711, %v3750
    %v3752 = vpop.f32.mrb[0].mxu0
    %v3753 = vpop.f32.mrb[0].mxu0
    %v3754 = vpop.f32.mrb[0].mxu0
    %3755 = vdwg.mxu0
    %3756 = vmatprep.subr.bf16.mxu0 0
    %3757 = vmatpush1.bf16.msra.mxu0 %v2742
    %3758 = vmatprep.subr.bf16.mxu0 0
    %3759 = vmatpush1.bf16.msra.mxu0 %v2743
    %3760 = vmatprep.subr.bf16.mxu0 0
    %3761 = vmatpush1.bf16.msra.mxu0 %v2744
    %3762 = vmatprep.subr.bf16.mxu0 0
    %3763 = vmatpush1.bf16.msra.mxu0 %v2745
    %3764 = vmatprep.subr.bf16.mxu0 0
    %3765 = vmatpush1.bf16.msra.mxu0 %v2746
    %3766 = vmatprep.subr.bf16.mxu0 0
    %3767 = vmatpush1.bf16.msra.mxu0 %v2747
    %3768 = vmatprep.subr.bf16.mxu0 0
    %3769 = vmatpush1.bf16.msra.mxu0 %v2748
    %3770 = vmatprep.subr.bf16.mxu0 0
    %3771 = vmatpush1.bf16.msra.mxu0 %v2749
    %3772 = vmatprep.subr.bf16.mxu0 0
    %3773 = vmatpush1.bf16.msra.mxu0 %v2750
    %3774 = vmatprep.subr.bf16.mxu0 0
    %3775 = vmatpush1.bf16.msra.mxu0 %v2751
    %3776 = vmatprep.subr.bf16.mxu0 0
    %3777 = vmatpush1.bf16.msra.mxu0 %v2752
    %3778 = vmatprep.subr.bf16.mxu0 0
    %3779 = vmatpush1.bf16.msra.mxu0 %v2753
    %3780 = vmatprep.subr.bf16.mxu0 0
    %3781 = vmatpush1.bf16.msra.mxu0 %v2754
    %3782 = vmatprep.subr.bf16.mxu0 0
    %3783 = vmatpush1.bf16.msra.mxu0 %v2755
    %3784 = vmatprep.subr.bf16.mxu0 0
    %3785 = vmatpush1.bf16.msra.mxu0 %v2756
    %3786 = vmatprep.subr.bf16.mxu0 0
    %3787 = vmatpush1.bf16.msra.mxu0 %v2757
    %3788 = vmatprep.mubr.bf16.mxu0 %v953
    %3789 = vmatmul.mubr.bf16.gmra.mrb[0].mxu0 %v939
    %v3790 = vpop.f32.mrb[0].mxu0
    %v3791 = vadd.f32 %v3751, %v3790
    %v3792 = vpop.f32.mrb[0].mxu0
    %v3793 = vpop.f32.mrb[0].mxu0
    %v3794 = vpop.f32.mrb[0].mxu0
    %3795 = vdwg.mxu0
    %3796 = vmatprep.subr.bf16.mxu0 0
    %3797 = vmatpush1.bf16.msra.mxu0 %v2758
    %3798 = vmatprep.subr.bf16.mxu0 0
    %3799 = vmatpush1.bf16.msra.mxu0 %v2759
    %3800 = vmatprep.subr.bf16.mxu0 0
    %3801 = vmatpush1.bf16.msra.mxu0 %v2760
    %3802 = vmatprep.subr.bf16.mxu0 0
    %3803 = vmatpush1.bf16.msra.mxu0 %v2761
    %3804 = vmatprep.subr.bf16.mxu0 0
    %3805 = vmatpush1.bf16.msra.mxu0 %v2762
    %3806 = vmatprep.subr.bf16.mxu0 0
    %3807 = vmatpush1.bf16.msra.mxu0 %v2763
    %3808 = vmatprep.subr.bf16.mxu0 0
    %3809 = vmatpush1.bf16.msra.mxu0 %v2764
    %3810 = vmatprep.subr.bf16.mxu0 0
    %3811 = vmatpush1.bf16.msra.mxu0 %v2765
    %3812 = vmatprep.subr.bf16.mxu0 0
    %3813 = vmatpush1.bf16.msra.mxu0 %v2766
    %3814 = vmatprep.subr.bf16.mxu0 0
    %3815 = vmatpush1.bf16.msra.mxu0 %v2767
    %3816 = vmatprep.subr.bf16.mxu0 0
    %3817 = vmatpush1.bf16.msra.mxu0 %v2768
    %3818 = vmatprep.subr.bf16.mxu0 0
    %3819 = vmatpush1.bf16.msra.mxu0 %v2769
    %3820 = vmatprep.subr.bf16.mxu0 0
    %3821 = vmatpush1.bf16.msra.mxu0 %v2770
    %3822 = vmatprep.subr.bf16.mxu0 0
    %3823 = vmatpush1.bf16.msra.mxu0 %v2771
    %3824 = vmatprep.subr.bf16.mxu0 0
    %3825 = vmatpush1.bf16.msra.mxu0 %v2772
    %3826 = vmatprep.subr.bf16.mxu0 0
    %3827 = vmatpush1.bf16.msra.mxu0 %v2773
    %3828 = vmatprep.mubr.bf16.mxu0 %v963
    %3829 = vmatmul.mubr.bf16.gmra.mrb[0].mxu0 %v961
    %v3830 = vpop.f32.mrb[0].mxu0
    %v3831 = vadd.f32 %v3791, %v3830
    %v3832 = vpop.f32.mrb[0].mxu0
    %v3833 = vpop.f32.mrb[0].mxu0
    %v3834 = vpop.f32.mrb[0].mxu0
    %3835 = vdwg.mxu0
    %3836 = vmatprep.subr.bf16.mxu0 0
    %3837 = vmatpush1.bf16.msra.mxu0 %v2774
    %3838 = vmatprep.subr.bf16.mxu0 0
    %3839 = vmatpush1.bf16.msra.mxu0 %v2775
    %3840 = vmatprep.subr.bf16.mxu0 0
    %3841 = vmatpush1.bf16.msra.mxu0 %v2776
    %3842 = vmatprep.subr.bf16.mxu0 0
    %3843 = vmatpush1.bf16.msra.mxu0 %v2777
    %3844 = vmatprep.subr.bf16.mxu0 0
    %3845 = vmatpush1.bf16.msra.mxu0 %v2778
    %3846 = vmatprep.subr.bf16.mxu0 0
    %3847 = vmatpush1.bf16.msra.mxu0 %v2779
    %3848 = vmatprep.subr.bf16.mxu0 0
    %3849 = vmatpush1.bf16.msra.mxu0 %v2780
    %3850 = vmatprep.subr.bf16.mxu0 0
    %3851 = vmatpush1.bf16.msra.mxu0 %v2781
    %3852 = vmatprep.subr.bf16.mxu0 0
    %3853 = vmatpush1.bf16.msra.mxu0 %v2782
    %3854 = vmatprep.subr.bf16.mxu0 0
    %3855 = vmatpush1.bf16.msra.mxu0 %v2783
    %3856 = vmatprep.subr.bf16.mxu0 0
    %3857 = vmatpush1.bf16.msra.mxu0 %v2784
    %3858 = vmatprep.subr.bf16.mxu0 0
    %3859 = vmatpush1.bf16.msra.mxu0 %v2785
    %3860 = vmatprep.subr.bf16.mxu0 0
    %3861 = vmatpush1.bf16.msra.mxu0 %v2786
    %3862 = vmatprep.subr.bf16.mxu0 0
    %3863 = vmatpush1.bf16.msra.mxu0 %v2787
    %3864 = vmatprep.subr.bf16.mxu0 0
    %3865 = vmatpush1.bf16.msra.mxu0 %v2788
    %3866 = vmatprep.subr.bf16.mxu0 0
    %3867 = vmatpush1.bf16.msra.mxu0 %v2789
    %3868 = vmatprep.mubr.bf16.mxu0 %v960
    %3869 = vmatmul.mubr.bf16.gmra.mrb[0].mxu0 %v946
    %v3870 = vpop.f32.mrb[0].mxu0
    %v3871 = vadd.f32 %v3831, %v3870
    %v3872 = vpop.f32.mrb[0].mxu0
    %v3873 = vpop.f32.mrb[0].mxu0
    %v3874 = vpop.f32.mrb[0].mxu0
    %3875 = vdwg.mxu0
    %3876 = vmatprep.subr.bf16.mxu0 0
    %3877 = vmatpush1.bf16.msra.mxu0 %v2790
    %3878 = vmatprep.subr.bf16.mxu0 0
    %3879 = vmatpush1.bf16.msra.mxu0 %v2791
    %3880 = vmatprep.subr.bf16.mxu0 0
    %3881 = vmatpush1.bf16.msra.mxu0 %v2792
    %3882 = vmatprep.subr.bf16.mxu0 0
    %3883 = vmatpush1.bf16.msra.mxu0 %v2793
    %3884 = vmatprep.subr.bf16.mxu0 0
    %3885 = vmatpush1.bf16.msra.mxu0 %v2794
    %3886 = vmatprep.subr.bf16.mxu0 0
    %3887 = vmatpush1.bf16.msra.mxu0 %v2795
    %3888 = vmatprep.subr.bf16.mxu0 0
    %3889 = vmatpush1.bf16.msra.mxu0 %v2796
    %3890 = vmatprep.subr.bf16.mxu0 0
    %3891 = vmatpush1.bf16.msra.mxu0 %v2797
    %3892 = vmatprep.subr.bf16.mxu0 0
    %3893 = vmatpush1.bf16.msra.mxu0 %v2798
    %3894 = vmatprep.subr.bf16.mxu0 0
    %3895 = vmatpush1.bf16.msra.mxu0 %v2799
    %3896 = vmatprep.subr.bf16.mxu0 0
    %3897 = vmatpush1.bf16.msra.mxu0 %v2800
    %3898 = vmatprep.subr.bf16.mxu0 0
    %3899 = vmatpush1.bf16.msra.mxu0 %v2801
    %3900 = vmatprep.subr.bf16.mxu0 0
    %3901 = vmatpush1.bf16.msra.mxu0 %v2802
    %3902 = vmatprep.subr.bf16.mxu0 0
    %3903 = vmatpush1.bf16.msra.mxu0 %v2803
    %3904 = vmatprep.subr.bf16.mxu0 0
    %3905 = vmatpush1.bf16.msra.mxu0 %v2804
    %3906 = vmatprep.subr.bf16.mxu0 0
    %3907 = vmatpush1.bf16.msra.mxu0 %v2805
    %3908 = vmatprep.mubr.bf16.mxu0 %v964
    %3909 = vmatmul.mubr.bf16.gmra.mrb[0].mxu0 %v962
    %v3910 = vpop.f32.mrb[0].mxu0
    %v3911 = vadd.f32 %v3871, %v3910
    %v3912 = vpop.f32.mrb[0].mxu0
    %v3913 = vpop.f32.mrb[0].mxu0
    %v3914 = vpop.f32.mrb[0].mxu0
    %3915 = vdwg.mxu0
    %3916 = vmatprep.subr.bf16.mxu0 0
    %3917 = vmatpush1.bf16.msra.mxu0 %v2806
    %3918 = vmatprep.subr.bf16.mxu0 0
    %3919 = vmatpush1.bf16.msra.mxu0 %v2807
    %3920 = vmatprep.subr.bf16.mxu0 0
    %3921 = vmatpush1.bf16.msra.mxu0 %v2808
    %3922 = vmatprep.subr.bf16.mxu0 0
    %3923 = vmatpush1.bf16.msra.mxu0 %v2809
    %3924 = vmatprep.subr.bf16.mxu0 0
    %3925 = vmatpush1.bf16.msra.mxu0 %v2810
    %3926 = vmatprep.subr.bf16.mxu0 0
    %3927 = vmatpush1.bf16.msra.mxu0 %v2811
    %3928 = vmatprep.subr.bf16.mxu0 0
    %3929 = vmatpush1.bf16.msra.mxu0 %v2812
    %3930 = vmatprep.subr.bf16.mxu0 0
    %3931 = vmatpush1.bf16.msra.mxu0 %v2813
    %3932 = vmatprep.subr.bf16.mxu0 0
    %3933 = vmatpush1.bf16.msra.mxu0 %v2814
    %3934 = vmatprep.subr.bf16.mxu0 0
    %3935 = vmatpush1.bf16.msra.mxu0 %v2815
    %3936 = vmatprep.subr.bf16.mxu0 0
    %3937 = vmatpush1.bf16.msra.mxu0 %v2816
    %3938 = vmatprep.subr.bf16.mxu0 0
    %3939 = vmatpush1.bf16.msra.mxu0 %v2817
    %3940 = vmatprep.subr.bf16.mxu0 0
    %3941 = vmatpush1.bf16.msra.mxu0 %v2818
    %3942 = vmatprep.subr.bf16.mxu0 0
    %3943 = vmatpush1.bf16.msra.mxu0 %v2819
    %3944 = vmatprep.subr.bf16.mxu0 0
    %3945 = vmatpush1.bf16.msra.mxu0 %v2820
    %3946 = vmatprep.subr.bf16.mxu0 0
    %3947 = vmatpush1.bf16.msra.mxu0 %v2821
    %3948 = vmatprep.mubr.bf16.mxu0 %v1002
    %3949 = vmatmul.mubr.bf16.gmra.mrb[0].mxu0 %v988
    %v3950 = vpop.f32.mrb[0].mxu0
    %v3951 = vadd.f32 %v3911, %v3950
    %v3952 = vpop.f32.mrb[0].mxu0
    %v3953 = vpop.f32.mrb[0].mxu0
    %v3954 = vpop.f32.mrb[0].mxu0
    %3955 = vdwg.mxu0
    %3956 = vmatprep.subr.bf16.mxu0 0
    %3957 = vmatpush1.bf16.msra.mxu0 %v2822
    %3958 = vmatprep.subr.bf16.mxu0 0
    %3959 = vmatpush1.bf16.msra.mxu0 %v2823
    %3960 = vmatprep.subr.bf16.mxu0 0
    %3961 = vmatpush1.bf16.msra.mxu0 %v2824
    %3962 = vmatprep.subr.bf16.mxu0 0
    %3963 = vmatpush1.bf16.msra.mxu0 %v2825
    %3964 = vmatprep.subr.bf16.mxu0 0
    %3965 = vmatpush1.bf16.msra.mxu0 %v2826
    %3966 = vmatprep.subr.bf16.mxu0 0
    %3967 = vmatpush1.bf16.msra.mxu0 %v2827
    %3968 = vmatprep.subr.bf16.mxu0 0
    %3969 = vmatpush1.bf16.msra.mxu0 %v2828
    %3970 = vmatprep.subr.bf16.mxu0 0
    %3971 = vmatpush1.bf16.msra.mxu0 %v2829
    %3972 = vmatprep.subr.bf16.mxu0 0
    %3973 = vmatpush1.bf16.msra.mxu0 %v2830
    %3974 = vmatprep.subr.bf16.mxu0 0
    %3975 = vmatpush1.bf16.msra.mxu0 %v2831
    %3976 = vmatprep.subr.bf16.mxu0 0
    %3977 = vmatpush1.bf16.msra.mxu0 %v2832
    %3978 = vmatprep.subr.bf16.mxu0 0
    %3979 = vmatpush1.bf16.msra.mxu0 %v2833
    %3980 = vmatprep.subr.bf16.mxu0 0
    %3981 = vmatpush1.bf16.msra.mxu0 %v2834
    %3982 = vmatprep.subr.bf16.mxu0 0
    %3983 = vmatpush1.bf16.msra.mxu0 %v2835
    %3984 = vmatprep.subr.bf16.mxu0 0
    %3985 = vmatpush1.bf16.msra.mxu0 %v2836
    %3986 = vmatprep.subr.bf16.mxu0 0
    %3987 = vmatpush1.bf16.msra.mxu0 %v2837
    %3988 = vmatprep.mubr.bf16.mxu0 %v1012
    %3989 = vmatmul.mubr.bf16.gmra.mrb[0].mxu0 %v1010
    %v3990 = vpop.f32.mrb[0].mxu0
    %v3991 = vadd.f32 %v3951, %v3990
    %v3992 = vpop.f32.mrb[0].mxu0
    %v3993 = vpop.f32.mrb[0].mxu0
    %v3994 = vpop.f32.mrb[0].mxu0
    %3995 = vdwg.mxu0
    %3996 = vmatprep.subr.bf16.mxu0 0
    %3997 = vmatpush1.bf16.msra.mxu0 %v2838
    %3998 = vmatprep.subr.bf16.mxu0 0
    %3999 = vmatpush1.bf16.msra.mxu0 %v2839
    %4000 = vmatprep.subr.bf16.mxu0 0
    %4001 = vmatpush1.bf16.msra.mxu0 %v2840
    %4002 = vmatprep.subr.bf16.mxu0 0
    %4003 = vmatpush1.bf16.msra.mxu0 %v2841
    %4004 = vmatprep.subr.bf16.mxu0 0
    %4005 = vmatpush1.bf16.msra.mxu0 %v2842
    %4006 = vmatprep.subr.bf16.mxu0 0
    %4007 = vmatpush1.bf16.msra.mxu0 %v2843
    %4008 = vmatprep.subr.bf16.mxu0 0
    %4009 = vmatpush1.bf16.msra.mxu0 %v2844
    %4010 = vmatprep.subr.bf16.mxu0 0
    %4011 = vmatpush1.bf16.msra.mxu0 %v2845
    %4012 = vmatprep.subr.bf16.mxu0 0
    %4013 = vmatpush1.bf16.msra.mxu0 %v2846
    %4014 = vmatprep.subr.bf16.mxu0 0
    %4015 = vmatpush1.bf16.msra.mxu0 %v2847
    %4016 = vmatprep.subr.bf16.mxu0 0
    %4017 = vmatpush1.bf16.msra.mxu0 %v2848
    %4018 = vmatprep.subr.bf16.mxu0 0
    %4019 = vmatpush1.bf16.msra.mxu0 %v2849
    %4020 = vmatprep.subr.bf16.mxu0 0
    %4021 = vmatpush1.bf16.msra.mxu0 %v2850
    %4022 = vmatprep.subr.bf16.mxu0 0
    %4023 = vmatpush1.bf16.msra.mxu0 %v2851
    %4024 = vmatprep.subr.bf16.mxu0 0
    %4025 = vmatpush1.bf16.msra.mxu0 %v2852
    %4026 = vmatprep.subr.bf16.mxu0 0
    %4027 = vmatpush1.bf16.msra.mxu0 %v2853
    %4028 = vmatprep.mubr.bf16.mxu0 %v1009
    %4029 = vmatmul.mubr.bf16.gmra.mrb[0].mxu0 %v995
    %v4030 = vpop.f32.mrb[0].mxu0
    %v4031 = vadd.f32 %v3991, %v4030
    %v4032 = vpop.f32.mrb[0].mxu0
    %v4033 = vpop.f32.mrb[0].mxu0
    %v4034 = vpop.f32.mrb[0].mxu0
    %4035 = vdwg.mxu0
    %4036 = vmatprep.subr.bf16.mxu0 0
    %4037 = vmatpush1.bf16.msra.mxu0 %v2854
    %4038 = vmatprep.subr.bf16.mxu0 0
    %4039 = vmatpush1.bf16.msra.mxu0 %v2855
    %4040 = vmatprep.subr.bf16.mxu0 0
    %4041 = vmatpush1.bf16.msra.mxu0 %v2856
    %4042 = vmatprep.subr.bf16.mxu0 0
    %4043 = vmatpush1.bf16.msra.mxu0 %v2857
    %4044 = vmatprep.subr.bf16.mxu0 0
    %4045 = vmatpush1.bf16.msra.mxu0 %v2858
    %4046 = vmatprep.subr.bf16.mxu0 0
    %4047 = vmatpush1.bf16.msra.mxu0 %v2859
    %4048 = vmatprep.subr.bf16.mxu0 0
    %4049 = vmatpush1.bf16.msra.mxu0 %v2860
    %4050 = vmatprep.subr.bf16.mxu0 0
    %4051 = vmatpush1.bf16.msra.mxu0 %v2861
    %4052 = vmatprep.subr.bf16.mxu0 0
    %4053 = vmatpush1.bf16.msra.mxu0 %v2862
    %4054 = vmatprep.subr.bf16.mxu0 0
    %4055 = vmatpush1.bf16.msra.mxu0 %v2863
    %4056 = vmatprep.subr.bf16.mxu0 0
    %4057 = vmatpush1.bf16.msra.mxu0 %v2864
    %4058 = vmatprep.subr.bf16.mxu0 0
    %4059 = vmatpush1.bf16.msra.mxu0 %v2865
    %4060 = vmatprep.subr.bf16.mxu0 0
    %4061 = vmatpush1.bf16.msra.mxu0 %v2866
    %4062 = vmatprep.subr.bf16.mxu0 0
    %4063 = vmatpush1.bf16.msra.mxu0 %v2867
    %4064 = vmatprep.subr.bf16.mxu0 0
    %4065 = vmatpush1.bf16.msra.mxu0 %v2868
    %4066 = vmatprep.subr.bf16.mxu0 0
    %4067 = vmatpush1.bf16.msra.mxu0 %v2869
    %4068 = vmatprep.mubr.bf16.mxu0 %v1013
    %4069 = vmatmul.mubr.bf16.gmra.mrb[0].mxu0 %v1011
    %v4070 = vpop.f32.mrb[0].mxu0
    %v4071 = vadd.f32 %v4031, %v4070
    %v4072 = vpop.f32.mrb[0].mxu0
    %v4073 = vpop.f32.mrb[0].mxu0
    %v4074 = vpop.f32.mrb[0].mxu0
    %4075 = vdwg.mxu0
    %4076 = vmatprep.subr.bf16.mxu0 0
    %4077 = vmatpush1.bf16.msra.mxu0 %v2870
    %4078 = vmatprep.subr.bf16.mxu0 0
    %4079 = vmatpush1.bf16.msra.mxu0 %v2871
    %4080 = vmatprep.subr.bf16.mxu0 0
    %4081 = vmatpush1.bf16.msra.mxu0 %v2872
    %4082 = vmatprep.subr.bf16.mxu0 0
    %4083 = vmatpush1.bf16.msra.mxu0 %v2873
    %4084 = vmatprep.subr.bf16.mxu0 0
    %4085 = vmatpush1.bf16.msra.mxu0 %v2874
    %4086 = vmatprep.subr.bf16.mxu0 0
    %4087 = vmatpush1.bf16.msra.mxu0 %v2875
    %4088 = vmatprep.subr.bf16.mxu0 0
    %4089 = vmatpush1.bf16.msra.mxu0 %v2876
    %4090 = vmatprep.subr.bf16.mxu0 0
    %4091 = vmatpush1.bf16.msra.mxu0 %v2877
    %4092 = vmatprep.subr.bf16.mxu0 0
    %4093 = vmatpush1.bf16.msra.mxu0 %v2878
    %4094 = vmatprep.subr.bf16.mxu0 0
    %4095 = vmatpush1.bf16.msra.mxu0 %v2879
    %4096 = vmatprep.subr.bf16.mxu0 0
    %4097 = vmatpush1.bf16.msra.mxu0 %v2880
    %4098 = vmatprep.subr.bf16.mxu0 0
    %4099 = vmatpush1.bf16.msra.mxu0 %v2881
    %4100 = vmatprep.subr.bf16.mxu0 0
    %4101 = vmatpush1.bf16.msra.mxu0 %v2882
    %4102 = vmatprep.subr.bf16.mxu0 0
    %4103 = vmatpush1.bf16.msra.mxu0 %v2883
    %4104 = vmatprep.subr.bf16.mxu0 0
    %4105 = vmatpush1.bf16.msra.mxu0 %v2884
    %4106 = vmatprep.subr.bf16.mxu0 0
    %4107 = vmatpush1.bf16.msra.mxu0 %v2885
    %4108 = vmatprep.mubr.bf16.mxu0 %v1051
    %4109 = vmatmul.mubr.bf16.gmra.mrb[0].mxu0 %v1037
    %v4110 = vpop.f32.mrb[0].mxu0
    %v4111 = vadd.f32 %v4071, %v4110
    %v4112 = vpop.f32.mrb[0].mxu0
    %v4113 = vpop.f32.mrb[0].mxu0
    %v4114 = vpop.f32.mrb[0].mxu0
    %4115 = vdwg.mxu0
    %4116 = vmatprep.subr.bf16.mxu0 0
    %4117 = vmatpush1.bf16.msra.mxu0 %v2886
    %4118 = vmatprep.subr.bf16.mxu0 0
    %4119 = vmatpush1.bf16.msra.mxu0 %v2887
    %4120 = vmatprep.subr.bf16.mxu0 0
    %4121 = vmatpush1.bf16.msra.mxu0 %v2888
    %4122 = vmatprep.subr.bf16.mxu0 0
    %4123 = vmatpush1.bf16.msra.mxu0 %v2889
    %4124 = vmatprep.subr.bf16.mxu0 0
    %4125 = vmatpush1.bf16.msra.mxu0 %v2890
    %4126 = vmatprep.subr.bf16.mxu0 0
    %4127 = vmatpush1.bf16.msra.mxu0 %v2891
    %4128 = vmatprep.subr.bf16.mxu0 0
    %4129 = vmatpush1.bf16.msra.mxu0 %v2892
    %4130 = vmatprep.subr.bf16.mxu0 0
    %4131 = vmatpush1.bf16.msra.mxu0 %v2893
    %4132 = vmatprep.subr.bf16.mxu0 0
    %4133 = vmatpush1.bf16.msra.mxu0 %v2894
    %4134 = vmatprep.subr.bf16.mxu0 0
    %4135 = vmatpush1.bf16.msra.mxu0 %v2895
    %4136 = vmatprep.subr.bf16.mxu0 0
    %4137 = vmatpush1.bf16.msra.mxu0 %v2896
    %4138 = vmatprep.subr.bf16.mxu0 0
    %4139 = vmatpush1.bf16.msra.mxu0 %v2897
    %4140 = vmatprep.subr.bf16.mxu0 0
    %4141 = vmatpush1.bf16.msra.mxu0 %v2898
    %4142 = vmatprep.subr.bf16.mxu0 0
    %4143 = vmatpush1.bf16.msra.mxu0 %v2899
    %4144 = vmatprep.subr.bf16.mxu0 0
    %4145 = vmatpush1.bf16.msra.mxu0 %v2900
    %4146 = vmatprep.subr.bf16.mxu0 0
    %4147 = vmatpush1.bf16.msra.mxu0 %v2901
    %4148 = vmatprep.mubr.bf16.mxu0 %v1060
    %4149 = vmatmul.mubr.bf16.gmra.mrb[0].mxu0 %v1059
    %v4150 = vpop.f32.mrb[0].mxu0
    %v4151 = vadd.f32 %v4111, %v4150
    %v4152 = vpop.f32.mrb[0].mxu0
    %v4153 = vpop.f32.mrb[0].mxu0
    %v4154 = vpop.f32.mrb[0].mxu0
    %4155 = vdwg.mxu0
    %4156 = vmatprep.subr.bf16.mxu0 0
    %4157 = vmatpush1.bf16.msra.mxu0 %v2902
    %4158 = vmatprep.subr.bf16.mxu0 0
    %4159 = vmatpush1.bf16.msra.mxu0 %v2903
    %4160 = vmatprep.subr.bf16.mxu0 0
    %4161 = vmatpush1.bf16.msra.mxu0 %v2904
    %4162 = vmatprep.subr.bf16.mxu0 0
    %4163 = vmatpush1.bf16.msra.mxu0 %v2905
    %4164 = vmatprep.subr.bf16.mxu0 0
    %4165 = vmatpush1.bf16.msra.mxu0 %v2906
    %4166 = vmatprep.subr.bf16.mxu0 0
    %4167 = vmatpush1.bf16.msra.mxu0 %v2907
    %4168 = vmatprep.subr.bf16.mxu0 0
    %4169 = vmatpush1.bf16.msra.mxu0 %v2908
    %4170 = vmatprep.subr.bf16.mxu0 0
    %4171 = vmatpush1.bf16.msra.mxu0 %v2909
    %4172 = vmatprep.subr.bf16.mxu0 0
    %4173 = vmatpush1.bf16.msra.mxu0 %v2910
    %4174 = vmatprep.subr.bf16.mxu0 0
    %4175 = vmatpush1.bf16.msra.mxu0 0
    %4176 = vmatprep.subr.bf16.mxu0 0
    %4177 = vmatpush1.bf16.msra.mxu0 0
    %4178 = vmatprep.subr.bf16.mxu0 0
    %4179 = vmatpush1.bf16.msra.mxu0 0
    %4180 = vmatprep.subr.bf16.mxu0 0
    %4181 = vmatpush1.bf16.msra.mxu0 0
    %4182 = vmatprep.subr.bf16.mxu0 0
    %4183 = vmatpush1.bf16.msra.mxu0 0
    %4184 = vmatprep.subr.bf16.mxu0 0
    %4185 = vmatpush1.bf16.msra.mxu0 0
    %4186 = vmatprep.subr.bf16.mxu0 0
    %4187 = vmatpush1.bf16.msra.mxu0 0
    %4188 = vmatprep.mubr.bf16.mxu0 %v3274
    %4189 = vmatmul.mubr.bf16.gmra.mrb[0].mxu0 %v1044
    %v4190 = vpop.f32.mrb[0].mxu0
    %v4191 = vadd.f32 %v4151, %v4190
    %v4192 = vpop.f32.mrb[0].mxu0
    %v4193 = vpop.f32.mrb[0].mxu0
    %v4194 = vpop.f32.mrb[0].mxu0
    %4195 = vdwg.mxu0
    %v4196 = vmax.f32 %v4191, 0.0
    %v4197 = vpack.c.bf16 %v4196, %v4196
    %v4198 = vld [vmem:[%s3] sm:$0xf]
    %v4199 = vld [vmem:[%s3 + $0x4] sm:$0xf]
    %v4200 = vld [vmem:[%s3 + $0x8] sm:$0xf]
    %v4201 = vld [vmem:[%s3 + $0xc] sm:$0xf]
    %v4202 = vld [vmem:[%s3 + $0x10] sm:$0xf]
    %v4203 = vld [vmem:[%s3 + $0x14] sm:$0xf]
    %v4204 = vld [vmem:[%s3 + $0x18] sm:$0xf]
    %v4205 = vld [vmem:[%s3 + $0x1c] sm:$0xf]
    %v4206 = vld [vmem:[%s3 + $0x20] sm:$0xf]
    %v4207 = vld [vmem:[%s3 + $0x24] sm:$0xf]
    %v4208 = vld [vmem:[%s3 + $0x28] sm:$0xf]
    %v4209 = vld [vmem:[%s3 + $0x2c] sm:$0xf]
    %v4210 = vld [vmem:[%s3 + $0x30] sm:$0xf]
    %v4211 = vld [vmem:[%s3 + $0x34] sm:$0xf]
    %v4212 = vld [vmem:[%s3 + $0x38] sm:$0xf]
    %v4213 = vld [vmem:[%s4] sm:$0x1]
    %v4215 = vlaneseq
    %v4216 = vshrl.u32 %v4215, 7
    %v4217 = vsub.s32 0, %v4216
    %v4218 = vrot.slane %v4213, %v4217
    %v4235 = vunpack.c.l.b16 %v4198
    %v4236 = vunpack.c.l.b16 %v4199
    %v4237 = vunpack.c.l.b16 %v4200
    %v4238 = vunpack.c.l.b16 %v4201
    %v4239 = vunpack.c.l.b16 %v4202
    %v4240 = vunpack.c.l.b16 %v4203
    %v4241 = vunpack.c.l.b16 %v4204
    %v4242 = vunpack.c.l.b16 %v4205
    %v4243 = vunpack.c.l.b16 %v4206
    %v4244 = vunpack.c.l.b16 %v4207
    %v4245 = vunpack.c.l.b16 %v4208
    %v4246 = vunpack.c.l.b16 %v4209
    %v4247 = vunpack.c.l.b16 %v4210
    %v4248 = vunpack.c.l.b16 %v4211
    %v4249 = vunpack.c.l.b16 %v4212
    %v4250 = vpack.c.b16 %v4236, %v4235
    %v4251 = vpack.c.b16 %v4238, %v4237
    %v4252 = vpack.c.b16 %v4240, %v4239
    %v4253 = vpack.c.b16 %v4242, %v4241
    %v4254 = vpack.c.b16 %v4244, %v4243
    %v4255 = vpack.c.b16 %v4246, %v4245
    %v4256 = vpack.c.b16 %v4248, %v4247
    %v4257 = vpack.c.b16 %v4249, %v4249
    %vm4265 = vcmask 982016
    %v4267 = vsel %vm4265, %v4197, 0
    %vm4269 = vcmask 1043456
    %v4271 = vsel %vm4269, %v4257, 0
    %4273 = vmatprep.subr.bf16.mxu0 0
    %4274 = vmatpush1.bf16.msra.mxu0 %v4250
    %4275 = vmatprep.subr.bf16.mxu0 0
    %4276 = vmatpush1.bf16.msra.mxu0 %v4251
    %4277 = vmatprep.subr.bf16.mxu0 0
    %4278 = vmatpush1.bf16.msra.mxu0 %v4252
    %4279 = vmatprep.subr.bf16.mxu0 0
    %4280 = vmatpush1.bf16.msra.mxu0 %v4253
    %4281 = vmatprep.subr.bf16.mxu0 0
    %4282 = vmatpush1.bf16.msra.mxu0 %v4254
    %4283 = vmatprep.subr.bf16.mxu0 0
    %4284 = vmatpush1.bf16.msra.mxu0 %v4255
    %4285 = vmatprep.subr.bf16.mxu0 0
    %4286 = vmatpush1.bf16.msra.mxu0 %v4256
    %4287 = vmatprep.subr.bf16.mxu0 0
    %4288 = vmatpush1.bf16.msra.mxu0 %v4271
    %4289 = vmatprep.subr.bf16.mxu0 0
    %4290 = vmatpush1.bf16.msra.mxu0 0
    %4291 = vmatprep.subr.bf16.mxu0 0
    %4292 = vmatpush1.bf16.msra.mxu0 0
    %4293 = vmatprep.subr.bf16.mxu0 0
    %4294 = vmatpush1.bf16.msra.mxu0 0
    %4295 = vmatprep.subr.bf16.mxu0 0
    %4296 = vmatpush1.bf16.msra.mxu0 0
    %4297 = vmatprep.subr.bf16.mxu0 0
    %4298 = vmatpush1.bf16.msra.mxu0 0
    %4299 = vmatprep.subr.bf16.mxu0 0
    %4300 = vmatpush1.bf16.msra.mxu0 0
    %4301 = vmatprep.subr.bf16.mxu0 0
    %4302 = vmatpush1.bf16.msra.mxu0 0
    %4303 = vmatprep.subr.bf16.mxu0 0
    %4304 = vmatpush1.bf16.msra.mxu0 0
    %4305 = vmatprep.mubr.bf16.mxu0 0
    %4306 = vmatmul.mubr.bf16.gmra.mrb[0].mxu0 %v4267
    %v4307 = vpop.f32.mrb[0].mxu0
    %v4308 = vadd.f32 %v4218, %v4307
    %v4309 = vpop.f32.mrb[0].mxu0
    %v4310 = vpop.f32.mrb[0].mxu0
    %v4311 = vpop.f32.mrb[0].mxu0
    %4312 = vdwg.mxu0
    %v4313 = vmax.f32 %v4308, 0.0
    %v4314 = vpack.c.bf16 %v4313, %v4313
    %v4315 = vld [vmem:[%s5] sm:$0xf]
    %v4316 = vld [vmem:[%s5 + $0x4] sm:$0xf]
    %v4317 = vld [vmem:[%s5 + $0x8] sm:$0xf]
    %v4318 = vld [vmem:[%s5 + $0xc] sm:$0xf]
    %v4319 = vld [vmem:[%s5 + $0x10] sm:$0xf]
    %v4320 = vld [vmem:[%s5 + $0x14] sm:$0xf]
    %v4321 = vld [vmem:[%s5 + $0x18] sm:$0xf]
    %v4322 = vld [vmem:[%s5 + $0x1c] sm:$0xf]
    %v4323 = vld [vmem:[%s5 + $0x20] sm:$0xf]
    %v4324 = vld [vmem:[%s5 + $0x24] sm:$0xf]
    %v4325 = vld [vmem:[%s5 + $0x28] sm:$0x3]
    %v4326 = vld [vmem:[%s6] sm:$0x1]
    %v4328 = vlaneseq
    %v4329 = vshrl.u32 %v4328, 7
    %v4330 = vsub.s32 0, %v4329
    %v4331 = vrot.slane %v4326, %v4330
    %v4344 = vunpack.c.l.b16 %v4315
    %v4345 = vunpack.c.l.b16 %v4316
    %v4346 = vunpack.c.l.b16 %v4317
    %v4347 = vunpack.c.l.b16 %v4318
    %v4348 = vunpack.c.l.b16 %v4319
    %v4349 = vunpack.c.l.b16 %v4320
    %v4350 = vunpack.c.l.b16 %v4321
    %v4351 = vunpack.c.l.b16 %v4322
    %v4352 = vunpack.c.l.b16 %v4323
    %v4353 = vunpack.c.l.b16 %v4324
    %v4354 = vunpack.c.l.b16 %v4325
    %v4355 = vpack.c.b16 %v4345, %v4344
    %v4356 = vpack.c.b16 %v4347, %v4346
    %v4357 = vpack.c.b16 %v4349, %v4348
    %v4358 = vpack.c.b16 %v4351, %v4350
    %v4359 = vpack.c.b16 %v4353, %v4352
    %v4360 = vpack.c.b16 %v4354, %v4354
    %vm4366 = vcmask 687104
    %v4368 = vsel %vm4366, %v4314, 0
    %vm4370 = vcmask 1041408
    %v4372 = vsel %vm4370, %v4360, 0
    %4374 = vmatprep.subr.bf16.mxu0 0
    %4375 = vmatpush1.bf16.msra.mxu0 %v4355
    %4376 = vmatprep.subr.bf16.mxu0 0
    %4377 = vmatpush1.bf16.msra.mxu0 %v4356
    %4378 = vmatprep.subr.bf16.mxu0 0
    %4379 = vmatpush1.bf16.msra.mxu0 %v4357
    %4380 = vmatprep.subr.bf16.mxu0 0
    %4381 = vmatpush1.bf16.msra.mxu0 %v4358
    %4382 = vmatprep.subr.bf16.mxu0 0
    %4383 = vmatpush1.bf16.msra.mxu0 %v4359
    %4384 = vmatprep.subr.bf16.mxu0 0
    %4385 = vmatpush1.bf16.msra.mxu0 %v4372
    %4386 = vmatprep.subr.bf16.mxu0 0
    %4387 = vmatpush1.bf16.msra.mxu0 0
    %4388 = vmatprep.subr.bf16.mxu0 0
    %4389 = vmatpush1.bf16.msra.mxu0 0
    %4390 = vmatprep.subr.bf16.mxu0 0
    %4391 = vmatpush1.bf16.msra.mxu0 0
    %4392 = vmatprep.subr.bf16.mxu0 0
    %4393 = vmatpush1.bf16.msra.mxu0 0
    %4394 = vmatprep.subr.bf16.mxu0 0
    %4395 = vmatpush1.bf16.msra.mxu0 0
    %4396 = vmatprep.subr.bf16.mxu0 0
    %4397 = vmatpush1.bf16.msra.mxu0 0
    %4398 = vmatprep.subr.bf16.mxu0 0
    %4399 = vmatpush1.bf16.msra.mxu0 0
    %4400 = vmatprep.subr.bf16.mxu0 0
    %4401 = vmatpush1.bf16.msra.mxu0 0
    %4402 = vmatprep.subr.bf16.mxu0 0
    %4403 = vmatpush1.bf16.msra.mxu0 0
    %4404 = vmatprep.subr.bf16.mxu0 0
    %4405 = vmatpush1.bf16.msra.mxu0 0
    %4406 = vmatprep.mubr.bf16.mxu0 0
    %4407 = vmatmul.mubr.bf16.gmra.mrb[0].mxu0 %v4368
    %v4408 = vpop.f32.mrb[0].mxu0
    %v4409 = vadd.f32 %v4331, %v4408
    %v4410 = vpop.f32.mrb[0].mxu0
    %v4411 = vpop.f32.mrb[0].mxu0
    %v4412 = vpop.f32.mrb[0].mxu0
    %4413 = vdwg.mxu0
    %vm4414 = vcmask 74752
    %v4415 = vsel %vm4414, %v4409, -inf
    %4416 = vmax.xlane.f32.xlu0 %v4415
    %v4417 = vpop.xlane.xlu0 %4416
    %v4418 = vsub.f32 %v4409, %v4417
    %v4419 = vmul.f32 %v4418, 1.442695
    %v4420 = vpow.pop %v4419
    %v4421 = vsel %vm4414, %v4420, 0.0
    %4422 = vadd.xlane.f32.xlu0 %v4421
    %v4423 = vpop.xlane.xlu0 %4422
    %v4424 = vrcp.pop %v4423
    %v4425 = vmul.f32 %v4420, %v4424
    %4426 = vst.msk [vmem:[#allocation2] sm:$0x3] %vm4414, %v4425
    // Predicated region
    $region30: #{net_forward.3} parent=1 // pred_check
      _
    $region31: #{net_forward.3} parent=1 // pred_check_branch
      %4428 = sbr.rel (0) target = $region33
    $region32: #{net_forward.3} parent=1 // pred_region
      %s4430 = ssub.s32 32, 32
      %4431 = vsyncadd [#allocation3], %s4430
      %s4433 = sshll.u32 [#allocation2], 4
      %s4434 = int_to_ptr.vmem [resolvable:$true] %s4433
      %4436 = dma.vmem_to_hbm [thread:$0]  %s4434, 32, %s7, [#allocation3]
    $region33: #{net_forward.3} parent=1 // pred_fallthru
      _
    // Predicated region
    $region34: #{net_forward.3} parent=1 // pred_check
      _
    $region35: #{net_forward.3} parent=1 // pred_check_branch
      %4438 = sbr.rel (0) target = $region37
    $region36: #{net_forward.3} parent=1 // pred_region
      %4439 = dma.done [#allocation3], 32
    $region37: #{net_forward.3} parent=1 // pred_fallthru
      _
    %4440 = vsyncpa [#allocation3], 1

</llo_original>
